<compile_context>
chip_gen: v7x
topology: tpu7x:2x2x1
jax: 0.10.0
libtpu: 0.0.40
codegen_flags: <defaults>
</compile_context>

<pallas_src>
import functools

import jax
import jax.numpy as jnp
from jax.experimental import pallas as pl
from jax.experimental.pallas import tpu as pltpu

EPS = 1e-5
LANE = 128
COMPUTE_DTYPE = jnp.bfloat16     # MXU operand dtype (accumulation stays f32)
STREAM_DTYPE = jnp.bfloat16      # inter-kernel activation streams in HBM


def _round_up(x, m):
    return (x + m - 1) // m * m


def _vmem_limit_bytes():
    # v7x has 64 MiB VMEM per TensorCore; v5e/v6e have 128 MiB.
    try:
        kind = jax.devices()[0].device_kind.lower()
    except Exception:
        kind = ""
    return (48 if "7" in kind else 96) * 1024 * 1024


def _compiler_params():
    return pltpu.CompilerParams(
        dimension_semantics=("parallel",),          # batch axis
        vmem_limit_bytes=_vmem_limit_bytes(),
    )


# ---------------------------------------------------------------------------
# In-kernel helpers
# ---------------------------------------------------------------------------
def _zero_halo(pad_ref, bottom_right):
    """Zero only the halo ring of the padded-activation scratch."""
    Hp, Wp, Cc = pad_ref.shape
    z_row = jnp.zeros((1, Wp, Cc), jnp.float32)
    z_col = jnp.zeros((Hp, 1, Cc), jnp.float32)
    pad_ref[0:1, :, :] = z_row
    pad_ref[:, 0:1, :] = z_col
    if bottom_right:
        pad_ref[Hp - 1:Hp, :, :] = z_row
        pad_ref[:, Wp - 1:Wp, :] = z_col


def _accum_taps(xpad, w, K, Ho, Wo):
    """K*K accumulating MXU dots over unit-stride tap slices (no lane concat)."""
    Cin = xpad.shape[-1]
    Cout = w.shape[-1]
    acc = jnp.zeros((Ho * Wo, Cout), jnp.float32)
    for t in range(K * K):
        kh, kw = divmod(t, K)
        tap = xpad[kh:kh + Ho, kw:kw + Wo, :].reshape(Ho * Wo, Cin)
        acc = acc + jnp.dot(tap.astype(COMPUTE_DTYPE), w[t],
                            preferred_element_type=jnp.float32)
    return acc


def _partial_stats(acc):
    """Per-image (sum, sum-of-squares) in f32, computed before the bf16 store."""
    return jnp.concatenate(
        [jnp.sum(acc, axis=0, keepdims=True),
         jnp.sum(acc * acc, axis=0, keepdims=True)], axis=0)


# ---------------------------------------------------------------------------
# Kernels (one image per grid step; weights resident in VMEM)
# ---------------------------------------------------------------------------
def _conv1_kernel(x_ref, w_ref, *refs, Hin, Win, K, Cp, has_proj):
    if has_proj:
        c1_ref, st_ref, sc_ref, pad_ref = refs
    else:
        c1_ref, st_ref, pad_ref = refs

    _zero_halo(pad_ref, bottom_right=(K == 3))
    pad_ref[1:1 + Hin, 1:1 + Win, :] = x_ref[...]

    acc = _accum_taps(pad_ref[...], w_ref[...], K, Hin, Win)    # (M, Cout) f32
    st_ref[...] = _partial_stats(acc)
    # Columns [0:Cp] = conv1, [Cp:2Cp] = fused 1x1 projection (if present).
    c1_ref[...] = acc[:, :Cp].astype(c1_ref.dtype)
    if has_proj:
        sc_ref[...] = acc[:, Cp:].astype(sc_ref.dtype)


def _conv2_kernel(c1_ref, a_ref, b_ref, w_ref, c2_ref, st_ref, pad_ref, *, H, W, Cp):
    _zero_halo(pad_ref, bottom_right=True)
    # BN1 (folded affine) + ReLU fused here: out1 never round-trips HBM in f32.
    y = jnp.maximum(c1_ref[...].astype(jnp.float32) * a_ref[...] + b_ref[...], 0.0)
    pad_ref[1:1 + H, 1:1 + W, :] = y.reshape(H, W, Cp)

    acc = _accum_taps(pad_ref[...], w_ref[...], 3, H, W)
    st_ref[...] = _partial_stats(acc)
    c2_ref[...] = acc.astype(c2_ref.dtype)


def _bn_add_relu_kernel(c2_ref, a_ref, b_ref, sc_ref, sa_ref, sb_ref, o_ref):
    y = c2_ref[...].astype(jnp.float32) * a_ref[...] + b_ref[...]
    s = sc_ref[...].astype(jnp.float32) * sa_ref[...] + sb_ref[...]
    o_ref[...] = jnp.maximum(y + s, 0.0).astype(o_ref.dtype)


# ---------------------------------------------------------------------------
# pallas_call wrappers
# ---------------------------------------------------------------------------
def _run_conv1(xin, w1b, K, Cp, has_proj):
    N, Hin, Win, Cin_pad = xin.shape
    T, _, Cout = w1b.shape
    M = Hin * Win
    halo = 2 if K == 3 else 1

    out_shape = [jax.ShapeDtypeStruct((N, M, Cp), STREAM_DTYPE),
                 jax.ShapeDtypeStruct((N, 2, Cout), jnp.float32)]
    out_specs = [pl.BlockSpec((None, M, Cp), lambda n: (n, 0, 0)),
                 pl.BlockSpec((None, 2, Cout), lambda n: (n, 0, 0))]
    if has_proj:
        out_shape.append(jax.ShapeDtypeStruct((N, M, Cp), STREAM_DTYPE))
        out_specs.append(pl.BlockSpec((None, M, Cp), lambda n: (n, 0, 0)))

    kernel = functools.partial(_conv1_kernel, Hin=Hin, Win=Win, K=K, Cp=Cp,
                               has_proj=has_proj)
    return pl.pallas_call(
        kernel,
        out_shape=tuple(out_shape),
        grid=(N,),
        in_specs=[pl.BlockSpec((None, Hin, Win, Cin_pad), lambda n: (n, 0, 0, 0)),
                  pl.BlockSpec((T, Cin_pad, Cout), lambda n: (0, 0, 0))],   # resident
        out_specs=tuple(out_specs),
        scratch_shapes=[pltpu.VMEM((Hin + halo, Win + halo, Cin_pad), jnp.float32)],
        compiler_params=_compiler_params(),
    )(xin, w1b)


def _run_conv2(c1_raw, a1, b1, w2b, Ho, Wo, Cp):
    N, M, _ = c1_raw.shape
    kernel = functools.partial(_conv2_kernel, H=Ho, W=Wo, Cp=Cp)
    return pl.pallas_call(
        kernel,
        out_shape=(jax.ShapeDtypeStruct((N, M, Cp), STREAM_DTYPE),
                   jax.ShapeDtypeStruct((N, 2, Cp), jnp.float32)),
        grid=(N,),
        in_specs=[pl.BlockSpec((None, M, Cp), lambda n: (n, 0, 0)),
                  pl.BlockSpec((1, Cp), lambda n: (0, 0)),
                  pl.BlockSpec((1, Cp), lambda n: (0, 0)),
                  pl.BlockSpec((9, Cp, Cp), lambda n: (0, 0, 0))],          # resident
        out_specs=(pl.BlockSpec((None, M, Cp), lambda n: (n, 0, 0)),
                   pl.BlockSpec((None, 2, Cp), lambda n: (n, 0, 0))),
        scratch_shapes=[pltpu.VMEM((Ho + 2, Wo + 2, Cp), jnp.float32)],
        compiler_params=_compiler_params(),
    )(c1_raw, a1, b1, w2b)


def _run_bn_add_relu(c2_raw, a2, b2, sc_raw, sa, sb):
    N, M, Cp = c2_raw.shape
    tile = pl.BlockSpec((None, M, Cp), lambda n: (n, 0, 0))
    vec = pl.BlockSpec((1, Cp), lambda n: (0, 0))
    return pl.pallas_call(
        _bn_add_relu_kernel,
        out_shape=jax.ShapeDtypeStruct((N, M, Cp), jnp.float32),
        grid=(N,),
        in_specs=[tile, vec, vec, tile, vec, vec],
        out_specs=tile,
        compiler_params=_compiler_params(),
    )(c2_raw, a2, b2, sc_raw, sa, sb)


# ---------------------------------------------------------------------------
# Host-side packing helpers (trace-time, fused by XLA into single layout passes)
# ---------------------------------------------------------------------------
def _fold_input_s2(x_nchw, Cin):
    """NCHW -> space-to-depth folded NHWC (N, H/2, W/2, 4*Cin); channel layout
    (row-parity, col-parity, cin).  A 3x3/stride-2/pad-1 conv on x becomes a
    2x2/stride-1 conv (pad 1 on top/left only) on the folded tensor."""
    N, _, H, W = x_nchw.shape
    xf = x_nchw.reshape(N, Cin, H // 2, 2, W // 2, 2)
    xf = jnp.transpose(xf, (0, 2, 4, 3, 5, 1))
    return xf.reshape(N, H // 2, W // 2, 4 * Cin)


def _fold_w1_s2(w1):
    """(3,3,Cin,C) HWIO -> (4, 4*Cin, C) weights for the folded 2x2 conv."""
    Cin, C = w1.shape[2], w1.shape[3]
    wf = jnp.zeros((2, 2, 2, 2, Cin, C), jnp.float32)      # (th, tw, ph, pw, i, o)
    for th in range(2):
        for ph in range(2):
            kh = 2 * th + ph - 1
            if not 0 <= kh < 3:
                continue
            for tw in range(2):
                for pw in range(2):
                    kw = 2 * tw + pw - 1
                    if not 0 <= kw < 3:
                        continue
                    wf = wf.at[th, tw, ph, pw].set(w1[kh, kw].astype(jnp.float32))
    return wf.reshape(4, 4 * Cin, C)


def _pack_weights(w_taps, ws, Cin_pad, Cp, centre_tap):
    """Pad (T, Cin, C) tap weights to (T, Cin_pad, Cout) bf16; if ws is given,
    fuse the 1x1 projection into the centre tap's columns [Cp:Cp+C]."""
    T, Cin_r, C_r = w_taps.shape
    Cout = Cp * (2 if ws is not None else 1)
    wb = jnp.zeros((T, Cin_pad, Cout), jnp.float32)
    wb = wb.at[:, :Cin_r, :C_r].set(w_taps.astype(jnp.float32))
    if ws is not None:
        wb = wb.at[centre_tap, :ws.shape[0], Cp:Cp + ws.shape[1]].set(
            ws.astype(jnp.float32))
    return wb.astype(COMPUTE_DTYPE)


def _bn_fold(stats, gamma, beta, count, Cp):
    """Fold per-image (sum, sumsq) partials into the per-channel BN affine
    (a, b) = (gamma*rsqrt(var+eps), beta - mean*a); padded channels get a=b=0."""
    total = jnp.sum(stats.astype(jnp.float32), axis=0)       # (2, Cp)
    mean = total[0] / count
    var = jnp.maximum(total[1] / count - mean * mean, 0.0)    # biased (training BN)
    g = jnp.zeros((Cp,), jnp.float32).at[:gamma.shape[0]].set(gamma.astype(jnp.float32))
    bb = jnp.zeros((Cp,), jnp.float32).at[:beta.shape[0]].set(beta.astype(jnp.float32))
    a = g * jax.lax.rsqrt(var + EPS)
    b = bb - mean * a
    return a.reshape(1, Cp), b.reshape(1, Cp)


# ---------------------------------------------------------------------------
# BasicBlock forward (NCHW in / NCHW out, training-mode BatchNorm)
# ---------------------------------------------------------------------------
@functools.partial(jax.jit, static_argnums=(2,))
def basic_block_forward(x_nchw, params, stride):
    assert stride in (1, 2), "only stride 1 and 2 are supported"
    N, Cin, H, W = x_nchw.shape
    C = params["w1"].shape[-1]
    has_proj = (stride != 1) or (Cin != C)
    Cp = _round_up(C, LANE)

    if stride == 1:
        Ho, Wo = H, W
        K, centre = 3, 4
        Cin_f = Cin
        xin = jnp.transpose(x_nchw, (0, 2, 3, 1)).astype(jnp.float32)
        w_taps = params["w1"].reshape(9, Cin, C)
    else:
        assert H % 2 == 0 and W % 2 == 0
        Ho, Wo = H // 2, W // 2
        K, centre = 2, 3
        Cin_f = 4 * Cin
        xin = _fold_input_s2(x_nchw.astype(jnp.float32), Cin)
        w_taps = _fold_w1_s2(params["w1"])

    Cin_pad = _round_up(Cin_f, LANE)
    # channel pad to a lane-dense width (fused by XLA with the layout pass above)
    xin = jnp.pad(xin, ((0, 0), (0, 0), (0, 0), (0, Cin_pad - Cin_f)))
    M = Ho * Wo

    ws = params["ws"] if has_proj else None
    w1b = _pack_weights(w_taps, ws, Cin_pad, Cp, centre)

    if has_proj:
        c1_raw, st1, sc_raw = _run_conv1(xin, w1b, K, Cp, True)
        sa, sb = _bn_fold(st1[:, :, Cp:], params["gs"], params["bs"], N * M, Cp)
    else:
        c1_raw, st1 = _run_conv1(xin, w1b, K, Cp, False)
        sc_raw = xin.reshape(N, M, Cin_pad)          # identity shortcut (free reshape)
        sa = jnp.ones((1, Cp), jnp.float32)
        sb = jnp.zeros((1, Cp), jnp.float32)

    a1, b1 = _bn_fold(st1[:, :, :Cp], params["g1"], params["b1"], N * M, Cp)

    w2b = _pack_weights(params["w2"].reshape(9, C, C), None, Cp, Cp, 4)
    c2_raw, st2 = _run_conv2(c1_raw, a1, b1, w2b, Ho, Wo, Cp)
    a2, b2 = _bn_fold(st2, params["g2"], params["b2"], N * M, Cp)

    out = _run_bn_add_relu(c2_raw, a2, b2, sc_raw, sa, sb)   # (N, M, Cp) f32
    out = out.reshape(N, Ho, Wo, Cp)[..., :C]
    return jnp.transpose(out, (0, 3, 1, 2))                  # -> NCHW


# ---------------------------------------------------------------------------
# Pure-JAX reference (mirrors the kernel's bf16 MXU operands / bf16 streams)
# ---------------------------------------------------------------------------
def _ref_conv(x, w, stride, pad):
    return jax.lax.conv_general_dilated(
        x.astype(COMPUTE_DTYPE), w.astype(COMPUTE_DTYPE), (stride, stride), pad,
        dimension_numbers=("NHWC", "HWIO", "NHWC"),
        preferred_element_type=jnp.float32)


def _ref_bn_affine(v, g, b):
    mean = jnp.mean(v, axis=(0, 1, 2))
    var = jnp.var(v, axis=(0, 1, 2))
    a = g * jax.lax.rsqrt(var + EPS)
    return a, b - mean * a


def _q(v):  # bf16 stream round-trip, as done between kernels
    return v.astype(STREAM_DTYPE).astype(jnp.float32)


def ref_forward(x_nchw, params, stride):
    x = jnp.transpose(x_nchw, (0, 2, 3, 1)).astype(jnp.float32)
    Cin = x.shape[-1]
    C = params["w1"].shape[-1]
    c1 = _ref_conv(x, params["w1"], stride, [(1, 1), (1, 1)])
    a1, b1 = _ref_bn_affine(c1, params["g1"], params["b1"])
    out1 = jax.nn.relu(_q(c1) * a1 + b1)
    c2 = _ref_conv(out1, params["w2"], 1, [(1, 1), (1, 1)])
    a2, b2 = _ref_bn_affine(c2, params["g2"], params["b2"])
    y = _q(c2) * a2 + b2
    if stride != 1 or Cin != C:
        s_raw = _ref_conv(x, params["ws"].reshape(1, 1, Cin, C), stride,
                          [(0, 0), (0, 0)])
        sa, sb = _ref_bn_affine(s_raw, params["gs"], params["bs"])
        s = _q(s_raw) * sa + sb
    else:
        s = x
    return jnp.transpose(jax.nn.relu(y + s), (0, 3, 1, 2))


# ---------------------------------------------------------------------------
def _make_params(key, cin, planes, has_proj):
    ks = jax.random.split(key, 9)
    params = {
        # conv weights stored HWIO (kh, kw, cin, cout)
        "w1": 0.1 * jax.random.normal(ks[0], (3, 3, cin, planes), jnp.float32),
        "g1": 1.0 + 0.1 * jax.random.normal(ks[1], (planes,), jnp.float32),
        "b1": 0.1 * jax.random.normal(ks[2], (planes,), jnp.float32),
        "w2": 0.1 * jax.random.normal(ks[3], (3, 3, planes, planes), jnp.float32),
        "g2": 1.0 + 0.1 * jax.random.normal(ks[4], (planes,), jnp.float32),
        "b2": 0.1 * jax.random.normal(ks[5], (planes,), jnp.float32),
    }
    if has_proj:
        params["ws"] = 0.1 * jax.random.normal(ks[6], (cin, planes), jnp.float32)
        params["gs"] = 1.0 + 0.1 * jax.random.normal(ks[7], (planes,), jnp.float32)
        params["bs"] = 0.1 * jax.random.normal(ks[8], (planes,), jnp.float32)
    return params


if __name__ == "__main__":
    ks = jax.random.split(jax.random.PRNGKey(0), 4)

    # Case 1: downsampling block (stride=2, cin != planes) -> fused 1x1 projection.
    params_a = _make_params(ks[0], 4, 8, True)
    x_a = jax.random.normal(ks[1], (2, 4, 32, 32), jnp.float32)
    out_a = jax.block_until_ready(basic_block_forward(x_a, params_a, 2))
    ref_a = jax.block_until_ready(ref_forward(x_a, params_a, 2))
    assert out_a.shape == (2, 8, 16, 16), out_a.shape
    err_a = float(jnp.max(jnp.abs(out_a - ref_a)))
    assert err_a < 3e-2, f"projection-shortcut case mismatch: {err_a}"

    # Case 2: identity shortcut (stride=1, cin == planes).
    params_b = _make_params(ks[2], 8, 8, False)
    x_b = jax.random.normal(ks[3], (2, 8, 16, 16), jnp.float32)
    out_b = jax.block_until_ready(basic_block_forward(x_b, params_b, 1))
    ref_b = jax.block_until_ready(ref_forward(x_b, params_b, 1))
    assert out_b.shape == (2, 8, 16, 16), out_b.shape
    err_b = float(jnp.max(jnp.abs(out_b - ref_b)))
    assert err_b < 3e-2, f"identity-shortcut case mismatch: {err_b}"

    print("KERNEL_OK")
</pallas_src>

<mosaic_0001>
module attributes {stable_mosaic.version = 11 : i64} {
  func.func @_conv1_kernel(%arg0: i32, %arg1: memref<1x16x16x128xf32, #tpu.memory_space<vmem>>, %arg2: memref<4x128x256xbf16, #tpu.memory_space<vmem>>, %arg3: memref<1x256x128xbf16, #tpu.memory_space<vmem>>, %arg4: memref<1x2x256xf32, #tpu.memory_space<vmem>>, %arg5: memref<1x256x128xbf16, #tpu.memory_space<vmem>>, %arg6: memref<17x17x128xf32, #tpu.memory_space<vmem>>) attributes {dimension_semantics = [#tpu.dimension_semantics<parallel>], iteration_bounds = array<i64: 2>, scalar_prefetch = 0 : i64, scratch_operands = 1 : i64, tpu.core_type = #tpu.core_type<tc>, window_params = [{transform_indices = @transform_0, window_bounds = array<i64: 1, 16, 16, 128>}, {pipeline_mode = #tpu.pipeline_mode<synchronous>, transform_indices = @transform_1, window_bounds = array<i64: 4, 128, 256>}, {transform_indices = @transform_2, window_bounds = array<i64: 1, 256, 128>}, {transform_indices = @transform_3, window_bounds = array<i64: 1, 2, 256>}, {transform_indices = @transform_4, window_bounds = array<i64: 1, 256, 128>}]} {
    %cst = arith.constant 0.000000e+00 : f32
    %0 = vector.broadcast %cst : f32 to vector<1x17x128xf32>
    %cst_0 = arith.constant 0.000000e+00 : f32
    %1 = vector.broadcast %cst_0 : f32 to vector<17x1x128xf32>
    %c0 = arith.constant 0 : index
    %c0_1 = arith.constant 0 : index
    %c0_2 = arith.constant 0 : index
    %2 = vector.load %arg6[%c0, %c0_1, %c0_2] : memref<17x17x128xf32, #tpu.memory_space<vmem>>, vector<1x17x128xf32>
    tpu.vector_store %arg6[%c0, %c0_1, %c0_2], %0 {strides = array<i32>} : memref<17x17x128xf32, #tpu.memory_space<vmem>>, vector<1x17x128xf32>,
    %c0_3 = arith.constant 0 : index
    %c0_4 = arith.constant 0 : index
    %c0_5 = arith.constant 0 : index
    %3 = vector.load %arg6[%c0_3, %c0_4, %c0_5] : memref<17x17x128xf32, #tpu.memory_space<vmem>>, vector<17x1x128xf32>
    tpu.vector_store %arg6[%c0_3, %c0_4, %c0_5], %1 {strides = array<i32>} : memref<17x17x128xf32, #tpu.memory_space<vmem>>, vector<17x1x128xf32>,
    %c0_6 = arith.constant 0 : index
    %c0_7 = arith.constant 0 : index
    %c0_8 = arith.constant 0 : index
    %c0_9 = arith.constant 0 : index
    %4 = vector.load %arg1[%c0_6, %c0_7, %c0_8, %c0_9] : memref<1x16x16x128xf32, #tpu.memory_space<vmem>>, vector<1x16x16x128xf32>
    %5 = vector.shape_cast %4 : vector<1x16x16x128xf32> to vector<16x16x128xf32>
    %c1 = arith.constant 1 : index
    %c1_10 = arith.constant 1 : index
    %c0_11 = arith.constant 0 : index
    %6 = vector.load %arg6[%c1, %c1_10, %c0_11] : memref<17x17x128xf32, #tpu.memory_space<vmem>>, vector<16x16x128xf32>
    tpu.vector_store %arg6[%c1, %c1_10, %c0_11], %5 {strides = array<i32>} : memref<17x17x128xf32, #tpu.memory_space<vmem>>, vector<16x16x128xf32>,
    %c0_12 = arith.constant 0 : index
    %c0_13 = arith.constant 0 : index
    %c0_14 = arith.constant 0 : index
    %7 = vector.load %arg6[%c0_12, %c0_13, %c0_14] : memref<17x17x128xf32, #tpu.memory_space<vmem>>, vector<17x17x128xf32>
    %c0_15 = arith.constant 0 : index
    %c0_16 = arith.constant 0 : index
    %c0_17 = arith.constant 0 : index
    %8 = vector.load %arg2[%c0_15, %c0_16, %c0_17] : memref<4x128x256xbf16, #tpu.memory_space<vmem>>, vector<4x128x256xbf16>
    %cst_18 = arith.constant 0.000000e+00 : f32
    %9 = vector.broadcast %cst_18 : f32 to vector<256x256xf32>
    %10 = vector.extract_strided_slice %7 {offsets = [0, 0, 0], sizes = [16, 16, 128], strides = [1, 1, 1]} : vector<17x17x128xf32> to vector<16x16x128xf32>
    %11 = vector.shape_cast %10 : vector<16x16x128xf32> to vector<256x128xf32>
    %12 = arith.truncf %11 : vector<256x128xf32> to vector<256x128xbf16>
    %13 = vector.extract_strided_slice %8 {offsets = [0, 0, 0], sizes = [1, 128, 256], strides = [1, 1, 1]} : vector<4x128x256xbf16> to vector<1x128x256xbf16>
    %14 = vector.shape_cast %13 : vector<1x128x256xbf16> to vector<128x256xbf16>
    %cst_19 = arith.constant dense<0.000000e+00> : vector<256x256xf32>
    %15 = tpu.matmul %12, %14, %cst_19 {dimension_numbers = #tpu.dot_dimension_numbers<[1], [0], [0], [1], [0, 0, 1, 1], [], []>} : vector<256x128xbf16>, vector<128x256xbf16>, vector<256x256xf32> -> vector<256x256xf32>
    %16 = arith.addf %9, %15 : vector<256x256xf32>
    %17 = vector.extract_strided_slice %7 {offsets = [0, 1, 0], sizes = [16, 16, 128], strides = [1, 1, 1]} : vector<17x17x128xf32> to vector<16x16x128xf32>
    %18 = vector.shape_cast %17 : vector<16x16x128xf32> to vector<256x128xf32>
    %19 = arith.truncf %18 : vector<256x128xf32> to vector<256x128xbf16>
    %20 = vector.extract_strided_slice %8 {offsets = [1, 0, 0], sizes = [1, 128, 256], strides = [1, 1, 1]} : vector<4x128x256xbf16> to vector<1x128x256xbf16>
    %21 = vector.shape_cast %20 : vector<1x128x256xbf16> to vector<128x256xbf16>
    %cst_20 = arith.constant dense<0.000000e+00> : vector<256x256xf32>
    %22 = tpu.matmul %19, %21, %cst_20 {dimension_numbers = #tpu.dot_dimension_numbers<[1], [0], [0], [1], [0, 0, 1, 1], [], []>} : vector<256x128xbf16>, vector<128x256xbf16>, vector<256x256xf32> -> vector<256x256xf32>
    %23 = arith.addf %16, %22 : vector<256x256xf32>
    %24 = vector.extract_strided_slice %7 {offsets = [1, 0, 0], sizes = [16, 16, 128], strides = [1, 1, 1]} : vector<17x17x128xf32> to vector<16x16x128xf32>
    %25 = vector.shape_cast %24 : vector<16x16x128xf32> to vector<256x128xf32>
    %26 = arith.truncf %25 : vector<256x128xf32> to vector<256x128xbf16>
    %27 = vector.extract_strided_slice %8 {offsets = [2, 0, 0], sizes = [1, 128, 256], strides = [1, 1, 1]} : vector<4x128x256xbf16> to vector<1x128x256xbf16>
    %28 = vector.shape_cast %27 : vector<1x128x256xbf16> to vector<128x256xbf16>
    %cst_21 = arith.constant dense<0.000000e+00> : vector<256x256xf32>
    %29 = tpu.matmul %26, %28, %cst_21 {dimension_numbers = #tpu.dot_dimension_numbers<[1], [0], [0], [1], [0, 0, 1, 1], [], []>} : vector<256x128xbf16>, vector<128x256xbf16>, vector<256x256xf32> -> vector<256x256xf32>
    %30 = arith.addf %23, %29 : vector<256x256xf32>
    %31 = vector.extract_strided_slice %7 {offsets = [1, 1, 0], sizes = [16, 16, 128], strides = [1, 1, 1]} : vector<17x17x128xf32> to vector<16x16x128xf32>
    %32 = vector.shape_cast %31 : vector<16x16x128xf32> to vector<256x128xf32>
    %33 = arith.truncf %32 : vector<256x128xf32> to vector<256x128xbf16>
    %34 = vector.extract_strided_slice %8 {offsets = [3, 0, 0], sizes = [1, 128, 256], strides = [1, 1, 1]} : vector<4x128x256xbf16> to vector<1x128x256xbf16>
    %35 = vector.shape_cast %34 : vector<1x128x256xbf16> to vector<128x256xbf16>
    %cst_22 = arith.constant dense<0.000000e+00> : vector<256x256xf32>
    %36 = tpu.matmul %33, %35, %cst_22 {dimension_numbers = #tpu.dot_dimension_numbers<[1], [0], [0], [1], [0, 0, 1, 1], [], []>} : vector<256x128xbf16>, vector<128x256xbf16>, vector<256x256xf32> -> vector<256x256xf32>
    %37 = arith.addf %30, %36 : vector<256x256xf32>
    %cst_23 = arith.constant dense<0.000000e+00> : vector<256xf32>
    %38 = vector.multi_reduction <add>, %37, %cst_23 [0] : vector<256x256xf32> to vector<256xf32>
    %39 = vector.shape_cast %38 : vector<256xf32> to vector<1x256xf32>
    %40 = arith.mulf %37, %37 : vector<256x256xf32>
    %cst_24 = arith.constant dense<0.000000e+00> : vector<256xf32>
    %41 = vector.multi_reduction <add>, %40, %cst_24 [0] : vector<256x256xf32> to vector<256xf32>
    %42 = vector.shape_cast %41 : vector<256xf32> to vector<1x256xf32>
    %43 = tpu.concatenate %39, %42 in 0 : vector<1x256xf32>, vector<1x256xf32> -> vector<2x256xf32>
    %c0_25 = arith.constant 0 : index
    %c0_26 = arith.constant 0 : index
    %c0_27 = arith.constant 0 : index
    %44 = vector.load %arg4[%c0_25, %c0_26, %c0_27] : memref<1x2x256xf32, #tpu.memory_space<vmem>>, vector<1x2x256xf32>
    %45 = vector.shape_cast %44 : vector<1x2x256xf32> to vector<2x256xf32>
    %46 = vector.shape_cast %43 : vector<2x256xf32> to vector<1x2x256xf32>
    tpu.vector_store %arg4[%c0_25, %c0_26, %c0_27], %46 {strides = array<i32>} : memref<1x2x256xf32, #tpu.memory_space<vmem>>, vector<1x2x256xf32>,
    %47 = vector.extract_strided_slice %37 {offsets = [0, 0], sizes = [256, 128], strides = [1, 1]} : vector<256x256xf32> to vector<256x128xf32>
    %48 = arith.truncf %47 : vector<256x128xf32> to vector<256x128xbf16>
    %c0_28 = arith.constant 0 : index
    %c0_29 = arith.constant 0 : index
    %c0_30 = arith.constant 0 : index
    %49 = vector.load %arg3[%c0_28, %c0_29, %c0_30] : memref<1x256x128xbf16, #tpu.memory_space<vmem>>, vector<1x256x128xbf16>
    %50 = vector.shape_cast %49 : vector<1x256x128xbf16> to vector<256x128xbf16>
    %51 = vector.shape_cast %48 : vector<256x128xbf16> to vector<1x256x128xbf16>
    tpu.vector_store %arg3[%c0_28, %c0_29, %c0_30], %51 {strides = array<i32>} : memref<1x256x128xbf16, #tpu.memory_space<vmem>>, vector<1x256x128xbf16>,
    %52 = vector.extract_strided_slice %37 {offsets = [0, 128], sizes = [256, 128], strides = [1, 1]} : vector<256x256xf32> to vector<256x128xf32>
    %53 = arith.truncf %52 : vector<256x128xf32> to vector<256x128xbf16>
    %c0_31 = arith.constant 0 : index
    %c0_32 = arith.constant 0 : index
    %c0_33 = arith.constant 0 : index
    %54 = vector.load %arg5[%c0_31, %c0_32, %c0_33] : memref<1x256x128xbf16, #tpu.memory_space<vmem>>, vector<1x256x128xbf16>
    %55 = vector.shape_cast %54 : vector<1x256x128xbf16> to vector<256x128xbf16>
    %56 = vector.shape_cast %53 : vector<256x128xbf16> to vector<1x256x128xbf16>
    tpu.vector_store %arg5[%c0_31, %c0_32, %c0_33], %56 {strides = array<i32>} : memref<1x256x128xbf16, #tpu.memory_space<vmem>>, vector<1x256x128xbf16>,
    return
  }
  func.func @transform_0(%arg0: i32) -> (i32, i32, i32, i32) {
    %c0_i32 = arith.constant 0 : i32
    %c0_i32_0 = arith.constant 0 : i32
    %c0_i32_1 = arith.constant 0 : i32
    %c0_i32_2 = arith.constant 0 : i32
    return %arg0, %c0_i32, %c0_i32_0, %c0_i32_1 : i32, i32, i32, i32
  }
  func.func @transform_1(%arg0: i32) -> (i32, i32, i32) {
    %c0_i32 = arith.constant 0 : i32
    %c0_i32_0 = arith.constant 0 : i32
    %c0_i32_1 = arith.constant 0 : i32
    %c0_i32_2 = arith.constant 0 : i32
    return %c0_i32, %c0_i32_0, %c0_i32_1 : i32, i32, i32
  }
  func.func @transform_2(%arg0: i32) -> (i32, i32, i32) {
    %c0_i32 = arith.constant 0 : i32
    %c0_i32_0 = arith.constant 0 : i32
    %c0_i32_1 = arith.constant 0 : i32
    return %arg0, %c0_i32, %c0_i32_0 : i32, i32, i32
  }
  func.func @transform_3(%arg0: i32) -> (i32, i32, i32) {
    %c0_i32 = arith.constant 0 : i32
    %c0_i32_0 = arith.constant 0 : i32
    %c0_i32_1 = arith.constant 0 : i32
    return %arg0, %c0_i32, %c0_i32_0 : i32, i32, i32
  }
  func.func @transform_4(%arg0: i32) -> (i32, i32, i32) {
    %c0_i32 = arith.constant 0 : i32
    %c0_i32_0 = arith.constant 0 : i32
    %c0_i32_1 = arith.constant 0 : i32
    return %arg0, %c0_i32, %c0_i32_0 : i32, i32, i32
  }
}

module attributes {stable_mosaic.version = 11 : i64} {
  func.func @_conv2_kernel(%arg0: i32, %arg1: memref<1x256x128xbf16, #tpu.memory_space<vmem>>, %arg2: memref<1x128xf32, #tpu.memory_space<vmem>>, %arg3: memref<1x128xf32, #tpu.memory_space<vmem>>, %arg4: memref<9x128x128xbf16, #tpu.memory_space<vmem>>, %arg5: memref<1x256x128xbf16, #tpu.memory_space<vmem>>, %arg6: memref<1x2x128xf32, #tpu.memory_space<vmem>>, %arg7: memref<18x18x128xf32, #tpu.memory_space<vmem>>) attributes {dimension_semantics = [#tpu.dimension_semantics<parallel>], iteration_bounds = array<i64: 2>, scalar_prefetch = 0 : i64, scratch_operands = 1 : i64, tpu.core_type = #tpu.core_type<tc>, window_params = [{transform_indices = @transform_0, window_bounds = array<i64: 1, 256, 128>}, {pipeline_mode = #tpu.pipeline_mode<synchronous>, transform_indices = @transform_1, window_bounds = array<i64: 1, 128>}, {pipeline_mode = #tpu.pipeline_mode<synchronous>, transform_indices = @transform_2, window_bounds = array<i64: 1, 128>}, {pipeline_mode = #tpu.pipeline_mode<synchronous>, transform_indices = @transform_3, window_bounds = array<i64: 9, 128, 128>}, {transform_indices = @transform_4, window_bounds = array<i64: 1, 256, 128>}, {transform_indices = @transform_5, window_bounds = array<i64: 1, 2, 128>}]} {
    %cst = arith.constant 0.000000e+00 : f32
    %0 = vector.broadcast %cst : f32 to vector<1x18x128xf32>
    %cst_0 = arith.constant 0.000000e+00 : f32
    %1 = vector.broadcast %cst_0 : f32 to vector<18x1x128xf32>
    %c0 = arith.constant 0 : index
    %c0_1 = arith.constant 0 : index
    %c0_2 = arith.constant 0 : index
    %2 = vector.load %arg7[%c0, %c0_1, %c0_2] : memref<18x18x128xf32, #tpu.memory_space<vmem>>, vector<1x18x128xf32>
    tpu.vector_store %arg7[%c0, %c0_1, %c0_2], %0 {strides = array<i32>} : memref<18x18x128xf32, #tpu.memory_space<vmem>>, vector<1x18x128xf32>,
    %c0_3 = arith.constant 0 : index
    %c0_4 = arith.constant 0 : index
    %c0_5 = arith.constant 0 : index
    %3 = vector.load %arg7[%c0_3, %c0_4, %c0_5] : memref<18x18x128xf32, #tpu.memory_space<vmem>>, vector<18x1x128xf32>
    tpu.vector_store %arg7[%c0_3, %c0_4, %c0_5], %1 {strides = array<i32>} : memref<18x18x128xf32, #tpu.memory_space<vmem>>, vector<18x1x128xf32>,
    %c17 = arith.constant 17 : index
    %c0_6 = arith.constant 0 : index
    %c0_7 = arith.constant 0 : index
    %4 = vector.load %arg7[%c17, %c0_6, %c0_7] : memref<18x18x128xf32, #tpu.memory_space<vmem>>, vector<1x18x128xf32>
    tpu.vector_store %arg7[%c17, %c0_6, %c0_7], %0 {strides = array<i32>} : memref<18x18x128xf32, #tpu.memory_space<vmem>>, vector<1x18x128xf32>,
    %c0_8 = arith.constant 0 : index
    %c17_9 = arith.constant 17 : index
    %c0_10 = arith.constant 0 : index
    %5 = vector.load %arg7[%c0_8, %c17_9, %c0_10] : memref<18x18x128xf32, #tpu.memory_space<vmem>>, vector<18x1x128xf32>
    tpu.vector_store %arg7[%c0_8, %c17_9, %c0_10], %1 {strides = array<i32>} : memref<18x18x128xf32, #tpu.memory_space<vmem>>, vector<18x1x128xf32>,
    %c0_11 = arith.constant 0 : index
    %c0_12 = arith.constant 0 : index
    %c0_13 = arith.constant 0 : index
    %6 = vector.load %arg1[%c0_11, %c0_12, %c0_13] : memref<1x256x128xbf16, #tpu.memory_space<vmem>>, vector<1x256x128xbf16>
    %7 = vector.shape_cast %6 : vector<1x256x128xbf16> to vector<256x128xbf16>
    %8 = arith.extf %7 : vector<256x128xbf16> to vector<256x128xf32>
    %c0_14 = arith.constant 0 : index
    %c0_15 = arith.constant 0 : index
    %9 = vector.load %arg2[%c0_14, %c0_15] : memref<1x128xf32, #tpu.memory_space<vmem>>, vector<1x128xf32>
    %10 = vector.broadcast %9 : vector<1x128xf32> to vector<256x128xf32>
    %11 = arith.mulf %8, %10 : vector<256x128xf32>
    %c0_16 = arith.constant 0 : index
    %c0_17 = arith.constant 0 : index
    %12 = vector.load %arg3[%c0_16, %c0_17] : memref<1x128xf32, #tpu.memory_space<vmem>>, vector<1x128xf32>
    %13 = vector.broadcast %12 : vector<1x128xf32> to vector<256x128xf32>
    %14 = arith.addf %11, %13 : vector<256x128xf32>
    %cst_18 = arith.constant 0.000000e+00 : f32
    %15 = vector.broadcast %cst_18 : f32 to vector<256x128xf32>
    %16 = arith.maximumf %14, %15 : vector<256x128xf32>
    %17 = vector.shape_cast %16 : vector<256x128xf32> to vector<16x16x128xf32>
    %c1 = arith.constant 1 : index
    %c1_19 = arith.constant 1 : index
    %c0_20 = arith.constant 0 : index
    %18 = vector.load %arg7[%c1, %c1_19, %c0_20] : memref<18x18x128xf32, #tpu.memory_space<vmem>>, vector<16x16x128xf32>
    tpu.vector_store %arg7[%c1, %c1_19, %c0_20], %17 {strides = array<i32>} : memref<18x18x128xf32, #tpu.memory_space<vmem>>, vector<16x16x128xf32>,
    %c0_21 = arith.constant 0 : index
    %c0_22 = arith.constant 0 : index
    %c0_23 = arith.constant 0 : index
    %19 = vector.load %arg7[%c0_21, %c0_22, %c0_23] : memref<18x18x128xf32, #tpu.memory_space<vmem>>, vector<18x18x128xf32>
    %c0_24 = arith.constant 0 : index
    %c0_25 = arith.constant 0 : index
    %c0_26 = arith.constant 0 : index
    %20 = vector.load %arg4[%c0_24, %c0_25, %c0_26] : memref<9x128x128xbf16, #tpu.memory_space<vmem>>, vector<9x128x128xbf16>
    %cst_27 = arith.constant 0.000000e+00 : f32
    %21 = vector.broadcast %cst_27 : f32 to vector<256x128xf32>
    %22 = vector.extract_strided_slice %19 {offsets = [0, 0, 0], sizes = [16, 16, 128], strides = [1, 1, 1]} : vector<18x18x128xf32> to vector<16x16x128xf32>
    %23 = vector.shape_cast %22 : vector<16x16x128xf32> to vector<256x128xf32>
    %24 = arith.truncf %23 : vector<256x128xf32> to vector<256x128xbf16>
    %25 = vector.extract_strided_slice %20 {offsets = [0, 0, 0], sizes = [1, 128, 128], strides = [1, 1, 1]} : vector<9x128x128xbf16> to vector<1x128x128xbf16>
    %26 = vector.shape_cast %25 : vector<1x128x128xbf16> to vector<128x128xbf16>
    %cst_28 = arith.constant dense<0.000000e+00> : vector<256x128xf32>
    %27 = tpu.matmul %24, %26, %cst_28 {dimension_numbers = #tpu.dot_dimension_numbers<[1], [0], [0], [1], [0, 0, 1, 1], [], []>} : vector<256x128xbf16>, vector<128x128xbf16>, vector<256x128xf32> -> vector<256x128xf32>
    %28 = arith.addf %21, %27 : vector<256x128xf32>
    %29 = vector.extract_strided_slice %19 {offsets = [0, 1, 0], sizes = [16, 16, 128], strides = [1, 1, 1]} : vector<18x18x128xf32> to vector<16x16x128xf32>
    %30 = vector.shape_cast %29 : vector<16x16x128xf32> to vector<256x128xf32>
    %31 = arith.truncf %30 : vector<256x128xf32> to vector<256x128xbf16>
    %32 = vector.extract_strided_slice %20 {offsets = [1, 0, 0], sizes = [1, 128, 128], strides = [1, 1, 1]} : vector<9x128x128xbf16> to vector<1x128x128xbf16>
    %33 = vector.shape_cast %32 : vector<1x128x128xbf16> to vector<128x128xbf16>
    %cst_29 = arith.constant dense<0.000000e+00> : vector<256x128xf32>
    %34 = tpu.matmul %31, %33, %cst_29 {dimension_numbers = #tpu.dot_dimension_numbers<[1], [0], [0], [1], [0, 0, 1, 1], [], []>} : vector<256x128xbf16>, vector<128x128xbf16>, vector<256x128xf32> -> vector<256x128xf32>
    %35 = arith.addf %28, %34 : vector<256x128xf32>
    %36 = vector.extract_strided_slice %19 {offsets = [0, 2, 0], sizes = [16, 16, 128], strides = [1, 1, 1]} : vector<18x18x128xf32> to vector<16x16x128xf32>
    %37 = vector.shape_cast %36 : vector<16x16x128xf32> to vector<256x128xf32>
    %38 = arith.truncf %37 : vector<256x128xf32> to vector<256x128xbf16>
    %39 = vector.extract_strided_slice %20 {offsets = [2, 0, 0], sizes = [1, 128, 128], strides = [1, 1, 1]} : vector<9x128x128xbf16> to vector<1x128x128xbf16>
    %40 = vector.shape_cast %39 : vector<1x128x128xbf16> to vector<128x128xbf16>
    %cst_30 = arith.constant dense<0.000000e+00> : vector<256x128xf32>
    %41 = tpu.matmul %38, %40, %cst_30 {dimension_numbers = #tpu.dot_dimension_numbers<[1], [0], [0], [1], [0, 0, 1, 1], [], []>} : vector<256x128xbf16>, vector<128x128xbf16>, vector<256x128xf32> -> vector<256x128xf32>
    %42 = arith.addf %35, %41 : vector<256x128xf32>
    %43 = vector.extract_strided_slice %19 {offsets = [1, 0, 0], sizes = [16, 16, 128], strides = [1, 1, 1]} : vector<18x18x128xf32> to vector<16x16x128xf32>
    %44 = vector.shape_cast %43 : vector<16x16x128xf32> to vector<256x128xf32>
    %45 = arith.truncf %44 : vector<256x128xf32> to vector<256x128xbf16>
    %46 = vector.extract_strided_slice %20 {offsets = [3, 0, 0], sizes = [1, 128, 128], strides = [1, 1, 1]} : vector<9x128x128xbf16> to vector<1x128x128xbf16>
    %47 = vector.shape_cast %46 : vector<1x128x128xbf16> to vector<128x128xbf16>
    %cst_31 = arith.constant dense<0.000000e+00> : vector<256x128xf32>
    %48 = tpu.matmul %45, %47, %cst_31 {dimension_numbers = #tpu.dot_dimension_numbers<[1], [0], [0], [1], [0, 0, 1, 1], [], []>} : vector<256x128xbf16>, vector<128x128xbf16>, vector<256x128xf32> -> vector<256x128xf32>
    %49 = arith.addf %42, %48 : vector<256x128xf32>
    %50 = vector.extract_strided_slice %19 {offsets = [1, 1, 0], sizes = [16, 16, 128], strides = [1, 1, 1]} : vector<18x18x128xf32> to vector<16x16x128xf32>
    %51 = vector.shape_cast %50 : vector<16x16x128xf32> to vector<256x128xf32>
    %52 = arith.truncf %51 : vector<256x128xf32> to vector<256x128xbf16>
    %53 = vector.extract_strided_slice %20 {offsets = [4, 0, 0], sizes = [1, 128, 128], strides = [1, 1, 1]} : vector<9x128x128xbf16> to vector<1x128x128xbf16>
    %54 = vector.shape_cast %53 : vector<1x128x128xbf16> to vector<128x128xbf16>
    %cst_32 = arith.constant dense<0.000000e+00> : vector<256x128xf32>
    %55 = tpu.matmul %52, %54, %cst_32 {dimension_numbers = #tpu.dot_dimension_numbers<[1], [0], [0], [1], [0, 0, 1, 1], [], []>} : vector<256x128xbf16>, vector<128x128xbf16>, vector<256x128xf32> -> vector<256x128xf32>
    %56 = arith.addf %49, %55 : vector<256x128xf32>
    %57 = vector.extract_strided_slice %19 {offsets = [1, 2, 0], sizes = [16, 16, 128], strides = [1, 1, 1]} : vector<18x18x128xf32> to vector<16x16x128xf32>
    %58 = vector.shape_cast %57 : vector<16x16x128xf32> to vector<256x128xf32>
    %59 = arith.truncf %58 : vector<256x128xf32> to vector<256x128xbf16>
    %60 = vector.extract_strided_slice %20 {offsets = [5, 0, 0], sizes = [1, 128, 128], strides = [1, 1, 1]} : vector<9x128x128xbf16> to vector<1x128x128xbf16>
    %61 = vector.shape_cast %60 : vector<1x128x128xbf16> to vector<128x128xbf16>
    %cst_33 = arith.constant dense<0.000000e+00> : vector<256x128xf32>
    %62 = tpu.matmul %59, %61, %cst_33 {dimension_numbers = #tpu.dot_dimension_numbers<[1], [0], [0], [1], [0, 0, 1, 1], [], []>} : vector<256x128xbf16>, vector<128x128xbf16>, vector<256x128xf32> -> vector<256x128xf32>
    %63 = arith.addf %56, %62 : vector<256x128xf32>
    %64 = vector.extract_strided_slice %19 {offsets = [2, 0, 0], sizes = [16, 16, 128], strides = [1, 1, 1]} : vector<18x18x128xf32> to vector<16x16x128xf32>
    %65 = vector.shape_cast %64 : vector<16x16x128xf32> to vector<256x128xf32>
    %66 = arith.truncf %65 : vector<256x128xf32> to vector<256x128xbf16>
    %67 = vector.extract_strided_slice %20 {offsets = [6, 0, 0], sizes = [1, 128, 128], strides = [1, 1, 1]} : vector<9x128x128xbf16> to vector<1x128x128xbf16>
    %68 = vector.shape_cast %67 : vector<1x128x128xbf16> to vector<128x128xbf16>
    %cst_34 = arith.constant dense<0.000000e+00> : vector<256x128xf32>
    %69 = tpu.matmul %66, %68, %cst_34 {dimension_numbers = #tpu.dot_dimension_numbers<[1], [0], [0], [1], [0, 0, 1, 1], [], []>} : vector<256x128xbf16>, vector<128x128xbf16>, vector<256x128xf32> -> vector<256x128xf32>
    %70 = arith.addf %63, %69 : vector<256x128xf32>
    %71 = vector.extract_strided_slice %19 {offsets = [2, 1, 0], sizes = [16, 16, 128], strides = [1, 1, 1]} : vector<18x18x128xf32> to vector<16x16x128xf32>
    %72 = vector.shape_cast %71 : vector<16x16x128xf32> to vector<256x128xf32>
    %73 = arith.truncf %72 : vector<256x128xf32> to vector<256x128xbf16>
    %74 = vector.extract_strided_slice %20 {offsets = [7, 0, 0], sizes = [1, 128, 128], strides = [1, 1, 1]} : vector<9x128x128xbf16> to vector<1x128x128xbf16>
    %75 = vector.shape_cast %74 : vector<1x128x128xbf16> to vector<128x128xbf16>
    %cst_35 = arith.constant dense<0.000000e+00> : vector<256x128xf32>
    %76 = tpu.matmul %73, %75, %cst_35 {dimension_numbers = #tpu.dot_dimension_numbers<[1], [0], [0], [1], [0, 0, 1, 1], [], []>} : vector<256x128xbf16>, vector<128x128xbf16>, vector<256x128xf32> -> vector<256x128xf32>
    %77 = arith.addf %70, %76 : vector<256x128xf32>
    %78 = vector.extract_strided_slice %19 {offsets = [2, 2, 0], sizes = [16, 16, 128], strides = [1, 1, 1]} : vector<18x18x128xf32> to vector<16x16x128xf32>
    %79 = vector.shape_cast %78 : vector<16x16x128xf32> to vector<256x128xf32>
    %80 = arith.truncf %79 : vector<256x128xf32> to vector<256x128xbf16>
    %81 = vector.extract_strided_slice %20 {offsets = [8, 0, 0], sizes = [1, 128, 128], strides = [1, 1, 1]} : vector<9x128x128xbf16> to vector<1x128x128xbf16>
    %82 = vector.shape_cast %81 : vector<1x128x128xbf16> to vector<128x128xbf16>
    %cst_36 = arith.constant dense<0.000000e+00> : vector<256x128xf32>
    %83 = tpu.matmul %80, %82, %cst_36 {dimension_numbers = #tpu.dot_dimension_numbers<[1], [0], [0], [1], [0, 0, 1, 1], [], []>} : vector<256x128xbf16>, vector<128x128xbf16>, vector<256x128xf32> -> vector<256x128xf32>
    %84 = arith.addf %77, %83 : vector<256x128xf32>
    %cst_37 = arith.constant dense<0.000000e+00> : vector<128xf32>
    %85 = vector.multi_reduction <add>, %84, %cst_37 [0] : vector<256x128xf32> to vector<128xf32>
    %86 = vector.shape_cast %85 : vector<128xf32> to vector<1x128xf32>
    %87 = arith.mulf %84, %84 : vector<256x128xf32>
    %cst_38 = arith.constant dense<0.000000e+00> : vector<128xf32>
    %88 = vector.multi_reduction <add>, %87, %cst_38 [0] : vector<256x128xf32> to vector<128xf32>
    %89 = vector.shape_cast %88 : vector<128xf32> to vector<1x128xf32>
    %90 = tpu.concatenate %86, %89 in 0 : vector<1x128xf32>, vector<1x128xf32> -> vector<2x128xf32>
    %c0_39 = arith.constant 0 : index
    %c0_40 = arith.constant 0 : index
    %c0_41 = arith.constant 0 : index
    %91 = vector.load %arg6[%c0_39, %c0_40, %c0_41] : memref<1x2x128xf32, #tpu.memory_space<vmem>>, vector<1x2x128xf32>
    %92 = vector.shape_cast %91 : vector<1x2x128xf32> to vector<2x128xf32>
    %93 = vector.shape_cast %90 : vector<2x128xf32> to vector<1x2x128xf32>
    tpu.vector_store %arg6[%c0_39, %c0_40, %c0_41], %93 {strides = array<i32>} : memref<1x2x128xf32, #tpu.memory_space<vmem>>, vector<1x2x128xf32>,
    %94 = arith.truncf %84 : vector<256x128xf32> to vector<256x128xbf16>
    %c0_42 = arith.constant 0 : index
    %c0_43 = arith.constant 0 : index
    %c0_44 = arith.constant 0 : index
    %95 = vector.load %arg5[%c0_42, %c0_43, %c0_44] : memref<1x256x128xbf16, #tpu.memory_space<vmem>>, vector<1x256x128xbf16>
    %96 = vector.shape_cast %95 : vector<1x256x128xbf16> to vector<256x128xbf16>
    %97 = vector.shape_cast %94 : vector<256x128xbf16> to vector<1x256x128xbf16>
    tpu.vector_store %arg5[%c0_42, %c0_43, %c0_44], %97 {strides = array<i32>} : memref<1x256x128xbf16, #tpu.memory_space<vmem>>, vector<1x256x128xbf16>,
    return
  }
  func.func @transform_0(%arg0: i32) -> (i32, i32, i32) {
    %c0_i32 = arith.constant 0 : i32
    %c0_i32_0 = arith.constant 0 : i32
    %c0_i32_1 = arith.constant 0 : i32
    return %arg0, %c0_i32, %c0_i32_0 : i32, i32, i32
  }
  func.func @transform_1(%arg0: i32) -> (i32, i32) {
    %c0_i32 = arith.constant 0 : i32
    %c0_i32_0 = arith.constant 0 : i32
    %c0_i32_1 = arith.constant 0 : i32
    return %c0_i32, %c0_i32_0 : i32, i32
  }
  func.func @transform_2(%arg0: i32) -> (i32, i32) {
    %c0_i32 = arith.constant 0 : i32
    %c0_i32_0 = arith.constant 0 : i32
    %c0_i32_1 = arith.constant 0 : i32
    return %c0_i32, %c0_i32_0 : i32, i32
  }
  func.func @transform_3(%arg0: i32) -> (i32, i32, i32) {
    %c0_i32 = arith.constant 0 : i32
    %c0_i32_0 = arith.constant 0 : i32
    %c0_i32_1 = arith.constant 0 : i32
    %c0_i32_2 = arith.constant 0 : i32
    return %c0_i32, %c0_i32_0, %c0_i32_1 : i32, i32, i32
  }
  func.func @transform_4(%arg0: i32) -> (i32, i32, i32) {
    %c0_i32 = arith.constant 0 : i32
    %c0_i32_0 = arith.constant 0 : i32
    %c0_i32_1 = arith.constant 0 : i32
    return %arg0, %c0_i32, %c0_i32_0 : i32, i32, i32
  }
  func.func @transform_5(%arg0: i32) -> (i32, i32, i32) {
    %c0_i32 = arith.constant 0 : i32
    %c0_i32_0 = arith.constant 0 : i32
    %c0_i32_1 = arith.constant 0 : i32
    return %arg0, %c0_i32, %c0_i32_0 : i32, i32, i32
  }
}

module attributes {stable_mosaic.version = 11 : i64} {
  func.func @_bn_add_relu_kernel(%arg0: i32, %arg1: memref<1x256x128xbf16, #tpu.memory_space<vmem>>, %arg2: memref<1x128xf32, #tpu.memory_space<vmem>>, %arg3: memref<1x128xf32, #tpu.memory_space<vmem>>, %arg4: memref<1x256x128xbf16, #tpu.memory_space<vmem>>, %arg5: memref<1x128xf32, #tpu.memory_space<vmem>>, %arg6: memref<1x128xf32, #tpu.memory_space<vmem>>, %arg7: memref<1x256x128xf32, #tpu.memory_space<vmem>>) attributes {dimension_semantics = [#tpu.dimension_semantics<parallel>], iteration_bounds = array<i64: 2>, scalar_prefetch = 0 : i64, scratch_operands = 0 : i64, tpu.core_type = #tpu.core_type<tc>, window_params = [{transform_indices = @transform_0, window_bounds = array<i64: 1, 256, 128>}, {pipeline_mode = #tpu.pipeline_mode<synchronous>, transform_indices = @transform_1, window_bounds = array<i64: 1, 128>}, {pipeline_mode = #tpu.pipeline_mode<synchronous>, transform_indices = @transform_2, window_bounds = array<i64: 1, 128>}, {transform_indices = @transform_3, window_bounds = array<i64: 1, 256, 128>}, {pipeline_mode = #tpu.pipeline_mode<synchronous>, transform_indices = @transform_4, window_bounds = array<i64: 1, 128>}, {pipeline_mode = #tpu.pipeline_mode<synchronous>, transform_indices = @transform_5, window_bounds = array<i64: 1, 128>}, {transform_indices = @transform_6, window_bounds = array<i64: 1, 256, 128>}]} {
    %c0 = arith.constant 0 : index
    %c0_0 = arith.constant 0 : index
    %c0_1 = arith.constant 0 : index
    %0 = vector.load %arg1[%c0, %c0_0, %c0_1] : memref<1x256x128xbf16, #tpu.memory_space<vmem>>, vector<1x256x128xbf16>
    %1 = vector.shape_cast %0 : vector<1x256x128xbf16> to vector<256x128xbf16>
    %2 = arith.extf %1 : vector<256x128xbf16> to vector<256x128xf32>
    %c0_2 = arith.constant 0 : index
    %c0_3 = arith.constant 0 : index
    %3 = vector.load %arg2[%c0_2, %c0_3] : memref<1x128xf32, #tpu.memory_space<vmem>>, vector<1x128xf32>
    %4 = vector.broadcast %3 : vector<1x128xf32> to vector<256x128xf32>
    %5 = arith.mulf %2, %4 : vector<256x128xf32>
    %c0_4 = arith.constant 0 : index
    %c0_5 = arith.constant 0 : index
    %6 = vector.load %arg3[%c0_4, %c0_5] : memref<1x128xf32, #tpu.memory_space<vmem>>, vector<1x128xf32>
    %7 = vector.broadcast %6 : vector<1x128xf32> to vector<256x128xf32>
    %8 = arith.addf %5, %7 : vector<256x128xf32>
    %c0_6 = arith.constant 0 : index
    %c0_7 = arith.constant 0 : index
    %c0_8 = arith.constant 0 : index
    %9 = vector.load %arg4[%c0_6, %c0_7, %c0_8] : memref<1x256x128xbf16, #tpu.memory_space<vmem>>, vector<1x256x128xbf16>
    %10 = vector.shape_cast %9 : vector<1x256x128xbf16> to vector<256x128xbf16>
    %11 = arith.extf %10 : vector<256x128xbf16> to vector<256x128xf32>
    %c0_9 = arith.constant 0 : index
    %c0_10 = arith.constant 0 : index
    %12 = vector.load %arg5[%c0_9, %c0_10] : memref<1x128xf32, #tpu.memory_space<vmem>>, vector<1x128xf32>
    %13 = vector.broadcast %12 : vector<1x128xf32> to vector<256x128xf32>
    %14 = arith.mulf %11, %13 : vector<256x128xf32>
    %c0_11 = arith.constant 0 : index
    %c0_12 = arith.constant 0 : index
    %15 = vector.load %arg6[%c0_11, %c0_12] : memref<1x128xf32, #tpu.memory_space<vmem>>, vector<1x128xf32>
    %16 = vector.broadcast %15 : vector<1x128xf32> to vector<256x128xf32>
    %17 = arith.addf %14, %16 : vector<256x128xf32>
    %18 = arith.addf %8, %17 : vector<256x128xf32>
    %cst = arith.constant 0.000000e+00 : f32
    %19 = vector.broadcast %cst : f32 to vector<256x128xf32>
    %20 = arith.maximumf %18, %19 : vector<256x128xf32>
    %c0_13 = arith.constant 0 : index
    %c0_14 = arith.constant 0 : index
    %c0_15 = arith.constant 0 : index
    %21 = vector.load %arg7[%c0_13, %c0_14, %c0_15] : memref<1x256x128xf32, #tpu.memory_space<vmem>>, vector<1x256x128xf32>
    %22 = vector.shape_cast %21 : vector<1x256x128xf32> to vector<256x128xf32>
    %23 = vector.shape_cast %20 : vector<256x128xf32> to vector<1x256x128xf32>
    tpu.vector_store %arg7[%c0_13, %c0_14, %c0_15], %23 {strides = array<i32>} : memref<1x256x128xf32, #tpu.memory_space<vmem>>, vector<1x256x128xf32>,
    return
  }
  func.func @transform_0(%arg0: i32) -> (i32, i32, i32) {
    %c0_i32 = arith.constant 0 : i32
    %c0_i32_0 = arith.constant 0 : i32
    %c0_i32_1 = arith.constant 0 : i32
    return %arg0, %c0_i32, %c0_i32_0 : i32, i32, i32
  }
  func.func @transform_1(%arg0: i32) -> (i32, i32) {
    %c0_i32 = arith.constant 0 : i32
    %c0_i32_0 = arith.constant 0 : i32
    %c0_i32_1 = arith.constant 0 : i32
    return %c0_i32, %c0_i32_0 : i32, i32
  }
  func.func @transform_2(%arg0: i32) -> (i32, i32) {
    %c0_i32 = arith.constant 0 : i32
    %c0_i32_0 = arith.constant 0 : i32
    %c0_i32_1 = arith.constant 0 : i32
    return %c0_i32, %c0_i32_0 : i32, i32
  }
  func.func @transform_3(%arg0: i32) -> (i32, i32, i32) {
    %c0_i32 = arith.constant 0 : i32
    %c0_i32_0 = arith.constant 0 : i32
    %c0_i32_1 = arith.constant 0 : i32
    return %arg0, %c0_i32, %c0_i32_0 : i32, i32, i32
  }
  func.func @transform_4(%arg0: i32) -> (i32, i32) {
    %c0_i32 = arith.constant 0 : i32
    %c0_i32_0 = arith.constant 0 : i32
    %c0_i32_1 = arith.constant 0 : i32
    return %c0_i32, %c0_i32_0 : i32, i32
  }
  func.func @transform_5(%arg0: i32) -> (i32, i32) {
    %c0_i32 = arith.constant 0 : i32
    %c0_i32_0 = arith.constant 0 : i32
    %c0_i32_1 = arith.constant 0 : i32
    return %c0_i32, %c0_i32_0 : i32, i32
  }
  func.func @transform_6(%arg0: i32) -> (i32, i32, i32) {
    %c0_i32 = arith.constant 0 : i32
    %c0_i32_0 = arith.constant 0 : i32
    %c0_i32_1 = arith.constant 0 : i32
    return %arg0, %c0_i32, %c0_i32_0 : i32, i32, i32
  }
}

</mosaic_0001>

<llo_original>
// kernel: basic_block_forward.5
$region0: #{basic_block_forward.5}
  #allocation0 [shape = 'u32[]', space=smem, size = 0x4, offset = 0x4, fixed_abs, tag = 'smem constant byte address 0x4 - core index']
  #allocation1 [shape = 'u32[144,128]{1,0:T(1,128)}', space=vmem, size = 0x12000, scoped, tag = 'internal scratch']
  %s0 = inlined_call_operand.hbm [shape: bf16[2,256,128], index: 0, kind: input, shape index: {}]
  %s1 = inlined_call_operand.hbm [shape: f32[1,128], index: 1, kind: input, shape index: {}]
  %s2 = inlined_call_operand.hbm [shape: f32[1,128], index: 2, kind: input, shape index: {}]
  %s3 = inlined_call_operand.hbm [shape: bf16[2,256,128], index: 3, kind: input, shape index: {}]
  %s4 = inlined_call_operand.hbm [shape: f32[1,128], index: 4, kind: input, shape index: {}]
  %s5 = inlined_call_operand.hbm [shape: f32[1,128], index: 5, kind: input, shape index: {}]
  %s6 = inlined_call_operand.hbm [shape: f32[2,256,128], index: 6, kind: output, shape index: {}]
  %s7 = sld [smem:[#allocation0]]
  $region81: #{basic_block_forward.5} parent=0
    _
  %s9 = ssub.s32 1, %s7
  %s10 = scalar_select 0, %s9, %s7
  $region1: #{basic_block_forward.5} parent=0
    #allocation2 [shape = 'u8[131072]{0}', space=vmem, size = 0x20000, scoped, tag = 'input window, operand 0']
    #allocation3 [shape = 's32[2]{0}', space=sflag, size = 0x8, scoped, tag = 'scoped memory for basic_block_forward.5']
    #allocation4 [shape = 's32[2]{0}', space=sflag, size = 0x8, scoped, tag = 'scoped memory for basic_block_forward.5']
    #allocation5 [shape = 'u8[512]{0}', space=vmem, size = 0x400, scoped, tag = 'input window, operand 1, single buffered']
    #allocation6 [shape = 's32[1]{0}', space=sflag, size = 0x4, scoped, tag = 'scoped memory for basic_block_forward.5']
    #allocation7 [shape = 'u8[512]{0}', space=vmem, size = 0x400, scoped, tag = 'input window, operand 2, single buffered']
    #allocation8 [shape = 'u8[131072]{0}', space=vmem, size = 0x20000, scoped, tag = 'input window, operand 3']
    #allocation9 [shape = 's32[2]{0}', space=sflag, size = 0x8, scoped, tag = 'scoped memory for basic_block_forward.5']
    #allocation10 [shape = 'u8[512]{0}', space=vmem, size = 0x400, scoped, tag = 'input window, operand 4, single buffered']
    #allocation11 [shape = 'u8[512]{0}', space=vmem, size = 0x400, scoped, tag = 'input window, operand 5, single buffered']
    #allocation12 [shape = 's32[1]{0}', space=sflag, size = 0x4, scoped, tag = 'scoped memory for basic_block_forward.5']
    #allocation13 [shape = 'u8[262144]{0}', space=vmem, size = 0x40000, scoped, tag = 'output window, operand 0']
    %11 = vsyncpa [#allocation3], 0
    %s12 = scalar_lea.sflag [#allocation3], 1
    %13 = vsyncpa %s12, 0
    %14 = vsyncpa [#allocation6], 0
    %15 = vsyncpa [#allocation9], 0
    %s16 = scalar_lea.sflag [#allocation9], 1
    %17 = vsyncpa %s16, 0
    %18 = vsyncpa [#allocation12], 0
    %19 = vsyncpa [#allocation4], 0
    %s20 = scalar_lea.sflag [#allocation4], 1
    %21 = vsyncpa %s20, 0
    loop: start=0, step=1, limit=4
    $region2: #{basic_block_forward.5} parent=1 // loop_pre_header
      _
    $region3: #{basic_block_forward.5} parent=1 // loop_header
      %s23 = sphi 0, %s27
      %p24 = scmp.ge.s32.totalorder %s23, 4
      %s33 = sphi 0, %s35
      %s36 = sphi 0, %s33
      %s37 = sphi 0, %s36
      %s53 = sphi 0, %s37
      %s57 = sphi 0, %s57
      %s59 = sphi 0, %s57
      %s60 = sphi 0, %s59
      %s74 = sphi 0, %s60
      %s78 = sphi 0, %s78
      %s80 = sphi 0, %s78
      %s81 = sphi 0, %s80
      %s95 = sphi 0, %s81
      %s101 = sphi 0, %s103
      %s104 = sphi 0, %s101
      %s105 = sphi 0, %s104
      %s121 = sphi 0, %s105
      %s125 = sphi 0, %s125
      %s127 = sphi 0, %s125
      %s128 = sphi 0, %s127
      %s142 = sphi 0, %s128
      %s146 = sphi 0, %s146
      %s148 = sphi 0, %s146
      %s149 = sphi 0, %s148
      %s163 = sphi 0, %s149
      %s169 = sphi 0, %s171
      %s172 = sphi 0, %s169
      %s173 = sphi 0, %s172
      %s189 = sphi 0, %s173
    $region4: #{basic_block_forward.5} parent=1 // loop_header_branch
      %26 = sbr.rel (%p24) target = $region8
    $region5: #{basic_block_forward.5} parent=1 // loop_body
      %s28 = ssub.s32 %s23, 1
      %s29 = ssub.s32 %s23, 2
      %s30 = sadd.s32 %s23, 1
      %s31 = ssub.s32 %s23, %s30
      %p32 = scmp.eq.s32.totalorder %s31, 0
      %s34 = sadd.s32 %s33, 1
      %s35 = scalar_select %p32, %s33, %s34
      %p38 = pneg %p32
      %p39 = scmp.eq.s32.totalorder %s23, 1
      %p40 = por %p38, %p39
      %p41 = scmp.ne.s32.totalorder %s33, %s36
      %p42 = scmp.eq.s32.totalorder %s23, 0
      %p43 = por %p41, %p42
      %p44 = scmp.ne.s32.totalorder %s33, %s36
      %p45 = scmp.eq.s32.totalorder %s28, 1
      %p46 = por %p44, %p45
      %p47 = scmp.ne.s32.totalorder %s36, %s37
      %p48 = scmp.eq.s32.totalorder %s28, 0
      %p49 = por %p47, %p48
      %p50 = scmp.ne.s32.totalorder %s36, %s37
      %p51 = scmp.eq.s32.totalorder %s29, 1
      %p52 = por %p50, %p51
      %p54 = scmp.ne.s32.totalorder %s37, %s53
      %p55 = scmp.eq.s32.totalorder %s29, 0
      %p56 = por %p54, %p55
      %s58 = sadd.s32 %s57, 1
      %p61 = scmp.eq.s32.totalorder %s23, 1
      %p62 = scmp.ne.s32.totalorder %s57, %s59
      %p63 = scmp.eq.s32.totalorder %s23, 0
      %p64 = por %p62, %p63
      %p65 = scmp.ne.s32.totalorder %s57, %s59
      %p66 = scmp.eq.s32.totalorder %s28, 1
      %p67 = por %p65, %p66
      %p68 = scmp.ne.s32.totalorder %s59, %s60
      %p69 = scmp.eq.s32.totalorder %s28, 0
      %p70 = por %p68, %p69
      %p71 = scmp.ne.s32.totalorder %s59, %s60
      %p72 = scmp.eq.s32.totalorder %s29, 1
      %p73 = por %p71, %p72
      %p75 = scmp.ne.s32.totalorder %s60, %s74
      %p76 = scmp.eq.s32.totalorder %s29, 0
      %p77 = por %p75, %p76
      %s79 = sadd.s32 %s78, 1
      %p82 = scmp.eq.s32.totalorder %s23, 1
      %p83 = scmp.ne.s32.totalorder %s78, %s80
      %p84 = scmp.eq.s32.totalorder %s23, 0
      %p85 = por %p83, %p84
      %p86 = scmp.ne.s32.totalorder %s78, %s80
      %p87 = scmp.eq.s32.totalorder %s28, 1
      %p88 = por %p86, %p87
      %p89 = scmp.ne.s32.totalorder %s80, %s81
      %p90 = scmp.eq.s32.totalorder %s28, 0
      %p91 = por %p89, %p90
      %p92 = scmp.ne.s32.totalorder %s80, %s81
      %p93 = scmp.eq.s32.totalorder %s29, 1
      %p94 = por %p92, %p93
      %p96 = scmp.ne.s32.totalorder %s81, %s95
      %p97 = scmp.eq.s32.totalorder %s29, 0
      %p98 = por %p96, %p97
      %s99 = ssub.s32 %s23, %s30
      %p100 = scmp.eq.s32.totalorder %s99, 0
      %s102 = sadd.s32 %s101, 1
      %s103 = scalar_select %p100, %s101, %s102
      %p106 = pneg %p100
      %p107 = scmp.eq.s32.totalorder %s23, 1
      %p108 = por %p106, %p107
      %p109 = scmp.ne.s32.totalorder %s101, %s104
      %p110 = scmp.eq.s32.totalorder %s23, 0
      %p111 = por %p109, %p110
      %p112 = scmp.ne.s32.totalorder %s101, %s104
      %p113 = scmp.eq.s32.totalorder %s28, 1
      %p114 = por %p112, %p113
      %p115 = scmp.ne.s32.totalorder %s104, %s105
      %p116 = scmp.eq.s32.totalorder %s28, 0
      %p117 = por %p115, %p116
      %p118 = scmp.ne.s32.totalorder %s104, %s105
      %p119 = scmp.eq.s32.totalorder %s29, 1
      %p120 = por %p118, %p119
      %p122 = scmp.ne.s32.totalorder %s105, %s121
      %p123 = scmp.eq.s32.totalorder %s29, 0
      %p124 = por %p122, %p123
      %s126 = sadd.s32 %s125, 1
      %p129 = scmp.eq.s32.totalorder %s23, 1
      %p130 = scmp.ne.s32.totalorder %s125, %s127
      %p131 = scmp.eq.s32.totalorder %s23, 0
      %p132 = por %p130, %p131
      %p133 = scmp.ne.s32.totalorder %s125, %s127
      %p134 = scmp.eq.s32.totalorder %s28, 1
      %p135 = por %p133, %p134
      %p136 = scmp.ne.s32.totalorder %s127, %s128
      %p137 = scmp.eq.s32.totalorder %s28, 0
      %p138 = por %p136, %p137
      %p139 = scmp.ne.s32.totalorder %s127, %s128
      %p140 = scmp.eq.s32.totalorder %s29, 1
      %p141 = por %p139, %p140
      %p143 = scmp.ne.s32.totalorder %s128, %s142
      %p144 = scmp.eq.s32.totalorder %s29, 0
      %p145 = por %p143, %p144
      %s147 = sadd.s32 %s146, 1
      %p150 = scmp.eq.s32.totalorder %s23, 1
      %p151 = scmp.ne.s32.totalorder %s146, %s148
      %p152 = scmp.eq.s32.totalorder %s23, 0
      %p153 = por %p151, %p152
      %p154 = scmp.ne.s32.totalorder %s146, %s148
      %p155 = scmp.eq.s32.totalorder %s28, 1
      %p156 = por %p154, %p155
      %p157 = scmp.ne.s32.totalorder %s148, %s149
      %p158 = scmp.eq.s32.totalorder %s28, 0
      %p159 = por %p157, %p158
      %p160 = scmp.ne.s32.totalorder %s148, %s149
      %p161 = scmp.eq.s32.totalorder %s29, 1
      %p162 = por %p160, %p161
      %p164 = scmp.ne.s32.totalorder %s149, %s163
      %p165 = scmp.eq.s32.totalorder %s29, 0
      %p166 = por %p164, %p165
      %s167 = ssub.s32 %s23, %s30
      %p168 = scmp.eq.s32.totalorder %s167, 0
      %s170 = sadd.s32 %s169, 1
      %s171 = scalar_select %p168, %s169, %s170
      %p174 = pneg %p168
      %p175 = scmp.eq.s32.totalorder %s23, 1
      %p176 = por %p174, %p175
      %p177 = scmp.ne.s32.totalorder %s169, %s172
      %p178 = scmp.eq.s32.totalorder %s23, 0
      %p179 = por %p177, %p178
      %p180 = scmp.ne.s32.totalorder %s169, %s172
      %p181 = scmp.eq.s32.totalorder %s28, 1
      %p182 = por %p180, %p181
      %p183 = scmp.ne.s32.totalorder %s172, %s173
      %p184 = scmp.eq.s32.totalorder %s28, 0
      %p185 = por %p183, %p184
      %p186 = scmp.ne.s32.totalorder %s172, %s173
      %p187 = scmp.eq.s32.totalorder %s29, 1
      %p188 = por %p186, %p187
      %p190 = scmp.ne.s32.totalorder %s173, %s189
      %p191 = scmp.eq.s32.totalorder %s29, 0
      %p192 = por %p190, %p191
      %p193 = scmp.le.s32.totalorder 1, %s23
      %p194 = scmp.lt.s32.totalorder %s23, 3
      %p195 = pnand %p193, %p194
      %p196 = pneg %p195
      // Predicated region
      $region9: #{basic_block_forward.5} parent=5 // pred_check
        _
      $region10: #{basic_block_forward.5} parent=5 // pred_check_branch
        %198 = sbr.rel (%p195) target = $region12
      $region11: #{basic_block_forward.5} parent=5 // pred_region
        %s199 = ssub.s32 %s23, 1
        // Predicated region
        $region13: #{basic_block_forward.5} parent=11 // pred_check
          %p200 = pneg %p70
        $region14: #{basic_block_forward.5} parent=11 // pred_check_branch
          %202 = sbr.rel (%p200) target = $region16
        $region15: #{basic_block_forward.5} parent=11 // pred_region
          %s204 = ssub.s32 16, 16
          %205 = vsyncadd [#allocation6], %s204
          %s207 = sshll.u32 [#allocation5], 4
          %s208 = int_to_ptr.vmem [resolvable:$true] %s207
          %210 = dma.hbm_to_vmem [thread:$0]  %s1, 16, %s208, [#allocation6]
        $region16: #{basic_block_forward.5} parent=11 // pred_fallthru
          _
        // Predicated region
        $region17: #{basic_block_forward.5} parent=11 // pred_check
          %p211 = pneg %p91
        $region18: #{basic_block_forward.5} parent=11 // pred_check_branch
          %213 = sbr.rel (%p211) target = $region20
        $region19: #{basic_block_forward.5} parent=11 // pred_region
          %s215 = ssub.s32 16, 16
          %216 = vsyncadd [#allocation6], %s215
          %s218 = sshll.u32 [#allocation7], 4
          %s219 = int_to_ptr.vmem [resolvable:$true] %s218
          %221 = dma.hbm_to_vmem [thread:$0]  %s2, 16, %s219, [#allocation6]
        $region20: #{basic_block_forward.5} parent=11 // pred_fallthru
          _
        // Predicated region
        $region21: #{basic_block_forward.5} parent=11 // pred_check
          %p222 = pneg %p138
        $region22: #{basic_block_forward.5} parent=11 // pred_check_branch
          %224 = sbr.rel (%p222) target = $region24
        $region23: #{basic_block_forward.5} parent=11 // pred_region
          %s226 = ssub.s32 16, 16
          %227 = vsyncadd [#allocation9], %s226
          %s229 = sshll.u32 [#allocation10], 4
          %s230 = int_to_ptr.vmem [resolvable:$true] %s229
          %232 = dma.hbm_to_vmem [thread:$0]  %s4, 16, %s230, [#allocation9]
        $region24: #{basic_block_forward.5} parent=11 // pred_fallthru
          _
        // Predicated region
        $region25: #{basic_block_forward.5} parent=11 // pred_check
          %p233 = pneg %p159
        $region26: #{basic_block_forward.5} parent=11 // pred_check_branch
          %235 = sbr.rel (%p233) target = $region28
        $region27: #{basic_block_forward.5} parent=11 // pred_region
          %s237 = ssub.s32 16, 16
          %238 = vsyncadd [#allocation12], %s237
          %s240 = sshll.u32 [#allocation11], 4
          %s241 = int_to_ptr.vmem [resolvable:$true] %s240
          %243 = dma.hbm_to_vmem [thread:$0]  %s5, 16, %s241, [#allocation12]
        $region28: #{basic_block_forward.5} parent=11 // pred_fallthru
          _
      $region12: #{basic_block_forward.5} parent=5 // pred_fallthru
        _
      %p244 = scmp.lt.s32.totalorder %s23, 2
      // Predicated region
      $region29: #{basic_block_forward.5} parent=5 // pred_check
        %p245 = pneg %p244
      $region30: #{basic_block_forward.5} parent=5 // pred_check_branch
        %247 = sbr.rel (%p245) target = $region32
      $region31: #{basic_block_forward.5} parent=5 // pred_region
        // Predicated region
        $region33: #{basic_block_forward.5} parent=31 // pred_check
          %p248 = pneg %p43
        $region34: #{basic_block_forward.5} parent=31 // pred_check_branch
          %250 = sbr.rel (%p248) target = $region36
        $region35: #{basic_block_forward.5} parent=31 // pred_region
          %s251 = sand.u32 %s33, 1
          %s252 = scalar_lea.sflag [#allocation3], %s251
          %s253 = sand.u32 %s33, 1
          %s254 = smul.addr %s253, 128
          %s255 = scalar_lea.vmem [#allocation2], %s254
          %s257 = ssub.s32 2048, 2048
          %258 = vsyncadd %s252, %s257
          %s259 = smul.addr %s23, 32
          %s260 = smul.addr %s259, 64
          %s261 = scalar_lea.hbm %s0, %s260
          %s262 = sshll.u32 %s255, 4
          %s263 = int_to_ptr.vmem [resolvable:$true] %s262
          %268 = dma.hbm_to_vmem [thread:$0]  %s261, 2048, %s263, %s252, 64, 64, 4
        $region36: #{basic_block_forward.5} parent=31 // pred_fallthru
          _
        // Predicated region
        $region37: #{basic_block_forward.5} parent=31 // pred_check
          %p269 = pneg %p111
        $region38: #{basic_block_forward.5} parent=31 // pred_check_branch
          %271 = sbr.rel (%p269) target = $region40
        $region39: #{basic_block_forward.5} parent=31 // pred_region
          %s272 = sand.u32 %s23, 1
          %s273 = scalar_lea.sflag [#allocation9], %s272
          %s274 = sand.u32 %s101, 1
          %s275 = smul.addr %s274, 128
          %s276 = scalar_lea.vmem [#allocation8], %s275
          %s278 = ssub.s32 2048, 2048
          %279 = vsyncadd %s273, %s278
          %s280 = smul.addr %s23, 32
          %s281 = smul.addr %s280, 64
          %s282 = scalar_lea.hbm %s3, %s281
          %s283 = sshll.u32 %s276, 4
          %s284 = int_to_ptr.vmem [resolvable:$true] %s283
          %289 = dma.hbm_to_vmem [thread:$0]  %s282, 2048, %s284, %s273, 64, 64, 4
        $region40: #{basic_block_forward.5} parent=31 // pred_fallthru
          _
      $region32: #{basic_block_forward.5} parent=5 // pred_fallthru
        _
      %p290 = scmp.le.s32.totalorder 1, %s23
      %p291 = scmp.lt.s32.totalorder %s23, 3
      %p292 = pnand %p290, %p291
      %p293 = pneg %p292
      // Predicated region
      $region41: #{basic_block_forward.5} parent=5 // pred_check
        _
      $region42: #{basic_block_forward.5} parent=5 // pred_check_branch
        %295 = sbr.rel (%p292) target = $region44
      $region43: #{basic_block_forward.5} parent=5 // pred_region
        %s296 = ssub.s32 %s23, 1
        %s297 = sand.u32 %s36, 1
        %s298 = scalar_lea.sflag [#allocation3], %s297
        %s299 = sand.u32 %s36, 1
        %s300 = smul.addr %s299, 128
        %s301 = scalar_lea.vmem [#allocation2], %s300
        // Predicated region
        $region45: #{basic_block_forward.5} parent=43 // pred_check
          %p302 = pneg %p49
        $region46: #{basic_block_forward.5} parent=43 // pred_check_branch
          %304 = sbr.rel (%p302) target = $region48
        $region47: #{basic_block_forward.5} parent=43 // pred_region
          %305 = dma.done %s298, 2048
        $region48: #{basic_block_forward.5} parent=43 // pred_fallthru
          _
        // Predicated region
        $region49: #{basic_block_forward.5} parent=43 // pred_check
          %p306 = pneg %p70
        $region50: #{basic_block_forward.5} parent=43 // pred_check_branch
          %308 = sbr.rel (%p306) target = $region52
        $region51: #{basic_block_forward.5} parent=43 // pred_region
          %309 = dma.done [#allocation6], 16
        $region52: #{basic_block_forward.5} parent=43 // pred_fallthru
          _
        // Predicated region
        $region53: #{basic_block_forward.5} parent=43 // pred_check
          %p310 = pneg %p91
        $region54: #{basic_block_forward.5} parent=43 // pred_check_branch
          %312 = sbr.rel (%p310) target = $region56
        $region55: #{basic_block_forward.5} parent=43 // pred_region
          %313 = dma.done [#allocation6], 16
        $region56: #{basic_block_forward.5} parent=43 // pred_fallthru
          _
        %s314 = sand.u32 %s28, 1
        %s315 = scalar_lea.sflag [#allocation9], %s314
        %s316 = sand.u32 %s104, 1
        %s317 = smul.addr %s316, 128
        %s318 = scalar_lea.vmem [#allocation8], %s317
        // Predicated region
        $region57: #{basic_block_forward.5} parent=43 // pred_check
          %p319 = pneg %p117
        $region58: #{basic_block_forward.5} parent=43 // pred_check_branch
          %321 = sbr.rel (%p319) target = $region60
        $region59: #{basic_block_forward.5} parent=43 // pred_region
          %322 = dma.done %s315, 2048
        $region60: #{basic_block_forward.5} parent=43 // pred_fallthru
          _
        // Predicated region
        $region61: #{basic_block_forward.5} parent=43 // pred_check
          %p323 = pneg %p138
        $region62: #{basic_block_forward.5} parent=43 // pred_check_branch
          %325 = sbr.rel (%p323) target = $region64
        $region63: #{basic_block_forward.5} parent=43 // pred_region
          %326 = dma.done [#allocation9], 16
        $region64: #{basic_block_forward.5} parent=43 // pred_fallthru
          _
        // Predicated region
        $region65: #{basic_block_forward.5} parent=43 // pred_check
          %p327 = pneg %p159
        $region66: #{basic_block_forward.5} parent=43 // pred_check_branch
          %329 = sbr.rel (%p327) target = $region68
        $region67: #{basic_block_forward.5} parent=43 // pred_region
          %330 = dma.done [#allocation12], 16
        $region68: #{basic_block_forward.5} parent=43 // pred_fallthru
          _
        %s331 = sand.u32 %s36, 1
        %s332 = scalar_lea.sflag [#allocation3], %s331
        %s333 = sand.u32 %s36, 1
        %s334 = smul.addr %s333, 128
        %s335 = scalar_lea.vmem [#allocation2], %s334
        %p336 = pneg %p49
        %p337 = pneg %p46
        %p338 = pneg %p70
        %p339 = pneg %p67
        %p340 = pneg %p91
        %p341 = pneg %p88
        %s342 = sand.u32 %s28, 1
        %s343 = scalar_lea.sflag [#allocation9], %s342
        %s344 = sand.u32 %s104, 1
        %s345 = smul.addr %s344, 128
        %s346 = scalar_lea.vmem [#allocation8], %s345
        %p347 = pneg %p117
        %p348 = pneg %p114
        %p349 = pneg %p138
        %p350 = pneg %p135
        %p351 = pneg %p159
        %p352 = pneg %p156
        %p353 = pneg %p185
        %p354 = pneg %p182
        %s355 = sand.u32 %s172, 1
        %s356 = scalar_lea.sflag [#allocation4], %s355
        %s357 = sand.u32 %s172, 1
        %s358 = smul.addr %s357, 256
        %s359 = scalar_lea.vmem [#allocation13], %s358
        %v360 = vld [vmem:[%s301] sm:$0xf]
        %v361 = vld [vmem:[%s301 + $0x4] sm:$0xf]
        %v362 = vld [vmem:[%s301 + $0x8] sm:$0xf]
        %v363 = vld [vmem:[%s301 + $0xc] sm:$0xf]
        %v364 = vld [vmem:[%s301 + $0x10] sm:$0xf]
        %v365 = vld [vmem:[%s301 + $0x14] sm:$0xf]
        %v366 = vld [vmem:[%s301 + $0x18] sm:$0xf]
        %v367 = vld [vmem:[%s301 + $0x1c] sm:$0xf]
        %v368 = vld [vmem:[%s301 + $0x20] sm:$0xf]
        %v369 = vld [vmem:[%s301 + $0x24] sm:$0xf]
        %v370 = vld [vmem:[%s301 + $0x28] sm:$0xf]
        %v371 = vld [vmem:[%s301 + $0x2c] sm:$0xf]
        %v372 = vld [vmem:[%s301 + $0x30] sm:$0xf]
        %v373 = vld [vmem:[%s301 + $0x34] sm:$0xf]
        %v374 = vld [vmem:[%s301 + $0x38] sm:$0xf]
        %v375 = vld [vmem:[%s301 + $0x3c] sm:$0xf]
        %v376 = vld [vmem:[%s301 + $0x40] sm:$0xf]
        %v377 = vld [vmem:[%s301 + $0x44] sm:$0xf]
        %v378 = vld [vmem:[%s301 + $0x48] sm:$0xf]
        %v379 = vld [vmem:[%s301 + $0x4c] sm:$0xf]
        %v380 = vld [vmem:[%s301 + $0x50] sm:$0xf]
        %v381 = vld [vmem:[%s301 + $0x54] sm:$0xf]
        %v382 = vld [vmem:[%s301 + $0x58] sm:$0xf]
        %v383 = vld [vmem:[%s301 + $0x5c] sm:$0xf]
        %v384 = vld [vmem:[%s301 + $0x60] sm:$0xf]
        %v385 = vld [vmem:[%s301 + $0x64] sm:$0xf]
        %v386 = vld [vmem:[%s301 + $0x68] sm:$0xf]
        %v387 = vld [vmem:[%s301 + $0x6c] sm:$0xf]
        %v388 = vld [vmem:[%s301 + $0x70] sm:$0xf]
        %v389 = vld [vmem:[%s301 + $0x74] sm:$0xf]
        %v390 = vld [vmem:[%s301 + $0x78] sm:$0xf]
        %v391 = vld [vmem:[%s301 + $0x7c] sm:$0xf]
        %v392 = vunpack.c.l.bf16 %v360
        %v393 = vunpack.c.l.bf16 %v361
        %v394 = vunpack.c.l.bf16 %v362
        %v395 = vunpack.c.l.bf16 %v363
        %v396 = vunpack.c.l.bf16 %v364
        %v397 = vunpack.c.l.bf16 %v365
        %v398 = vunpack.c.l.bf16 %v366
        %v399 = vunpack.c.l.bf16 %v367
        %v400 = vunpack.c.l.bf16 %v368
        %v401 = vunpack.c.l.bf16 %v369
        %v402 = vunpack.c.l.bf16 %v370
        %v403 = vunpack.c.l.bf16 %v371
        %v404 = vunpack.c.l.bf16 %v372
        %v405 = vunpack.c.l.bf16 %v373
        %v406 = vunpack.c.l.bf16 %v374
        %v407 = vunpack.c.l.bf16 %v375
        %v408 = vunpack.c.l.bf16 %v376
        %v409 = vunpack.c.l.bf16 %v377
        %v410 = vunpack.c.l.bf16 %v378
        %v411 = vunpack.c.l.bf16 %v379
        %v412 = vunpack.c.l.bf16 %v380
        %v413 = vunpack.c.l.bf16 %v381
        %v414 = vunpack.c.l.bf16 %v382
        %v415 = vunpack.c.l.bf16 %v383
        %v416 = vunpack.c.l.bf16 %v384
        %v417 = vunpack.c.l.bf16 %v385
        %v418 = vunpack.c.l.bf16 %v386
        %v419 = vunpack.c.l.bf16 %v387
        %v420 = vunpack.c.l.bf16 %v388
        %v421 = vunpack.c.l.bf16 %v389
        %v422 = vunpack.c.l.bf16 %v390
        %v423 = vunpack.c.l.bf16 %v391
        %v424 = vld [vmem:[#allocation5] sm:$0x1]
        %v426 = vlaneseq
        %v427 = vshrl.u32 %v426, 7
        %v428 = vsub.s32 0, %v427
        %v429 = vrot.slane %v424, %v428
        %v431 = vmul.f32 %v392, %v429
        %v432 = vmul.f32 %v393, %v429
        %v433 = vmul.f32 %v394, %v429
        %v434 = vmul.f32 %v395, %v429
        %v435 = vmul.f32 %v396, %v429
        %v436 = vmul.f32 %v397, %v429
        %v437 = vmul.f32 %v398, %v429
        %v438 = vmul.f32 %v399, %v429
        %v439 = vmul.f32 %v400, %v429
        %v440 = vmul.f32 %v401, %v429
        %v441 = vmul.f32 %v402, %v429
        %v442 = vmul.f32 %v403, %v429
        %v443 = vmul.f32 %v404, %v429
        %v444 = vmul.f32 %v405, %v429
        %v445 = vmul.f32 %v406, %v429
        %v446 = vmul.f32 %v407, %v429
        %v447 = vmul.f32 %v408, %v429
        %v448 = vmul.f32 %v409, %v429
        %v449 = vmul.f32 %v410, %v429
        %v450 = vmul.f32 %v411, %v429
        %v451 = vmul.f32 %v412, %v429
        %v452 = vmul.f32 %v413, %v429
        %v453 = vmul.f32 %v414, %v429
        %v454 = vmul.f32 %v415, %v429
        %v455 = vmul.f32 %v416, %v429
        %v456 = vmul.f32 %v417, %v429
        %v457 = vmul.f32 %v418, %v429
        %v458 = vmul.f32 %v419, %v429
        %v459 = vmul.f32 %v420, %v429
        %v460 = vmul.f32 %v421, %v429
        %v461 = vmul.f32 %v422, %v429
        %v462 = vmul.f32 %v423, %v429
        %v463 = vld [vmem:[#allocation7] sm:$0x1]
        %v465 = vlaneseq
        %v466 = vshrl.u32 %v465, 7
        %v467 = vsub.s32 0, %v466
        %v468 = vrot.slane %v463, %v467
        %v470 = vadd.f32 %v431, %v468
        %v471 = vadd.f32 %v432, %v468
        %v472 = vadd.f32 %v433, %v468
        %v473 = vadd.f32 %v434, %v468
        %v474 = vadd.f32 %v435, %v468
        %v475 = vadd.f32 %v436, %v468
        %v476 = vadd.f32 %v437, %v468
        %v477 = vadd.f32 %v438, %v468
        %v478 = vadd.f32 %v439, %v468
        %v479 = vadd.f32 %v440, %v468
        %v480 = vadd.f32 %v441, %v468
        %v481 = vadd.f32 %v442, %v468
        %v482 = vadd.f32 %v443, %v468
        %v483 = vadd.f32 %v444, %v468
        %v484 = vadd.f32 %v445, %v468
        %v485 = vadd.f32 %v446, %v468
        %v486 = vadd.f32 %v447, %v468
        %v487 = vadd.f32 %v448, %v468
        %v488 = vadd.f32 %v449, %v468
        %v489 = vadd.f32 %v450, %v468
        %v490 = vadd.f32 %v451, %v468
        %v491 = vadd.f32 %v452, %v468
        %v492 = vadd.f32 %v453, %v468
        %v493 = vadd.f32 %v454, %v468
        %v494 = vadd.f32 %v455, %v468
        %v495 = vadd.f32 %v456, %v468
        %v496 = vadd.f32 %v457, %v468
        %v497 = vadd.f32 %v458, %v468
        %v498 = vadd.f32 %v459, %v468
        %v499 = vadd.f32 %v460, %v468
        %v500 = vadd.f32 %v461, %v468
        %v501 = vadd.f32 %v462, %v468
        %v502 = vld [vmem:[%s318] sm:$0xf]
        %v503 = vld [vmem:[%s318 + $0x4] sm:$0xf]
        %v504 = vld [vmem:[%s318 + $0x8] sm:$0xf]
        %v505 = vld [vmem:[%s318 + $0xc] sm:$0xf]
        %v506 = vld [vmem:[%s318 + $0x10] sm:$0xf]
        %v507 = vld [vmem:[%s318 + $0x14] sm:$0xf]
        %v508 = vld [vmem:[%s318 + $0x18] sm:$0xf]
        %v509 = vld [vmem:[%s318 + $0x1c] sm:$0xf]
        %v510 = vld [vmem:[%s318 + $0x20] sm:$0xf]
        %v511 = vld [vmem:[%s318 + $0x24] sm:$0xf]
        %v512 = vld [vmem:[%s318 + $0x28] sm:$0xf]
        %v513 = vld [vmem:[%s318 + $0x2c] sm:$0xf]
        %v514 = vld [vmem:[%s318 + $0x30] sm:$0xf]
        %v515 = vld [vmem:[%s318 + $0x34] sm:$0xf]
        %v516 = vld [vmem:[%s318 + $0x38] sm:$0xf]
        %v517 = vld [vmem:[%s318 + $0x3c] sm:$0xf]
        %v518 = vld [vmem:[%s318 + $0x40] sm:$0xf]
        %v519 = vld [vmem:[%s318 + $0x44] sm:$0xf]
        %v520 = vld [vmem:[%s318 + $0x48] sm:$0xf]
        %v521 = vld [vmem:[%s318 + $0x4c] sm:$0xf]
        %v522 = vld [vmem:[%s318 + $0x50] sm:$0xf]
        %v523 = vld [vmem:[%s318 + $0x54] sm:$0xf]
        %v524 = vld [vmem:[%s318 + $0x58] sm:$0xf]
        %v525 = vld [vmem:[%s318 + $0x5c] sm:$0xf]
        %v526 = vld [vmem:[%s318 + $0x60] sm:$0xf]
        %v527 = vld [vmem:[%s318 + $0x64] sm:$0xf]
        %v528 = vld [vmem:[%s318 + $0x68] sm:$0xf]
        %v529 = vld [vmem:[%s318 + $0x6c] sm:$0xf]
        %v530 = vld [vmem:[%s318 + $0x70] sm:$0xf]
        %v531 = vld [vmem:[%s318 + $0x74] sm:$0xf]
        %v532 = vld [vmem:[%s318 + $0x78] sm:$0xf]
        %v533 = vld [vmem:[%s318 + $0x7c] sm:$0xf]
        %v534 = vunpack.c.l.bf16 %v502
        %v535 = vunpack.c.l.bf16 %v503
        %v536 = vunpack.c.l.bf16 %v504
        %v537 = vunpack.c.l.bf16 %v505
        %v538 = vunpack.c.l.bf16 %v506
        %v539 = vunpack.c.l.bf16 %v507
        %v540 = vunpack.c.l.bf16 %v508
        %v541 = vunpack.c.l.bf16 %v509
        %v542 = vunpack.c.l.bf16 %v510
        %v543 = vunpack.c.l.bf16 %v511
        %v544 = vunpack.c.l.bf16 %v512
        %v545 = vunpack.c.l.bf16 %v513
        %v546 = vunpack.c.l.bf16 %v514
        %v547 = vunpack.c.l.bf16 %v515
        %v548 = vunpack.c.l.bf16 %v516
        %v549 = vunpack.c.l.bf16 %v517
        %v550 = vunpack.c.l.bf16 %v518
        %v551 = vunpack.c.l.bf16 %v519
        %v552 = vunpack.c.l.bf16 %v520
        %v553 = vunpack.c.l.bf16 %v521
        %v554 = vunpack.c.l.bf16 %v522
        %v555 = vunpack.c.l.bf16 %v523
        %v556 = vunpack.c.l.bf16 %v524
        %v557 = vunpack.c.l.bf16 %v525
        %v558 = vunpack.c.l.bf16 %v526
        %v559 = vunpack.c.l.bf16 %v527
        %v560 = vunpack.c.l.bf16 %v528
        %v561 = vunpack.c.l.bf16 %v529
        %v562 = vunpack.c.l.bf16 %v530
        %v563 = vunpack.c.l.bf16 %v531
        %v564 = vunpack.c.l.bf16 %v532
        %v565 = vunpack.c.l.bf16 %v533
        %v566 = vld [vmem:[#allocation10] sm:$0x1]
        %v568 = vlaneseq
        %v569 = vshrl.u32 %v568, 7
        %v570 = vsub.s32 0, %v569
        %v571 = vrot.slane %v566, %v570
        %v573 = vmul.f32 %v534, %v571
        %v574 = vmul.f32 %v535, %v571
        %v575 = vmul.f32 %v536, %v571
        %v576 = vmul.f32 %v537, %v571
        %v577 = vmul.f32 %v538, %v571
        %v578 = vmul.f32 %v539, %v571
        %v579 = vmul.f32 %v540, %v571
        %v580 = vmul.f32 %v541, %v571
        %v581 = vmul.f32 %v542, %v571
        %v582 = vmul.f32 %v543, %v571
        %v583 = vmul.f32 %v544, %v571
        %v584 = vmul.f32 %v545, %v571
        %v585 = vmul.f32 %v546, %v571
        %v586 = vmul.f32 %v547, %v571
        %v587 = vmul.f32 %v548, %v571
        %v588 = vmul.f32 %v549, %v571
        %v589 = vmul.f32 %v550, %v571
        %v590 = vmul.f32 %v551, %v571
        %v591 = vmul.f32 %v552, %v571
        %v592 = vmul.f32 %v553, %v571
        %v593 = vmul.f32 %v554, %v571
        %v594 = vmul.f32 %v555, %v571
        %v595 = vmul.f32 %v556, %v571
        %v596 = vmul.f32 %v557, %v571
        %v597 = vmul.f32 %v558, %v571
        %v598 = vmul.f32 %v559, %v571
        %v599 = vmul.f32 %v560, %v571
        %v600 = vmul.f32 %v561, %v571
        %v601 = vmul.f32 %v562, %v571
        %v602 = vmul.f32 %v563, %v571
        %v603 = vmul.f32 %v564, %v571
        %v604 = vmul.f32 %v565, %v571
        %v605 = vld [vmem:[#allocation11] sm:$0x1]
        %v607 = vlaneseq
        %v608 = vshrl.u32 %v607, 7
        %v609 = vsub.s32 0, %v608
        %v610 = vrot.slane %v605, %v609
        %v612 = vadd.f32 %v573, %v610
        %v613 = vadd.f32 %v574, %v610
        %v614 = vadd.f32 %v575, %v610
        %v615 = vadd.f32 %v576, %v610
        %v616 = vadd.f32 %v577, %v610
        %v617 = vadd.f32 %v578, %v610
        %v618 = vadd.f32 %v579, %v610
        %v619 = vadd.f32 %v580, %v610
        %v620 = vadd.f32 %v581, %v610
        %v621 = vadd.f32 %v582, %v610
        %v622 = vadd.f32 %v583, %v610
        %v623 = vadd.f32 %v584, %v610
        %v624 = vadd.f32 %v585, %v610
        %v625 = vadd.f32 %v586, %v610
        %v626 = vadd.f32 %v587, %v610
        %v627 = vadd.f32 %v588, %v610
        %v628 = vadd.f32 %v589, %v610
        %v629 = vadd.f32 %v590, %v610
        %v630 = vadd.f32 %v591, %v610
        %v631 = vadd.f32 %v592, %v610
        %v632 = vadd.f32 %v593, %v610
        %v633 = vadd.f32 %v594, %v610
        %v634 = vadd.f32 %v595, %v610
        %v635 = vadd.f32 %v596, %v610
        %v636 = vadd.f32 %v597, %v610
        %v637 = vadd.f32 %v598, %v610
        %v638 = vadd.f32 %v599, %v610
        %v639 = vadd.f32 %v600, %v610
        %v640 = vadd.f32 %v601, %v610
        %v641 = vadd.f32 %v602, %v610
        %v642 = vadd.f32 %v603, %v610
        %v643 = vadd.f32 %v604, %v610
        %v644 = vadd.f32 %v470, %v612
        %v645 = vadd.f32 %v471, %v613
        %v646 = vadd.f32 %v472, %v614
        %v647 = vadd.f32 %v473, %v615
        %v648 = vadd.f32 %v474, %v616
        %v649 = vadd.f32 %v475, %v617
        %v650 = vadd.f32 %v476, %v618
        %v651 = vadd.f32 %v477, %v619
        %v652 = vadd.f32 %v478, %v620
        %v653 = vadd.f32 %v479, %v621
        %v654 = vadd.f32 %v480, %v622
        %v655 = vadd.f32 %v481, %v623
        %v656 = vadd.f32 %v482, %v624
        %v657 = vadd.f32 %v483, %v625
        %v658 = vadd.f32 %v484, %v626
        %v659 = vadd.f32 %v485, %v627
        %v660 = vadd.f32 %v486, %v628
        %v661 = vadd.f32 %v487, %v629
        %v662 = vadd.f32 %v488, %v630
        %v663 = vadd.f32 %v489, %v631
        %v664 = vadd.f32 %v490, %v632
        %v665 = vadd.f32 %v491, %v633
        %v666 = vadd.f32 %v492, %v634
        %v667 = vadd.f32 %v493, %v635
        %v668 = vadd.f32 %v494, %v636
        %v669 = vadd.f32 %v495, %v637
        %v670 = vadd.f32 %v496, %v638
        %v671 = vadd.f32 %v497, %v639
        %v672 = vadd.f32 %v498, %v640
        %v673 = vadd.f32 %v499, %v641
        %v674 = vadd.f32 %v500, %v642
        %v675 = vadd.f32 %v501, %v643
        %v676 = vmax.f32 %v644, 0.0
        %v677 = vmax.f32 %v645, 0.0
        %v678 = vmax.f32 %v646, 0.0
        %v679 = vmax.f32 %v647, 0.0
        %v680 = vmax.f32 %v648, 0.0
        %v681 = vmax.f32 %v649, 0.0
        %v682 = vmax.f32 %v650, 0.0
        %v683 = vmax.f32 %v651, 0.0
        %v684 = vmax.f32 %v652, 0.0
        %v685 = vmax.f32 %v653, 0.0
        %v686 = vmax.f32 %v654, 0.0
        %v687 = vmax.f32 %v655, 0.0
        %v688 = vmax.f32 %v656, 0.0
        %v689 = vmax.f32 %v657, 0.0
        %v690 = vmax.f32 %v658, 0.0
        %v691 = vmax.f32 %v659, 0.0
        %v692 = vmax.f32 %v660, 0.0
        %v693 = vmax.f32 %v661, 0.0
        %v694 = vmax.f32 %v662, 0.0
        %v695 = vmax.f32 %v663, 0.0
        %v696 = vmax.f32 %v664, 0.0
        %v697 = vmax.f32 %v665, 0.0
        %v698 = vmax.f32 %v666, 0.0
        %v699 = vmax.f32 %v667, 0.0
        %v700 = vmax.f32 %v668, 0.0
        %v701 = vmax.f32 %v669, 0.0
        %v702 = vmax.f32 %v670, 0.0
        %v703 = vmax.f32 %v671, 0.0
        %v704 = vmax.f32 %v672, 0.0
        %v705 = vmax.f32 %v673, 0.0
        %v706 = vmax.f32 %v674, 0.0
        %v707 = vmax.f32 %v675, 0.0
        %708 = vst [vmem:[%s359] sm:$0xff] %v676
        %709 = vst [vmem:[%s359 + $0x8] sm:$0xff] %v677
        %710 = vst [vmem:[%s359 + $0x10] sm:$0xff] %v678
        %711 = vst [vmem:[%s359 + $0x18] sm:$0xff] %v679
        %712 = vst [vmem:[%s359 + $0x20] sm:$0xff] %v680
        %713 = vst [vmem:[%s359 + $0x28] sm:$0xff] %v681
        %714 = vst [vmem:[%s359 + $0x30] sm:$0xff] %v682
        %715 = vst [vmem:[%s359 + $0x38] sm:$0xff] %v683
        %716 = vst [vmem:[%s359 + $0x40] sm:$0xff] %v684
        %717 = vst [vmem:[%s359 + $0x48] sm:$0xff] %v685
        %718 = vst [vmem:[%s359 + $0x50] sm:$0xff] %v686
        %719 = vst [vmem:[%s359 + $0x58] sm:$0xff] %v687
        %720 = vst [vmem:[%s359 + $0x60] sm:$0xff] %v688
        %721 = vst [vmem:[%s359 + $0x68] sm:$0xff] %v689
        %722 = vst [vmem:[%s359 + $0x70] sm:$0xff] %v690
        %723 = vst [vmem:[%s359 + $0x78] sm:$0xff] %v691
        %724 = vst [vmem:[%s359 + $0x80] sm:$0xff] %v692
        %725 = vst [vmem:[%s359 + $0x88] sm:$0xff] %v693
        %726 = vst [vmem:[%s359 + $0x90] sm:$0xff] %v694
        %727 = vst [vmem:[%s359 + $0x98] sm:$0xff] %v695
        %728 = vst [vmem:[%s359 + $0xa0] sm:$0xff] %v696
        %729 = vst [vmem:[%s359 + $0xa8] sm:$0xff] %v697
        %730 = vst [vmem:[%s359 + $0xb0] sm:$0xff] %v698
        %731 = vst [vmem:[%s359 + $0xb8] sm:$0xff] %v699
        %732 = vst [vmem:[%s359 + $0xc0] sm:$0xff] %v700
        %733 = vst [vmem:[%s359 + $0xc8] sm:$0xff] %v701
        %734 = vst [vmem:[%s359 + $0xd0] sm:$0xff] %v702
        %735 = vst [vmem:[%s359 + $0xd8] sm:$0xff] %v703
        %736 = vst [vmem:[%s359 + $0xe0] sm:$0xff] %v704
        %737 = vst [vmem:[%s359 + $0xe8] sm:$0xff] %v705
        %738 = vst [vmem:[%s359 + $0xf0] sm:$0xff] %v706
        %739 = vst [vmem:[%s359 + $0xf8] sm:$0xff] %v707
        %s740 = sand.u32 %s172, 1
        %s741 = scalar_lea.sflag [#allocation4], %s740
        %s742 = sand.u32 %s172, 1
        %s743 = smul.addr %s742, 256
        %s744 = scalar_lea.vmem [#allocation13], %s743
        // Predicated region
        $region69: #{basic_block_forward.5} parent=43 // pred_check
          %p745 = pneg %p182
        $region70: #{basic_block_forward.5} parent=43 // pred_check_branch
          %747 = sbr.rel (%p745) target = $region72
        $region71: #{basic_block_forward.5} parent=43 // pred_region
          %s749 = ssub.s32 4096, 4096
          %750 = vsyncadd %s741, %s749
          %s751 = smul.addr %s28, 32
          %s752 = smul.addr %s751, 128
          %s753 = scalar_lea.hbm %s6, %s752
          %s754 = sshll.u32 %s744, 4
          %s755 = int_to_ptr.vmem [resolvable:$true] %s754
          %760 = dma.vmem_to_hbm [thread:$0]  %s755, 4096, %s753, %s741, 128, 128, 8
        $region72: #{basic_block_forward.5} parent=43 // pred_fallthru
          _
      $region44: #{basic_block_forward.5} parent=5 // pred_fallthru
        _
      %p761 = scmp.le.s32.totalorder 2, %s23
      // Predicated region
      $region73: #{basic_block_forward.5} parent=5 // pred_check
        %p762 = pneg %p761
      $region74: #{basic_block_forward.5} parent=5 // pred_check_branch
        %764 = sbr.rel (%p762) target = $region76
      $region75: #{basic_block_forward.5} parent=5 // pred_region
        %s765 = ssub.s32 %s23, 2
        // Predicated region
        $region77: #{basic_block_forward.5} parent=75 // pred_check
          %p766 = pneg %p188
        $region78: #{basic_block_forward.5} parent=75 // pred_check_branch
          %768 = sbr.rel (%p766) target = $region80
        $region79: #{basic_block_forward.5} parent=75 // pred_region
          %s769 = sand.u32 %s173, 1
          %s770 = scalar_lea.sflag [#allocation4], %s769
          %s771 = sand.u32 %s173, 1
          %s772 = smul.addr %s771, 256
          %s773 = scalar_lea.vmem [#allocation13], %s772
          %774 = dma.done %s770, 4096
        $region80: #{basic_block_forward.5} parent=75 // pred_fallthru
          _
      $region76: #{basic_block_forward.5} parent=5 // pred_fallthru
        _
    $region6: #{basic_block_forward.5} parent=1 // loop_footer
      %s27 = sadd.s32 1, %s23
    $region7: #{basic_block_forward.5} parent=1 // loop_footer_branch
      %22 = sbr.rel target = $region3
    $region8: #{basic_block_forward.5} parent=1 // loop_exit
      _
    %775 = vsyncpa [#allocation3], 1
    %s776 = scalar_lea.sflag [#allocation3], 1
    %777 = vsyncpa %s776, 1
    %778 = vsyncpa [#allocation6], 1
    %779 = vsyncpa [#allocation9], 1
    %s780 = scalar_lea.sflag [#allocation9], 1
    %781 = vsyncpa %s780, 1
    %782 = vsyncpa [#allocation12], 1
    %783 = vsyncpa [#allocation4], 1
    %s784 = scalar_lea.sflag [#allocation4], 1
    %785 = vsyncpa %s784, 1

// kernel: basic_block_forward.3
$region0: #{basic_block_forward.3}
  #allocation0 [shape = 'u32[]', space=smem, size = 0x4, offset = 0x4, fixed_abs, tag = 'smem constant byte address 0x4 - core index']
  #allocation1 [shape = 'u32[144,128]{1,0:T(1,128)}', space=vmem, size = 0x12000, scoped, tag = 'internal scratch']
  #allocation2 [shape = 'f32[17,17,128]{2,1,0:T(8,128)}', space=vmem, size = 0x33000, scoped, tag = 'scratch operand']
  %s0 = inlined_call_operand.hbm [shape: f32[2,16,16,128], index: 0, kind: input, shape index: {}]
  %s1 = inlined_call_operand.hbm [shape: bf16[4,128,256], index: 1, kind: input, shape index: {}]
  %s2 = inlined_call_operand.hbm [shape: bf16[2,256,128], index: 2, kind: output, shape index: {0}]
  %s3 = inlined_call_operand.hbm [shape: f32[2,2,256], index: 3, kind: output, shape index: {1}]
  %s4 = inlined_call_operand.hbm [shape: bf16[2,256,128], index: 4, kind: output, shape index: {2}]
  %5 = xla_tuple %s2, %s3, %s4
  %s6 = sld [smem:[#allocation0]]
  $region65: #{basic_block_forward.3} parent=0
    _
  %s8 = ssub.s32 1, %s6
  %s9 = scalar_select 0, %s8, %s6
  $region1: #{basic_block_forward.3} parent=0
    #allocation3 [shape = 'u8[262144]{0}', space=vmem, size = 0x40000, scoped, tag = 'input window, operand 0']
    #allocation4 [shape = 's32[2]{0}', space=sflag, size = 0x8, scoped, tag = 'scoped memory for basic_block_forward.3']
    #allocation5 [shape = 's32[2]{0}', space=sflag, size = 0x8, scoped, tag = 'scoped memory for basic_block_forward.3']
    #allocation6 [shape = 'u8[262144]{0}', space=vmem, size = 0x40000, scoped, tag = 'input window, operand 1, single buffered']
    #allocation7 [shape = 's32[1]{0}', space=sflag, size = 0x4, scoped, tag = 'scoped memory for basic_block_forward.3']
    #allocation8 [shape = 'u8[131072]{0}', space=vmem, size = 0x20000, scoped, tag = 'output window, operand 0']
    #allocation9 [shape = 'u8[4096]{0}', space=vmem, size = 0x1000, scoped, tag = 'output window, operand 1']
    #allocation10 [shape = 's32[2]{0}', space=sflag, size = 0x8, scoped, tag = 'scoped memory for basic_block_forward.3']
    #allocation11 [shape = 'u8[131072]{0}', space=vmem, size = 0x20000, scoped, tag = 'output window, operand 2']
    %10 = vsyncpa [#allocation4], 0
    %s11 = scalar_lea.sflag [#allocation4], 1
    %12 = vsyncpa %s11, 0
    %13 = vsyncpa [#allocation7], 0
    %14 = vsyncpa [#allocation5], 0
    %s15 = scalar_lea.sflag [#allocation5], 1
    %16 = vsyncpa %s15, 0
    %17 = vsyncpa [#allocation10], 0
    %s18 = scalar_lea.sflag [#allocation10], 1
    %19 = vsyncpa %s18, 0
    loop: start=0, step=1, limit=4
    $region2: #{basic_block_forward.3} parent=1 // loop_pre_header
      _
    $region3: #{basic_block_forward.3} parent=1 // loop_header
      %s21 = sphi 0, %s25
      %p22 = scmp.ge.s32.totalorder %s21, 4
      %s31 = sphi 0, %s33
      %s34 = sphi 0, %s31
      %s35 = sphi 0, %s34
      %s51 = sphi 0, %s35
      %s55 = sphi 0, %s55
      %s57 = sphi 0, %s55
      %s58 = sphi 0, %s57
      %s72 = sphi 0, %s58
      %s78 = sphi 0, %s80
      %s81 = sphi 0, %s78
      %s82 = sphi 0, %s81
      %s98 = sphi 0, %s82
      %s104 = sphi 0, %s106
      %s107 = sphi 0, %s104
      %s108 = sphi 0, %s107
      %s124 = sphi 0, %s108
      %s130 = sphi 0, %s132
      %s133 = sphi 0, %s130
      %s134 = sphi 0, %s133
      %s150 = sphi 0, %s134
    $region4: #{basic_block_forward.3} parent=1 // loop_header_branch
      %24 = sbr.rel (%p22) target = $region8
    $region5: #{basic_block_forward.3} parent=1 // loop_body
      %s26 = ssub.s32 %s21, 1
      %s27 = ssub.s32 %s21, 2
      %s28 = sadd.s32 %s21, 1
      %s29 = ssub.s32 %s21, %s28
      %p30 = scmp.eq.s32.totalorder %s29, 0
      %s32 = sadd.s32 %s31, 1
      %s33 = scalar_select %p30, %s31, %s32
      %p36 = pneg %p30
      %p37 = scmp.eq.s32.totalorder %s21, 1
      %p38 = por %p36, %p37
      %p39 = scmp.ne.s32.totalorder %s31, %s34
      %p40 = scmp.eq.s32.totalorder %s21, 0
      %p41 = por %p39, %p40
      %p42 = scmp.ne.s32.totalorder %s31, %s34
      %p43 = scmp.eq.s32.totalorder %s26, 1
      %p44 = por %p42, %p43
      %p45 = scmp.ne.s32.totalorder %s34, %s35
      %p46 = scmp.eq.s32.totalorder %s26, 0
      %p47 = por %p45, %p46
      %p48 = scmp.ne.s32.totalorder %s34, %s35
      %p49 = scmp.eq.s32.totalorder %s27, 1
      %p50 = por %p48, %p49
      %p52 = scmp.ne.s32.totalorder %s35, %s51
      %p53 = scmp.eq.s32.totalorder %s27, 0
      %p54 = por %p52, %p53
      %s56 = sadd.s32 %s55, 1
      %p59 = scmp.eq.s32.totalorder %s21, 1
      %p60 = scmp.ne.s32.totalorder %s55, %s57
      %p61 = scmp.eq.s32.totalorder %s21, 0
      %p62 = por %p60, %p61
      %p63 = scmp.ne.s32.totalorder %s55, %s57
      %p64 = scmp.eq.s32.totalorder %s26, 1
      %p65 = por %p63, %p64
      %p66 = scmp.ne.s32.totalorder %s57, %s58
      %p67 = scmp.eq.s32.totalorder %s26, 0
      %p68 = por %p66, %p67
      %p69 = scmp.ne.s32.totalorder %s57, %s58
      %p70 = scmp.eq.s32.totalorder %s27, 1
      %p71 = por %p69, %p70
      %p73 = scmp.ne.s32.totalorder %s58, %s72
      %p74 = scmp.eq.s32.totalorder %s27, 0
      %p75 = por %p73, %p74
      %s76 = ssub.s32 %s21, %s28
      %p77 = scmp.eq.s32.totalorder %s76, 0
      %s79 = sadd.s32 %s78, 1
      %s80 = scalar_select %p77, %s78, %s79
      %p83 = pneg %p77
      %p84 = scmp.eq.s32.totalorder %s21, 1
      %p85 = por %p83, %p84
      %p86 = scmp.ne.s32.totalorder %s78, %s81
      %p87 = scmp.eq.s32.totalorder %s21, 0
      %p88 = por %p86, %p87
      %p89 = scmp.ne.s32.totalorder %s78, %s81
      %p90 = scmp.eq.s32.totalorder %s26, 1
      %p91 = por %p89, %p90
      %p92 = scmp.ne.s32.totalorder %s81, %s82
      %p93 = scmp.eq.s32.totalorder %s26, 0
      %p94 = por %p92, %p93
      %p95 = scmp.ne.s32.totalorder %s81, %s82
      %p96 = scmp.eq.s32.totalorder %s27, 1
      %p97 = por %p95, %p96
      %p99 = scmp.ne.s32.totalorder %s82, %s98
      %p100 = scmp.eq.s32.totalorder %s27, 0
      %p101 = por %p99, %p100
      %s102 = ssub.s32 %s21, %s28
      %p103 = scmp.eq.s32.totalorder %s102, 0
      %s105 = sadd.s32 %s104, 1
      %s106 = scalar_select %p103, %s104, %s105
      %p109 = pneg %p103
      %p110 = scmp.eq.s32.totalorder %s21, 1
      %p111 = por %p109, %p110
      %p112 = scmp.ne.s32.totalorder %s104, %s107
      %p113 = scmp.eq.s32.totalorder %s21, 0
      %p114 = por %p112, %p113
      %p115 = scmp.ne.s32.totalorder %s104, %s107
      %p116 = scmp.eq.s32.totalorder %s26, 1
      %p117 = por %p115, %p116
      %p118 = scmp.ne.s32.totalorder %s107, %s108
      %p119 = scmp.eq.s32.totalorder %s26, 0
      %p120 = por %p118, %p119
      %p121 = scmp.ne.s32.totalorder %s107, %s108
      %p122 = scmp.eq.s32.totalorder %s27, 1
      %p123 = por %p121, %p122
      %p125 = scmp.ne.s32.totalorder %s108, %s124
      %p126 = scmp.eq.s32.totalorder %s27, 0
      %p127 = por %p125, %p126
      %s128 = ssub.s32 %s21, %s28
      %p129 = scmp.eq.s32.totalorder %s128, 0
      %s131 = sadd.s32 %s130, 1
      %s132 = scalar_select %p129, %s130, %s131
      %p135 = pneg %p129
      %p136 = scmp.eq.s32.totalorder %s21, 1
      %p137 = por %p135, %p136
      %p138 = scmp.ne.s32.totalorder %s130, %s133
      %p139 = scmp.eq.s32.totalorder %s21, 0
      %p140 = por %p138, %p139
      %p141 = scmp.ne.s32.totalorder %s130, %s133
      %p142 = scmp.eq.s32.totalorder %s26, 1
      %p143 = por %p141, %p142
      %p144 = scmp.ne.s32.totalorder %s133, %s134
      %p145 = scmp.eq.s32.totalorder %s26, 0
      %p146 = por %p144, %p145
      %p147 = scmp.ne.s32.totalorder %s133, %s134
      %p148 = scmp.eq.s32.totalorder %s27, 1
      %p149 = por %p147, %p148
      %p151 = scmp.ne.s32.totalorder %s134, %s150
      %p152 = scmp.eq.s32.totalorder %s27, 0
      %p153 = por %p151, %p152
      %p154 = scmp.le.s32.totalorder 1, %s21
      %p155 = scmp.lt.s32.totalorder %s21, 3
      %p156 = pnand %p154, %p155
      %p157 = pneg %p156
      // Predicated region
      $region9: #{basic_block_forward.3} parent=5 // pred_check
        _
      $region10: #{basic_block_forward.3} parent=5 // pred_check_branch
        %159 = sbr.rel (%p156) target = $region12
      $region11: #{basic_block_forward.3} parent=5 // pred_region
        %s160 = ssub.s32 %s21, 1
        // Predicated region
        $region13: #{basic_block_forward.3} parent=11 // pred_check
          %p161 = pneg %p68
        $region14: #{basic_block_forward.3} parent=11 // pred_check_branch
          %163 = sbr.rel (%p161) target = $region16
        $region15: #{basic_block_forward.3} parent=11 // pred_region
          %s165 = ssub.s32 8192, 8192
          %166 = vsyncadd [#allocation7], %s165
          %s167 = sshll.u32 [#allocation6], 4
          %s168 = int_to_ptr.vmem [resolvable:$true] %s167
          %173 = dma.hbm_to_vmem [thread:$0]  %s1, 8192, %s168, [#allocation7], 128, 128, 8
        $region16: #{basic_block_forward.3} parent=11 // pred_fallthru
          _
      $region12: #{basic_block_forward.3} parent=5 // pred_fallthru
        _
      %p174 = scmp.lt.s32.totalorder %s21, 2
      // Predicated region
      $region17: #{basic_block_forward.3} parent=5 // pred_check
        %p175 = pneg %p174
      $region18: #{basic_block_forward.3} parent=5 // pred_check_branch
        %177 = sbr.rel (%p175) target = $region20
      $region19: #{basic_block_forward.3} parent=5 // pred_region
        // Predicated region
        $region21: #{basic_block_forward.3} parent=19 // pred_check
          %p178 = pneg %p41
        $region22: #{basic_block_forward.3} parent=19 // pred_check_branch
          %180 = sbr.rel (%p178) target = $region24
        $region23: #{basic_block_forward.3} parent=19 // pred_region
          %s181 = sand.u32 %s31, 1
          %s182 = scalar_lea.sflag [#allocation4], %s181
          %s183 = sand.u32 %s31, 1
          %s184 = smul.addr %s183, 256
          %s185 = scalar_lea.vmem [#allocation3], %s184
          %s187 = ssub.s32 4096, 4096
          %188 = vsyncadd %s182, %s187
          %s189 = smul.addr %s21, 32
          %s190 = smul.addr %s189, 128
          %s191 = scalar_lea.hbm %s0, %s190
          %s192 = sshll.u32 %s185, 4
          %s193 = int_to_ptr.vmem [resolvable:$true] %s192
          %198 = dma.hbm_to_vmem [thread:$0]  %s191, 4096, %s193, %s182, 128, 128, 8
        $region24: #{basic_block_forward.3} parent=19 // pred_fallthru
          _
      $region20: #{basic_block_forward.3} parent=5 // pred_fallthru
        _
      %p199 = scmp.le.s32.totalorder 1, %s21
      %p200 = scmp.lt.s32.totalorder %s21, 3
      %p201 = pnand %p199, %p200
      %p202 = pneg %p201
      // Predicated region
      $region25: #{basic_block_forward.3} parent=5 // pred_check
        _
      $region26: #{basic_block_forward.3} parent=5 // pred_check_branch
        %204 = sbr.rel (%p201) target = $region28
      $region27: #{basic_block_forward.3} parent=5 // pred_region
        %s205 = ssub.s32 %s21, 1
        %s206 = sand.u32 %s34, 1
        %s207 = scalar_lea.sflag [#allocation4], %s206
        %s208 = sand.u32 %s34, 1
        %s209 = smul.addr %s208, 256
        %s210 = scalar_lea.vmem [#allocation3], %s209
        // Predicated region
        $region29: #{basic_block_forward.3} parent=27 // pred_check
          %p211 = pneg %p47
        $region30: #{basic_block_forward.3} parent=27 // pred_check_branch
          %213 = sbr.rel (%p211) target = $region32
        $region31: #{basic_block_forward.3} parent=27 // pred_region
          %214 = dma.done %s207, 4096
        $region32: #{basic_block_forward.3} parent=27 // pred_fallthru
          _
        // Predicated region
        $region33: #{basic_block_forward.3} parent=27 // pred_check
          %p215 = pneg %p68
        $region34: #{basic_block_forward.3} parent=27 // pred_check_branch
          %217 = sbr.rel (%p215) target = $region36
        $region35: #{basic_block_forward.3} parent=27 // pred_region
          %218 = dma.done [#allocation7], 8192
        $region36: #{basic_block_forward.3} parent=27 // pred_fallthru
          _
        %s219 = sand.u32 %s34, 1
        %s220 = scalar_lea.sflag [#allocation4], %s219
        %s221 = sand.u32 %s34, 1
        %s222 = smul.addr %s221, 256
        %s223 = scalar_lea.vmem [#allocation3], %s222
        %p224 = pneg %p47
        %p225 = pneg %p44
        %p226 = pneg %p68
        %p227 = pneg %p65
        %p228 = pneg %p94
        %p229 = pneg %p91
        %s230 = sand.u32 %s81, 1
        %s231 = scalar_lea.sflag [#allocation5], %s230
        %s232 = sand.u32 %s81, 1
        %s233 = smul.addr %s232, 128
        %s234 = scalar_lea.vmem [#allocation8], %s233
        %p235 = pneg %p120
        %p236 = pneg %p117
        %s237 = sand.u32 %s26, 1
        %s238 = scalar_lea.sflag [#allocation10], %s237
        %s239 = sand.u32 %s107, 1
        %s240 = smul.addr %s239, 4
        %s241 = scalar_lea.vmem [#allocation9], %s240
        %p242 = pneg %p146
        %p243 = pneg %p143
        %s244 = sand.u32 %s26, 1
        %s245 = scalar_lea.sflag [#allocation10], %s244
        %s246 = sand.u32 %s133, 1
        %s247 = smul.addr %s246, 128
        %s248 = scalar_lea.vmem [#allocation11], %s247
        %250 = vst [vmem:[#allocation2] sm:$0xff] 0.0
        %251 = vst [vmem:[#allocation2 + $0x8] sm:$0xff] 0.0
        %252 = vst [vmem:[#allocation2 + $0x10] sm:$0x1] 0.0
        %253 = vst [vmem:[#allocation2] sm:$0x1] 0.0
        %254 = vst [vmem:[#allocation2 + $0x18] sm:$0x1] 0.0
        %255 = vst [vmem:[#allocation2 + $0x30] sm:$0x1] 0.0
        %256 = vst [vmem:[#allocation2 + $0x48] sm:$0x1] 0.0
        %257 = vst [vmem:[#allocation2 + $0x60] sm:$0x1] 0.0
        %258 = vst [vmem:[#allocation2 + $0x78] sm:$0x1] 0.0
        %259 = vst [vmem:[#allocation2 + $0x90] sm:$0x1] 0.0
        %260 = vst [vmem:[#allocation2 + $0xa8] sm:$0x1] 0.0
        %261 = vst [vmem:[#allocation2 + $0xc0] sm:$0x1] 0.0
        %262 = vst [vmem:[#allocation2 + $0xd8] sm:$0x1] 0.0
        %263 = vst [vmem:[#allocation2 + $0xf0] sm:$0x1] 0.0
        %264 = vst [vmem:[#allocation2 + $0x108] sm:$0x1] 0.0
        %265 = vst [vmem:[#allocation2 + $0x120] sm:$0x1] 0.0
        %266 = vst [vmem:[#allocation2 + $0x138] sm:$0x1] 0.0
        %267 = vst [vmem:[#allocation2 + $0x150] sm:$0x1] 0.0
        %268 = vst [vmem:[#allocation2 + $0x168] sm:$0x1] 0.0
        %269 = vst [vmem:[#allocation2 + $0x180] sm:$0x1] 0.0
        %v270 = vld [vmem:[%s210] sm:$0xff]
        %v271 = vld [vmem:[%s210 + $0x8] sm:$0xff]
        %v272 = vld [vmem:[%s210 + $0x10] sm:$0xff]
        %v273 = vld [vmem:[%s210 + $0x18] sm:$0xff]
        %v274 = vld [vmem:[%s210 + $0x20] sm:$0xff]
        %v275 = vld [vmem:[%s210 + $0x28] sm:$0xff]
        %v276 = vld [vmem:[%s210 + $0x30] sm:$0xff]
        %v277 = vld [vmem:[%s210 + $0x38] sm:$0xff]
        %v278 = vld [vmem:[%s210 + $0x40] sm:$0xff]
        %v279 = vld [vmem:[%s210 + $0x48] sm:$0xff]
        %v280 = vld [vmem:[%s210 + $0x50] sm:$0xff]
        %v281 = vld [vmem:[%s210 + $0x58] sm:$0xff]
        %v282 = vld [vmem:[%s210 + $0x60] sm:$0xff]
        %v283 = vld [vmem:[%s210 + $0x68] sm:$0xff]
        %v284 = vld [vmem:[%s210 + $0x70] sm:$0xff]
        %v285 = vld [vmem:[%s210 + $0x78] sm:$0xff]
        %v286 = vld [vmem:[%s210 + $0x80] sm:$0xff]
        %v287 = vld [vmem:[%s210 + $0x88] sm:$0xff]
        %v288 = vld [vmem:[%s210 + $0x90] sm:$0xff]
        %v289 = vld [vmem:[%s210 + $0x98] sm:$0xff]
        %v290 = vld [vmem:[%s210 + $0xa0] sm:$0xff]
        %v291 = vld [vmem:[%s210 + $0xa8] sm:$0xff]
        %v292 = vld [vmem:[%s210 + $0xb0] sm:$0xff]
        %v293 = vld [vmem:[%s210 + $0xb8] sm:$0xff]
        %v294 = vld [vmem:[%s210 + $0xc0] sm:$0xff]
        %v295 = vld [vmem:[%s210 + $0xc8] sm:$0xff]
        %v296 = vld [vmem:[%s210 + $0xd0] sm:$0xff]
        %v297 = vld [vmem:[%s210 + $0xd8] sm:$0xff]
        %v298 = vld [vmem:[%s210 + $0xe0] sm:$0xff]
        %v299 = vld [vmem:[%s210 + $0xe8] sm:$0xff]
        %v300 = vld [vmem:[%s210 + $0xf0] sm:$0xff]
        %v301 = vld [vmem:[%s210 + $0xf8] sm:$0xff]
        %s302 = scalar_lea.vmem [#allocation2], 24
        %303 = vst [vmem:[%s302 + $0x1] sm:$0xff] %v270
        %304 = vst [vmem:[%s302 + $0x9] sm:$0xff] %v271
        %305 = vst [vmem:[%s302 + $0x19] sm:$0xff] %v272
        %306 = vst [vmem:[%s302 + $0x21] sm:$0xff] %v273
        %307 = vst [vmem:[%s302 + $0x31] sm:$0xff] %v274
        %308 = vst [vmem:[%s302 + $0x39] sm:$0xff] %v275
        %309 = vst [vmem:[%s302 + $0x49] sm:$0xff] %v276
        %310 = vst [vmem:[%s302 + $0x51] sm:$0xff] %v277
        %311 = vst [vmem:[%s302 + $0x61] sm:$0xff] %v278
        %312 = vst [vmem:[%s302 + $0x69] sm:$0xff] %v279
        %313 = vst [vmem:[%s302 + $0x79] sm:$0xff] %v280
        %314 = vst [vmem:[%s302 + $0x81] sm:$0xff] %v281
        %315 = vst [vmem:[%s302 + $0x91] sm:$0xff] %v282
        %316 = vst [vmem:[%s302 + $0x99] sm:$0xff] %v283
        %317 = vst [vmem:[%s302 + $0xa9] sm:$0xff] %v284
        %318 = vst [vmem:[%s302 + $0xb1] sm:$0xff] %v285
        %319 = vst [vmem:[%s302 + $0xc1] sm:$0xff] %v286
        %320 = vst [vmem:[%s302 + $0xc9] sm:$0xff] %v287
        %321 = vst [vmem:[%s302 + $0xd9] sm:$0xff] %v288
        %322 = vst [vmem:[%s302 + $0xe1] sm:$0xff] %v289
        %323 = vst [vmem:[%s302 + $0xf1] sm:$0xff] %v290
        %324 = vst [vmem:[%s302 + $0xf9] sm:$0xff] %v291
        %325 = vst [vmem:[%s302 + $0x109] sm:$0xff] %v292
        %326 = vst [vmem:[%s302 + $0x111] sm:$0xff] %v293
        %327 = vst [vmem:[%s302 + $0x121] sm:$0xff] %v294
        %328 = vst [vmem:[%s302 + $0x129] sm:$0xff] %v295
        %329 = vst [vmem:[%s302 + $0x139] sm:$0xff] %v296
        %330 = vst [vmem:[%s302 + $0x141] sm:$0xff] %v297
        %331 = vst [vmem:[%s302 + $0x151] sm:$0xff] %v298
        %332 = vst [vmem:[%s302 + $0x159] sm:$0xff] %v299
        %333 = vst [vmem:[%s302 + $0x169] sm:$0xff] %v300
        %334 = vst [vmem:[%s302 + $0x171] sm:$0xff] %v301
        %v335 = vld [vmem:[#allocation2] sm:$0xff]
        %v336 = vld [vmem:[#allocation2 + $0x8] sm:$0xff]
        %v337 = vld [vmem:[#allocation2 + $0x10] sm:$0x1]
        %v338 = vld [vmem:[#allocation2 + $0x18] sm:$0xff]
        %v339 = vld [vmem:[#allocation2 + $0x20] sm:$0xff]
        %v340 = vld [vmem:[#allocation2 + $0x28] sm:$0x1]
        %v341 = vld [vmem:[#allocation2 + $0x30] sm:$0xff]
        %v342 = vld [vmem:[#allocation2 + $0x38] sm:$0xff]
        %v343 = vld [vmem:[#allocation2 + $0x40] sm:$0x1]
        %v344 = vld [vmem:[#allocation2 + $0x48] sm:$0xff]
        %v345 = vld [vmem:[#allocation2 + $0x50] sm:$0xff]
        %v346 = vld [vmem:[#allocation2 + $0x58] sm:$0x1]
        %v347 = vld [vmem:[#allocation2 + $0x60] sm:$0xff]
        %v348 = vld [vmem:[#allocation2 + $0x68] sm:$0xff]
        %v349 = vld [vmem:[#allocation2 + $0x70] sm:$0x1]
        %v350 = vld [vmem:[#allocation2 + $0x78] sm:$0xff]
        %v351 = vld [vmem:[#allocation2 + $0x80] sm:$0xff]
        %v352 = vld [vmem:[#allocation2 + $0x88] sm:$0x1]
        %v353 = vld [vmem:[#allocation2 + $0x90] sm:$0xff]
        %v354 = vld [vmem:[#allocation2 + $0x98] sm:$0xff]
        %v355 = vld [vmem:[#allocation2 + $0xa0] sm:$0x1]
        %v356 = vld [vmem:[#allocation2 + $0xa8] sm:$0xff]
        %v357 = vld [vmem:[#allocation2 + $0xb0] sm:$0xff]
        %v358 = vld [vmem:[#allocation2 + $0xb8] sm:$0x1]
        %v359 = vld [vmem:[#allocation2 + $0xc0] sm:$0xff]
        %v360 = vld [vmem:[#allocation2 + $0xc8] sm:$0xff]
        %v361 = vld [vmem:[#allocation2 + $0xd0] sm:$0x1]
        %v362 = vld [vmem:[#allocation2 + $0xd8] sm:$0xff]
        %v363 = vld [vmem:[#allocation2 + $0xe0] sm:$0xff]
        %v364 = vld [vmem:[#allocation2 + $0xe8] sm:$0x1]
        %v365 = vld [vmem:[#allocation2 + $0xf0] sm:$0xff]
        %v366 = vld [vmem:[#allocation2 + $0xf8] sm:$0xff]
        %v367 = vld [vmem:[#allocation2 + $0x100] sm:$0x1]
        %v368 = vld [vmem:[#allocation2 + $0x108] sm:$0xff]
        %v369 = vld [vmem:[#allocation2 + $0x110] sm:$0xff]
        %v370 = vld [vmem:[#allocation2 + $0x118] sm:$0x1]
        %v371 = vld [vmem:[#allocation2 + $0x120] sm:$0xff]
        %v372 = vld [vmem:[#allocation2 + $0x128] sm:$0xff]
        %v373 = vld [vmem:[#allocation2 + $0x130] sm:$0x1]
        %v374 = vld [vmem:[#allocation2 + $0x138] sm:$0xff]
        %v375 = vld [vmem:[#allocation2 + $0x140] sm:$0xff]
        %v376 = vld [vmem:[#allocation2 + $0x148] sm:$0x1]
        %v377 = vld [vmem:[#allocation2 + $0x150] sm:$0xff]
        %v378 = vld [vmem:[#allocation2 + $0x158] sm:$0xff]
        %v379 = vld [vmem:[#allocation2 + $0x160] sm:$0x1]
        %v380 = vld [vmem:[#allocation2 + $0x168] sm:$0xff]
        %v381 = vld [vmem:[#allocation2 + $0x170] sm:$0xff]
        %v382 = vld [vmem:[#allocation2 + $0x178] sm:$0x1]
        %v383 = vld [vmem:[#allocation2 + $0x180] sm:$0xff]
        %v384 = vld [vmem:[#allocation2 + $0x188] sm:$0xff]
        %v385 = vld [vmem:[#allocation2 + $0x190] sm:$0x1]
        %v386 = vld [vmem:[#allocation6] sm:$0xff]
        %v387 = vld [vmem:[#allocation6 + $0x8] sm:$0xff]
        %v388 = vld [vmem:[#allocation6 + $0x10] sm:$0xff]
        %v389 = vld [vmem:[#allocation6 + $0x18] sm:$0xff]
        %v390 = vld [vmem:[#allocation6 + $0x20] sm:$0xff]
        %v391 = vld [vmem:[#allocation6 + $0x28] sm:$0xff]
        %v392 = vld [vmem:[#allocation6 + $0x30] sm:$0xff]
        %v393 = vld [vmem:[#allocation6 + $0x38] sm:$0xff]
        %v394 = vld [vmem:[#allocation6 + $0x40] sm:$0xff]
        %v395 = vld [vmem:[#allocation6 + $0x48] sm:$0xff]
        %v396 = vld [vmem:[#allocation6 + $0x50] sm:$0xff]
        %v397 = vld [vmem:[#allocation6 + $0x58] sm:$0xff]
        %v398 = vld [vmem:[#allocation6 + $0x60] sm:$0xff]
        %v399 = vld [vmem:[#allocation6 + $0x68] sm:$0xff]
        %v400 = vld [vmem:[#allocation6 + $0x70] sm:$0xff]
        %v401 = vld [vmem:[#allocation6 + $0x78] sm:$0xff]
        %v402 = vld [vmem:[#allocation6 + $0x80] sm:$0xff]
        %v403 = vld [vmem:[#allocation6 + $0x88] sm:$0xff]
        %v404 = vld [vmem:[#allocation6 + $0x90] sm:$0xff]
        %v405 = vld [vmem:[#allocation6 + $0x98] sm:$0xff]
        %v406 = vld [vmem:[#allocation6 + $0xa0] sm:$0xff]
        %v407 = vld [vmem:[#allocation6 + $0xa8] sm:$0xff]
        %v408 = vld [vmem:[#allocation6 + $0xb0] sm:$0xff]
        %v409 = vld [vmem:[#allocation6 + $0xb8] sm:$0xff]
        %v410 = vld [vmem:[#allocation6 + $0xc0] sm:$0xff]
        %v411 = vld [vmem:[#allocation6 + $0xc8] sm:$0xff]
        %v412 = vld [vmem:[#allocation6 + $0xd0] sm:$0xff]
        %v413 = vld [vmem:[#allocation6 + $0xd8] sm:$0xff]
        %v414 = vld [vmem:[#allocation6 + $0xe0] sm:$0xff]
        %v415 = vld [vmem:[#allocation6 + $0xe8] sm:$0xff]
        %v416 = vld [vmem:[#allocation6 + $0xf0] sm:$0xff]
        %v417 = vld [vmem:[#allocation6 + $0xf8] sm:$0xff]
        %v418 = vld [vmem:[#allocation6 + $0x100] sm:$0xff]
        %v419 = vld [vmem:[#allocation6 + $0x108] sm:$0xff]
        %v420 = vld [vmem:[#allocation6 + $0x110] sm:$0xff]
        %v421 = vld [vmem:[#allocation6 + $0x118] sm:$0xff]
        %v422 = vld [vmem:[#allocation6 + $0x120] sm:$0xff]
        %v423 = vld [vmem:[#allocation6 + $0x128] sm:$0xff]
        %v424 = vld [vmem:[#allocation6 + $0x130] sm:$0xff]
        %v425 = vld [vmem:[#allocation6 + $0x138] sm:$0xff]
        %v426 = vld [vmem:[#allocation6 + $0x140] sm:$0xff]
        %v427 = vld [vmem:[#allocation6 + $0x148] sm:$0xff]
        %v428 = vld [vmem:[#allocation6 + $0x150] sm:$0xff]
        %v429 = vld [vmem:[#allocation6 + $0x158] sm:$0xff]
        %v430 = vld [vmem:[#allocation6 + $0x160] sm:$0xff]
        %v431 = vld [vmem:[#allocation6 + $0x168] sm:$0xff]
        %v432 = vld [vmem:[#allocation6 + $0x170] sm:$0xff]
        %v433 = vld [vmem:[#allocation6 + $0x178] sm:$0xff]
        %v434 = vld [vmem:[#allocation6 + $0x180] sm:$0xff]
        %v435 = vld [vmem:[#allocation6 + $0x188] sm:$0xff]
        %v436 = vld [vmem:[#allocation6 + $0x190] sm:$0xff]
        %v437 = vld [vmem:[#allocation6 + $0x198] sm:$0xff]
        %v438 = vld [vmem:[#allocation6 + $0x1a0] sm:$0xff]
        %v439 = vld [vmem:[#allocation6 + $0x1a8] sm:$0xff]
        %v440 = vld [vmem:[#allocation6 + $0x1b0] sm:$0xff]
        %v441 = vld [vmem:[#allocation6 + $0x1b8] sm:$0xff]
        %v442 = vld [vmem:[#allocation6 + $0x1c0] sm:$0xff]
        %v443 = vld [vmem:[#allocation6 + $0x1c8] sm:$0xff]
        %v444 = vld [vmem:[#allocation6 + $0x1d0] sm:$0xff]
        %v445 = vld [vmem:[#allocation6 + $0x1d8] sm:$0xff]
        %v446 = vld [vmem:[#allocation6 + $0x1e0] sm:$0xff]
        %v447 = vld [vmem:[#allocation6 + $0x1e8] sm:$0xff]
        %v448 = vld [vmem:[#allocation6 + $0x1f0] sm:$0xff]
        %v449 = vld [vmem:[#allocation6 + $0x1f8] sm:$0xff]
        %v450 = vpack.c.bf16 %v336, %v335
        %v451 = vpack.c.bf16 %v339, %v338
        %v452 = vpack.c.bf16 %v342, %v341
        %v453 = vpack.c.bf16 %v345, %v344
        %v454 = vpack.c.bf16 %v348, %v347
        %v455 = vpack.c.bf16 %v351, %v350
        %v456 = vpack.c.bf16 %v354, %v353
        %v457 = vpack.c.bf16 %v357, %v356
        %v458 = vpack.c.bf16 %v360, %v359
        %v459 = vpack.c.bf16 %v363, %v362
        %v460 = vpack.c.bf16 %v366, %v365
        %v461 = vpack.c.bf16 %v369, %v368
        %v462 = vpack.c.bf16 %v372, %v371
        %v463 = vpack.c.bf16 %v375, %v374
        %v464 = vpack.c.bf16 %v378, %v377
        %v465 = vpack.c.bf16 %v381, %v380
        %vm514 = vcmask 1046528
        %v515 = vrot.slane %v335, 1
        %v516 = vrot.slane %v336, 1
        %v517 = vsel %vm514, %v515, %v516
        %v518 = vrot.slane %v337, 1
        %v519 = vsel %vm514, %v516, %v518
        %v520 = vrot.slane %v338, 1
        %v521 = vrot.slane %v339, 1
        %v522 = vsel %vm514, %v520, %v521
        %v523 = vrot.slane %v340, 1
        %v524 = vsel %vm514, %v521, %v523
        %v525 = vrot.slane %v341, 1
        %v526 = vrot.slane %v342, 1
        %v527 = vsel %vm514, %v525, %v526
        %v528 = vrot.slane %v343, 1
        %v529 = vsel %vm514, %v526, %v528
        %v530 = vrot.slane %v344, 1
        %v531 = vrot.slane %v345, 1
        %v532 = vsel %vm514, %v530, %v531
        %v533 = vrot.slane %v346, 1
        %v534 = vsel %vm514, %v531, %v533
        %v535 = vrot.slane %v347, 1
        %v536 = vrot.slane %v348, 1
        %v537 = vsel %vm514, %v535, %v536
        %v538 = vrot.slane %v349, 1
        %v539 = vsel %vm514, %v536, %v538
        %v540 = vrot.slane %v350, 1
        %v541 = vrot.slane %v351, 1
        %v542 = vsel %vm514, %v540, %v541
        %v543 = vrot.slane %v352, 1
        %v544 = vsel %vm514, %v541, %v543
        %v545 = vrot.slane %v353, 1
        %v546 = vrot.slane %v354, 1
        %v547 = vsel %vm514, %v545, %v546
        %v548 = vrot.slane %v355, 1
        %v549 = vsel %vm514, %v546, %v548
        %v550 = vrot.slane %v356, 1
        %v551 = vrot.slane %v357, 1
        %v552 = vsel %vm514, %v550, %v551
        %v553 = vrot.slane %v358, 1
        %v554 = vsel %vm514, %v551, %v553
        %v555 = vrot.slane %v359, 1
        %v556 = vrot.slane %v360, 1
        %v557 = vsel %vm514, %v555, %v556
        %v558 = vrot.slane %v361, 1
        %v559 = vsel %vm514, %v556, %v558
        %v560 = vrot.slane %v362, 1
        %v561 = vrot.slane %v363, 1
        %v562 = vsel %vm514, %v560, %v561
        %v563 = vrot.slane %v364, 1
        %v564 = vsel %vm514, %v561, %v563
        %v565 = vrot.slane %v365, 1
        %v566 = vrot.slane %v366, 1
        %v567 = vsel %vm514, %v565, %v566
        %v568 = vrot.slane %v367, 1
        %v569 = vsel %vm514, %v566, %v568
        %v570 = vrot.slane %v368, 1
        %v571 = vrot.slane %v369, 1
        %v572 = vsel %vm514, %v570, %v571
        %v573 = vrot.slane %v370, 1
        %v574 = vsel %vm514, %v571, %v573
        %v575 = vrot.slane %v371, 1
        %v576 = vrot.slane %v372, 1
        %v577 = vsel %vm514, %v575, %v576
        %v578 = vrot.slane %v373, 1
        %v579 = vsel %vm514, %v576, %v578
        %v580 = vrot.slane %v374, 1
        %v581 = vrot.slane %v375, 1
        %v582 = vsel %vm514, %v580, %v581
        %v583 = vrot.slane %v376, 1
        %v584 = vsel %vm514, %v581, %v583
        %v585 = vrot.slane %v377, 1
        %v586 = vrot.slane %v378, 1
        %v587 = vsel %vm514, %v585, %v586
        %v588 = vrot.slane %v379, 1
        %v589 = vsel %vm514, %v586, %v588
        %v590 = vrot.slane %v380, 1
        %v591 = vrot.slane %v381, 1
        %v592 = vsel %vm514, %v590, %v591
        %v593 = vrot.slane %v382, 1
        %v594 = vsel %vm514, %v591, %v593
        %v627 = vpack.c.bf16 %v519, %v517
        %v628 = vpack.c.bf16 %v524, %v522
        %v629 = vpack.c.bf16 %v529, %v527
        %v630 = vpack.c.bf16 %v534, %v532
        %v631 = vpack.c.bf16 %v539, %v537
        %v632 = vpack.c.bf16 %v544, %v542
        %v633 = vpack.c.bf16 %v549, %v547
        %v634 = vpack.c.bf16 %v554, %v552
        %v635 = vpack.c.bf16 %v559, %v557
        %v636 = vpack.c.bf16 %v564, %v562
        %v637 = vpack.c.bf16 %v569, %v567
        %v638 = vpack.c.bf16 %v574, %v572
        %v639 = vpack.c.bf16 %v579, %v577
        %v640 = vpack.c.bf16 %v584, %v582
        %v641 = vpack.c.bf16 %v589, %v587
        %v642 = vpack.c.bf16 %v594, %v592
        %v659 = vunpack.c.l.b16 %v402
        %v660 = vunpack.c.h.b16 %v402
        %v661 = vunpack.c.l.b16 %v403
        %v662 = vunpack.c.h.b16 %v403
        %v663 = vunpack.c.l.b16 %v404
        %v664 = vunpack.c.h.b16 %v404
        %v665 = vunpack.c.l.b16 %v405
        %v666 = vunpack.c.h.b16 %v405
        %v667 = vunpack.c.l.b16 %v406
        %v668 = vunpack.c.h.b16 %v406
        %v669 = vunpack.c.l.b16 %v407
        %v670 = vunpack.c.h.b16 %v407
        %v671 = vunpack.c.l.b16 %v408
        %v672 = vunpack.c.h.b16 %v408
        %v673 = vunpack.c.l.b16 %v409
        %v674 = vunpack.c.h.b16 %v409
        %v675 = vunpack.c.l.b16 %v410
        %v676 = vunpack.c.h.b16 %v410
        %v677 = vunpack.c.l.b16 %v411
        %v678 = vunpack.c.h.b16 %v411
        %v679 = vunpack.c.l.b16 %v412
        %v680 = vunpack.c.h.b16 %v412
        %v681 = vunpack.c.l.b16 %v413
        %v682 = vunpack.c.h.b16 %v413
        %v683 = vunpack.c.l.b16 %v414
        %v684 = vunpack.c.h.b16 %v414
        %v685 = vunpack.c.l.b16 %v415
        %v686 = vunpack.c.h.b16 %v415
        %v687 = vunpack.c.l.b16 %v416
        %v688 = vunpack.c.h.b16 %v416
        %v689 = vunpack.c.l.b16 %v417
        %v690 = vunpack.c.h.b16 %v417
        %v691 = vpack.c.b16 %v661, %v659
        %v692 = vpack.c.b16 %v662, %v660
        %v693 = vpack.c.b16 %v665, %v663
        %v694 = vpack.c.b16 %v666, %v664
        %v695 = vpack.c.b16 %v669, %v667
        %v696 = vpack.c.b16 %v670, %v668
        %v697 = vpack.c.b16 %v673, %v671
        %v698 = vpack.c.b16 %v674, %v672
        %v699 = vpack.c.b16 %v677, %v675
        %v700 = vpack.c.b16 %v678, %v676
        %v701 = vpack.c.b16 %v681, %v679
        %v702 = vpack.c.b16 %v682, %v680
        %v703 = vpack.c.b16 %v685, %v683
        %v704 = vpack.c.b16 %v686, %v684
        %v705 = vpack.c.b16 %v689, %v687
        %v706 = vpack.c.b16 %v690, %v688
        %723 = vmatprep.subr.bf16.mxu0 %v692
        %724 = vmatpush1.bf16.msra.mxu0 %v691
        %725 = vmatprep.subr.bf16.mxu0 %v694
        %726 = vmatpush1.bf16.msra.mxu0 %v693
        %727 = vmatprep.subr.bf16.mxu0 %v696
        %728 = vmatpush1.bf16.msra.mxu0 %v695
        %729 = vmatprep.subr.bf16.mxu0 %v698
        %730 = vmatpush1.bf16.msra.mxu0 %v697
        %731 = vmatprep.subr.bf16.mxu0 %v700
        %732 = vmatpush1.bf16.msra.mxu0 %v699
        %733 = vmatprep.subr.bf16.mxu0 %v702
        %734 = vmatpush1.bf16.msra.mxu0 %v701
        %735 = vmatprep.subr.bf16.mxu0 %v704
        %736 = vmatpush1.bf16.msra.mxu0 %v703
        %737 = vmatprep.subr.bf16.mxu0 %v706
        %738 = vmatpush1.bf16.msra.mxu0 %v705
        %739 = vmatprep.subr.bf16.mxu0 0
        %740 = vmatpush1.bf16.msra.mxu0 0
        %741 = vmatprep.subr.bf16.mxu0 0
        %742 = vmatpush1.bf16.msra.mxu0 0
        %743 = vmatprep.subr.bf16.mxu0 0
        %744 = vmatpush1.bf16.msra.mxu0 0
        %745 = vmatprep.subr.bf16.mxu0 0
        %746 = vmatpush1.bf16.msra.mxu0 0
        %747 = vmatprep.subr.bf16.mxu0 0
        %748 = vmatpush1.bf16.msra.mxu0 0
        %749 = vmatprep.subr.bf16.mxu0 0
        %750 = vmatpush1.bf16.msra.mxu0 0
        %751 = vmatprep.subr.bf16.mxu0 0
        %752 = vmatpush1.bf16.msra.mxu0 0
        %753 = vmatprep.subr.bf16.mxu0 0
        %754 = vmatpush1.bf16.msra.mxu0 0
        %755 = vmatprep.mubr.bf16.mxu0 0
        %756 = vmatmul.mubr.bf16.gmra.mrb[0].mxu0 %v627
        %v757 = vpop.f32.mrb[0].mxu0
        %v758 = vadd.f32 0.0, %v757
        %v759 = vpop.f32.mrb[0].mxu0
        %v760 = vadd.f32 0.0, %v759
        %v761 = vpop.f32.mrb[0].mxu0
        %v762 = vadd.f32 0.0, %v761
        %v763 = vpop.f32.mrb[0].mxu0
        %v764 = vadd.f32 0.0, %v763
        %765 = vmatprep.mubr.bf16.mxu0 0
        %766 = vmatmul.mubr.bf16.gmra.mrb[0].mxu0 %v628
        %v767 = vpop.f32.mrb[0].mxu0
        %v768 = vadd.f32 0.0, %v767
        %v769 = vpop.f32.mrb[0].mxu0
        %v770 = vadd.f32 0.0, %v769
        %v771 = vpop.f32.mrb[0].mxu0
        %v772 = vadd.f32 0.0, %v771
        %v773 = vpop.f32.mrb[0].mxu0
        %v774 = vadd.f32 0.0, %v773
        %775 = vmatprep.mubr.bf16.mxu0 0
        %776 = vmatmul.mubr.bf16.gmra.mrb[0].mxu0 %v629
        %v777 = vpop.f32.mrb[0].mxu0
        %v778 = vadd.f32 0.0, %v777
        %v779 = vpop.f32.mrb[0].mxu0
        %v780 = vadd.f32 0.0, %v779
        %v781 = vpop.f32.mrb[0].mxu0
        %v782 = vadd.f32 0.0, %v781
        %v783 = vpop.f32.mrb[0].mxu0
        %v784 = vadd.f32 0.0, %v783
        %785 = vmatprep.mubr.bf16.mxu0 0
        %786 = vmatmul.mubr.bf16.gmra.mrb[0].mxu0 %v630
        %v787 = vpop.f32.mrb[0].mxu0
        %v788 = vadd.f32 0.0, %v787
        %v789 = vpop.f32.mrb[0].mxu0
        %v790 = vadd.f32 0.0, %v789
        %v791 = vpop.f32.mrb[0].mxu0
        %v792 = vadd.f32 0.0, %v791
        %v793 = vpop.f32.mrb[0].mxu0
        %v794 = vadd.f32 0.0, %v793
        %795 = vmatprep.mubr.bf16.mxu0 0
        %796 = vmatmul.mubr.bf16.gmra.mrb[0].mxu0 %v631
        %v797 = vpop.f32.mrb[0].mxu0
        %v798 = vadd.f32 0.0, %v797
        %v799 = vpop.f32.mrb[0].mxu0
        %v800 = vadd.f32 0.0, %v799
        %v801 = vpop.f32.mrb[0].mxu0
        %v802 = vadd.f32 0.0, %v801
        %v803 = vpop.f32.mrb[0].mxu0
        %v804 = vadd.f32 0.0, %v803
        %805 = vmatprep.mubr.bf16.mxu0 0
        %806 = vmatmul.mubr.bf16.gmra.mrb[0].mxu0 %v632
        %v807 = vpop.f32.mrb[0].mxu0
        %v808 = vadd.f32 0.0, %v807
        %v809 = vpop.f32.mrb[0].mxu0
        %v810 = vadd.f32 0.0, %v809
        %v811 = vpop.f32.mrb[0].mxu0
        %v812 = vadd.f32 0.0, %v811
        %v813 = vpop.f32.mrb[0].mxu0
        %v814 = vadd.f32 0.0, %v813
        %815 = vmatprep.mubr.bf16.mxu0 0
        %816 = vmatmul.mubr.bf16.gmra.mrb[0].mxu0 %v633
        %v817 = vpop.f32.mrb[0].mxu0
        %v818 = vadd.f32 0.0, %v817
        %v819 = vpop.f32.mrb[0].mxu0
        %v820 = vadd.f32 0.0, %v819
        %v821 = vpop.f32.mrb[0].mxu0
        %v822 = vadd.f32 0.0, %v821
        %v823 = vpop.f32.mrb[0].mxu0
        %v824 = vadd.f32 0.0, %v823
        %825 = vmatprep.mubr.bf16.mxu0 0
        %826 = vmatmul.mubr.bf16.gmra.mrb[0].mxu0 %v634
        %v827 = vpop.f32.mrb[0].mxu0
        %v828 = vadd.f32 0.0, %v827
        %v829 = vpop.f32.mrb[0].mxu0
        %v830 = vadd.f32 0.0, %v829
        %v831 = vpop.f32.mrb[0].mxu0
        %v832 = vadd.f32 0.0, %v831
        %v833 = vpop.f32.mrb[0].mxu0
        %v834 = vadd.f32 0.0, %v833
        %835 = vmatprep.mubr.bf16.mxu0 0
        %836 = vmatmul.mubr.bf16.gmra.mrb[0].mxu0 %v635
        %v837 = vpop.f32.mrb[0].mxu0
        %v838 = vadd.f32 0.0, %v837
        %v839 = vpop.f32.mrb[0].mxu0
        %v840 = vadd.f32 0.0, %v839
        %v841 = vpop.f32.mrb[0].mxu0
        %v842 = vadd.f32 0.0, %v841
        %v843 = vpop.f32.mrb[0].mxu0
        %v844 = vadd.f32 0.0, %v843
        %845 = vmatprep.mubr.bf16.mxu0 0
        %846 = vmatmul.mubr.bf16.gmra.mrb[0].mxu0 %v636
        %v847 = vpop.f32.mrb[0].mxu0
        %v848 = vadd.f32 0.0, %v847
        %v849 = vpop.f32.mrb[0].mxu0
        %v850 = vadd.f32 0.0, %v849
        %v851 = vpop.f32.mrb[0].mxu0
        %v852 = vadd.f32 0.0, %v851
        %v853 = vpop.f32.mrb[0].mxu0
        %v854 = vadd.f32 0.0, %v853
        %855 = vmatprep.mubr.bf16.mxu0 0
        %856 = vmatmul.mubr.bf16.gmra.mrb[0].mxu0 %v637
        %v857 = vpop.f32.mrb[0].mxu0
        %v858 = vadd.f32 0.0, %v857
        %v859 = vpop.f32.mrb[0].mxu0
        %v860 = vadd.f32 0.0, %v859
        %v861 = vpop.f32.mrb[0].mxu0
        %v862 = vadd.f32 0.0, %v861
        %v863 = vpop.f32.mrb[0].mxu0
        %v864 = vadd.f32 0.0, %v863
        %865 = vmatprep.mubr.bf16.mxu0 0
        %866 = vmatmul.mubr.bf16.gmra.mrb[0].mxu0 %v638
        %v867 = vpop.f32.mrb[0].mxu0
        %v868 = vadd.f32 0.0, %v867
        %v869 = vpop.f32.mrb[0].mxu0
        %v870 = vadd.f32 0.0, %v869
        %v871 = vpop.f32.mrb[0].mxu0
        %v872 = vadd.f32 0.0, %v871
        %v873 = vpop.f32.mrb[0].mxu0
        %v874 = vadd.f32 0.0, %v873
        %875 = vmatprep.mubr.bf16.mxu0 0
        %876 = vmatmul.mubr.bf16.gmra.mrb[0].mxu0 %v639
        %v877 = vpop.f32.mrb[0].mxu0
        %v878 = vadd.f32 0.0, %v877
        %v879 = vpop.f32.mrb[0].mxu0
        %v880 = vadd.f32 0.0, %v879
        %v881 = vpop.f32.mrb[0].mxu0
        %v882 = vadd.f32 0.0, %v881
        %v883 = vpop.f32.mrb[0].mxu0
        %v884 = vadd.f32 0.0, %v883
        %885 = vmatprep.mubr.bf16.mxu0 0
        %886 = vmatmul.mubr.bf16.gmra.mrb[0].mxu0 %v640
        %v887 = vpop.f32.mrb[0].mxu0
        %v888 = vadd.f32 0.0, %v887
        %v889 = vpop.f32.mrb[0].mxu0
        %v890 = vadd.f32 0.0, %v889
        %v891 = vpop.f32.mrb[0].mxu0
        %v892 = vadd.f32 0.0, %v891
        %v893 = vpop.f32.mrb[0].mxu0
        %v894 = vadd.f32 0.0, %v893
        %895 = vmatprep.mubr.bf16.mxu0 0
        %896 = vmatmul.mubr.bf16.gmra.mrb[0].mxu0 %v641
        %v897 = vpop.f32.mrb[0].mxu0
        %v898 = vadd.f32 0.0, %v897
        %v899 = vpop.f32.mrb[0].mxu0
        %v900 = vadd.f32 0.0, %v899
        %v901 = vpop.f32.mrb[0].mxu0
        %v902 = vadd.f32 0.0, %v901
        %v903 = vpop.f32.mrb[0].mxu0
        %v904 = vadd.f32 0.0, %v903
        %905 = vmatprep.mubr.bf16.mxu0 0
        %906 = vmatmul.mubr.bf16.gmra.mrb[0].mxu0 %v642
        %v907 = vpop.f32.mrb[0].mxu0
        %v908 = vadd.f32 0.0, %v907
        %v909 = vpop.f32.mrb[0].mxu0
        %v910 = vadd.f32 0.0, %v909
        %v911 = vpop.f32.mrb[0].mxu0
        %v912 = vadd.f32 0.0, %v911
        %v913 = vpop.f32.mrb[0].mxu0
        %v914 = vadd.f32 0.0, %v913
        %915 = vdwg.mxu0
        %v932 = vunpack.c.l.b16 %v386
        %v933 = vunpack.c.h.b16 %v386
        %v934 = vunpack.c.l.b16 %v387
        %v935 = vunpack.c.h.b16 %v387
        %v936 = vunpack.c.l.b16 %v388
        %v937 = vunpack.c.h.b16 %v388
        %v938 = vunpack.c.l.b16 %v389
        %v939 = vunpack.c.h.b16 %v389
        %v940 = vunpack.c.l.b16 %v390
        %v941 = vunpack.c.h.b16 %v390
        %v942 = vunpack.c.l.b16 %v391
        %v943 = vunpack.c.h.b16 %v391
        %v944 = vunpack.c.l.b16 %v392
        %v945 = vunpack.c.h.b16 %v392
        %v946 = vunpack.c.l.b16 %v393
        %v947 = vunpack.c.h.b16 %v393
        %v948 = vunpack.c.l.b16 %v394
        %v949 = vunpack.c.h.b16 %v394
        %v950 = vunpack.c.l.b16 %v395
        %v951 = vunpack.c.h.b16 %v395
        %v952 = vunpack.c.l.b16 %v396
        %v953 = vunpack.c.h.b16 %v396
        %v954 = vunpack.c.l.b16 %v397
        %v955 = vunpack.c.h.b16 %v397
        %v956 = vunpack.c.l.b16 %v398
        %v957 = vunpack.c.h.b16 %v398
        %v958 = vunpack.c.l.b16 %v399
        %v959 = vunpack.c.h.b16 %v399
        %v960 = vunpack.c.l.b16 %v400
        %v961 = vunpack.c.h.b16 %v400
        %v962 = vunpack.c.l.b16 %v401
        %v963 = vunpack.c.h.b16 %v401
        %v964 = vpack.c.b16 %v934, %v932
        %v965 = vpack.c.b16 %v935, %v933
        %v966 = vpack.c.b16 %v938, %v936
        %v967 = vpack.c.b16 %v939, %v937
        %v968 = vpack.c.b16 %v942, %v940
        %v969 = vpack.c.b16 %v943, %v941
        %v970 = vpack.c.b16 %v946, %v944
        %v971 = vpack.c.b16 %v947, %v945
        %v972 = vpack.c.b16 %v950, %v948
        %v973 = vpack.c.b16 %v951, %v949
        %v974 = vpack.c.b16 %v954, %v952
        %v975 = vpack.c.b16 %v955, %v953
        %v976 = vpack.c.b16 %v958, %v956
        %v977 = vpack.c.b16 %v959, %v957
        %v978 = vpack.c.b16 %v962, %v960
        %v979 = vpack.c.b16 %v963, %v961
        %996 = vmatprep.subr.bf16.mxu0 %v965
        %997 = vmatpush1.bf16.msra.mxu0 %v964
        %998 = vmatprep.subr.bf16.mxu0 %v967
        %999 = vmatpush1.bf16.msra.mxu0 %v966
        %1000 = vmatprep.subr.bf16.mxu0 %v969
        %1001 = vmatpush1.bf16.msra.mxu0 %v968
        %1002 = vmatprep.subr.bf16.mxu0 %v971
        %1003 = vmatpush1.bf16.msra.mxu0 %v970
        %1004 = vmatprep.subr.bf16.mxu0 %v973
        %1005 = vmatpush1.bf16.msra.mxu0 %v972
        %1006 = vmatprep.subr.bf16.mxu0 %v975
        %1007 = vmatpush1.bf16.msra.mxu0 %v974
        %1008 = vmatprep.subr.bf16.mxu0 %v977
        %1009 = vmatpush1.bf16.msra.mxu0 %v976
        %1010 = vmatprep.subr.bf16.mxu0 %v979
        %1011 = vmatpush1.bf16.msra.mxu0 %v978
        %1012 = vmatprep.subr.bf16.mxu0 0
        %1013 = vmatpush1.bf16.msra.mxu0 0
        %1014 = vmatprep.subr.bf16.mxu0 0
        %1015 = vmatpush1.bf16.msra.mxu0 0
        %1016 = vmatprep.subr.bf16.mxu0 0
        %1017 = vmatpush1.bf16.msra.mxu0 0
        %1018 = vmatprep.subr.bf16.mxu0 0
        %1019 = vmatpush1.bf16.msra.mxu0 0
        %1020 = vmatprep.subr.bf16.mxu0 0
        %1021 = vmatpush1.bf16.msra.mxu0 0
        %1022 = vmatprep.subr.bf16.mxu0 0
        %1023 = vmatpush1.bf16.msra.mxu0 0
        %1024 = vmatprep.subr.bf16.mxu0 0
        %1025 = vmatpush1.bf16.msra.mxu0 0
        %1026 = vmatprep.subr.bf16.mxu0 0
        %1027 = vmatpush1.bf16.msra.mxu0 0
        %1028 = vmatprep.mubr.bf16.mxu0 0
        %1029 = vmatmul.mubr.bf16.gmra.mrb[0].mxu0 %v450
        %v1030 = vpop.f32.mrb[0].mxu0
        %v1031 = vadd.f32 %v758, %v1030
        %v1032 = vpop.f32.mrb[0].mxu0
        %v1033 = vadd.f32 %v760, %v1032
        %v1034 = vpop.f32.mrb[0].mxu0
        %v1035 = vadd.f32 %v762, %v1034
        %v1036 = vpop.f32.mrb[0].mxu0
        %v1037 = vadd.f32 %v764, %v1036
        %1038 = vmatprep.mubr.bf16.mxu0 0
        %1039 = vmatmul.mubr.bf16.gmra.mrb[0].mxu0 %v451
        %v1040 = vpop.f32.mrb[0].mxu0
        %v1041 = vadd.f32 %v768, %v1040
        %v1042 = vpop.f32.mrb[0].mxu0
        %v1043 = vadd.f32 %v770, %v1042
        %v1044 = vpop.f32.mrb[0].mxu0
        %v1045 = vadd.f32 %v772, %v1044
        %v1046 = vpop.f32.mrb[0].mxu0
        %v1047 = vadd.f32 %v774, %v1046
        %1048 = vmatprep.mubr.bf16.mxu0 0
        %1049 = vmatmul.mubr.bf16.gmra.mrb[0].mxu0 %v452
        %v1050 = vpop.f32.mrb[0].mxu0
        %v1051 = vadd.f32 %v778, %v1050
        %v1052 = vpop.f32.mrb[0].mxu0
        %v1053 = vadd.f32 %v780, %v1052
        %v1054 = vpop.f32.mrb[0].mxu0
        %v1055 = vadd.f32 %v782, %v1054
        %v1056 = vpop.f32.mrb[0].mxu0
        %v1057 = vadd.f32 %v784, %v1056
        %1058 = vmatprep.mubr.bf16.mxu0 0
        %1059 = vmatmul.mubr.bf16.gmra.mrb[0].mxu0 %v453
        %v1060 = vpop.f32.mrb[0].mxu0
        %v1061 = vadd.f32 %v788, %v1060
        %v1062 = vpop.f32.mrb[0].mxu0
        %v1063 = vadd.f32 %v790, %v1062
        %v1064 = vpop.f32.mrb[0].mxu0
        %v1065 = vadd.f32 %v792, %v1064
        %v1066 = vpop.f32.mrb[0].mxu0
        %v1067 = vadd.f32 %v794, %v1066
        %1068 = vmatprep.mubr.bf16.mxu0 0
        %1069 = vmatmul.mubr.bf16.gmra.mrb[0].mxu0 %v454
        %v1070 = vpop.f32.mrb[0].mxu0
        %v1071 = vadd.f32 %v798, %v1070
        %v1072 = vpop.f32.mrb[0].mxu0
        %v1073 = vadd.f32 %v800, %v1072
        %v1074 = vpop.f32.mrb[0].mxu0
        %v1075 = vadd.f32 %v802, %v1074
        %v1076 = vpop.f32.mrb[0].mxu0
        %v1077 = vadd.f32 %v804, %v1076
        %1078 = vmatprep.mubr.bf16.mxu0 0
        %1079 = vmatmul.mubr.bf16.gmra.mrb[0].mxu0 %v455
        %v1080 = vpop.f32.mrb[0].mxu0
        %v1081 = vadd.f32 %v808, %v1080
        %v1082 = vpop.f32.mrb[0].mxu0
        %v1083 = vadd.f32 %v810, %v1082
        %v1084 = vpop.f32.mrb[0].mxu0
        %v1085 = vadd.f32 %v812, %v1084
        %v1086 = vpop.f32.mrb[0].mxu0
        %v1087 = vadd.f32 %v814, %v1086
        %1088 = vmatprep.mubr.bf16.mxu0 0
        %1089 = vmatmul.mubr.bf16.gmra.mrb[0].mxu0 %v456
        %v1090 = vpop.f32.mrb[0].mxu0
        %v1091 = vadd.f32 %v818, %v1090
        %v1092 = vpop.f32.mrb[0].mxu0
        %v1093 = vadd.f32 %v820, %v1092
        %v1094 = vpop.f32.mrb[0].mxu0
        %v1095 = vadd.f32 %v822, %v1094
        %v1096 = vpop.f32.mrb[0].mxu0
        %v1097 = vadd.f32 %v824, %v1096
        %1098 = vmatprep.mubr.bf16.mxu0 0
        %1099 = vmatmul.mubr.bf16.gmra.mrb[0].mxu0 %v457
        %v1100 = vpop.f32.mrb[0].mxu0
        %v1101 = vadd.f32 %v828, %v1100
        %v1102 = vpop.f32.mrb[0].mxu0
        %v1103 = vadd.f32 %v830, %v1102
        %v1104 = vpop.f32.mrb[0].mxu0
        %v1105 = vadd.f32 %v832, %v1104
        %v1106 = vpop.f32.mrb[0].mxu0
        %v1107 = vadd.f32 %v834, %v1106
        %1108 = vmatprep.mubr.bf16.mxu0 0
        %1109 = vmatmul.mubr.bf16.gmra.mrb[0].mxu0 %v458
        %v1110 = vpop.f32.mrb[0].mxu0
        %v1111 = vadd.f32 %v838, %v1110
        %v1112 = vpop.f32.mrb[0].mxu0
        %v1113 = vadd.f32 %v840, %v1112
        %v1114 = vpop.f32.mrb[0].mxu0
        %v1115 = vadd.f32 %v842, %v1114
        %v1116 = vpop.f32.mrb[0].mxu0
        %v1117 = vadd.f32 %v844, %v1116
        %1118 = vmatprep.mubr.bf16.mxu0 0
        %1119 = vmatmul.mubr.bf16.gmra.mrb[0].mxu0 %v459
        %v1120 = vpop.f32.mrb[0].mxu0
        %v1121 = vadd.f32 %v848, %v1120
        %v1122 = vpop.f32.mrb[0].mxu0
        %v1123 = vadd.f32 %v850, %v1122
        %v1124 = vpop.f32.mrb[0].mxu0
        %v1125 = vadd.f32 %v852, %v1124
        %v1126 = vpop.f32.mrb[0].mxu0
        %v1127 = vadd.f32 %v854, %v1126
        %1128 = vmatprep.mubr.bf16.mxu0 0
        %1129 = vmatmul.mubr.bf16.gmra.mrb[0].mxu0 %v460
        %v1130 = vpop.f32.mrb[0].mxu0
        %v1131 = vadd.f32 %v858, %v1130
        %v1132 = vpop.f32.mrb[0].mxu0
        %v1133 = vadd.f32 %v860, %v1132
        %v1134 = vpop.f32.mrb[0].mxu0
        %v1135 = vadd.f32 %v862, %v1134
        %v1136 = vpop.f32.mrb[0].mxu0
        %v1137 = vadd.f32 %v864, %v1136
        %1138 = vmatprep.mubr.bf16.mxu0 0
        %1139 = vmatmul.mubr.bf16.gmra.mrb[0].mxu0 %v461
        %v1140 = vpop.f32.mrb[0].mxu0
        %v1141 = vadd.f32 %v868, %v1140
        %v1142 = vpop.f32.mrb[0].mxu0
        %v1143 = vadd.f32 %v870, %v1142
        %v1144 = vpop.f32.mrb[0].mxu0
        %v1145 = vadd.f32 %v872, %v1144
        %v1146 = vpop.f32.mrb[0].mxu0
        %v1147 = vadd.f32 %v874, %v1146
        %1148 = vmatprep.mubr.bf16.mxu0 0
        %1149 = vmatmul.mubr.bf16.gmra.mrb[0].mxu0 %v462
        %v1150 = vpop.f32.mrb[0].mxu0
        %v1151 = vadd.f32 %v878, %v1150
        %v1152 = vpop.f32.mrb[0].mxu0
        %v1153 = vadd.f32 %v880, %v1152
        %v1154 = vpop.f32.mrb[0].mxu0
        %v1155 = vadd.f32 %v882, %v1154
        %v1156 = vpop.f32.mrb[0].mxu0
        %v1157 = vadd.f32 %v884, %v1156
        %1158 = vmatprep.mubr.bf16.mxu0 0
        %1159 = vmatmul.mubr.bf16.gmra.mrb[0].mxu0 %v463
        %v1160 = vpop.f32.mrb[0].mxu0
        %v1161 = vadd.f32 %v888, %v1160
        %v1162 = vpop.f32.mrb[0].mxu0
        %v1163 = vadd.f32 %v890, %v1162
        %v1164 = vpop.f32.mrb[0].mxu0
        %v1165 = vadd.f32 %v892, %v1164
        %v1166 = vpop.f32.mrb[0].mxu0
        %v1167 = vadd.f32 %v894, %v1166
        %1168 = vmatprep.mubr.bf16.mxu0 0
        %1169 = vmatmul.mubr.bf16.gmra.mrb[0].mxu0 %v464
        %v1170 = vpop.f32.mrb[0].mxu0
        %v1171 = vadd.f32 %v898, %v1170
        %v1172 = vpop.f32.mrb[0].mxu0
        %v1173 = vadd.f32 %v900, %v1172
        %v1174 = vpop.f32.mrb[0].mxu0
        %v1175 = vadd.f32 %v902, %v1174
        %v1176 = vpop.f32.mrb[0].mxu0
        %v1177 = vadd.f32 %v904, %v1176
        %1178 = vmatprep.mubr.bf16.mxu0 0
        %1179 = vmatmul.mubr.bf16.gmra.mrb[0].mxu0 %v465
        %v1180 = vpop.f32.mrb[0].mxu0
        %v1181 = vadd.f32 %v908, %v1180
        %v1182 = vpop.f32.mrb[0].mxu0
        %v1183 = vadd.f32 %v910, %v1182
        %v1184 = vpop.f32.mrb[0].mxu0
        %v1185 = vadd.f32 %v912, %v1184
        %v1186 = vpop.f32.mrb[0].mxu0
        %v1187 = vadd.f32 %v914, %v1186
        %1188 = vdwg.mxu0
        %v1189 = vpack.c.bf16 %v384, %v383
        %v1206 = vunpack.c.l.b16 %v418
        %v1207 = vunpack.c.h.b16 %v418
        %v1208 = vunpack.c.l.b16 %v419
        %v1209 = vunpack.c.h.b16 %v419
        %v1210 = vunpack.c.l.b16 %v420
        %v1211 = vunpack.c.h.b16 %v420
        %v1212 = vunpack.c.l.b16 %v421
        %v1213 = vunpack.c.h.b16 %v421
        %v1214 = vunpack.c.l.b16 %v422
        %v1215 = vunpack.c.h.b16 %v422
        %v1216 = vunpack.c.l.b16 %v423
        %v1217 = vunpack.c.h.b16 %v423
        %v1218 = vunpack.c.l.b16 %v424
        %v1219 = vunpack.c.h.b16 %v424
        %v1220 = vunpack.c.l.b16 %v425
        %v1221 = vunpack.c.h.b16 %v425
        %v1222 = vunpack.c.l.b16 %v426
        %v1223 = vunpack.c.h.b16 %v426
        %v1224 = vunpack.c.l.b16 %v427
        %v1225 = vunpack.c.h.b16 %v427
        %v1226 = vunpack.c.l.b16 %v428
        %v1227 = vunpack.c.h.b16 %v428
        %v1228 = vunpack.c.l.b16 %v429
        %v1229 = vunpack.c.h.b16 %v429
        %v1230 = vunpack.c.l.b16 %v430
        %v1231 = vunpack.c.h.b16 %v430
        %v1232 = vunpack.c.l.b16 %v431
        %v1233 = vunpack.c.h.b16 %v431
        %v1234 = vunpack.c.l.b16 %v432
        %v1235 = vunpack.c.h.b16 %v432
        %v1236 = vunpack.c.l.b16 %v433
        %v1237 = vunpack.c.h.b16 %v433
        %v1238 = vpack.c.b16 %v1208, %v1206
        %v1239 = vpack.c.b16 %v1209, %v1207
        %v1240 = vpack.c.b16 %v1212, %v1210
        %v1241 = vpack.c.b16 %v1213, %v1211
        %v1242 = vpack.c.b16 %v1216, %v1214
        %v1243 = vpack.c.b16 %v1217, %v1215
        %v1244 = vpack.c.b16 %v1220, %v1218
        %v1245 = vpack.c.b16 %v1221, %v1219
        %v1246 = vpack.c.b16 %v1224, %v1222
        %v1247 = vpack.c.b16 %v1225, %v1223
        %v1248 = vpack.c.b16 %v1228, %v1226
        %v1249 = vpack.c.b16 %v1229, %v1227
        %v1250 = vpack.c.b16 %v1232, %v1230
        %v1251 = vpack.c.b16 %v1233, %v1231
        %v1252 = vpack.c.b16 %v1236, %v1234
        %v1253 = vpack.c.b16 %v1237, %v1235
        %1270 = vmatprep.subr.bf16.mxu0 %v1239
        %1271 = vmatpush1.bf16.msra.mxu0 %v1238
        %1272 = vmatprep.subr.bf16.mxu0 %v1241
        %1273 = vmatpush1.bf16.msra.mxu0 %v1240
        %1274 = vmatprep.subr.bf16.mxu0 %v1243
        %1275 = vmatpush1.bf16.msra.mxu0 %v1242
        %1276 = vmatprep.subr.bf16.mxu0 %v1245
        %1277 = vmatpush1.bf16.msra.mxu0 %v1244
        %1278 = vmatprep.subr.bf16.mxu0 %v1247
        %1279 = vmatpush1.bf16.msra.mxu0 %v1246
        %1280 = vmatprep.subr.bf16.mxu0 %v1249
        %1281 = vmatpush1.bf16.msra.mxu0 %v1248
        %1282 = vmatprep.subr.bf16.mxu0 %v1251
        %1283 = vmatpush1.bf16.msra.mxu0 %v1250
        %1284 = vmatprep.subr.bf16.mxu0 %v1253
        %1285 = vmatpush1.bf16.msra.mxu0 %v1252
        %1286 = vmatprep.subr.bf16.mxu0 0
        %1287 = vmatpush1.bf16.msra.mxu0 0
        %1288 = vmatprep.subr.bf16.mxu0 0
        %1289 = vmatpush1.bf16.msra.mxu0 0
        %1290 = vmatprep.subr.bf16.mxu0 0
        %1291 = vmatpush1.bf16.msra.mxu0 0
        %1292 = vmatprep.subr.bf16.mxu0 0
        %1293 = vmatpush1.bf16.msra.mxu0 0
        %1294 = vmatprep.subr.bf16.mxu0 0
        %1295 = vmatpush1.bf16.msra.mxu0 0
        %1296 = vmatprep.subr.bf16.mxu0 0
        %1297 = vmatpush1.bf16.msra.mxu0 0
        %1298 = vmatprep.subr.bf16.mxu0 0
        %1299 = vmatpush1.bf16.msra.mxu0 0
        %1300 = vmatprep.subr.bf16.mxu0 0
        %1301 = vmatpush1.bf16.msra.mxu0 0
        %1302 = vmatprep.mubr.bf16.mxu0 0
        %1303 = vmatmul.mubr.bf16.gmra.mrb[0].mxu0 %v451
        %v1304 = vpop.f32.mrb[0].mxu0
        %v1305 = vadd.f32 0.0, %v1304
        %v1306 = vpop.f32.mrb[0].mxu0
        %v1307 = vadd.f32 0.0, %v1306
        %v1308 = vpop.f32.mrb[0].mxu0
        %v1309 = vadd.f32 0.0, %v1308
        %v1310 = vpop.f32.mrb[0].mxu0
        %v1311 = vadd.f32 0.0, %v1310
        %1312 = vmatprep.mubr.bf16.mxu0 0
        %1313 = vmatmul.mubr.bf16.gmra.mrb[0].mxu0 %v452
        %v1314 = vpop.f32.mrb[0].mxu0
        %v1315 = vadd.f32 0.0, %v1314
        %v1316 = vpop.f32.mrb[0].mxu0
        %v1317 = vadd.f32 0.0, %v1316
        %v1318 = vpop.f32.mrb[0].mxu0
        %v1319 = vadd.f32 0.0, %v1318
        %v1320 = vpop.f32.mrb[0].mxu0
        %v1321 = vadd.f32 0.0, %v1320
        %1322 = vmatprep.mubr.bf16.mxu0 0
        %1323 = vmatmul.mubr.bf16.gmra.mrb[0].mxu0 %v453
        %v1324 = vpop.f32.mrb[0].mxu0
        %v1325 = vadd.f32 0.0, %v1324
        %v1326 = vpop.f32.mrb[0].mxu0
        %v1327 = vadd.f32 0.0, %v1326
        %v1328 = vpop.f32.mrb[0].mxu0
        %v1329 = vadd.f32 0.0, %v1328
        %v1330 = vpop.f32.mrb[0].mxu0
        %v1331 = vadd.f32 0.0, %v1330
        %1332 = vmatprep.mubr.bf16.mxu0 0
        %1333 = vmatmul.mubr.bf16.gmra.mrb[0].mxu0 %v454
        %v1334 = vpop.f32.mrb[0].mxu0
        %v1335 = vadd.f32 0.0, %v1334
        %v1336 = vpop.f32.mrb[0].mxu0
        %v1337 = vadd.f32 0.0, %v1336
        %v1338 = vpop.f32.mrb[0].mxu0
        %v1339 = vadd.f32 0.0, %v1338
        %v1340 = vpop.f32.mrb[0].mxu0
        %v1341 = vadd.f32 0.0, %v1340
        %1342 = vmatprep.mubr.bf16.mxu0 0
        %1343 = vmatmul.mubr.bf16.gmra.mrb[0].mxu0 %v455
        %v1344 = vpop.f32.mrb[0].mxu0
        %v1345 = vadd.f32 0.0, %v1344
        %v1346 = vpop.f32.mrb[0].mxu0
        %v1347 = vadd.f32 0.0, %v1346
        %v1348 = vpop.f32.mrb[0].mxu0
        %v1349 = vadd.f32 0.0, %v1348
        %v1350 = vpop.f32.mrb[0].mxu0
        %v1351 = vadd.f32 0.0, %v1350
        %1352 = vmatprep.mubr.bf16.mxu0 0
        %1353 = vmatmul.mubr.bf16.gmra.mrb[0].mxu0 %v456
        %v1354 = vpop.f32.mrb[0].mxu0
        %v1355 = vadd.f32 0.0, %v1354
        %v1356 = vpop.f32.mrb[0].mxu0
        %v1357 = vadd.f32 0.0, %v1356
        %v1358 = vpop.f32.mrb[0].mxu0
        %v1359 = vadd.f32 0.0, %v1358
        %v1360 = vpop.f32.mrb[0].mxu0
        %v1361 = vadd.f32 0.0, %v1360
        %1362 = vmatprep.mubr.bf16.mxu0 0
        %1363 = vmatmul.mubr.bf16.gmra.mrb[0].mxu0 %v457
        %v1364 = vpop.f32.mrb[0].mxu0
        %v1365 = vadd.f32 0.0, %v1364
        %v1366 = vpop.f32.mrb[0].mxu0
        %v1367 = vadd.f32 0.0, %v1366
        %v1368 = vpop.f32.mrb[0].mxu0
        %v1369 = vadd.f32 0.0, %v1368
        %v1370 = vpop.f32.mrb[0].mxu0
        %v1371 = vadd.f32 0.0, %v1370
        %1372 = vmatprep.mubr.bf16.mxu0 0
        %1373 = vmatmul.mubr.bf16.gmra.mrb[0].mxu0 %v458
        %v1374 = vpop.f32.mrb[0].mxu0
        %v1375 = vadd.f32 0.0, %v1374
        %v1376 = vpop.f32.mrb[0].mxu0
        %v1377 = vadd.f32 0.0, %v1376
        %v1378 = vpop.f32.mrb[0].mxu0
        %v1379 = vadd.f32 0.0, %v1378
        %v1380 = vpop.f32.mrb[0].mxu0
        %v1381 = vadd.f32 0.0, %v1380
        %1382 = vmatprep.mubr.bf16.mxu0 0
        %1383 = vmatmul.mubr.bf16.gmra.mrb[0].mxu0 %v459
        %v1384 = vpop.f32.mrb[0].mxu0
        %v1385 = vadd.f32 0.0, %v1384
        %v1386 = vpop.f32.mrb[0].mxu0
        %v1387 = vadd.f32 0.0, %v1386
        %v1388 = vpop.f32.mrb[0].mxu0
        %v1389 = vadd.f32 0.0, %v1388
        %v1390 = vpop.f32.mrb[0].mxu0
        %v1391 = vadd.f32 0.0, %v1390
        %1392 = vmatprep.mubr.bf16.mxu0 0
        %1393 = vmatmul.mubr.bf16.gmra.mrb[0].mxu0 %v460
        %v1394 = vpop.f32.mrb[0].mxu0
        %v1395 = vadd.f32 0.0, %v1394
        %v1396 = vpop.f32.mrb[0].mxu0
        %v1397 = vadd.f32 0.0, %v1396
        %v1398 = vpop.f32.mrb[0].mxu0
        %v1399 = vadd.f32 0.0, %v1398
        %v1400 = vpop.f32.mrb[0].mxu0
        %v1401 = vadd.f32 0.0, %v1400
        %1402 = vmatprep.mubr.bf16.mxu0 0
        %1403 = vmatmul.mubr.bf16.gmra.mrb[0].mxu0 %v461
        %v1404 = vpop.f32.mrb[0].mxu0
        %v1405 = vadd.f32 0.0, %v1404
        %v1406 = vpop.f32.mrb[0].mxu0
        %v1407 = vadd.f32 0.0, %v1406
        %v1408 = vpop.f32.mrb[0].mxu0
        %v1409 = vadd.f32 0.0, %v1408
        %v1410 = vpop.f32.mrb[0].mxu0
        %v1411 = vadd.f32 0.0, %v1410
        %1412 = vmatprep.mubr.bf16.mxu0 0
        %1413 = vmatmul.mubr.bf16.gmra.mrb[0].mxu0 %v462
        %v1414 = vpop.f32.mrb[0].mxu0
        %v1415 = vadd.f32 0.0, %v1414
        %v1416 = vpop.f32.mrb[0].mxu0
        %v1417 = vadd.f32 0.0, %v1416
        %v1418 = vpop.f32.mrb[0].mxu0
        %v1419 = vadd.f32 0.0, %v1418
        %v1420 = vpop.f32.mrb[0].mxu0
        %v1421 = vadd.f32 0.0, %v1420
        %1422 = vmatprep.mubr.bf16.mxu0 0
        %1423 = vmatmul.mubr.bf16.gmra.mrb[0].mxu0 %v463
        %v1424 = vpop.f32.mrb[0].mxu0
        %v1425 = vadd.f32 0.0, %v1424
        %v1426 = vpop.f32.mrb[0].mxu0
        %v1427 = vadd.f32 0.0, %v1426
        %v1428 = vpop.f32.mrb[0].mxu0
        %v1429 = vadd.f32 0.0, %v1428
        %v1430 = vpop.f32.mrb[0].mxu0
        %v1431 = vadd.f32 0.0, %v1430
        %1432 = vmatprep.mubr.bf16.mxu0 0
        %1433 = vmatmul.mubr.bf16.gmra.mrb[0].mxu0 %v464
        %v1434 = vpop.f32.mrb[0].mxu0
        %v1435 = vadd.f32 0.0, %v1434
        %v1436 = vpop.f32.mrb[0].mxu0
        %v1437 = vadd.f32 0.0, %v1436
        %v1438 = vpop.f32.mrb[0].mxu0
        %v1439 = vadd.f32 0.0, %v1438
        %v1440 = vpop.f32.mrb[0].mxu0
        %v1441 = vadd.f32 0.0, %v1440
        %1442 = vmatprep.mubr.bf16.mxu0 0
        %1443 = vmatmul.mubr.bf16.gmra.mrb[0].mxu0 %v465
        %v1444 = vpop.f32.mrb[0].mxu0
        %v1445 = vadd.f32 0.0, %v1444
        %v1446 = vpop.f32.mrb[0].mxu0
        %v1447 = vadd.f32 0.0, %v1446
        %v1448 = vpop.f32.mrb[0].mxu0
        %v1449 = vadd.f32 0.0, %v1448
        %v1450 = vpop.f32.mrb[0].mxu0
        %v1451 = vadd.f32 0.0, %v1450
        %1452 = vmatprep.mubr.bf16.mxu0 0
        %1453 = vmatmul.mubr.bf16.gmra.mrb[0].mxu0 %v1189
        %v1454 = vpop.f32.mrb[0].mxu0
        %v1455 = vadd.f32 0.0, %v1454
        %v1456 = vpop.f32.mrb[0].mxu0
        %v1457 = vadd.f32 0.0, %v1456
        %v1458 = vpop.f32.mrb[0].mxu0
        %v1459 = vadd.f32 0.0, %v1458
        %v1460 = vpop.f32.mrb[0].mxu0
        %v1461 = vadd.f32 0.0, %v1460
        %1462 = vdwg.mxu0
        %v1463 = vadd.f32 %v1031, %v1305
        %v1464 = vadd.f32 %v1033, %v1307
        %v1465 = vadd.f32 %v1035, %v1309
        %v1466 = vadd.f32 %v1037, %v1311
        %v1467 = vadd.f32 %v1041, %v1315
        %v1468 = vadd.f32 %v1043, %v1317
        %v1469 = vadd.f32 %v1045, %v1319
        %v1470 = vadd.f32 %v1047, %v1321
        %v1471 = vadd.f32 %v1051, %v1325
        %v1472 = vadd.f32 %v1053, %v1327
        %v1473 = vadd.f32 %v1055, %v1329
        %v1474 = vadd.f32 %v1057, %v1331
        %v1475 = vadd.f32 %v1061, %v1335
        %v1476 = vadd.f32 %v1063, %v1337
        %v1477 = vadd.f32 %v1065, %v1339
        %v1478 = vadd.f32 %v1067, %v1341
        %v1479 = vadd.f32 %v1071, %v1345
        %v1480 = vadd.f32 %v1073, %v1347
        %v1481 = vadd.f32 %v1075, %v1349
        %v1482 = vadd.f32 %v1077, %v1351
        %v1483 = vadd.f32 %v1081, %v1355
        %v1484 = vadd.f32 %v1083, %v1357
        %v1485 = vadd.f32 %v1085, %v1359
        %v1486 = vadd.f32 %v1087, %v1361
        %v1487 = vadd.f32 %v1091, %v1365
        %v1488 = vadd.f32 %v1093, %v1367
        %v1489 = vadd.f32 %v1095, %v1369
        %v1490 = vadd.f32 %v1097, %v1371
        %v1491 = vadd.f32 %v1101, %v1375
        %v1492 = vadd.f32 %v1103, %v1377
        %v1493 = vadd.f32 %v1105, %v1379
        %v1494 = vadd.f32 %v1107, %v1381
        %v1495 = vadd.f32 %v1111, %v1385
        %v1496 = vadd.f32 %v1113, %v1387
        %v1497 = vadd.f32 %v1115, %v1389
        %v1498 = vadd.f32 %v1117, %v1391
        %v1499 = vadd.f32 %v1121, %v1395
        %v1500 = vadd.f32 %v1123, %v1397
        %v1501 = vadd.f32 %v1125, %v1399
        %v1502 = vadd.f32 %v1127, %v1401
        %v1503 = vadd.f32 %v1131, %v1405
        %v1504 = vadd.f32 %v1133, %v1407
        %v1505 = vadd.f32 %v1135, %v1409
        %v1506 = vadd.f32 %v1137, %v1411
        %v1507 = vadd.f32 %v1141, %v1415
        %v1508 = vadd.f32 %v1143, %v1417
        %v1509 = vadd.f32 %v1145, %v1419
        %v1510 = vadd.f32 %v1147, %v1421
        %v1511 = vadd.f32 %v1151, %v1425
        %v1512 = vadd.f32 %v1153, %v1427
        %v1513 = vadd.f32 %v1155, %v1429
        %v1514 = vadd.f32 %v1157, %v1431
        %v1515 = vadd.f32 %v1161, %v1435
        %v1516 = vadd.f32 %v1163, %v1437
        %v1517 = vadd.f32 %v1165, %v1439
        %v1518 = vadd.f32 %v1167, %v1441
        %v1519 = vadd.f32 %v1171, %v1445
        %v1520 = vadd.f32 %v1173, %v1447
        %v1521 = vadd.f32 %v1175, %v1449
        %v1522 = vadd.f32 %v1177, %v1451
        %v1523 = vadd.f32 %v1181, %v1455
        %v1524 = vadd.f32 %v1183, %v1457
        %v1525 = vadd.f32 %v1185, %v1459
        %v1526 = vadd.f32 %v1187, %v1461
        %v1530 = vrot.slane %v383, 1
        %v1531 = vrot.slane %v384, 1
        %v1532 = vsel %vm514, %v1530, %v1531
        %v1533 = vrot.slane %v385, 1
        %v1534 = vsel %vm514, %v1531, %v1533
        %v1537 = vpack.c.bf16 %v1534, %v1532
        %v1554 = vunpack.c.l.b16 %v434
        %v1555 = vunpack.c.h.b16 %v434
        %v1556 = vunpack.c.l.b16 %v435
        %v1557 = vunpack.c.h.b16 %v435
        %v1558 = vunpack.c.l.b16 %v436
        %v1559 = vunpack.c.h.b16 %v436
        %v1560 = vunpack.c.l.b16 %v437
        %v1561 = vunpack.c.h.b16 %v437
        %v1562 = vunpack.c.l.b16 %v438
        %v1563 = vunpack.c.h.b16 %v438
        %v1564 = vunpack.c.l.b16 %v439
        %v1565 = vunpack.c.h.b16 %v439
        %v1566 = vunpack.c.l.b16 %v440
        %v1567 = vunpack.c.h.b16 %v440
        %v1568 = vunpack.c.l.b16 %v441
        %v1569 = vunpack.c.h.b16 %v441
        %v1570 = vunpack.c.l.b16 %v442
        %v1571 = vunpack.c.h.b16 %v442
        %v1572 = vunpack.c.l.b16 %v443
        %v1573 = vunpack.c.h.b16 %v443
        %v1574 = vunpack.c.l.b16 %v444
        %v1575 = vunpack.c.h.b16 %v444
        %v1576 = vunpack.c.l.b16 %v445
        %v1577 = vunpack.c.h.b16 %v445
        %v1578 = vunpack.c.l.b16 %v446
        %v1579 = vunpack.c.h.b16 %v446
        %v1580 = vunpack.c.l.b16 %v447
        %v1581 = vunpack.c.h.b16 %v447
        %v1582 = vunpack.c.l.b16 %v448
        %v1583 = vunpack.c.h.b16 %v448
        %v1584 = vunpack.c.l.b16 %v449
        %v1585 = vunpack.c.h.b16 %v449
        %v1586 = vpack.c.b16 %v1556, %v1554
        %v1587 = vpack.c.b16 %v1557, %v1555
        %v1588 = vpack.c.b16 %v1560, %v1558
        %v1589 = vpack.c.b16 %v1561, %v1559
        %v1590 = vpack.c.b16 %v1564, %v1562
        %v1591 = vpack.c.b16 %v1565, %v1563
        %v1592 = vpack.c.b16 %v1568, %v1566
        %v1593 = vpack.c.b16 %v1569, %v1567
        %v1594 = vpack.c.b16 %v1572, %v1570
        %v1595 = vpack.c.b16 %v1573, %v1571
        %v1596 = vpack.c.b16 %v1576, %v1574
        %v1597 = vpack.c.b16 %v1577, %v1575
        %v1598 = vpack.c.b16 %v1580, %v1578
        %v1599 = vpack.c.b16 %v1581, %v1579
        %v1600 = vpack.c.b16 %v1584, %v1582
        %v1601 = vpack.c.b16 %v1585, %v1583
        %1618 = vmatprep.subr.bf16.mxu0 %v1587
        %1619 = vmatpush1.bf16.msra.mxu0 %v1586
        %1620 = vmatprep.subr.bf16.mxu0 %v1589
        %1621 = vmatpush1.bf16.msra.mxu0 %v1588
        %1622 = vmatprep.subr.bf16.mxu0 %v1591
        %1623 = vmatpush1.bf16.msra.mxu0 %v1590
        %1624 = vmatprep.subr.bf16.mxu0 %v1593
        %1625 = vmatpush1.bf16.msra.mxu0 %v1592
        %1626 = vmatprep.subr.bf16.mxu0 %v1595
        %1627 = vmatpush1.bf16.msra.mxu0 %v1594
        %1628 = vmatprep.subr.bf16.mxu0 %v1597
        %1629 = vmatpush1.bf16.msra.mxu0 %v1596
        %1630 = vmatprep.subr.bf16.mxu0 %v1599
        %1631 = vmatpush1.bf16.msra.mxu0 %v1598
        %1632 = vmatprep.subr.bf16.mxu0 %v1601
        %1633 = vmatpush1.bf16.msra.mxu0 %v1600
        %1634 = vmatprep.subr.bf16.mxu0 0
        %1635 = vmatpush1.bf16.msra.mxu0 0
        %1636 = vmatprep.subr.bf16.mxu0 0
        %1637 = vmatpush1.bf16.msra.mxu0 0
        %1638 = vmatprep.subr.bf16.mxu0 0
        %1639 = vmatpush1.bf16.msra.mxu0 0
        %1640 = vmatprep.subr.bf16.mxu0 0
        %1641 = vmatpush1.bf16.msra.mxu0 0
        %1642 = vmatprep.subr.bf16.mxu0 0
        %1643 = vmatpush1.bf16.msra.mxu0 0
        %1644 = vmatprep.subr.bf16.mxu0 0
        %1645 = vmatpush1.bf16.msra.mxu0 0
        %1646 = vmatprep.subr.bf16.mxu0 0
        %1647 = vmatpush1.bf16.msra.mxu0 0
        %1648 = vmatprep.subr.bf16.mxu0 0
        %1649 = vmatpush1.bf16.msra.mxu0 0
        %1650 = vmatprep.mubr.bf16.mxu0 0
        %1651 = vmatmul.mubr.bf16.gmra.mrb[0].mxu0 %v628
        %v1652 = vpop.f32.mrb[0].mxu0
        %v1653 = vadd.f32 0.0, %v1652
        %v1654 = vpop.f32.mrb[0].mxu0
        %v1655 = vadd.f32 0.0, %v1654
        %v1656 = vpop.f32.mrb[0].mxu0
        %v1657 = vadd.f32 0.0, %v1656
        %v1658 = vpop.f32.mrb[0].mxu0
        %v1659 = vadd.f32 0.0, %v1658
        %1660 = vmatprep.mubr.bf16.mxu0 0
        %1661 = vmatmul.mubr.bf16.gmra.mrb[0].mxu0 %v629
        %v1662 = vpop.f32.mrb[0].mxu0
        %v1663 = vadd.f32 0.0, %v1662
        %v1664 = vpop.f32.mrb[0].mxu0
        %v1665 = vadd.f32 0.0, %v1664
        %v1666 = vpop.f32.mrb[0].mxu0
        %v1667 = vadd.f32 0.0, %v1666
        %v1668 = vpop.f32.mrb[0].mxu0
        %v1669 = vadd.f32 0.0, %v1668
        %1670 = vmatprep.mubr.bf16.mxu0 0
        %1671 = vmatmul.mubr.bf16.gmra.mrb[0].mxu0 %v630
        %v1672 = vpop.f32.mrb[0].mxu0
        %v1673 = vadd.f32 0.0, %v1672
        %v1674 = vpop.f32.mrb[0].mxu0
        %v1675 = vadd.f32 0.0, %v1674
        %v1676 = vpop.f32.mrb[0].mxu0
        %v1677 = vadd.f32 0.0, %v1676
        %v1678 = vpop.f32.mrb[0].mxu0
        %v1679 = vadd.f32 0.0, %v1678
        %1680 = vmatprep.mubr.bf16.mxu0 0
        %1681 = vmatmul.mubr.bf16.gmra.mrb[0].mxu0 %v631
        %v1682 = vpop.f32.mrb[0].mxu0
        %v1683 = vadd.f32 0.0, %v1682
        %v1684 = vpop.f32.mrb[0].mxu0
        %v1685 = vadd.f32 0.0, %v1684
        %v1686 = vpop.f32.mrb[0].mxu0
        %v1687 = vadd.f32 0.0, %v1686
        %v1688 = vpop.f32.mrb[0].mxu0
        %v1689 = vadd.f32 0.0, %v1688
        %1690 = vmatprep.mubr.bf16.mxu0 0
        %1691 = vmatmul.mubr.bf16.gmra.mrb[0].mxu0 %v632
        %v1692 = vpop.f32.mrb[0].mxu0
        %v1693 = vadd.f32 0.0, %v1692
        %v1694 = vpop.f32.mrb[0].mxu0
        %v1695 = vadd.f32 0.0, %v1694
        %v1696 = vpop.f32.mrb[0].mxu0
        %v1697 = vadd.f32 0.0, %v1696
        %v1698 = vpop.f32.mrb[0].mxu0
        %v1699 = vadd.f32 0.0, %v1698
        %1700 = vmatprep.mubr.bf16.mxu0 0
        %1701 = vmatmul.mubr.bf16.gmra.mrb[0].mxu0 %v633
        %v1702 = vpop.f32.mrb[0].mxu0
        %v1703 = vadd.f32 0.0, %v1702
        %v1704 = vpop.f32.mrb[0].mxu0
        %v1705 = vadd.f32 0.0, %v1704
        %v1706 = vpop.f32.mrb[0].mxu0
        %v1707 = vadd.f32 0.0, %v1706
        %v1708 = vpop.f32.mrb[0].mxu0
        %v1709 = vadd.f32 0.0, %v1708
        %1710 = vmatprep.mubr.bf16.mxu0 0
        %1711 = vmatmul.mubr.bf16.gmra.mrb[0].mxu0 %v634
        %v1712 = vpop.f32.mrb[0].mxu0
        %v1713 = vadd.f32 0.0, %v1712
        %v1714 = vpop.f32.mrb[0].mxu0
        %v1715 = vadd.f32 0.0, %v1714
        %v1716 = vpop.f32.mrb[0].mxu0
        %v1717 = vadd.f32 0.0, %v1716
        %v1718 = vpop.f32.mrb[0].mxu0
        %v1719 = vadd.f32 0.0, %v1718
        %1720 = vmatprep.mubr.bf16.mxu0 0
        %1721 = vmatmul.mubr.bf16.gmra.mrb[0].mxu0 %v635
        %v1722 = vpop.f32.mrb[0].mxu0
        %v1723 = vadd.f32 0.0, %v1722
        %v1724 = vpop.f32.mrb[0].mxu0
        %v1725 = vadd.f32 0.0, %v1724
        %v1726 = vpop.f32.mrb[0].mxu0
        %v1727 = vadd.f32 0.0, %v1726
        %v1728 = vpop.f32.mrb[0].mxu0
        %v1729 = vadd.f32 0.0, %v1728
        %1730 = vmatprep.mubr.bf16.mxu0 0
        %1731 = vmatmul.mubr.bf16.gmra.mrb[0].mxu0 %v636
        %v1732 = vpop.f32.mrb[0].mxu0
        %v1733 = vadd.f32 0.0, %v1732
        %v1734 = vpop.f32.mrb[0].mxu0
        %v1735 = vadd.f32 0.0, %v1734
        %v1736 = vpop.f32.mrb[0].mxu0
        %v1737 = vadd.f32 0.0, %v1736
        %v1738 = vpop.f32.mrb[0].mxu0
        %v1739 = vadd.f32 0.0, %v1738
        %1740 = vmatprep.mubr.bf16.mxu0 0
        %1741 = vmatmul.mubr.bf16.gmra.mrb[0].mxu0 %v637
        %v1742 = vpop.f32.mrb[0].mxu0
        %v1743 = vadd.f32 0.0, %v1742
        %v1744 = vpop.f32.mrb[0].mxu0
        %v1745 = vadd.f32 0.0, %v1744
        %v1746 = vpop.f32.mrb[0].mxu0
        %v1747 = vadd.f32 0.0, %v1746
        %v1748 = vpop.f32.mrb[0].mxu0
        %v1749 = vadd.f32 0.0, %v1748
        %1750 = vmatprep.mubr.bf16.mxu0 0
        %1751 = vmatmul.mubr.bf16.gmra.mrb[0].mxu0 %v638
        %v1752 = vpop.f32.mrb[0].mxu0
        %v1753 = vadd.f32 0.0, %v1752
        %v1754 = vpop.f32.mrb[0].mxu0
        %v1755 = vadd.f32 0.0, %v1754
        %v1756 = vpop.f32.mrb[0].mxu0
        %v1757 = vadd.f32 0.0, %v1756
        %v1758 = vpop.f32.mrb[0].mxu0
        %v1759 = vadd.f32 0.0, %v1758
        %1760 = vmatprep.mubr.bf16.mxu0 0
        %1761 = vmatmul.mubr.bf16.gmra.mrb[0].mxu0 %v639
        %v1762 = vpop.f32.mrb[0].mxu0
        %v1763 = vadd.f32 0.0, %v1762
        %v1764 = vpop.f32.mrb[0].mxu0
        %v1765 = vadd.f32 0.0, %v1764
        %v1766 = vpop.f32.mrb[0].mxu0
        %v1767 = vadd.f32 0.0, %v1766
        %v1768 = vpop.f32.mrb[0].mxu0
        %v1769 = vadd.f32 0.0, %v1768
        %1770 = vmatprep.mubr.bf16.mxu0 0
        %1771 = vmatmul.mubr.bf16.gmra.mrb[0].mxu0 %v640
        %v1772 = vpop.f32.mrb[0].mxu0
        %v1773 = vadd.f32 0.0, %v1772
        %v1774 = vpop.f32.mrb[0].mxu0
        %v1775 = vadd.f32 0.0, %v1774
        %v1776 = vpop.f32.mrb[0].mxu0
        %v1777 = vadd.f32 0.0, %v1776
        %v1778 = vpop.f32.mrb[0].mxu0
        %v1779 = vadd.f32 0.0, %v1778
        %1780 = vmatprep.mubr.bf16.mxu0 0
        %1781 = vmatmul.mubr.bf16.gmra.mrb[0].mxu0 %v641
        %v1782 = vpop.f32.mrb[0].mxu0
        %v1783 = vadd.f32 0.0, %v1782
        %v1784 = vpop.f32.mrb[0].mxu0
        %v1785 = vadd.f32 0.0, %v1784
        %v1786 = vpop.f32.mrb[0].mxu0
        %v1787 = vadd.f32 0.0, %v1786
        %v1788 = vpop.f32.mrb[0].mxu0
        %v1789 = vadd.f32 0.0, %v1788
        %1790 = vmatprep.mubr.bf16.mxu0 0
        %1791 = vmatmul.mubr.bf16.gmra.mrb[0].mxu0 %v642
        %v1792 = vpop.f32.mrb[0].mxu0
        %v1793 = vadd.f32 0.0, %v1792
        %v1794 = vpop.f32.mrb[0].mxu0
        %v1795 = vadd.f32 0.0, %v1794
        %v1796 = vpop.f32.mrb[0].mxu0
        %v1797 = vadd.f32 0.0, %v1796
        %v1798 = vpop.f32.mrb[0].mxu0
        %v1799 = vadd.f32 0.0, %v1798
        %1800 = vmatprep.mubr.bf16.mxu0 0
        %1801 = vmatmul.mubr.bf16.gmra.mrb[0].mxu0 %v1537
        %v1802 = vpop.f32.mrb[0].mxu0
        %v1803 = vadd.f32 0.0, %v1802
        %v1804 = vpop.f32.mrb[0].mxu0
        %v1805 = vadd.f32 0.0, %v1804
        %v1806 = vpop.f32.mrb[0].mxu0
        %v1807 = vadd.f32 0.0, %v1806
        %v1808 = vpop.f32.mrb[0].mxu0
        %v1809 = vadd.f32 0.0, %v1808
        %1810 = vdwg.mxu0
        %v1811 = vadd.f32 %v1463, %v1653
        %v1812 = vadd.f32 %v1464, %v1655
        %v1813 = vadd.f32 %v1465, %v1657
        %v1814 = vadd.f32 %v1466, %v1659
        %v1815 = vadd.f32 %v1467, %v1663
        %v1816 = vadd.f32 %v1468, %v1665
        %v1817 = vadd.f32 %v1469, %v1667
        %v1818 = vadd.f32 %v1470, %v1669
        %v1819 = vadd.f32 %v1471, %v1673
        %v1820 = vadd.f32 %v1472, %v1675
        %v1821 = vadd.f32 %v1473, %v1677
        %v1822 = vadd.f32 %v1474, %v1679
        %v1823 = vadd.f32 %v1475, %v1683
        %v1824 = vadd.f32 %v1476, %v1685
        %v1825 = vadd.f32 %v1477, %v1687
        %v1826 = vadd.f32 %v1478, %v1689
        %v1827 = vadd.f32 %v1479, %v1693
        %v1828 = vadd.f32 %v1480, %v1695
        %v1829 = vadd.f32 %v1481, %v1697
        %v1830 = vadd.f32 %v1482, %v1699
        %v1831 = vadd.f32 %v1483, %v1703
        %v1832 = vadd.f32 %v1484, %v1705
        %v1833 = vadd.f32 %v1485, %v1707
        %v1834 = vadd.f32 %v1486, %v1709
        %v1835 = vadd.f32 %v1487, %v1713
        %v1836 = vadd.f32 %v1488, %v1715
        %v1837 = vadd.f32 %v1489, %v1717
        %v1838 = vadd.f32 %v1490, %v1719
        %v1839 = vadd.f32 %v1491, %v1723
        %v1840 = vadd.f32 %v1492, %v1725
        %v1841 = vadd.f32 %v1493, %v1727
        %v1842 = vadd.f32 %v1494, %v1729
        %v1843 = vadd.f32 %v1495, %v1733
        %v1844 = vadd.f32 %v1496, %v1735
        %v1845 = vadd.f32 %v1497, %v1737
        %v1846 = vadd.f32 %v1498, %v1739
        %v1847 = vadd.f32 %v1499, %v1743
        %v1848 = vadd.f32 %v1500, %v1745
        %v1849 = vadd.f32 %v1501, %v1747
        %v1850 = vadd.f32 %v1502, %v1749
        %v1851 = vadd.f32 %v1503, %v1753
        %v1852 = vadd.f32 %v1504, %v1755
        %v1853 = vadd.f32 %v1505, %v1757
        %v1854 = vadd.f32 %v1506, %v1759
        %v1855 = vadd.f32 %v1507, %v1763
        %v1856 = vadd.f32 %v1508, %v1765
        %v1857 = vadd.f32 %v1509, %v1767
        %v1858 = vadd.f32 %v1510, %v1769
        %v1859 = vadd.f32 %v1511, %v1773
        %v1860 = vadd.f32 %v1512, %v1775
        %v1861 = vadd.f32 %v1513, %v1777
        %v1862 = vadd.f32 %v1514, %v1779
        %v1863 = vadd.f32 %v1515, %v1783
        %v1864 = vadd.f32 %v1516, %v1785
        %v1865 = vadd.f32 %v1517, %v1787
        %v1866 = vadd.f32 %v1518, %v1789
        %v1867 = vadd.f32 %v1519, %v1793
        %v1868 = vadd.f32 %v1520, %v1795
        %v1869 = vadd.f32 %v1521, %v1797
        %v1870 = vadd.f32 %v1522, %v1799
        %v1871 = vadd.f32 %v1523, %v1803
        %v1872 = vadd.f32 %v1524, %v1805
        %v1873 = vadd.f32 %v1525, %v1807
        %v1874 = vadd.f32 %v1526, %v1809
        %v1875 = vadd.f32 %v1811, %v1813
        %v1876 = vadd.f32 %v1875, %v1815
        %v1877 = vadd.f32 %v1876, %v1817
        %v1878 = vadd.f32 %v1877, %v1819
        %v1879 = vadd.f32 %v1878, %v1821
        %v1880 = vadd.f32 %v1879, %v1823
        %v1881 = vadd.f32 %v1880, %v1825
        %v1882 = vadd.f32 %v1881, %v1827
        %v1883 = vadd.f32 %v1882, %v1829
        %v1884 = vadd.f32 %v1883, %v1831
        %v1885 = vadd.f32 %v1884, %v1833
        %v1886 = vadd.f32 %v1885, %v1835
        %v1887 = vadd.f32 %v1886, %v1837
        %v1888 = vadd.f32 %v1887, %v1839
        %v1889 = vadd.f32 %v1888, %v1841
        %v1890 = vadd.f32 %v1889, %v1843
        %v1891 = vadd.f32 %v1890, %v1845
        %v1892 = vadd.f32 %v1891, %v1847
        %v1893 = vadd.f32 %v1892, %v1849
        %v1894 = vadd.f32 %v1893, %v1851
        %v1895 = vadd.f32 %v1894, %v1853
        %v1896 = vadd.f32 %v1895, %v1855
        %v1897 = vadd.f32 %v1896, %v1857
        %v1898 = vadd.f32 %v1897, %v1859
        %v1899 = vadd.f32 %v1898, %v1861
        %v1900 = vadd.f32 %v1899, %v1863
        %v1901 = vadd.f32 %v1900, %v1865
        %v1902 = vadd.f32 %v1901, %v1867
        %v1903 = vadd.f32 %v1902, %v1869
        %v1904 = vadd.f32 %v1903, %v1871
        %v1905 = vadd.f32 %v1904, %v1873
        %v1906 = vrot.slane %v1905, 4
        %v1907 = vadd.f32 %v1905, %v1906
        %v1908 = vrot.slane %v1907, 2
        %v1909 = vadd.f32 %v1907, %v1908
        %v1910 = vrot.slane %v1909, 1
        %v1911 = vadd.f32 %v1909, %v1910
        %v1912 = vadd.f32 %v1812, %v1814
        %v1913 = vadd.f32 %v1912, %v1816
        %v1914 = vadd.f32 %v1913, %v1818
        %v1915 = vadd.f32 %v1914, %v1820
        %v1916 = vadd.f32 %v1915, %v1822
        %v1917 = vadd.f32 %v1916, %v1824
        %v1918 = vadd.f32 %v1917, %v1826
        %v1919 = vadd.f32 %v1918, %v1828
        %v1920 = vadd.f32 %v1919, %v1830
        %v1921 = vadd.f32 %v1920, %v1832
        %v1922 = vadd.f32 %v1921, %v1834
        %v1923 = vadd.f32 %v1922, %v1836
        %v1924 = vadd.f32 %v1923, %v1838
        %v1925 = vadd.f32 %v1924, %v1840
        %v1926 = vadd.f32 %v1925, %v1842
        %v1927 = vadd.f32 %v1926, %v1844
        %v1928 = vadd.f32 %v1927, %v1846
        %v1929 = vadd.f32 %v1928, %v1848
        %v1930 = vadd.f32 %v1929, %v1850
        %v1931 = vadd.f32 %v1930, %v1852
        %v1932 = vadd.f32 %v1931, %v1854
        %v1933 = vadd.f32 %v1932, %v1856
        %v1934 = vadd.f32 %v1933, %v1858
        %v1935 = vadd.f32 %v1934, %v1860
        %v1936 = vadd.f32 %v1935, %v1862
        %v1937 = vadd.f32 %v1936, %v1864
        %v1938 = vadd.f32 %v1937, %v1866
        %v1939 = vadd.f32 %v1938, %v1868
        %v1940 = vadd.f32 %v1939, %v1870
        %v1941 = vadd.f32 %v1940, %v1872
        %v1942 = vadd.f32 %v1941, %v1874
        %v1943 = vrot.slane %v1942, 4
        %v1944 = vadd.f32 %v1942, %v1943
        %v1945 = vrot.slane %v1944, 2
        %v1946 = vadd.f32 %v1944, %v1945
        %v1947 = vrot.slane %v1946, 1
        %v1948 = vadd.f32 %v1946, %v1947
        %v1949 = vmul.f32 %v1811, %v1811
        %v1950 = vmul.f32 %v1812, %v1812
        %v1951 = vmul.f32 %v1813, %v1813
        %v1952 = vmul.f32 %v1814, %v1814
        %v1953 = vmul.f32 %v1815, %v1815
        %v1954 = vmul.f32 %v1816, %v1816
        %v1955 = vmul.f32 %v1817, %v1817
        %v1956 = vmul.f32 %v1818, %v1818
        %v1957 = vmul.f32 %v1819, %v1819
        %v1958 = vmul.f32 %v1820, %v1820
        %v1959 = vmul.f32 %v1821, %v1821
        %v1960 = vmul.f32 %v1822, %v1822
        %v1961 = vmul.f32 %v1823, %v1823
        %v1962 = vmul.f32 %v1824, %v1824
        %v1963 = vmul.f32 %v1825, %v1825
        %v1964 = vmul.f32 %v1826, %v1826
        %v1965 = vmul.f32 %v1827, %v1827
        %v1966 = vmul.f32 %v1828, %v1828
        %v1967 = vmul.f32 %v1829, %v1829
        %v1968 = vmul.f32 %v1830, %v1830
        %v1969 = vmul.f32 %v1831, %v1831
        %v1970 = vmul.f32 %v1832, %v1832
        %v1971 = vmul.f32 %v1833, %v1833
        %v1972 = vmul.f32 %v1834, %v1834
        %v1973 = vmul.f32 %v1835, %v1835
        %v1974 = vmul.f32 %v1836, %v1836
        %v1975 = vmul.f32 %v1837, %v1837
        %v1976 = vmul.f32 %v1838, %v1838
        %v1977 = vmul.f32 %v1839, %v1839
        %v1978 = vmul.f32 %v1840, %v1840
        %v1979 = vmul.f32 %v1841, %v1841
        %v1980 = vmul.f32 %v1842, %v1842
        %v1981 = vmul.f32 %v1843, %v1843
        %v1982 = vmul.f32 %v1844, %v1844
        %v1983 = vmul.f32 %v1845, %v1845
        %v1984 = vmul.f32 %v1846, %v1846
        %v1985 = vmul.f32 %v1847, %v1847
        %v1986 = vmul.f32 %v1848, %v1848
        %v1987 = vmul.f32 %v1849, %v1849
        %v1988 = vmul.f32 %v1850, %v1850
        %v1989 = vmul.f32 %v1851, %v1851
        %v1990 = vmul.f32 %v1852, %v1852
        %v1991 = vmul.f32 %v1853, %v1853
        %v1992 = vmul.f32 %v1854, %v1854
        %v1993 = vmul.f32 %v1855, %v1855
        %v1994 = vmul.f32 %v1856, %v1856
        %v1995 = vmul.f32 %v1857, %v1857
        %v1996 = vmul.f32 %v1858, %v1858
        %v1997 = vmul.f32 %v1859, %v1859
        %v1998 = vmul.f32 %v1860, %v1860
        %v1999 = vmul.f32 %v1861, %v1861
        %v2000 = vmul.f32 %v1862, %v1862
        %v2001 = vmul.f32 %v1863, %v1863
        %v2002 = vmul.f32 %v1864, %v1864
        %v2003 = vmul.f32 %v1865, %v1865
        %v2004 = vmul.f32 %v1866, %v1866
        %v2005 = vmul.f32 %v1867, %v1867
        %v2006 = vmul.f32 %v1868, %v1868
        %v2007 = vmul.f32 %v1869, %v1869
        %v2008 = vmul.f32 %v1870, %v1870
        %v2009 = vmul.f32 %v1871, %v1871
        %v2010 = vmul.f32 %v1872, %v1872
        %v2011 = vmul.f32 %v1873, %v1873
        %v2012 = vmul.f32 %v1874, %v1874
        %v2013 = vadd.f32 %v1949, %v1951
        %v2014 = vadd.f32 %v2013, %v1953
        %v2015 = vadd.f32 %v2014, %v1955
        %v2016 = vadd.f32 %v2015, %v1957
        %v2017 = vadd.f32 %v2016, %v1959
        %v2018 = vadd.f32 %v2017, %v1961
        %v2019 = vadd.f32 %v2018, %v1963
        %v2020 = vadd.f32 %v2019, %v1965
        %v2021 = vadd.f32 %v2020, %v1967
        %v2022 = vadd.f32 %v2021, %v1969
        %v2023 = vadd.f32 %v2022, %v1971
        %v2024 = vadd.f32 %v2023, %v1973
        %v2025 = vadd.f32 %v2024, %v1975
        %v2026 = vadd.f32 %v2025, %v1977
        %v2027 = vadd.f32 %v2026, %v1979
        %v2028 = vadd.f32 %v2027, %v1981
        %v2029 = vadd.f32 %v2028, %v1983
        %v2030 = vadd.f32 %v2029, %v1985
        %v2031 = vadd.f32 %v2030, %v1987
        %v2032 = vadd.f32 %v2031, %v1989
        %v2033 = vadd.f32 %v2032, %v1991
        %v2034 = vadd.f32 %v2033, %v1993
        %v2035 = vadd.f32 %v2034, %v1995
        %v2036 = vadd.f32 %v2035, %v1997
        %v2037 = vadd.f32 %v2036, %v1999
        %v2038 = vadd.f32 %v2037, %v2001
        %v2039 = vadd.f32 %v2038, %v2003
        %v2040 = vadd.f32 %v2039, %v2005
        %v2041 = vadd.f32 %v2040, %v2007
        %v2042 = vadd.f32 %v2041, %v2009
        %v2043 = vadd.f32 %v2042, %v2011
        %v2044 = vrot.slane %v2043, 4
        %v2045 = vadd.f32 %v2043, %v2044
        %v2046 = vrot.slane %v2045, 2
        %v2047 = vadd.f32 %v2045, %v2046
        %v2048 = vrot.slane %v2047, 1
        %v2049 = vadd.f32 %v2047, %v2048
        %v2050 = vadd.f32 %v1950, %v1952
        %v2051 = vadd.f32 %v2050, %v1954
        %v2052 = vadd.f32 %v2051, %v1956
        %v2053 = vadd.f32 %v2052, %v1958
        %v2054 = vadd.f32 %v2053, %v1960
        %v2055 = vadd.f32 %v2054, %v1962
        %v2056 = vadd.f32 %v2055, %v1964
        %v2057 = vadd.f32 %v2056, %v1966
        %v2058 = vadd.f32 %v2057, %v1968
        %v2059 = vadd.f32 %v2058, %v1970
        %v2060 = vadd.f32 %v2059, %v1972
        %v2061 = vadd.f32 %v2060, %v1974
        %v2062 = vadd.f32 %v2061, %v1976
        %v2063 = vadd.f32 %v2062, %v1978
        %v2064 = vadd.f32 %v2063, %v1980
        %v2065 = vadd.f32 %v2064, %v1982
        %v2066 = vadd.f32 %v2065, %v1984
        %v2067 = vadd.f32 %v2066, %v1986
        %v2068 = vadd.f32 %v2067, %v1988
        %v2069 = vadd.f32 %v2068, %v1990
        %v2070 = vadd.f32 %v2069, %v1992
        %v2071 = vadd.f32 %v2070, %v1994
        %v2072 = vadd.f32 %v2071, %v1996
        %v2073 = vadd.f32 %v2072, %v1998
        %v2074 = vadd.f32 %v2073, %v2000
        %v2075 = vadd.f32 %v2074, %v2002
        %v2076 = vadd.f32 %v2075, %v2004
        %v2077 = vadd.f32 %v2076, %v2006
        %v2078 = vadd.f32 %v2077, %v2008
        %v2079 = vadd.f32 %v2078, %v2010
        %v2080 = vadd.f32 %v2079, %v2012
        %v2081 = vrot.slane %v2080, 4
        %v2082 = vadd.f32 %v2080, %v2081
        %v2083 = vrot.slane %v2082, 2
        %v2084 = vadd.f32 %v2082, %v2083
        %v2085 = vrot.slane %v2084, 1
        %v2086 = vadd.f32 %v2084, %v2085
        %vm2087 = vcmask 1040384
        %v2088 = vsel %vm2087, %v1911, %v2049
        %v2089 = vsel %vm2087, %v1948, %v2086
        %v2092 = vcombine.low %v2088, %v2089
        %v2094 = vunpack.c.l.s4 1983009808
        %v2095 = vunpack.c.0.s8 %v2094
        %v2096 = vlaneseq
        %v2097 = vshrl.u32 %v2096, 7
        %v2098 = vsub.s32 %v2095, %v2097
        %v2099 = vrot.slane %v2092, %v2098
        %2101 = vst [vmem:[%s241] sm:$0xf] %v2099
        %v2102 = vpack.c.bf16 %v1813, %v1811
        %v2103 = vpack.c.bf16 %v1817, %v1815
        %v2104 = vpack.c.bf16 %v1821, %v1819
        %v2105 = vpack.c.bf16 %v1825, %v1823
        %v2106 = vpack.c.bf16 %v1829, %v1827
        %v2107 = vpack.c.bf16 %v1833, %v1831
        %v2108 = vpack.c.bf16 %v1837, %v1835
        %v2109 = vpack.c.bf16 %v1841, %v1839
        %v2110 = vpack.c.bf16 %v1845, %v1843
        %v2111 = vpack.c.bf16 %v1849, %v1847
        %v2112 = vpack.c.bf16 %v1853, %v1851
        %v2113 = vpack.c.bf16 %v1857, %v1855
        %v2114 = vpack.c.bf16 %v1861, %v1859
        %v2115 = vpack.c.bf16 %v1865, %v1863
        %v2116 = vpack.c.bf16 %v1869, %v1867
        %v2117 = vpack.c.bf16 %v1873, %v1871
        %v2134 = vunpack.c.l.b16 %v2102
        %v2135 = vunpack.c.h.b16 %v2102
        %v2136 = vunpack.c.l.b16 %v2103
        %v2137 = vunpack.c.h.b16 %v2103
        %v2138 = vunpack.c.l.b16 %v2104
        %v2139 = vunpack.c.h.b16 %v2104
        %v2140 = vunpack.c.l.b16 %v2105
        %v2141 = vunpack.c.h.b16 %v2105
        %v2142 = vunpack.c.l.b16 %v2106
        %v2143 = vunpack.c.h.b16 %v2106
        %v2144 = vunpack.c.l.b16 %v2107
        %v2145 = vunpack.c.h.b16 %v2107
        %v2146 = vunpack.c.l.b16 %v2108
        %v2147 = vunpack.c.h.b16 %v2108
        %v2148 = vunpack.c.l.b16 %v2109
        %v2149 = vunpack.c.h.b16 %v2109
        %v2150 = vunpack.c.l.b16 %v2110
        %v2151 = vunpack.c.h.b16 %v2110
        %v2152 = vunpack.c.l.b16 %v2111
        %v2153 = vunpack.c.h.b16 %v2111
        %v2154 = vunpack.c.l.b16 %v2112
        %v2155 = vunpack.c.h.b16 %v2112
        %v2156 = vunpack.c.l.b16 %v2113
        %v2157 = vunpack.c.h.b16 %v2113
        %v2158 = vunpack.c.l.b16 %v2114
        %v2159 = vunpack.c.h.b16 %v2114
        %v2160 = vunpack.c.l.b16 %v2115
        %v2161 = vunpack.c.h.b16 %v2115
        %v2162 = vunpack.c.l.b16 %v2116
        %v2163 = vunpack.c.h.b16 %v2116
        %v2164 = vunpack.c.l.b16 %v2117
        %v2165 = vunpack.c.h.b16 %v2117
        %v2166 = vpack.c.b16 %v2134, %v2134
        %v2167 = vpack.c.b16 %v2135, %v2135
        %v2168 = vpack.c.b16 %v2136, %v2136
        %v2169 = vpack.c.b16 %v2137, %v2137
        %v2170 = vpack.c.b16 %v2138, %v2138
        %v2171 = vpack.c.b16 %v2139, %v2139
        %v2172 = vpack.c.b16 %v2140, %v2140
        %v2173 = vpack.c.b16 %v2141, %v2141
        %v2174 = vpack.c.b16 %v2142, %v2142
        %v2175 = vpack.c.b16 %v2143, %v2143
        %v2176 = vpack.c.b16 %v2144, %v2144
        %v2177 = vpack.c.b16 %v2145, %v2145
        %v2178 = vpack.c.b16 %v2146, %v2146
        %v2179 = vpack.c.b16 %v2147, %v2147
        %v2180 = vpack.c.b16 %v2148, %v2148
        %v2181 = vpack.c.b16 %v2149, %v2149
        %v2182 = vpack.c.b16 %v2150, %v2150
        %v2183 = vpack.c.b16 %v2151, %v2151
        %v2184 = vpack.c.b16 %v2152, %v2152
        %v2185 = vpack.c.b16 %v2153, %v2153
        %v2186 = vpack.c.b16 %v2154, %v2154
        %v2187 = vpack.c.b16 %v2155, %v2155
        %v2188 = vpack.c.b16 %v2156, %v2156
        %v2189 = vpack.c.b16 %v2157, %v2157
        %v2190 = vpack.c.b16 %v2158, %v2158
        %v2191 = vpack.c.b16 %v2159, %v2159
        %v2192 = vpack.c.b16 %v2160, %v2160
        %v2193 = vpack.c.b16 %v2161, %v2161
        %v2194 = vpack.c.b16 %v2162, %v2162
        %v2195 = vpack.c.b16 %v2163, %v2163
        %v2196 = vpack.c.b16 %v2164, %v2164
        %v2197 = vpack.c.b16 %v2165, %v2165
        %2230 = vst [vmem:[%s234] sm:$0xf] %v2166
        %2231 = vst [vmem:[%s234 + $0x4] sm:$0xf] %v2167
        %2232 = vst [vmem:[%s234 + $0x8] sm:$0xf] %v2168
        %2233 = vst [vmem:[%s234 + $0xc] sm:$0xf] %v2169
        %2234 = vst [vmem:[%s234 + $0x10] sm:$0xf] %v2170
        %2235 = vst [vmem:[%s234 + $0x14] sm:$0xf] %v2171
        %2236 = vst [vmem:[%s234 + $0x18] sm:$0xf] %v2172
        %2237 = vst [vmem:[%s234 + $0x1c] sm:$0xf] %v2173
        %2238 = vst [vmem:[%s234 + $0x20] sm:$0xf] %v2174
        %2239 = vst [vmem:[%s234 + $0x24] sm:$0xf] %v2175
        %2240 = vst [vmem:[%s234 + $0x28] sm:$0xf] %v2176
        %2241 = vst [vmem:[%s234 + $0x2c] sm:$0xf] %v2177
        %2242 = vst [vmem:[%s234 + $0x30] sm:$0xf] %v2178
        %2243 = vst [vmem:[%s234 + $0x34] sm:$0xf] %v2179
        %2244 = vst [vmem:[%s234 + $0x38] sm:$0xf] %v2180
        %2245 = vst [vmem:[%s234 + $0x3c] sm:$0xf] %v2181
        %2246 = vst [vmem:[%s234 + $0x40] sm:$0xf] %v2182
        %2247 = vst [vmem:[%s234 + $0x44] sm:$0xf] %v2183
        %2248 = vst [vmem:[%s234 + $0x48] sm:$0xf] %v2184
        %2249 = vst [vmem:[%s234 + $0x4c] sm:$0xf] %v2185
        %2250 = vst [vmem:[%s234 + $0x50] sm:$0xf] %v2186
        %2251 = vst [vmem:[%s234 + $0x54] sm:$0xf] %v2187
        %2252 = vst [vmem:[%s234 + $0x58] sm:$0xf] %v2188
        %2253 = vst [vmem:[%s234 + $0x5c] sm:$0xf] %v2189
        %2254 = vst [vmem:[%s234 + $0x60] sm:$0xf] %v2190
        %2255 = vst [vmem:[%s234 + $0x64] sm:$0xf] %v2191
        %2256 = vst [vmem:[%s234 + $0x68] sm:$0xf] %v2192
        %2257 = vst [vmem:[%s234 + $0x6c] sm:$0xf] %v2193
        %2258 = vst [vmem:[%s234 + $0x70] sm:$0xf] %v2194
        %2259 = vst [vmem:[%s234 + $0x74] sm:$0xf] %v2195
        %2260 = vst [vmem:[%s234 + $0x78] sm:$0xf] %v2196
        %2261 = vst [vmem:[%s234 + $0x7c] sm:$0xf] %v2197
        %v2262 = vpack.c.bf16 %v1814, %v1812
        %v2263 = vpack.c.bf16 %v1818, %v1816
        %v2264 = vpack.c.bf16 %v1822, %v1820
        %v2265 = vpack.c.bf16 %v1826, %v1824
        %v2266 = vpack.c.bf16 %v1830, %v1828
        %v2267 = vpack.c.bf16 %v1834, %v1832
        %v2268 = vpack.c.bf16 %v1838, %v1836
        %v2269 = vpack.c.bf16 %v1842, %v1840
        %v2270 = vpack.c.bf16 %v1846, %v1844
        %v2271 = vpack.c.bf16 %v1850, %v1848
        %v2272 = vpack.c.bf16 %v1854, %v1852
        %v2273 = vpack.c.bf16 %v1858, %v1856
        %v2274 = vpack.c.bf16 %v1862, %v1860
        %v2275 = vpack.c.bf16 %v1866, %v1864
        %v2276 = vpack.c.bf16 %v1870, %v1868
        %v2277 = vpack.c.bf16 %v1874, %v1872
        %v2294 = vunpack.c.l.b16 %v2262
        %v2295 = vunpack.c.h.b16 %v2262
        %v2296 = vunpack.c.l.b16 %v2263
        %v2297 = vunpack.c.h.b16 %v2263
        %v2298 = vunpack.c.l.b16 %v2264
        %v2299 = vunpack.c.h.b16 %v2264
        %v2300 = vunpack.c.l.b16 %v2265
        %v2301 = vunpack.c.h.b16 %v2265
        %v2302 = vunpack.c.l.b16 %v2266
        %v2303 = vunpack.c.h.b16 %v2266
        %v2304 = vunpack.c.l.b16 %v2267
        %v2305 = vunpack.c.h.b16 %v2267
        %v2306 = vunpack.c.l.b16 %v2268
        %v2307 = vunpack.c.h.b16 %v2268
        %v2308 = vunpack.c.l.b16 %v2269
        %v2309 = vunpack.c.h.b16 %v2269
        %v2310 = vunpack.c.l.b16 %v2270
        %v2311 = vunpack.c.h.b16 %v2270
        %v2312 = vunpack.c.l.b16 %v2271
        %v2313 = vunpack.c.h.b16 %v2271
        %v2314 = vunpack.c.l.b16 %v2272
        %v2315 = vunpack.c.h.b16 %v2272
        %v2316 = vunpack.c.l.b16 %v2273
        %v2317 = vunpack.c.h.b16 %v2273
        %v2318 = vunpack.c.l.b16 %v2274
        %v2319 = vunpack.c.h.b16 %v2274
        %v2320 = vunpack.c.l.b16 %v2275
        %v2321 = vunpack.c.h.b16 %v2275
        %v2322 = vunpack.c.l.b16 %v2276
        %v2323 = vunpack.c.h.b16 %v2276
        %v2324 = vunpack.c.l.b16 %v2277
        %v2325 = vunpack.c.h.b16 %v2277
        %v2326 = vpack.c.b16 %v2294, %v2294
        %v2327 = vpack.c.b16 %v2295, %v2295
        %v2328 = vpack.c.b16 %v2296, %v2296
        %v2329 = vpack.c.b16 %v2297, %v2297
        %v2330 = vpack.c.b16 %v2298, %v2298
        %v2331 = vpack.c.b16 %v2299, %v2299
        %v2332 = vpack.c.b16 %v2300, %v2300
        %v2333 = vpack.c.b16 %v2301, %v2301
        %v2334 = vpack.c.b16 %v2302, %v2302
        %v2335 = vpack.c.b16 %v2303, %v2303
        %v2336 = vpack.c.b16 %v2304, %v2304
        %v2337 = vpack.c.b16 %v2305, %v2305
        %v2338 = vpack.c.b16 %v2306, %v2306
        %v2339 = vpack.c.b16 %v2307, %v2307
        %v2340 = vpack.c.b16 %v2308, %v2308
        %v2341 = vpack.c.b16 %v2309, %v2309
        %v2342 = vpack.c.b16 %v2310, %v2310
        %v2343 = vpack.c.b16 %v2311, %v2311
        %v2344 = vpack.c.b16 %v2312, %v2312
        %v2345 = vpack.c.b16 %v2313, %v2313
        %v2346 = vpack.c.b16 %v2314, %v2314
        %v2347 = vpack.c.b16 %v2315, %v2315
        %v2348 = vpack.c.b16 %v2316, %v2316
        %v2349 = vpack.c.b16 %v2317, %v2317
        %v2350 = vpack.c.b16 %v2318, %v2318
        %v2351 = vpack.c.b16 %v2319, %v2319
        %v2352 = vpack.c.b16 %v2320, %v2320
        %v2353 = vpack.c.b16 %v2321, %v2321
        %v2354 = vpack.c.b16 %v2322, %v2322
        %v2355 = vpack.c.b16 %v2323, %v2323
        %v2356 = vpack.c.b16 %v2324, %v2324
        %v2357 = vpack.c.b16 %v2325, %v2325
        %2390 = vst [vmem:[%s248] sm:$0xf] %v2326
        %2391 = vst [vmem:[%s248 + $0x4] sm:$0xf] %v2327
        %2392 = vst [vmem:[%s248 + $0x8] sm:$0xf] %v2328
        %2393 = vst [vmem:[%s248 + $0xc] sm:$0xf] %v2329
        %2394 = vst [vmem:[%s248 + $0x10] sm:$0xf] %v2330
        %2395 = vst [vmem:[%s248 + $0x14] sm:$0xf] %v2331
        %2396 = vst [vmem:[%s248 + $0x18] sm:$0xf] %v2332
        %2397 = vst [vmem:[%s248 + $0x1c] sm:$0xf] %v2333
        %2398 = vst [vmem:[%s248 + $0x20] sm:$0xf] %v2334
        %2399 = vst [vmem:[%s248 + $0x24] sm:$0xf] %v2335
        %2400 = vst [vmem:[%s248 + $0x28] sm:$0xf] %v2336
        %2401 = vst [vmem:[%s248 + $0x2c] sm:$0xf] %v2337
        %2402 = vst [vmem:[%s248 + $0x30] sm:$0xf] %v2338
        %2403 = vst [vmem:[%s248 + $0x34] sm:$0xf] %v2339
        %2404 = vst [vmem:[%s248 + $0x38] sm:$0xf] %v2340
        %2405 = vst [vmem:[%s248 + $0x3c] sm:$0xf] %v2341
        %2406 = vst [vmem:[%s248 + $0x40] sm:$0xf] %v2342
        %2407 = vst [vmem:[%s248 + $0x44] sm:$0xf] %v2343
        %2408 = vst [vmem:[%s248 + $0x48] sm:$0xf] %v2344
        %2409 = vst [vmem:[%s248 + $0x4c] sm:$0xf] %v2345
        %2410 = vst [vmem:[%s248 + $0x50] sm:$0xf] %v2346
        %2411 = vst [vmem:[%s248 + $0x54] sm:$0xf] %v2347
        %2412 = vst [vmem:[%s248 + $0x58] sm:$0xf] %v2348
        %2413 = vst [vmem:[%s248 + $0x5c] sm:$0xf] %v2349
        %2414 = vst [vmem:[%s248 + $0x60] sm:$0xf] %v2350
        %2415 = vst [vmem:[%s248 + $0x64] sm:$0xf] %v2351
        %2416 = vst [vmem:[%s248 + $0x68] sm:$0xf] %v2352
        %2417 = vst [vmem:[%s248 + $0x6c] sm:$0xf] %v2353
        %2418 = vst [vmem:[%s248 + $0x70] sm:$0xf] %v2354
        %2419 = vst [vmem:[%s248 + $0x74] sm:$0xf] %v2355
        %2420 = vst [vmem:[%s248 + $0x78] sm:$0xf] %v2356
        %2421 = vst [vmem:[%s248 + $0x7c] sm:$0xf] %v2357
        %s2422 = sand.u32 %s81, 1
        %s2423 = scalar_lea.sflag [#allocation5], %s2422
        %s2424 = sand.u32 %s81, 1
        %s2425 = smul.addr %s2424, 128
        %s2426 = scalar_lea.vmem [#allocation8], %s2425
        %s2427 = sand.u32 %s26, 1
        %s2428 = scalar_lea.sflag [#allocation10], %s2427
        %s2429 = sand.u32 %s107, 1
        %s2430 = smul.addr %s2429, 4
        %s2431 = scalar_lea.vmem [#allocation9], %s2430
        %s2432 = sand.u32 %s26, 1
        %s2433 = scalar_lea.sflag [#allocation10], %s2432
        %s2434 = sand.u32 %s133, 1
        %s2435 = smul.addr %s2434, 128
        %s2436 = scalar_lea.vmem [#allocation11], %s2435
        // Predicated region
        $region37: #{basic_block_forward.3} parent=27 // pred_check
          %p2437 = pneg %p91
        $region38: #{basic_block_forward.3} parent=27 // pred_check_branch
          %2439 = sbr.rel (%p2437) target = $region40
        $region39: #{basic_block_forward.3} parent=27 // pred_region
          %s2441 = ssub.s32 2048, 2048
          %2442 = vsyncadd %s2423, %s2441
          %s2443 = smul.addr %s26, 32
          %s2444 = smul.addr %s2443, 64
          %s2445 = scalar_lea.hbm %s2, %s2444
          %s2446 = sshll.u32 %s2426, 4
          %s2447 = int_to_ptr.vmem [resolvable:$true] %s2446
          %2452 = dma.vmem_to_hbm [thread:$0]  %s2447, 2048, %s2445, %s2423, 64, 64, 4
        $region40: #{basic_block_forward.3} parent=27 // pred_fallthru
          _
        // Predicated region
        $region41: #{basic_block_forward.3} parent=27 // pred_check
          %p2453 = pneg %p117
        $region42: #{basic_block_forward.3} parent=27 // pred_check_branch
          %2455 = sbr.rel (%p2453) target = $region44
        $region43: #{basic_block_forward.3} parent=27 // pred_region
          %s2457 = ssub.s32 64, 64
          %2458 = vsyncadd %s2428, %s2457
          %s2459 = smul.addr %s26, 2
          %s2460 = smul.addr %s2459, 32
          %s2461 = scalar_lea.hbm %s3, %s2460
          %s2463 = sshll.u32 %s2431, 4
          %s2464 = int_to_ptr.vmem [resolvable:$true] %s2463
          %2466 = dma.vmem_to_hbm [thread:$0]  %s2464, 64, %s2461, %s2428
        $region44: #{basic_block_forward.3} parent=27 // pred_fallthru
          _
        // Predicated region
        $region45: #{basic_block_forward.3} parent=27 // pred_check
          %p2467 = pneg %p143
        $region46: #{basic_block_forward.3} parent=27 // pred_check_branch
          %2469 = sbr.rel (%p2467) target = $region48
        $region47: #{basic_block_forward.3} parent=27 // pred_region
          %s2471 = ssub.s32 2048, 2048
          %2472 = vsyncadd %s2433, %s2471
          %s2473 = smul.addr %s26, 32
          %s2474 = smul.addr %s2473, 64
          %s2475 = scalar_lea.hbm %s4, %s2474
          %s2476 = sshll.u32 %s2436, 4
          %s2477 = int_to_ptr.vmem [resolvable:$true] %s2476
          %2482 = dma.vmem_to_hbm [thread:$0]  %s2477, 2048, %s2475, %s2433, 64, 64, 4
        $region48: #{basic_block_forward.3} parent=27 // pred_fallthru
          _
      $region28: #{basic_block_forward.3} parent=5 // pred_fallthru
        _
      %p2483 = scmp.le.s32.totalorder 2, %s21
      // Predicated region
      $region49: #{basic_block_forward.3} parent=5 // pred_check
        %p2484 = pneg %p2483
      $region50: #{basic_block_forward.3} parent=5 // pred_check_branch
        %2486 = sbr.rel (%p2484) target = $region52
      $region51: #{basic_block_forward.3} parent=5 // pred_region
        %s2487 = ssub.s32 %s21, 2
        // Predicated region
        $region53: #{basic_block_forward.3} parent=51 // pred_check
          %p2488 = pneg %p97
        $region54: #{basic_block_forward.3} parent=51 // pred_check_branch
          %2490 = sbr.rel (%p2488) target = $region56
        $region55: #{basic_block_forward.3} parent=51 // pred_region
          %s2491 = sand.u32 %s82, 1
          %s2492 = scalar_lea.sflag [#allocation5], %s2491
          %s2493 = sand.u32 %s82, 1
          %s2494 = smul.addr %s2493, 128
          %s2495 = scalar_lea.vmem [#allocation8], %s2494
          %2496 = dma.done %s2492, 2048
        $region56: #{basic_block_forward.3} parent=51 // pred_fallthru
          _
        // Predicated region
        $region57: #{basic_block_forward.3} parent=51 // pred_check
          %p2497 = pneg %p123
        $region58: #{basic_block_forward.3} parent=51 // pred_check_branch
          %2499 = sbr.rel (%p2497) target = $region60
        $region59: #{basic_block_forward.3} parent=51 // pred_region
          %s2500 = sand.u32 %s27, 1
          %s2501 = scalar_lea.sflag [#allocation10], %s2500
          %s2502 = sand.u32 %s108, 1
          %s2503 = smul.addr %s2502, 4
          %s2504 = scalar_lea.vmem [#allocation9], %s2503
          %2505 = dma.done %s2501, 64
        $region60: #{basic_block_forward.3} parent=51 // pred_fallthru
          _
        // Predicated region
        $region61: #{basic_block_forward.3} parent=51 // pred_check
          %p2506 = pneg %p149
        $region62: #{basic_block_forward.3} parent=51 // pred_check_branch
          %2508 = sbr.rel (%p2506) target = $region64
        $region63: #{basic_block_forward.3} parent=51 // pred_region
          %s2509 = sand.u32 %s27, 1
          %s2510 = scalar_lea.sflag [#allocation10], %s2509
          %s2511 = sand.u32 %s134, 1
          %s2512 = smul.addr %s2511, 128
          %s2513 = scalar_lea.vmem [#allocation11], %s2512
          %2514 = dma.done %s2510, 2048
        $region64: #{basic_block_forward.3} parent=51 // pred_fallthru
          _
      $region52: #{basic_block_forward.3} parent=5 // pred_fallthru
        _
    $region6: #{basic_block_forward.3} parent=1 // loop_footer
      %s25 = sadd.s32 1, %s21
    $region7: #{basic_block_forward.3} parent=1 // loop_footer_branch
      %20 = sbr.rel target = $region3
    $region8: #{basic_block_forward.3} parent=1 // loop_exit
      _
    %2515 = vsyncpa [#allocation4], 1
    %s2516 = scalar_lea.sflag [#allocation4], 1
    %2517 = vsyncpa %s2516, 1
    %2518 = vsyncpa [#allocation7], 1
    %2519 = vsyncpa [#allocation5], 1
    %s2520 = scalar_lea.sflag [#allocation5], 1
    %2521 = vsyncpa %s2520, 1
    %2522 = vsyncpa [#allocation10], 1
    %s2523 = scalar_lea.sflag [#allocation10], 1
    %2524 = vsyncpa %s2523, 1

// kernel: basic_block_forward.4
$region0: #{basic_block_forward.4}
  #allocation0 [shape = 'u32[]', space=smem, size = 0x4, offset = 0x4, fixed_abs, tag = 'smem constant byte address 0x4 - core index']
  #allocation1 [shape = 'u32[144,128]{1,0:T(1,128)}', space=vmem, size = 0x12000, scoped, tag = 'internal scratch']
  #allocation2 [shape = 'f32[18,18,128]{2,1,0:T(8,128)}', space=vmem, size = 0x36000, scoped, tag = 'scratch operand']
  %s0 = inlined_call_operand.hbm [shape: bf16[2,256,128], index: 0, kind: input, shape index: {}]
  %s1 = inlined_call_operand.hbm [shape: f32[1,128], index: 1, kind: input, shape index: {}]
  %s2 = inlined_call_operand.hbm [shape: f32[1,128], index: 2, kind: input, shape index: {}]
  %s3 = inlined_call_operand.hbm [shape: bf16[9,128,128], index: 3, kind: input, shape index: {}]
  %s4 = inlined_call_operand.hbm [shape: bf16[2,256,128], index: 4, kind: output, shape index: {0}]
  %s5 = inlined_call_operand.hbm [shape: f32[2,2,128], index: 5, kind: output, shape index: {1}]
  %6 = xla_tuple %s4, %s5
  %s7 = sld [smem:[#allocation0]]
  $region73: #{basic_block_forward.4} parent=0
    _
  %s9 = ssub.s32 1, %s7
  %s10 = scalar_select 0, %s9, %s7
  $region1: #{basic_block_forward.4} parent=0
    #allocation3 [shape = 'u8[131072]{0}', space=vmem, size = 0x20000, scoped, tag = 'input window, operand 0']
    #allocation4 [shape = 's32[2]{0}', space=sflag, size = 0x8, scoped, tag = 'scoped memory for basic_block_forward.4']
    #allocation5 [shape = 's32[2]{0}', space=sflag, size = 0x8, scoped, tag = 'scoped memory for basic_block_forward.4']
    #allocation6 [shape = 'u8[512]{0}', space=vmem, size = 0x400, scoped, tag = 'input window, operand 1, single buffered']
    #allocation7 [shape = 's32[1]{0}', space=sflag, size = 0x4, scoped, tag = 'scoped memory for basic_block_forward.4']
    #allocation8 [shape = 'u8[512]{0}', space=vmem, size = 0x400, scoped, tag = 'input window, operand 2, single buffered']
    #allocation9 [shape = 'u8[294912]{0}', space=vmem, size = 0x48000, scoped, tag = 'input window, operand 3, single buffered']
    #allocation10 [shape = 's32[1]{0}', space=sflag, size = 0x4, scoped, tag = 'scoped memory for basic_block_forward.4']
    #allocation11 [shape = 'u8[131072]{0}', space=vmem, size = 0x20000, scoped, tag = 'output window, operand 0']
    #allocation12 [shape = 'u8[2048]{0}', space=vmem, size = 0x800, scoped, tag = 'output window, operand 1']
    #allocation13 [shape = 's32[2]{0}', space=sflag, size = 0x8, scoped, tag = 'scoped memory for basic_block_forward.4']
    %11 = vsyncpa [#allocation4], 0
    %s12 = scalar_lea.sflag [#allocation4], 1
    %13 = vsyncpa %s12, 0
    %14 = vsyncpa [#allocation7], 0
    %15 = vsyncpa [#allocation10], 0
    %16 = vsyncpa [#allocation5], 0
    %s17 = scalar_lea.sflag [#allocation5], 1
    %18 = vsyncpa %s17, 0
    %19 = vsyncpa [#allocation13], 0
    %s20 = scalar_lea.sflag [#allocation13], 1
    %21 = vsyncpa %s20, 0
    loop: start=0, step=1, limit=4
    $region2: #{basic_block_forward.4} parent=1 // loop_pre_header
      _
    $region3: #{basic_block_forward.4} parent=1 // loop_header
      %s23 = sphi 0, %s27
      %p24 = scmp.ge.s32.totalorder %s23, 4
      %s33 = sphi 0, %s35
      %s36 = sphi 0, %s33
      %s37 = sphi 0, %s36
      %s53 = sphi 0, %s37
      %s57 = sphi 0, %s57
      %s59 = sphi 0, %s57
      %s60 = sphi 0, %s59
      %s74 = sphi 0, %s60
      %s78 = sphi 0, %s78
      %s80 = sphi 0, %s78
      %s81 = sphi 0, %s80
      %s95 = sphi 0, %s81
      %s99 = sphi 0, %s99
      %s101 = sphi 0, %s99
      %s102 = sphi 0, %s101
      %s116 = sphi 0, %s102
      %s122 = sphi 0, %s124
      %s125 = sphi 0, %s122
      %s126 = sphi 0, %s125
      %s142 = sphi 0, %s126
      %s148 = sphi 0, %s150
      %s151 = sphi 0, %s148
      %s152 = sphi 0, %s151
      %s168 = sphi 0, %s152
    $region4: #{basic_block_forward.4} parent=1 // loop_header_branch
      %26 = sbr.rel (%p24) target = $region8
    $region5: #{basic_block_forward.4} parent=1 // loop_body
      %s28 = ssub.s32 %s23, 1
      %s29 = ssub.s32 %s23, 2
      %s30 = sadd.s32 %s23, 1
      %s31 = ssub.s32 %s23, %s30
      %p32 = scmp.eq.s32.totalorder %s31, 0
      %s34 = sadd.s32 %s33, 1
      %s35 = scalar_select %p32, %s33, %s34
      %p38 = pneg %p32
      %p39 = scmp.eq.s32.totalorder %s23, 1
      %p40 = por %p38, %p39
      %p41 = scmp.ne.s32.totalorder %s33, %s36
      %p42 = scmp.eq.s32.totalorder %s23, 0
      %p43 = por %p41, %p42
      %p44 = scmp.ne.s32.totalorder %s33, %s36
      %p45 = scmp.eq.s32.totalorder %s28, 1
      %p46 = por %p44, %p45
      %p47 = scmp.ne.s32.totalorder %s36, %s37
      %p48 = scmp.eq.s32.totalorder %s28, 0
      %p49 = por %p47, %p48
      %p50 = scmp.ne.s32.totalorder %s36, %s37
      %p51 = scmp.eq.s32.totalorder %s29, 1
      %p52 = por %p50, %p51
      %p54 = scmp.ne.s32.totalorder %s37, %s53
      %p55 = scmp.eq.s32.totalorder %s29, 0
      %p56 = por %p54, %p55
      %s58 = sadd.s32 %s57, 1
      %p61 = scmp.eq.s32.totalorder %s23, 1
      %p62 = scmp.ne.s32.totalorder %s57, %s59
      %p63 = scmp.eq.s32.totalorder %s23, 0
      %p64 = por %p62, %p63
      %p65 = scmp.ne.s32.totalorder %s57, %s59
      %p66 = scmp.eq.s32.totalorder %s28, 1
      %p67 = por %p65, %p66
      %p68 = scmp.ne.s32.totalorder %s59, %s60
      %p69 = scmp.eq.s32.totalorder %s28, 0
      %p70 = por %p68, %p69
      %p71 = scmp.ne.s32.totalorder %s59, %s60
      %p72 = scmp.eq.s32.totalorder %s29, 1
      %p73 = por %p71, %p72
      %p75 = scmp.ne.s32.totalorder %s60, %s74
      %p76 = scmp.eq.s32.totalorder %s29, 0
      %p77 = por %p75, %p76
      %s79 = sadd.s32 %s78, 1
      %p82 = scmp.eq.s32.totalorder %s23, 1
      %p83 = scmp.ne.s32.totalorder %s78, %s80
      %p84 = scmp.eq.s32.totalorder %s23, 0
      %p85 = por %p83, %p84
      %p86 = scmp.ne.s32.totalorder %s78, %s80
      %p87 = scmp.eq.s32.totalorder %s28, 1
      %p88 = por %p86, %p87
      %p89 = scmp.ne.s32.totalorder %s80, %s81
      %p90 = scmp.eq.s32.totalorder %s28, 0
      %p91 = por %p89, %p90
      %p92 = scmp.ne.s32.totalorder %s80, %s81
      %p93 = scmp.eq.s32.totalorder %s29, 1
      %p94 = por %p92, %p93
      %p96 = scmp.ne.s32.totalorder %s81, %s95
      %p97 = scmp.eq.s32.totalorder %s29, 0
      %p98 = por %p96, %p97
      %s100 = sadd.s32 %s99, 1
      %p103 = scmp.eq.s32.totalorder %s23, 1
      %p104 = scmp.ne.s32.totalorder %s99, %s101
      %p105 = scmp.eq.s32.totalorder %s23, 0
      %p106 = por %p104, %p105
      %p107 = scmp.ne.s32.totalorder %s99, %s101
      %p108 = scmp.eq.s32.totalorder %s28, 1
      %p109 = por %p107, %p108
      %p110 = scmp.ne.s32.totalorder %s101, %s102
      %p111 = scmp.eq.s32.totalorder %s28, 0
      %p112 = por %p110, %p111
      %p113 = scmp.ne.s32.totalorder %s101, %s102
      %p114 = scmp.eq.s32.totalorder %s29, 1
      %p115 = por %p113, %p114
      %p117 = scmp.ne.s32.totalorder %s102, %s116
      %p118 = scmp.eq.s32.totalorder %s29, 0
      %p119 = por %p117, %p118
      %s120 = ssub.s32 %s23, %s30
      %p121 = scmp.eq.s32.totalorder %s120, 0
      %s123 = sadd.s32 %s122, 1
      %s124 = scalar_select %p121, %s122, %s123
      %p127 = pneg %p121
      %p128 = scmp.eq.s32.totalorder %s23, 1
      %p129 = por %p127, %p128
      %p130 = scmp.ne.s32.totalorder %s122, %s125
      %p131 = scmp.eq.s32.totalorder %s23, 0
      %p132 = por %p130, %p131
      %p133 = scmp.ne.s32.totalorder %s122, %s125
      %p134 = scmp.eq.s32.totalorder %s28, 1
      %p135 = por %p133, %p134
      %p136 = scmp.ne.s32.totalorder %s125, %s126
      %p137 = scmp.eq.s32.totalorder %s28, 0
      %p138 = por %p136, %p137
      %p139 = scmp.ne.s32.totalorder %s125, %s126
      %p140 = scmp.eq.s32.totalorder %s29, 1
      %p141 = por %p139, %p140
      %p143 = scmp.ne.s32.totalorder %s126, %s142
      %p144 = scmp.eq.s32.totalorder %s29, 0
      %p145 = por %p143, %p144
      %s146 = ssub.s32 %s23, %s30
      %p147 = scmp.eq.s32.totalorder %s146, 0
      %s149 = sadd.s32 %s148, 1
      %s150 = scalar_select %p147, %s148, %s149
      %p153 = pneg %p147
      %p154 = scmp.eq.s32.totalorder %s23, 1
      %p155 = por %p153, %p154
      %p156 = scmp.ne.s32.totalorder %s148, %s151
      %p157 = scmp.eq.s32.totalorder %s23, 0
      %p158 = por %p156, %p157
      %p159 = scmp.ne.s32.totalorder %s148, %s151
      %p160 = scmp.eq.s32.totalorder %s28, 1
      %p161 = por %p159, %p160
      %p162 = scmp.ne.s32.totalorder %s151, %s152
      %p163 = scmp.eq.s32.totalorder %s28, 0
      %p164 = por %p162, %p163
      %p165 = scmp.ne.s32.totalorder %s151, %s152
      %p166 = scmp.eq.s32.totalorder %s29, 1
      %p167 = por %p165, %p166
      %p169 = scmp.ne.s32.totalorder %s152, %s168
      %p170 = scmp.eq.s32.totalorder %s29, 0
      %p171 = por %p169, %p170
      %p172 = scmp.le.s32.totalorder 1, %s23
      %p173 = scmp.lt.s32.totalorder %s23, 3
      %p174 = pnand %p172, %p173
      %p175 = pneg %p174
      // Predicated region
      $region9: #{basic_block_forward.4} parent=5 // pred_check
        _
      $region10: #{basic_block_forward.4} parent=5 // pred_check_branch
        %177 = sbr.rel (%p174) target = $region12
      $region11: #{basic_block_forward.4} parent=5 // pred_region
        %s178 = ssub.s32 %s23, 1
        // Predicated region
        $region13: #{basic_block_forward.4} parent=11 // pred_check
          %p179 = pneg %p70
        $region14: #{basic_block_forward.4} parent=11 // pred_check_branch
          %181 = sbr.rel (%p179) target = $region16
        $region15: #{basic_block_forward.4} parent=11 // pred_region
          %s183 = ssub.s32 16, 16
          %184 = vsyncadd [#allocation7], %s183
          %s186 = sshll.u32 [#allocation6], 4
          %s187 = int_to_ptr.vmem [resolvable:$true] %s186
          %189 = dma.hbm_to_vmem [thread:$0]  %s1, 16, %s187, [#allocation7]
        $region16: #{basic_block_forward.4} parent=11 // pred_fallthru
          _
        // Predicated region
        $region17: #{basic_block_forward.4} parent=11 // pred_check
          %p190 = pneg %p91
        $region18: #{basic_block_forward.4} parent=11 // pred_check_branch
          %192 = sbr.rel (%p190) target = $region20
        $region19: #{basic_block_forward.4} parent=11 // pred_region
          %s194 = ssub.s32 16, 16
          %195 = vsyncadd [#allocation7], %s194
          %s197 = sshll.u32 [#allocation8], 4
          %s198 = int_to_ptr.vmem [resolvable:$true] %s197
          %200 = dma.hbm_to_vmem [thread:$0]  %s2, 16, %s198, [#allocation7]
        $region20: #{basic_block_forward.4} parent=11 // pred_fallthru
          _
        // Predicated region
        $region21: #{basic_block_forward.4} parent=11 // pred_check
          %p201 = pneg %p112
        $region22: #{basic_block_forward.4} parent=11 // pred_check_branch
          %203 = sbr.rel (%p201) target = $region24
        $region23: #{basic_block_forward.4} parent=11 // pred_region
          %s205 = ssub.s32 9216, 9216
          %206 = vsyncadd [#allocation10], %s205
          %s207 = sshll.u32 [#allocation9], 4
          %s208 = int_to_ptr.vmem [resolvable:$true] %s207
          %213 = dma.hbm_to_vmem [thread:$0]  %s3, 9216, %s208, [#allocation10], 64, 64, 4
        $region24: #{basic_block_forward.4} parent=11 // pred_fallthru
          _
      $region12: #{basic_block_forward.4} parent=5 // pred_fallthru
        _
      %p214 = scmp.lt.s32.totalorder %s23, 2
      // Predicated region
      $region25: #{basic_block_forward.4} parent=5 // pred_check
        %p215 = pneg %p214
      $region26: #{basic_block_forward.4} parent=5 // pred_check_branch
        %217 = sbr.rel (%p215) target = $region28
      $region27: #{basic_block_forward.4} parent=5 // pred_region
        // Predicated region
        $region29: #{basic_block_forward.4} parent=27 // pred_check
          %p218 = pneg %p43
        $region30: #{basic_block_forward.4} parent=27 // pred_check_branch
          %220 = sbr.rel (%p218) target = $region32
        $region31: #{basic_block_forward.4} parent=27 // pred_region
          %s221 = sand.u32 %s33, 1
          %s222 = scalar_lea.sflag [#allocation4], %s221
          %s223 = sand.u32 %s33, 1
          %s224 = smul.addr %s223, 128
          %s225 = scalar_lea.vmem [#allocation3], %s224
          %s227 = ssub.s32 2048, 2048
          %228 = vsyncadd %s222, %s227
          %s229 = smul.addr %s23, 32
          %s230 = smul.addr %s229, 64
          %s231 = scalar_lea.hbm %s0, %s230
          %s232 = sshll.u32 %s225, 4
          %s233 = int_to_ptr.vmem [resolvable:$true] %s232
          %238 = dma.hbm_to_vmem [thread:$0]  %s231, 2048, %s233, %s222, 64, 64, 4
        $region32: #{basic_block_forward.4} parent=27 // pred_fallthru
          _
      $region28: #{basic_block_forward.4} parent=5 // pred_fallthru
        _
      %p239 = scmp.le.s32.totalorder 1, %s23
      %p240 = scmp.lt.s32.totalorder %s23, 3
      %p241 = pnand %p239, %p240
      %p242 = pneg %p241
      // Predicated region
      $region33: #{basic_block_forward.4} parent=5 // pred_check
        _
      $region34: #{basic_block_forward.4} parent=5 // pred_check_branch
        %244 = sbr.rel (%p241) target = $region36
      $region35: #{basic_block_forward.4} parent=5 // pred_region
        %s245 = ssub.s32 %s23, 1
        %s246 = sand.u32 %s36, 1
        %s247 = scalar_lea.sflag [#allocation4], %s246
        %s248 = sand.u32 %s36, 1
        %s249 = smul.addr %s248, 128
        %s250 = scalar_lea.vmem [#allocation3], %s249
        // Predicated region
        $region37: #{basic_block_forward.4} parent=35 // pred_check
          %p251 = pneg %p49
        $region38: #{basic_block_forward.4} parent=35 // pred_check_branch
          %253 = sbr.rel (%p251) target = $region40
        $region39: #{basic_block_forward.4} parent=35 // pred_region
          %254 = dma.done %s247, 2048
        $region40: #{basic_block_forward.4} parent=35 // pred_fallthru
          _
        // Predicated region
        $region41: #{basic_block_forward.4} parent=35 // pred_check
          %p255 = pneg %p70
        $region42: #{basic_block_forward.4} parent=35 // pred_check_branch
          %257 = sbr.rel (%p255) target = $region44
        $region43: #{basic_block_forward.4} parent=35 // pred_region
          %258 = dma.done [#allocation7], 16
        $region44: #{basic_block_forward.4} parent=35 // pred_fallthru
          _
        // Predicated region
        $region45: #{basic_block_forward.4} parent=35 // pred_check
          %p259 = pneg %p91
        $region46: #{basic_block_forward.4} parent=35 // pred_check_branch
          %261 = sbr.rel (%p259) target = $region48
        $region47: #{basic_block_forward.4} parent=35 // pred_region
          %262 = dma.done [#allocation7], 16
        $region48: #{basic_block_forward.4} parent=35 // pred_fallthru
          _
        // Predicated region
        $region49: #{basic_block_forward.4} parent=35 // pred_check
          %p263 = pneg %p112
        $region50: #{basic_block_forward.4} parent=35 // pred_check_branch
          %265 = sbr.rel (%p263) target = $region52
        $region51: #{basic_block_forward.4} parent=35 // pred_region
          %266 = dma.done [#allocation10], 9216
        $region52: #{basic_block_forward.4} parent=35 // pred_fallthru
          _
        %s267 = sand.u32 %s36, 1
        %s268 = scalar_lea.sflag [#allocation4], %s267
        %s269 = sand.u32 %s36, 1
        %s270 = smul.addr %s269, 128
        %s271 = scalar_lea.vmem [#allocation3], %s270
        %p272 = pneg %p49
        %p273 = pneg %p46
        %p274 = pneg %p70
        %p275 = pneg %p67
        %p276 = pneg %p91
        %p277 = pneg %p88
        %p278 = pneg %p112
        %p279 = pneg %p109
        %p280 = pneg %p138
        %p281 = pneg %p135
        %s282 = sand.u32 %s125, 1
        %s283 = scalar_lea.sflag [#allocation5], %s282
        %s284 = sand.u32 %s125, 1
        %s285 = smul.addr %s284, 128
        %s286 = scalar_lea.vmem [#allocation11], %s285
        %p287 = pneg %p164
        %p288 = pneg %p161
        %s289 = sand.u32 %s151, 1
        %s290 = scalar_lea.sflag [#allocation13], %s289
        %s291 = sand.u32 %s151, 1
        %s292 = smul.addr %s291, 2
        %s293 = scalar_lea.vmem [#allocation12], %s292
        %295 = vst [vmem:[#allocation2] sm:$0xff] 0.0
        %296 = vst [vmem:[#allocation2 + $0x8] sm:$0xff] 0.0
        %297 = vst [vmem:[#allocation2 + $0x10] sm:$0x3] 0.0
        %298 = vst [vmem:[#allocation2] sm:$0x1] 0.0
        %299 = vst [vmem:[#allocation2 + $0x18] sm:$0x1] 0.0
        %300 = vst [vmem:[#allocation2 + $0x30] sm:$0x1] 0.0
        %301 = vst [vmem:[#allocation2 + $0x48] sm:$0x1] 0.0
        %302 = vst [vmem:[#allocation2 + $0x60] sm:$0x1] 0.0
        %303 = vst [vmem:[#allocation2 + $0x78] sm:$0x1] 0.0
        %304 = vst [vmem:[#allocation2 + $0x90] sm:$0x1] 0.0
        %305 = vst [vmem:[#allocation2 + $0xa8] sm:$0x1] 0.0
        %306 = vst [vmem:[#allocation2 + $0xc0] sm:$0x1] 0.0
        %307 = vst [vmem:[#allocation2 + $0xd8] sm:$0x1] 0.0
        %308 = vst [vmem:[#allocation2 + $0xf0] sm:$0x1] 0.0
        %309 = vst [vmem:[#allocation2 + $0x108] sm:$0x1] 0.0
        %310 = vst [vmem:[#allocation2 + $0x120] sm:$0x1] 0.0
        %311 = vst [vmem:[#allocation2 + $0x138] sm:$0x1] 0.0
        %312 = vst [vmem:[#allocation2 + $0x150] sm:$0x1] 0.0
        %313 = vst [vmem:[#allocation2 + $0x168] sm:$0x1] 0.0
        %314 = vst [vmem:[#allocation2 + $0x180] sm:$0x1] 0.0
        %315 = vst [vmem:[#allocation2 + $0x198] sm:$0x1] 0.0
        %s316 = scalar_lea.vmem [#allocation2], 408
        %317 = vst [vmem:[%s316] sm:$0xff] 0.0
        %318 = vst [vmem:[%s316 + $0x8] sm:$0xff] 0.0
        %319 = vst [vmem:[%s316 + $0x10] sm:$0x3] 0.0
        %320 = vst [vmem:[#allocation2 + $0x11] sm:$0x1] 0.0
        %321 = vst [vmem:[#allocation2 + $0x29] sm:$0x1] 0.0
        %322 = vst [vmem:[#allocation2 + $0x41] sm:$0x1] 0.0
        %323 = vst [vmem:[#allocation2 + $0x59] sm:$0x1] 0.0
        %324 = vst [vmem:[#allocation2 + $0x71] sm:$0x1] 0.0
        %325 = vst [vmem:[#allocation2 + $0x89] sm:$0x1] 0.0
        %326 = vst [vmem:[#allocation2 + $0xa1] sm:$0x1] 0.0
        %327 = vst [vmem:[#allocation2 + $0xb9] sm:$0x1] 0.0
        %328 = vst [vmem:[#allocation2 + $0xd1] sm:$0x1] 0.0
        %329 = vst [vmem:[#allocation2 + $0xe9] sm:$0x1] 0.0
        %330 = vst [vmem:[#allocation2 + $0x101] sm:$0x1] 0.0
        %331 = vst [vmem:[#allocation2 + $0x119] sm:$0x1] 0.0
        %332 = vst [vmem:[#allocation2 + $0x131] sm:$0x1] 0.0
        %333 = vst [vmem:[#allocation2 + $0x149] sm:$0x1] 0.0
        %334 = vst [vmem:[#allocation2 + $0x161] sm:$0x1] 0.0
        %335 = vst [vmem:[#allocation2 + $0x179] sm:$0x1] 0.0
        %336 = vst [vmem:[#allocation2 + $0x191] sm:$0x1] 0.0
        %337 = vst [vmem:[#allocation2 + $0x1a9] sm:$0x1] 0.0
        %v338 = vld [vmem:[%s250] sm:$0xf]
        %v339 = vld [vmem:[%s250 + $0x4] sm:$0xf]
        %v340 = vld [vmem:[%s250 + $0x8] sm:$0xf]
        %v341 = vld [vmem:[%s250 + $0xc] sm:$0xf]
        %v342 = vld [vmem:[%s250 + $0x10] sm:$0xf]
        %v343 = vld [vmem:[%s250 + $0x14] sm:$0xf]
        %v344 = vld [vmem:[%s250 + $0x18] sm:$0xf]
        %v345 = vld [vmem:[%s250 + $0x1c] sm:$0xf]
        %v346 = vld [vmem:[%s250 + $0x20] sm:$0xf]
        %v347 = vld [vmem:[%s250 + $0x24] sm:$0xf]
        %v348 = vld [vmem:[%s250 + $0x28] sm:$0xf]
        %v349 = vld [vmem:[%s250 + $0x2c] sm:$0xf]
        %v350 = vld [vmem:[%s250 + $0x30] sm:$0xf]
        %v351 = vld [vmem:[%s250 + $0x34] sm:$0xf]
        %v352 = vld [vmem:[%s250 + $0x38] sm:$0xf]
        %v353 = vld [vmem:[%s250 + $0x3c] sm:$0xf]
        %v354 = vld [vmem:[%s250 + $0x40] sm:$0xf]
        %v355 = vld [vmem:[%s250 + $0x44] sm:$0xf]
        %v356 = vld [vmem:[%s250 + $0x48] sm:$0xf]
        %v357 = vld [vmem:[%s250 + $0x4c] sm:$0xf]
        %v358 = vld [vmem:[%s250 + $0x50] sm:$0xf]
        %v359 = vld [vmem:[%s250 + $0x54] sm:$0xf]
        %v360 = vld [vmem:[%s250 + $0x58] sm:$0xf]
        %v361 = vld [vmem:[%s250 + $0x5c] sm:$0xf]
        %v362 = vld [vmem:[%s250 + $0x60] sm:$0xf]
        %v363 = vld [vmem:[%s250 + $0x64] sm:$0xf]
        %v364 = vld [vmem:[%s250 + $0x68] sm:$0xf]
        %v365 = vld [vmem:[%s250 + $0x6c] sm:$0xf]
        %v366 = vld [vmem:[%s250 + $0x70] sm:$0xf]
        %v367 = vld [vmem:[%s250 + $0x74] sm:$0xf]
        %v368 = vld [vmem:[%s250 + $0x78] sm:$0xf]
        %v369 = vld [vmem:[%s250 + $0x7c] sm:$0xf]
        %v370 = vunpack.c.l.bf16 %v338
        %v371 = vunpack.c.l.bf16 %v339
        %v372 = vunpack.c.l.bf16 %v340
        %v373 = vunpack.c.l.bf16 %v341
        %v374 = vunpack.c.l.bf16 %v342
        %v375 = vunpack.c.l.bf16 %v343
        %v376 = vunpack.c.l.bf16 %v344
        %v377 = vunpack.c.l.bf16 %v345
        %v378 = vunpack.c.l.bf16 %v346
        %v379 = vunpack.c.l.bf16 %v347
        %v380 = vunpack.c.l.bf16 %v348
        %v381 = vunpack.c.l.bf16 %v349
        %v382 = vunpack.c.l.bf16 %v350
        %v383 = vunpack.c.l.bf16 %v351
        %v384 = vunpack.c.l.bf16 %v352
        %v385 = vunpack.c.l.bf16 %v353
        %v386 = vunpack.c.l.bf16 %v354
        %v387 = vunpack.c.l.bf16 %v355
        %v388 = vunpack.c.l.bf16 %v356
        %v389 = vunpack.c.l.bf16 %v357
        %v390 = vunpack.c.l.bf16 %v358
        %v391 = vunpack.c.l.bf16 %v359
        %v392 = vunpack.c.l.bf16 %v360
        %v393 = vunpack.c.l.bf16 %v361
        %v394 = vunpack.c.l.bf16 %v362
        %v395 = vunpack.c.l.bf16 %v363
        %v396 = vunpack.c.l.bf16 %v364
        %v397 = vunpack.c.l.bf16 %v365
        %v398 = vunpack.c.l.bf16 %v366
        %v399 = vunpack.c.l.bf16 %v367
        %v400 = vunpack.c.l.bf16 %v368
        %v401 = vunpack.c.l.bf16 %v369
        %v402 = vld [vmem:[#allocation6] sm:$0x1]
        %v404 = vlaneseq
        %v405 = vshrl.u32 %v404, 7
        %v406 = vsub.s32 0, %v405
        %v407 = vrot.slane %v402, %v406
        %v409 = vmul.f32 %v370, %v407
        %v410 = vmul.f32 %v371, %v407
        %v411 = vmul.f32 %v372, %v407
        %v412 = vmul.f32 %v373, %v407
        %v413 = vmul.f32 %v374, %v407
        %v414 = vmul.f32 %v375, %v407
        %v415 = vmul.f32 %v376, %v407
        %v416 = vmul.f32 %v377, %v407
        %v417 = vmul.f32 %v378, %v407
        %v418 = vmul.f32 %v379, %v407
        %v419 = vmul.f32 %v380, %v407
        %v420 = vmul.f32 %v381, %v407
        %v421 = vmul.f32 %v382, %v407
        %v422 = vmul.f32 %v383, %v407
        %v423 = vmul.f32 %v384, %v407
        %v424 = vmul.f32 %v385, %v407
        %v425 = vmul.f32 %v386, %v407
        %v426 = vmul.f32 %v387, %v407
        %v427 = vmul.f32 %v388, %v407
        %v428 = vmul.f32 %v389, %v407
        %v429 = vmul.f32 %v390, %v407
        %v430 = vmul.f32 %v391, %v407
        %v431 = vmul.f32 %v392, %v407
        %v432 = vmul.f32 %v393, %v407
        %v433 = vmul.f32 %v394, %v407
        %v434 = vmul.f32 %v395, %v407
        %v435 = vmul.f32 %v396, %v407
        %v436 = vmul.f32 %v397, %v407
        %v437 = vmul.f32 %v398, %v407
        %v438 = vmul.f32 %v399, %v407
        %v439 = vmul.f32 %v400, %v407
        %v440 = vmul.f32 %v401, %v407
        %v441 = vld [vmem:[#allocation8] sm:$0x1]
        %v443 = vlaneseq
        %v444 = vshrl.u32 %v443, 7
        %v445 = vsub.s32 0, %v444
        %v446 = vrot.slane %v441, %v445
        %v448 = vadd.f32 %v409, %v446
        %v449 = vadd.f32 %v410, %v446
        %v450 = vadd.f32 %v411, %v446
        %v451 = vadd.f32 %v412, %v446
        %v452 = vadd.f32 %v413, %v446
        %v453 = vadd.f32 %v414, %v446
        %v454 = vadd.f32 %v415, %v446
        %v455 = vadd.f32 %v416, %v446
        %v456 = vadd.f32 %v417, %v446
        %v457 = vadd.f32 %v418, %v446
        %v458 = vadd.f32 %v419, %v446
        %v459 = vadd.f32 %v420, %v446
        %v460 = vadd.f32 %v421, %v446
        %v461 = vadd.f32 %v422, %v446
        %v462 = vadd.f32 %v423, %v446
        %v463 = vadd.f32 %v424, %v446
        %v464 = vadd.f32 %v425, %v446
        %v465 = vadd.f32 %v426, %v446
        %v466 = vadd.f32 %v427, %v446
        %v467 = vadd.f32 %v428, %v446
        %v468 = vadd.f32 %v429, %v446
        %v469 = vadd.f32 %v430, %v446
        %v470 = vadd.f32 %v431, %v446
        %v471 = vadd.f32 %v432, %v446
        %v472 = vadd.f32 %v433, %v446
        %v473 = vadd.f32 %v434, %v446
        %v474 = vadd.f32 %v435, %v446
        %v475 = vadd.f32 %v436, %v446
        %v476 = vadd.f32 %v437, %v446
        %v477 = vadd.f32 %v438, %v446
        %v478 = vadd.f32 %v439, %v446
        %v479 = vadd.f32 %v440, %v446
        %v480 = vmax.f32 %v448, 0.0
        %v481 = vmax.f32 %v449, 0.0
        %v482 = vmax.f32 %v450, 0.0
        %v483 = vmax.f32 %v451, 0.0
        %v484 = vmax.f32 %v452, 0.0
        %v485 = vmax.f32 %v453, 0.0
        %v486 = vmax.f32 %v454, 0.0
        %v487 = vmax.f32 %v455, 0.0
        %v488 = vmax.f32 %v456, 0.0
        %v489 = vmax.f32 %v457, 0.0
        %v490 = vmax.f32 %v458, 0.0
        %v491 = vmax.f32 %v459, 0.0
        %v492 = vmax.f32 %v460, 0.0
        %v493 = vmax.f32 %v461, 0.0
        %v494 = vmax.f32 %v462, 0.0
        %v495 = vmax.f32 %v463, 0.0
        %v496 = vmax.f32 %v464, 0.0
        %v497 = vmax.f32 %v465, 0.0
        %v498 = vmax.f32 %v466, 0.0
        %v499 = vmax.f32 %v467, 0.0
        %v500 = vmax.f32 %v468, 0.0
        %v501 = vmax.f32 %v469, 0.0
        %v502 = vmax.f32 %v470, 0.0
        %v503 = vmax.f32 %v471, 0.0
        %v504 = vmax.f32 %v472, 0.0
        %v505 = vmax.f32 %v473, 0.0
        %v506 = vmax.f32 %v474, 0.0
        %v507 = vmax.f32 %v475, 0.0
        %v508 = vmax.f32 %v476, 0.0
        %v509 = vmax.f32 %v477, 0.0
        %v510 = vmax.f32 %v478, 0.0
        %v511 = vmax.f32 %v479, 0.0
        %s512 = scalar_lea.vmem [#allocation2], 24
        %513 = vst [vmem:[%s512 + $0x1] sm:$0xff] %v480
        %514 = vst [vmem:[%s512 + $0x9] sm:$0xff] %v481
        %515 = vst [vmem:[%s512 + $0x19] sm:$0xff] %v482
        %516 = vst [vmem:[%s512 + $0x21] sm:$0xff] %v483
        %517 = vst [vmem:[%s512 + $0x31] sm:$0xff] %v484
        %518 = vst [vmem:[%s512 + $0x39] sm:$0xff] %v485
        %519 = vst [vmem:[%s512 + $0x49] sm:$0xff] %v486
        %520 = vst [vmem:[%s512 + $0x51] sm:$0xff] %v487
        %521 = vst [vmem:[%s512 + $0x61] sm:$0xff] %v488
        %522 = vst [vmem:[%s512 + $0x69] sm:$0xff] %v489
        %523 = vst [vmem:[%s512 + $0x79] sm:$0xff] %v490
        %524 = vst [vmem:[%s512 + $0x81] sm:$0xff] %v491
        %525 = vst [vmem:[%s512 + $0x91] sm:$0xff] %v492
        %526 = vst [vmem:[%s512 + $0x99] sm:$0xff] %v493
        %527 = vst [vmem:[%s512 + $0xa9] sm:$0xff] %v494
        %528 = vst [vmem:[%s512 + $0xb1] sm:$0xff] %v495
        %529 = vst [vmem:[%s512 + $0xc1] sm:$0xff] %v496
        %530 = vst [vmem:[%s512 + $0xc9] sm:$0xff] %v497
        %531 = vst [vmem:[%s512 + $0xd9] sm:$0xff] %v498
        %532 = vst [vmem:[%s512 + $0xe1] sm:$0xff] %v499
        %533 = vst [vmem:[%s512 + $0xf1] sm:$0xff] %v500
        %534 = vst [vmem:[%s512 + $0xf9] sm:$0xff] %v501
        %535 = vst [vmem:[%s512 + $0x109] sm:$0xff] %v502
        %536 = vst [vmem:[%s512 + $0x111] sm:$0xff] %v503
        %537 = vst [vmem:[%s512 + $0x121] sm:$0xff] %v504
        %538 = vst [vmem:[%s512 + $0x129] sm:$0xff] %v505
        %539 = vst [vmem:[%s512 + $0x139] sm:$0xff] %v506
        %540 = vst [vmem:[%s512 + $0x141] sm:$0xff] %v507
        %541 = vst [vmem:[%s512 + $0x151] sm:$0xff] %v508
        %542 = vst [vmem:[%s512 + $0x159] sm:$0xff] %v509
        %543 = vst [vmem:[%s512 + $0x169] sm:$0xff] %v510
        %544 = vst [vmem:[%s512 + $0x171] sm:$0xff] %v511
        %v545 = vld [vmem:[#allocation2] sm:$0xff]
        %v546 = vld [vmem:[#allocation2 + $0x8] sm:$0xff]
        %v547 = vld [vmem:[#allocation2 + $0x10] sm:$0x3]
        %v548 = vld [vmem:[#allocation2 + $0x18] sm:$0xff]
        %v549 = vld [vmem:[#allocation2 + $0x20] sm:$0xff]
        %v550 = vld [vmem:[#allocation2 + $0x28] sm:$0x3]
        %v551 = vld [vmem:[#allocation2 + $0x30] sm:$0xff]
        %v552 = vld [vmem:[#allocation2 + $0x38] sm:$0xff]
        %v553 = vld [vmem:[#allocation2 + $0x40] sm:$0x3]
        %v554 = vld [vmem:[#allocation2 + $0x48] sm:$0xff]
        %v555 = vld [vmem:[#allocation2 + $0x50] sm:$0xff]
        %v556 = vld [vmem:[#allocation2 + $0x58] sm:$0x3]
        %v557 = vld [vmem:[#allocation2 + $0x60] sm:$0xff]
        %v558 = vld [vmem:[#allocation2 + $0x68] sm:$0xff]
        %v559 = vld [vmem:[#allocation2 + $0x70] sm:$0x3]
        %v560 = vld [vmem:[#allocation2 + $0x78] sm:$0xff]
        %v561 = vld [vmem:[#allocation2 + $0x80] sm:$0xff]
        %v562 = vld [vmem:[#allocation2 + $0x88] sm:$0x3]
        %v563 = vld [vmem:[#allocation2 + $0x90] sm:$0xff]
        %v564 = vld [vmem:[#allocation2 + $0x98] sm:$0xff]
        %v565 = vld [vmem:[#allocation2 + $0xa0] sm:$0x3]
        %v566 = vld [vmem:[#allocation2 + $0xa8] sm:$0xff]
        %v567 = vld [vmem:[#allocation2 + $0xb0] sm:$0xff]
        %v568 = vld [vmem:[#allocation2 + $0xb8] sm:$0x3]
        %v569 = vld [vmem:[#allocation2 + $0xc0] sm:$0xff]
        %v570 = vld [vmem:[#allocation2 + $0xc8] sm:$0xff]
        %v571 = vld [vmem:[#allocation2 + $0xd0] sm:$0x3]
        %v572 = vld [vmem:[#allocation2 + $0xd8] sm:$0xff]
        %v573 = vld [vmem:[#allocation2 + $0xe0] sm:$0xff]
        %v574 = vld [vmem:[#allocation2 + $0xe8] sm:$0x3]
        %v575 = vld [vmem:[#allocation2 + $0xf0] sm:$0xff]
        %v576 = vld [vmem:[#allocation2 + $0xf8] sm:$0xff]
        %v577 = vld [vmem:[#allocation2 + $0x100] sm:$0x3]
        %v578 = vld [vmem:[#allocation2 + $0x108] sm:$0xff]
        %v579 = vld [vmem:[#allocation2 + $0x110] sm:$0xff]
        %v580 = vld [vmem:[#allocation2 + $0x118] sm:$0x3]
        %v581 = vld [vmem:[#allocation2 + $0x120] sm:$0xff]
        %v582 = vld [vmem:[#allocation2 + $0x128] sm:$0xff]
        %v583 = vld [vmem:[#allocation2 + $0x130] sm:$0x3]
        %v584 = vld [vmem:[#allocation2 + $0x138] sm:$0xff]
        %v585 = vld [vmem:[#allocation2 + $0x140] sm:$0xff]
        %v586 = vld [vmem:[#allocation2 + $0x148] sm:$0x3]
        %v587 = vld [vmem:[#allocation2 + $0x150] sm:$0xff]
        %v588 = vld [vmem:[#allocation2 + $0x158] sm:$0xff]
        %v589 = vld [vmem:[#allocation2 + $0x160] sm:$0x3]
        %v590 = vld [vmem:[#allocation2 + $0x168] sm:$0xff]
        %v591 = vld [vmem:[#allocation2 + $0x170] sm:$0xff]
        %v592 = vld [vmem:[#allocation2 + $0x178] sm:$0x3]
        %v593 = vld [vmem:[#allocation2 + $0x180] sm:$0xff]
        %v594 = vld [vmem:[#allocation2 + $0x188] sm:$0xff]
        %v595 = vld [vmem:[#allocation2 + $0x190] sm:$0x3]
        %v596 = vld [vmem:[#allocation2 + $0x198] sm:$0xff]
        %v597 = vld [vmem:[#allocation2 + $0x1a0] sm:$0xff]
        %v598 = vld [vmem:[#allocation2 + $0x1a8] sm:$0x3]
        %v599 = vld [vmem:[#allocation9] sm:$0xf]
        %v600 = vld [vmem:[#allocation9 + $0x4] sm:$0xf]
        %v601 = vld [vmem:[#allocation9 + $0x8] sm:$0xf]
        %v602 = vld [vmem:[#allocation9 + $0xc] sm:$0xf]
        %v603 = vld [vmem:[#allocation9 + $0x10] sm:$0xf]
        %v604 = vld [vmem:[#allocation9 + $0x14] sm:$0xf]
        %v605 = vld [vmem:[#allocation9 + $0x18] sm:$0xf]
        %v606 = vld [vmem:[#allocation9 + $0x1c] sm:$0xf]
        %v607 = vld [vmem:[#allocation9 + $0x20] sm:$0xf]
        %v608 = vld [vmem:[#allocation9 + $0x24] sm:$0xf]
        %v609 = vld [vmem:[#allocation9 + $0x28] sm:$0xf]
        %v610 = vld [vmem:[#allocation9 + $0x2c] sm:$0xf]
        %v611 = vld [vmem:[#allocation9 + $0x30] sm:$0xf]
        %v612 = vld [vmem:[#allocation9 + $0x34] sm:$0xf]
        %v613 = vld [vmem:[#allocation9 + $0x38] sm:$0xf]
        %v614 = vld [vmem:[#allocation9 + $0x3c] sm:$0xf]
        %v615 = vld [vmem:[#allocation9 + $0x40] sm:$0xf]
        %v616 = vld [vmem:[#allocation9 + $0x44] sm:$0xf]
        %v617 = vld [vmem:[#allocation9 + $0x48] sm:$0xf]
        %v618 = vld [vmem:[#allocation9 + $0x4c] sm:$0xf]
        %v619 = vld [vmem:[#allocation9 + $0x50] sm:$0xf]
        %v620 = vld [vmem:[#allocation9 + $0x54] sm:$0xf]
        %v621 = vld [vmem:[#allocation9 + $0x58] sm:$0xf]
        %v622 = vld [vmem:[#allocation9 + $0x5c] sm:$0xf]
        %v623 = vld [vmem:[#allocation9 + $0x60] sm:$0xf]
        %v624 = vld [vmem:[#allocation9 + $0x64] sm:$0xf]
        %v625 = vld [vmem:[#allocation9 + $0x68] sm:$0xf]
        %v626 = vld [vmem:[#allocation9 + $0x6c] sm:$0xf]
        %v627 = vld [vmem:[#allocation9 + $0x70] sm:$0xf]
        %v628 = vld [vmem:[#allocation9 + $0x74] sm:$0xf]
        %v629 = vld [vmem:[#allocation9 + $0x78] sm:$0xf]
        %v630 = vld [vmem:[#allocation9 + $0x7c] sm:$0xf]
        %v631 = vld [vmem:[#allocation9 + $0x80] sm:$0xf]
        %v632 = vld [vmem:[#allocation9 + $0x84] sm:$0xf]
        %v633 = vld [vmem:[#allocation9 + $0x88] sm:$0xf]
        %v634 = vld [vmem:[#allocation9 + $0x8c] sm:$0xf]
        %v635 = vld [vmem:[#allocation9 + $0x90] sm:$0xf]
        %v636 = vld [vmem:[#allocation9 + $0x94] sm:$0xf]
        %v637 = vld [vmem:[#allocation9 + $0x98] sm:$0xf]
        %v638 = vld [vmem:[#allocation9 + $0x9c] sm:$0xf]
        %v639 = vld [vmem:[#allocation9 + $0xa0] sm:$0xf]
        %v640 = vld [vmem:[#allocation9 + $0xa4] sm:$0xf]
        %v641 = vld [vmem:[#allocation9 + $0xa8] sm:$0xf]
        %v642 = vld [vmem:[#allocation9 + $0xac] sm:$0xf]
        %v643 = vld [vmem:[#allocation9 + $0xb0] sm:$0xf]
        %v644 = vld [vmem:[#allocation9 + $0xb4] sm:$0xf]
        %v645 = vld [vmem:[#allocation9 + $0xb8] sm:$0xf]
        %v646 = vld [vmem:[#allocation9 + $0xbc] sm:$0xf]
        %v647 = vld [vmem:[#allocation9 + $0xc0] sm:$0xf]
        %v648 = vld [vmem:[#allocation9 + $0xc4] sm:$0xf]
        %v649 = vld [vmem:[#allocation9 + $0xc8] sm:$0xf]
        %v650 = vld [vmem:[#allocation9 + $0xcc] sm:$0xf]
        %v651 = vld [vmem:[#allocation9 + $0xd0] sm:$0xf]
        %v652 = vld [vmem:[#allocation9 + $0xd4] sm:$0xf]
        %v653 = vld [vmem:[#allocation9 + $0xd8] sm:$0xf]
        %v654 = vld [vmem:[#allocation9 + $0xdc] sm:$0xf]
        %v655 = vld [vmem:[#allocation9 + $0xe0] sm:$0xf]
        %v656 = vld [vmem:[#allocation9 + $0xe4] sm:$0xf]
        %v657 = vld [vmem:[#allocation9 + $0xe8] sm:$0xf]
        %v658 = vld [vmem:[#allocation9 + $0xec] sm:$0xf]
        %v659 = vld [vmem:[#allocation9 + $0xf0] sm:$0xf]
        %v660 = vld [vmem:[#allocation9 + $0xf4] sm:$0xf]
        %v661 = vld [vmem:[#allocation9 + $0xf8] sm:$0xf]
        %v662 = vld [vmem:[#allocation9 + $0xfc] sm:$0xf]
        %v663 = vld [vmem:[#allocation9 + $0x100] sm:$0xf]
        %v664 = vld [vmem:[#allocation9 + $0x104] sm:$0xf]
        %v665 = vld [vmem:[#allocation9 + $0x108] sm:$0xf]
        %v666 = vld [vmem:[#allocation9 + $0x10c] sm:$0xf]
        %v667 = vld [vmem:[#allocation9 + $0x110] sm:$0xf]
        %v668 = vld [vmem:[#allocation9 + $0x114] sm:$0xf]
        %v669 = vld [vmem:[#allocation9 + $0x118] sm:$0xf]
        %v670 = vld [vmem:[#allocation9 + $0x11c] sm:$0xf]
        %v671 = vld [vmem:[#allocation9 + $0x120] sm:$0xf]
        %v672 = vld [vmem:[#allocation9 + $0x124] sm:$0xf]
        %v673 = vld [vmem:[#allocation9 + $0x128] sm:$0xf]
        %v674 = vld [vmem:[#allocation9 + $0x12c] sm:$0xf]
        %v675 = vld [vmem:[#allocation9 + $0x130] sm:$0xf]
        %v676 = vld [vmem:[#allocation9 + $0x134] sm:$0xf]
        %v677 = vld [vmem:[#allocation9 + $0x138] sm:$0xf]
        %v678 = vld [vmem:[#allocation9 + $0x13c] sm:$0xf]
        %v679 = vld [vmem:[#allocation9 + $0x140] sm:$0xf]
        %v680 = vld [vmem:[#allocation9 + $0x144] sm:$0xf]
        %v681 = vld [vmem:[#allocation9 + $0x148] sm:$0xf]
        %v682 = vld [vmem:[#allocation9 + $0x14c] sm:$0xf]
        %v683 = vld [vmem:[#allocation9 + $0x150] sm:$0xf]
        %v684 = vld [vmem:[#allocation9 + $0x154] sm:$0xf]
        %v685 = vld [vmem:[#allocation9 + $0x158] sm:$0xf]
        %v686 = vld [vmem:[#allocation9 + $0x15c] sm:$0xf]
        %v687 = vld [vmem:[#allocation9 + $0x160] sm:$0xf]
        %v688 = vld [vmem:[#allocation9 + $0x164] sm:$0xf]
        %v689 = vld [vmem:[#allocation9 + $0x168] sm:$0xf]
        %v690 = vld [vmem:[#allocation9 + $0x16c] sm:$0xf]
        %v691 = vld [vmem:[#allocation9 + $0x170] sm:$0xf]
        %v692 = vld [vmem:[#allocation9 + $0x174] sm:$0xf]
        %v693 = vld [vmem:[#allocation9 + $0x178] sm:$0xf]
        %v694 = vld [vmem:[#allocation9 + $0x17c] sm:$0xf]
        %v695 = vld [vmem:[#allocation9 + $0x180] sm:$0xf]
        %v696 = vld [vmem:[#allocation9 + $0x184] sm:$0xf]
        %v697 = vld [vmem:[#allocation9 + $0x188] sm:$0xf]
        %v698 = vld [vmem:[#allocation9 + $0x18c] sm:$0xf]
        %v699 = vld [vmem:[#allocation9 + $0x190] sm:$0xf]
        %v700 = vld [vmem:[#allocation9 + $0x194] sm:$0xf]
        %v701 = vld [vmem:[#allocation9 + $0x198] sm:$0xf]
        %v702 = vld [vmem:[#allocation9 + $0x19c] sm:$0xf]
        %v703 = vld [vmem:[#allocation9 + $0x1a0] sm:$0xf]
        %v704 = vld [vmem:[#allocation9 + $0x1a4] sm:$0xf]
        %v705 = vld [vmem:[#allocation9 + $0x1a8] sm:$0xf]
        %v706 = vld [vmem:[#allocation9 + $0x1ac] sm:$0xf]
        %v707 = vld [vmem:[#allocation9 + $0x1b0] sm:$0xf]
        %v708 = vld [vmem:[#allocation9 + $0x1b4] sm:$0xf]
        %v709 = vld [vmem:[#allocation9 + $0x1b8] sm:$0xf]
        %v710 = vld [vmem:[#allocation9 + $0x1bc] sm:$0xf]
        %v711 = vld [vmem:[#allocation9 + $0x1c0] sm:$0xf]
        %v712 = vld [vmem:[#allocation9 + $0x1c4] sm:$0xf]
        %v713 = vld [vmem:[#allocation9 + $0x1c8] sm:$0xf]
        %v714 = vld [vmem:[#allocation9 + $0x1cc] sm:$0xf]
        %v715 = vld [vmem:[#allocation9 + $0x1d0] sm:$0xf]
        %v716 = vld [vmem:[#allocation9 + $0x1d4] sm:$0xf]
        %v717 = vld [vmem:[#allocation9 + $0x1d8] sm:$0xf]
        %v718 = vld [vmem:[#allocation9 + $0x1dc] sm:$0xf]
        %v719 = vld [vmem:[#allocation9 + $0x1e0] sm:$0xf]
        %v720 = vld [vmem:[#allocation9 + $0x1e4] sm:$0xf]
        %v721 = vld [vmem:[#allocation9 + $0x1e8] sm:$0xf]
        %v722 = vld [vmem:[#allocation9 + $0x1ec] sm:$0xf]
        %v723 = vld [vmem:[#allocation9 + $0x1f0] sm:$0xf]
        %v724 = vld [vmem:[#allocation9 + $0x1f4] sm:$0xf]
        %v725 = vld [vmem:[#allocation9 + $0x1f8] sm:$0xf]
        %v726 = vld [vmem:[#allocation9 + $0x1fc] sm:$0xf]
        %v727 = vld [vmem:[#allocation9 + $0x200] sm:$0xf]
        %v728 = vld [vmem:[#allocation9 + $0x204] sm:$0xf]
        %v729 = vld [vmem:[#allocation9 + $0x208] sm:$0xf]
        %v730 = vld [vmem:[#allocation9 + $0x20c] sm:$0xf]
        %v731 = vld [vmem:[#allocation9 + $0x210] sm:$0xf]
        %v732 = vld [vmem:[#allocation9 + $0x214] sm:$0xf]
        %v733 = vld [vmem:[#allocation9 + $0x218] sm:$0xf]
        %v734 = vld [vmem:[#allocation9 + $0x21c] sm:$0xf]
        %v735 = vld [vmem:[#allocation9 + $0x220] sm:$0xf]
        %v736 = vld [vmem:[#allocation9 + $0x224] sm:$0xf]
        %v737 = vld [vmem:[#allocation9 + $0x228] sm:$0xf]
        %v738 = vld [vmem:[#allocation9 + $0x22c] sm:$0xf]
        %v739 = vld [vmem:[#allocation9 + $0x230] sm:$0xf]
        %v740 = vld [vmem:[#allocation9 + $0x234] sm:$0xf]
        %v741 = vld [vmem:[#allocation9 + $0x238] sm:$0xf]
        %v742 = vld [vmem:[#allocation9 + $0x23c] sm:$0xf]
        %v743 = vpack.c.bf16 %v546, %v545
        %v744 = vpack.c.bf16 %v549, %v548
        %v745 = vpack.c.bf16 %v552, %v551
        %v746 = vpack.c.bf16 %v555, %v554
        %v747 = vpack.c.bf16 %v558, %v557
        %v748 = vpack.c.bf16 %v561, %v560
        %v749 = vpack.c.bf16 %v564, %v563
        %v750 = vpack.c.bf16 %v567, %v566
        %v751 = vpack.c.bf16 %v570, %v569
        %v752 = vpack.c.bf16 %v573, %v572
        %v753 = vpack.c.bf16 %v576, %v575
        %v754 = vpack.c.bf16 %v579, %v578
        %v755 = vpack.c.bf16 %v582, %v581
        %v756 = vpack.c.bf16 %v585, %v584
        %v757 = vpack.c.bf16 %v588, %v587
        %v758 = vpack.c.bf16 %v591, %v590
        %vm807 = vcmask 1046528
        %v808 = vrot.slane %v545, 1
        %v809 = vrot.slane %v546, 1
        %v810 = vsel %vm807, %v808, %v809
        %v811 = vrot.slane %v547, 1
        %v812 = vsel %vm807, %v809, %v811
        %v813 = vrot.slane %v548, 1
        %v814 = vrot.slane %v549, 1
        %v815 = vsel %vm807, %v813, %v814
        %v816 = vrot.slane %v550, 1
        %v817 = vsel %vm807, %v814, %v816
        %v818 = vrot.slane %v551, 1
        %v819 = vrot.slane %v552, 1
        %v820 = vsel %vm807, %v818, %v819
        %v821 = vrot.slane %v553, 1
        %v822 = vsel %vm807, %v819, %v821
        %v823 = vrot.slane %v554, 1
        %v824 = vrot.slane %v555, 1
        %v825 = vsel %vm807, %v823, %v824
        %v826 = vrot.slane %v556, 1
        %v827 = vsel %vm807, %v824, %v826
        %v828 = vrot.slane %v557, 1
        %v829 = vrot.slane %v558, 1
        %v830 = vsel %vm807, %v828, %v829
        %v831 = vrot.slane %v559, 1
        %v832 = vsel %vm807, %v829, %v831
        %v833 = vrot.slane %v560, 1
        %v834 = vrot.slane %v561, 1
        %v835 = vsel %vm807, %v833, %v834
        %v836 = vrot.slane %v562, 1
        %v837 = vsel %vm807, %v834, %v836
        %v838 = vrot.slane %v563, 1
        %v839 = vrot.slane %v564, 1
        %v840 = vsel %vm807, %v838, %v839
        %v841 = vrot.slane %v565, 1
        %v842 = vsel %vm807, %v839, %v841
        %v843 = vrot.slane %v566, 1
        %v844 = vrot.slane %v567, 1
        %v845 = vsel %vm807, %v843, %v844
        %v846 = vrot.slane %v568, 1
        %v847 = vsel %vm807, %v844, %v846
        %v848 = vrot.slane %v569, 1
        %v849 = vrot.slane %v570, 1
        %v850 = vsel %vm807, %v848, %v849
        %v851 = vrot.slane %v571, 1
        %v852 = vsel %vm807, %v849, %v851
        %v853 = vrot.slane %v572, 1
        %v854 = vrot.slane %v573, 1
        %v855 = vsel %vm807, %v853, %v854
        %v856 = vrot.slane %v574, 1
        %v857 = vsel %vm807, %v854, %v856
        %v858 = vrot.slane %v575, 1
        %v859 = vrot.slane %v576, 1
        %v860 = vsel %vm807, %v858, %v859
        %v861 = vrot.slane %v577, 1
        %v862 = vsel %vm807, %v859, %v861
        %v863 = vrot.slane %v578, 1
        %v864 = vrot.slane %v579, 1
        %v865 = vsel %vm807, %v863, %v864
        %v866 = vrot.slane %v580, 1
        %v867 = vsel %vm807, %v864, %v866
        %v868 = vrot.slane %v581, 1
        %v869 = vrot.slane %v582, 1
        %v870 = vsel %vm807, %v868, %v869
        %v871 = vrot.slane %v583, 1
        %v872 = vsel %vm807, %v869, %v871
        %v873 = vrot.slane %v584, 1
        %v874 = vrot.slane %v585, 1
        %v875 = vsel %vm807, %v873, %v874
        %v876 = vrot.slane %v586, 1
        %v877 = vsel %vm807, %v874, %v876
        %v878 = vrot.slane %v587, 1
        %v879 = vrot.slane %v588, 1
        %v880 = vsel %vm807, %v878, %v879
        %v881 = vrot.slane %v589, 1
        %v882 = vsel %vm807, %v879, %v881
        %v883 = vrot.slane %v590, 1
        %v884 = vrot.slane %v591, 1
        %v885 = vsel %vm807, %v883, %v884
        %v886 = vrot.slane %v592, 1
        %v887 = vsel %vm807, %v884, %v886
        %v920 = vpack.c.bf16 %v812, %v810
        %v921 = vpack.c.bf16 %v817, %v815
        %v922 = vpack.c.bf16 %v822, %v820
        %v923 = vpack.c.bf16 %v827, %v825
        %v924 = vpack.c.bf16 %v832, %v830
        %v925 = vpack.c.bf16 %v837, %v835
        %v926 = vpack.c.bf16 %v842, %v840
        %v927 = vpack.c.bf16 %v847, %v845
        %v928 = vpack.c.bf16 %v852, %v850
        %v929 = vpack.c.bf16 %v857, %v855
        %v930 = vpack.c.bf16 %v862, %v860
        %v931 = vpack.c.bf16 %v867, %v865
        %v932 = vpack.c.bf16 %v872, %v870
        %v933 = vpack.c.bf16 %v877, %v875
        %v934 = vpack.c.bf16 %v882, %v880
        %v935 = vpack.c.bf16 %v887, %v885
        %v952 = vunpack.c.l.b16 %v615
        %v953 = vunpack.c.l.b16 %v616
        %v954 = vunpack.c.l.b16 %v617
        %v955 = vunpack.c.l.b16 %v618
        %v956 = vunpack.c.l.b16 %v619
        %v957 = vunpack.c.l.b16 %v620
        %v958 = vunpack.c.l.b16 %v621
        %v959 = vunpack.c.l.b16 %v622
        %v960 = vunpack.c.l.b16 %v623
        %v961 = vunpack.c.l.b16 %v624
        %v962 = vunpack.c.l.b16 %v625
        %v963 = vunpack.c.l.b16 %v626
        %v964 = vunpack.c.l.b16 %v627
        %v965 = vunpack.c.l.b16 %v628
        %v966 = vunpack.c.l.b16 %v629
        %v967 = vunpack.c.l.b16 %v630
        %v968 = vpack.c.b16 %v953, %v952
        %v969 = vpack.c.b16 %v955, %v954
        %v970 = vpack.c.b16 %v957, %v956
        %v971 = vpack.c.b16 %v959, %v958
        %v972 = vpack.c.b16 %v961, %v960
        %v973 = vpack.c.b16 %v963, %v962
        %v974 = vpack.c.b16 %v965, %v964
        %v975 = vpack.c.b16 %v967, %v966
        %984 = vmatprep.subr.bf16.mxu0 0
        %985 = vmatpush1.bf16.msra.mxu0 %v968
        %986 = vmatprep.subr.bf16.mxu0 0
        %987 = vmatpush1.bf16.msra.mxu0 %v969
        %988 = vmatprep.subr.bf16.mxu0 0
        %989 = vmatpush1.bf16.msra.mxu0 %v970
        %990 = vmatprep.subr.bf16.mxu0 0
        %991 = vmatpush1.bf16.msra.mxu0 %v971
        %992 = vmatprep.subr.bf16.mxu0 0
        %993 = vmatpush1.bf16.msra.mxu0 %v972
        %994 = vmatprep.subr.bf16.mxu0 0
        %995 = vmatpush1.bf16.msra.mxu0 %v973
        %996 = vmatprep.subr.bf16.mxu0 0
        %997 = vmatpush1.bf16.msra.mxu0 %v974
        %998 = vmatprep.subr.bf16.mxu0 0
        %999 = vmatpush1.bf16.msra.mxu0 %v975
        %1000 = vmatprep.subr.bf16.mxu0 0
        %1001 = vmatpush1.bf16.msra.mxu0 0
        %1002 = vmatprep.subr.bf16.mxu0 0
        %1003 = vmatpush1.bf16.msra.mxu0 0
        %1004 = vmatprep.subr.bf16.mxu0 0
        %1005 = vmatpush1.bf16.msra.mxu0 0
        %1006 = vmatprep.subr.bf16.mxu0 0
        %1007 = vmatpush1.bf16.msra.mxu0 0
        %1008 = vmatprep.subr.bf16.mxu0 0
        %1009 = vmatpush1.bf16.msra.mxu0 0
        %1010 = vmatprep.subr.bf16.mxu0 0
        %1011 = vmatpush1.bf16.msra.mxu0 0
        %1012 = vmatprep.subr.bf16.mxu0 0
        %1013 = vmatpush1.bf16.msra.mxu0 0
        %1014 = vmatprep.subr.bf16.mxu0 0
        %1015 = vmatpush1.bf16.msra.mxu0 0
        %1016 = vmatprep.mubr.bf16.mxu0 0
        %1017 = vmatmul.mubr.bf16.gmra.mrb[0].mxu0 %v920
        %v1018 = vpop.f32.mrb[0].mxu0
        %v1019 = vadd.f32 0.0, %v1018
        %v1020 = vpop.f32.mrb[0].mxu0
        %v1021 = vpop.f32.mrb[0].mxu0
        %v1022 = vadd.f32 0.0, %v1021
        %v1023 = vpop.f32.mrb[0].mxu0
        %1024 = vmatprep.mubr.bf16.mxu0 0
        %1025 = vmatmul.mubr.bf16.gmra.mrb[0].mxu0 %v921
        %v1026 = vpop.f32.mrb[0].mxu0
        %v1027 = vadd.f32 0.0, %v1026
        %v1028 = vpop.f32.mrb[0].mxu0
        %v1029 = vpop.f32.mrb[0].mxu0
        %v1030 = vadd.f32 0.0, %v1029
        %v1031 = vpop.f32.mrb[0].mxu0
        %1032 = vmatprep.mubr.bf16.mxu0 0
        %1033 = vmatmul.mubr.bf16.gmra.mrb[0].mxu0 %v922
        %v1034 = vpop.f32.mrb[0].mxu0
        %v1035 = vadd.f32 0.0, %v1034
        %v1036 = vpop.f32.mrb[0].mxu0
        %v1037 = vpop.f32.mrb[0].mxu0
        %v1038 = vadd.f32 0.0, %v1037
        %v1039 = vpop.f32.mrb[0].mxu0
        %1040 = vmatprep.mubr.bf16.mxu0 0
        %1041 = vmatmul.mubr.bf16.gmra.mrb[0].mxu0 %v923
        %v1042 = vpop.f32.mrb[0].mxu0
        %v1043 = vadd.f32 0.0, %v1042
        %v1044 = vpop.f32.mrb[0].mxu0
        %v1045 = vpop.f32.mrb[0].mxu0
        %v1046 = vadd.f32 0.0, %v1045
        %v1047 = vpop.f32.mrb[0].mxu0
        %1048 = vmatprep.mubr.bf16.mxu0 0
        %1049 = vmatmul.mubr.bf16.gmra.mrb[0].mxu0 %v924
        %v1050 = vpop.f32.mrb[0].mxu0
        %v1051 = vadd.f32 0.0, %v1050
        %v1052 = vpop.f32.mrb[0].mxu0
        %v1053 = vpop.f32.mrb[0].mxu0
        %v1054 = vadd.f32 0.0, %v1053
        %v1055 = vpop.f32.mrb[0].mxu0
        %1056 = vmatprep.mubr.bf16.mxu0 0
        %1057 = vmatmul.mubr.bf16.gmra.mrb[0].mxu0 %v925
        %v1058 = vpop.f32.mrb[0].mxu0
        %v1059 = vadd.f32 0.0, %v1058
        %v1060 = vpop.f32.mrb[0].mxu0
        %v1061 = vpop.f32.mrb[0].mxu0
        %v1062 = vadd.f32 0.0, %v1061
        %v1063 = vpop.f32.mrb[0].mxu0
        %1064 = vmatprep.mubr.bf16.mxu0 0
        %1065 = vmatmul.mubr.bf16.gmra.mrb[0].mxu0 %v926
        %v1066 = vpop.f32.mrb[0].mxu0
        %v1067 = vadd.f32 0.0, %v1066
        %v1068 = vpop.f32.mrb[0].mxu0
        %v1069 = vpop.f32.mrb[0].mxu0
        %v1070 = vadd.f32 0.0, %v1069
        %v1071 = vpop.f32.mrb[0].mxu0
        %1072 = vmatprep.mubr.bf16.mxu0 0
        %1073 = vmatmul.mubr.bf16.gmra.mrb[0].mxu0 %v927
        %v1074 = vpop.f32.mrb[0].mxu0
        %v1075 = vadd.f32 0.0, %v1074
        %v1076 = vpop.f32.mrb[0].mxu0
        %v1077 = vpop.f32.mrb[0].mxu0
        %v1078 = vadd.f32 0.0, %v1077
        %v1079 = vpop.f32.mrb[0].mxu0
        %1080 = vmatprep.mubr.bf16.mxu0 0
        %1081 = vmatmul.mubr.bf16.gmra.mrb[0].mxu0 %v928
        %v1082 = vpop.f32.mrb[0].mxu0
        %v1083 = vadd.f32 0.0, %v1082
        %v1084 = vpop.f32.mrb[0].mxu0
        %v1085 = vpop.f32.mrb[0].mxu0
        %v1086 = vadd.f32 0.0, %v1085
        %v1087 = vpop.f32.mrb[0].mxu0
        %1088 = vmatprep.mubr.bf16.mxu0 0
        %1089 = vmatmul.mubr.bf16.gmra.mrb[0].mxu0 %v929
        %v1090 = vpop.f32.mrb[0].mxu0
        %v1091 = vadd.f32 0.0, %v1090
        %v1092 = vpop.f32.mrb[0].mxu0
        %v1093 = vpop.f32.mrb[0].mxu0
        %v1094 = vadd.f32 0.0, %v1093
        %v1095 = vpop.f32.mrb[0].mxu0
        %1096 = vmatprep.mubr.bf16.mxu0 0
        %1097 = vmatmul.mubr.bf16.gmra.mrb[0].mxu0 %v930
        %v1098 = vpop.f32.mrb[0].mxu0
        %v1099 = vadd.f32 0.0, %v1098
        %v1100 = vpop.f32.mrb[0].mxu0
        %v1101 = vpop.f32.mrb[0].mxu0
        %v1102 = vadd.f32 0.0, %v1101
        %v1103 = vpop.f32.mrb[0].mxu0
        %1104 = vmatprep.mubr.bf16.mxu0 0
        %1105 = vmatmul.mubr.bf16.gmra.mrb[0].mxu0 %v931
        %v1106 = vpop.f32.mrb[0].mxu0
        %v1107 = vadd.f32 0.0, %v1106
        %v1108 = vpop.f32.mrb[0].mxu0
        %v1109 = vpop.f32.mrb[0].mxu0
        %v1110 = vadd.f32 0.0, %v1109
        %v1111 = vpop.f32.mrb[0].mxu0
        %1112 = vmatprep.mubr.bf16.mxu0 0
        %1113 = vmatmul.mubr.bf16.gmra.mrb[0].mxu0 %v932
        %v1114 = vpop.f32.mrb[0].mxu0
        %v1115 = vadd.f32 0.0, %v1114
        %v1116 = vpop.f32.mrb[0].mxu0
        %v1117 = vpop.f32.mrb[0].mxu0
        %v1118 = vadd.f32 0.0, %v1117
        %v1119 = vpop.f32.mrb[0].mxu0
        %1120 = vmatprep.mubr.bf16.mxu0 0
        %1121 = vmatmul.mubr.bf16.gmra.mrb[0].mxu0 %v933
        %v1122 = vpop.f32.mrb[0].mxu0
        %v1123 = vadd.f32 0.0, %v1122
        %v1124 = vpop.f32.mrb[0].mxu0
        %v1125 = vpop.f32.mrb[0].mxu0
        %v1126 = vadd.f32 0.0, %v1125
        %v1127 = vpop.f32.mrb[0].mxu0
        %1128 = vmatprep.mubr.bf16.mxu0 0
        %1129 = vmatmul.mubr.bf16.gmra.mrb[0].mxu0 %v934
        %v1130 = vpop.f32.mrb[0].mxu0
        %v1131 = vadd.f32 0.0, %v1130
        %v1132 = vpop.f32.mrb[0].mxu0
        %v1133 = vpop.f32.mrb[0].mxu0
        %v1134 = vadd.f32 0.0, %v1133
        %v1135 = vpop.f32.mrb[0].mxu0
        %1136 = vmatprep.mubr.bf16.mxu0 0
        %1137 = vmatmul.mubr.bf16.gmra.mrb[0].mxu0 %v935
        %v1138 = vpop.f32.mrb[0].mxu0
        %v1139 = vadd.f32 0.0, %v1138
        %v1140 = vpop.f32.mrb[0].mxu0
        %v1141 = vpop.f32.mrb[0].mxu0
        %v1142 = vadd.f32 0.0, %v1141
        %v1143 = vpop.f32.mrb[0].mxu0
        %1144 = vdwg.mxu0
        %v1161 = vunpack.c.l.b16 %v599
        %v1162 = vunpack.c.l.b16 %v600
        %v1163 = vunpack.c.l.b16 %v601
        %v1164 = vunpack.c.l.b16 %v602
        %v1165 = vunpack.c.l.b16 %v603
        %v1166 = vunpack.c.l.b16 %v604
        %v1167 = vunpack.c.l.b16 %v605
        %v1168 = vunpack.c.l.b16 %v606
        %v1169 = vunpack.c.l.b16 %v607
        %v1170 = vunpack.c.l.b16 %v608
        %v1171 = vunpack.c.l.b16 %v609
        %v1172 = vunpack.c.l.b16 %v610
        %v1173 = vunpack.c.l.b16 %v611
        %v1174 = vunpack.c.l.b16 %v612
        %v1175 = vunpack.c.l.b16 %v613
        %v1176 = vunpack.c.l.b16 %v614
        %v1177 = vpack.c.b16 %v1162, %v1161
        %v1178 = vpack.c.b16 %v1164, %v1163
        %v1179 = vpack.c.b16 %v1166, %v1165
        %v1180 = vpack.c.b16 %v1168, %v1167
        %v1181 = vpack.c.b16 %v1170, %v1169
        %v1182 = vpack.c.b16 %v1172, %v1171
        %v1183 = vpack.c.b16 %v1174, %v1173
        %v1184 = vpack.c.b16 %v1176, %v1175
        %1193 = vmatprep.subr.bf16.mxu0 0
        %1194 = vmatpush1.bf16.msra.mxu0 %v1177
        %1195 = vmatprep.subr.bf16.mxu0 0
        %1196 = vmatpush1.bf16.msra.mxu0 %v1178
        %1197 = vmatprep.subr.bf16.mxu0 0
        %1198 = vmatpush1.bf16.msra.mxu0 %v1179
        %1199 = vmatprep.subr.bf16.mxu0 0
        %1200 = vmatpush1.bf16.msra.mxu0 %v1180
        %1201 = vmatprep.subr.bf16.mxu0 0
        %1202 = vmatpush1.bf16.msra.mxu0 %v1181
        %1203 = vmatprep.subr.bf16.mxu0 0
        %1204 = vmatpush1.bf16.msra.mxu0 %v1182
        %1205 = vmatprep.subr.bf16.mxu0 0
        %1206 = vmatpush1.bf16.msra.mxu0 %v1183
        %1207 = vmatprep.subr.bf16.mxu0 0
        %1208 = vmatpush1.bf16.msra.mxu0 %v1184
        %1209 = vmatprep.subr.bf16.mxu0 0
        %1210 = vmatpush1.bf16.msra.mxu0 0
        %1211 = vmatprep.subr.bf16.mxu0 0
        %1212 = vmatpush1.bf16.msra.mxu0 0
        %1213 = vmatprep.subr.bf16.mxu0 0
        %1214 = vmatpush1.bf16.msra.mxu0 0
        %1215 = vmatprep.subr.bf16.mxu0 0
        %1216 = vmatpush1.bf16.msra.mxu0 0
        %1217 = vmatprep.subr.bf16.mxu0 0
        %1218 = vmatpush1.bf16.msra.mxu0 0
        %1219 = vmatprep.subr.bf16.mxu0 0
        %1220 = vmatpush1.bf16.msra.mxu0 0
        %1221 = vmatprep.subr.bf16.mxu0 0
        %1222 = vmatpush1.bf16.msra.mxu0 0
        %1223 = vmatprep.subr.bf16.mxu0 0
        %1224 = vmatpush1.bf16.msra.mxu0 0
        %1225 = vmatprep.mubr.bf16.mxu0 0
        %1226 = vmatmul.mubr.bf16.gmra.mrb[0].mxu0 %v743
        %v1227 = vpop.f32.mrb[0].mxu0
        %v1228 = vadd.f32 %v1019, %v1227
        %v1229 = vpop.f32.mrb[0].mxu0
        %v1230 = vpop.f32.mrb[0].mxu0
        %v1231 = vadd.f32 %v1022, %v1230
        %v1232 = vpop.f32.mrb[0].mxu0
        %1233 = vmatprep.mubr.bf16.mxu0 0
        %1234 = vmatmul.mubr.bf16.gmra.mrb[0].mxu0 %v744
        %v1235 = vpop.f32.mrb[0].mxu0
        %v1236 = vadd.f32 %v1027, %v1235
        %v1237 = vpop.f32.mrb[0].mxu0
        %v1238 = vpop.f32.mrb[0].mxu0
        %v1239 = vadd.f32 %v1030, %v1238
        %v1240 = vpop.f32.mrb[0].mxu0
        %1241 = vmatprep.mubr.bf16.mxu0 0
        %1242 = vmatmul.mubr.bf16.gmra.mrb[0].mxu0 %v745
        %v1243 = vpop.f32.mrb[0].mxu0
        %v1244 = vadd.f32 %v1035, %v1243
        %v1245 = vpop.f32.mrb[0].mxu0
        %v1246 = vpop.f32.mrb[0].mxu0
        %v1247 = vadd.f32 %v1038, %v1246
        %v1248 = vpop.f32.mrb[0].mxu0
        %1249 = vmatprep.mubr.bf16.mxu0 0
        %1250 = vmatmul.mubr.bf16.gmra.mrb[0].mxu0 %v746
        %v1251 = vpop.f32.mrb[0].mxu0
        %v1252 = vadd.f32 %v1043, %v1251
        %v1253 = vpop.f32.mrb[0].mxu0
        %v1254 = vpop.f32.mrb[0].mxu0
        %v1255 = vadd.f32 %v1046, %v1254
        %v1256 = vpop.f32.mrb[0].mxu0
        %1257 = vmatprep.mubr.bf16.mxu0 0
        %1258 = vmatmul.mubr.bf16.gmra.mrb[0].mxu0 %v747
        %v1259 = vpop.f32.mrb[0].mxu0
        %v1260 = vadd.f32 %v1051, %v1259
        %v1261 = vpop.f32.mrb[0].mxu0
        %v1262 = vpop.f32.mrb[0].mxu0
        %v1263 = vadd.f32 %v1054, %v1262
        %v1264 = vpop.f32.mrb[0].mxu0
        %1265 = vmatprep.mubr.bf16.mxu0 0
        %1266 = vmatmul.mubr.bf16.gmra.mrb[0].mxu0 %v748
        %v1267 = vpop.f32.mrb[0].mxu0
        %v1268 = vadd.f32 %v1059, %v1267
        %v1269 = vpop.f32.mrb[0].mxu0
        %v1270 = vpop.f32.mrb[0].mxu0
        %v1271 = vadd.f32 %v1062, %v1270
        %v1272 = vpop.f32.mrb[0].mxu0
        %1273 = vmatprep.mubr.bf16.mxu0 0
        %1274 = vmatmul.mubr.bf16.gmra.mrb[0].mxu0 %v749
        %v1275 = vpop.f32.mrb[0].mxu0
        %v1276 = vadd.f32 %v1067, %v1275
        %v1277 = vpop.f32.mrb[0].mxu0
        %v1278 = vpop.f32.mrb[0].mxu0
        %v1279 = vadd.f32 %v1070, %v1278
        %v1280 = vpop.f32.mrb[0].mxu0
        %1281 = vmatprep.mubr.bf16.mxu0 0
        %1282 = vmatmul.mubr.bf16.gmra.mrb[0].mxu0 %v750
        %v1283 = vpop.f32.mrb[0].mxu0
        %v1284 = vadd.f32 %v1075, %v1283
        %v1285 = vpop.f32.mrb[0].mxu0
        %v1286 = vpop.f32.mrb[0].mxu0
        %v1287 = vadd.f32 %v1078, %v1286
        %v1288 = vpop.f32.mrb[0].mxu0
        %1289 = vmatprep.mubr.bf16.mxu0 0
        %1290 = vmatmul.mubr.bf16.gmra.mrb[0].mxu0 %v751
        %v1291 = vpop.f32.mrb[0].mxu0
        %v1292 = vadd.f32 %v1083, %v1291
        %v1293 = vpop.f32.mrb[0].mxu0
        %v1294 = vpop.f32.mrb[0].mxu0
        %v1295 = vadd.f32 %v1086, %v1294
        %v1296 = vpop.f32.mrb[0].mxu0
        %1297 = vmatprep.mubr.bf16.mxu0 0
        %1298 = vmatmul.mubr.bf16.gmra.mrb[0].mxu0 %v752
        %v1299 = vpop.f32.mrb[0].mxu0
        %v1300 = vadd.f32 %v1091, %v1299
        %v1301 = vpop.f32.mrb[0].mxu0
        %v1302 = vpop.f32.mrb[0].mxu0
        %v1303 = vadd.f32 %v1094, %v1302
        %v1304 = vpop.f32.mrb[0].mxu0
        %1305 = vmatprep.mubr.bf16.mxu0 0
        %1306 = vmatmul.mubr.bf16.gmra.mrb[0].mxu0 %v753
        %v1307 = vpop.f32.mrb[0].mxu0
        %v1308 = vadd.f32 %v1099, %v1307
        %v1309 = vpop.f32.mrb[0].mxu0
        %v1310 = vpop.f32.mrb[0].mxu0
        %v1311 = vadd.f32 %v1102, %v1310
        %v1312 = vpop.f32.mrb[0].mxu0
        %1313 = vmatprep.mubr.bf16.mxu0 0
        %1314 = vmatmul.mubr.bf16.gmra.mrb[0].mxu0 %v754
        %v1315 = vpop.f32.mrb[0].mxu0
        %v1316 = vadd.f32 %v1107, %v1315
        %v1317 = vpop.f32.mrb[0].mxu0
        %v1318 = vpop.f32.mrb[0].mxu0
        %v1319 = vadd.f32 %v1110, %v1318
        %v1320 = vpop.f32.mrb[0].mxu0
        %1321 = vmatprep.mubr.bf16.mxu0 0
        %1322 = vmatmul.mubr.bf16.gmra.mrb[0].mxu0 %v755
        %v1323 = vpop.f32.mrb[0].mxu0
        %v1324 = vadd.f32 %v1115, %v1323
        %v1325 = vpop.f32.mrb[0].mxu0
        %v1326 = vpop.f32.mrb[0].mxu0
        %v1327 = vadd.f32 %v1118, %v1326
        %v1328 = vpop.f32.mrb[0].mxu0
        %1329 = vmatprep.mubr.bf16.mxu0 0
        %1330 = vmatmul.mubr.bf16.gmra.mrb[0].mxu0 %v756
        %v1331 = vpop.f32.mrb[0].mxu0
        %v1332 = vadd.f32 %v1123, %v1331
        %v1333 = vpop.f32.mrb[0].mxu0
        %v1334 = vpop.f32.mrb[0].mxu0
        %v1335 = vadd.f32 %v1126, %v1334
        %v1336 = vpop.f32.mrb[0].mxu0
        %1337 = vmatprep.mubr.bf16.mxu0 0
        %1338 = vmatmul.mubr.bf16.gmra.mrb[0].mxu0 %v757
        %v1339 = vpop.f32.mrb[0].mxu0
        %v1340 = vadd.f32 %v1131, %v1339
        %v1341 = vpop.f32.mrb[0].mxu0
        %v1342 = vpop.f32.mrb[0].mxu0
        %v1343 = vadd.f32 %v1134, %v1342
        %v1344 = vpop.f32.mrb[0].mxu0
        %1345 = vmatprep.mubr.bf16.mxu0 0
        %1346 = vmatmul.mubr.bf16.gmra.mrb[0].mxu0 %v758
        %v1347 = vpop.f32.mrb[0].mxu0
        %v1348 = vadd.f32 %v1139, %v1347
        %v1349 = vpop.f32.mrb[0].mxu0
        %v1350 = vpop.f32.mrb[0].mxu0
        %v1351 = vadd.f32 %v1142, %v1350
        %v1352 = vpop.f32.mrb[0].mxu0
        %1353 = vdwg.mxu0
        %vm1354 = vcmask 1045504
        %v1355 = vrot.slane %v545, 2
        %v1356 = vrot.slane %v546, 2
        %v1357 = vsel %vm1354, %v1355, %v1356
        %v1358 = vrot.slane %v547, 2
        %v1359 = vsel %vm1354, %v1356, %v1358
        %v1360 = vrot.slane %v548, 2
        %v1361 = vrot.slane %v549, 2
        %v1362 = vsel %vm1354, %v1360, %v1361
        %v1363 = vrot.slane %v550, 2
        %v1364 = vsel %vm1354, %v1361, %v1363
        %v1365 = vrot.slane %v551, 2
        %v1366 = vrot.slane %v552, 2
        %v1367 = vsel %vm1354, %v1365, %v1366
        %v1368 = vrot.slane %v553, 2
        %v1369 = vsel %vm1354, %v1366, %v1368
        %v1370 = vrot.slane %v554, 2
        %v1371 = vrot.slane %v555, 2
        %v1372 = vsel %vm1354, %v1370, %v1371
        %v1373 = vrot.slane %v556, 2
        %v1374 = vsel %vm1354, %v1371, %v1373
        %v1375 = vrot.slane %v557, 2
        %v1376 = vrot.slane %v558, 2
        %v1377 = vsel %vm1354, %v1375, %v1376
        %v1378 = vrot.slane %v559, 2
        %v1379 = vsel %vm1354, %v1376, %v1378
        %v1380 = vrot.slane %v560, 2
        %v1381 = vrot.slane %v561, 2
        %v1382 = vsel %vm1354, %v1380, %v1381
        %v1383 = vrot.slane %v562, 2
        %v1384 = vsel %vm1354, %v1381, %v1383
        %v1385 = vrot.slane %v563, 2
        %v1386 = vrot.slane %v564, 2
        %v1387 = vsel %vm1354, %v1385, %v1386
        %v1388 = vrot.slane %v565, 2
        %v1389 = vsel %vm1354, %v1386, %v1388
        %v1390 = vrot.slane %v566, 2
        %v1391 = vrot.slane %v567, 2
        %v1392 = vsel %vm1354, %v1390, %v1391
        %v1393 = vrot.slane %v568, 2
        %v1394 = vsel %vm1354, %v1391, %v1393
        %v1395 = vrot.slane %v569, 2
        %v1396 = vrot.slane %v570, 2
        %v1397 = vsel %vm1354, %v1395, %v1396
        %v1398 = vrot.slane %v571, 2
        %v1399 = vsel %vm1354, %v1396, %v1398
        %v1400 = vrot.slane %v572, 2
        %v1401 = vrot.slane %v573, 2
        %v1402 = vsel %vm1354, %v1400, %v1401
        %v1403 = vrot.slane %v574, 2
        %v1404 = vsel %vm1354, %v1401, %v1403
        %v1405 = vrot.slane %v575, 2
        %v1406 = vrot.slane %v576, 2
        %v1407 = vsel %vm1354, %v1405, %v1406
        %v1408 = vrot.slane %v577, 2
        %v1409 = vsel %vm1354, %v1406, %v1408
        %v1410 = vrot.slane %v578, 2
        %v1411 = vrot.slane %v579, 2
        %v1412 = vsel %vm1354, %v1410, %v1411
        %v1413 = vrot.slane %v580, 2
        %v1414 = vsel %vm1354, %v1411, %v1413
        %v1415 = vrot.slane %v581, 2
        %v1416 = vrot.slane %v582, 2
        %v1417 = vsel %vm1354, %v1415, %v1416
        %v1418 = vrot.slane %v583, 2
        %v1419 = vsel %vm1354, %v1416, %v1418
        %v1420 = vrot.slane %v584, 2
        %v1421 = vrot.slane %v585, 2
        %v1422 = vsel %vm1354, %v1420, %v1421
        %v1423 = vrot.slane %v586, 2
        %v1424 = vsel %vm1354, %v1421, %v1423
        %v1425 = vrot.slane %v587, 2
        %v1426 = vrot.slane %v588, 2
        %v1427 = vsel %vm1354, %v1425, %v1426
        %v1428 = vrot.slane %v589, 2
        %v1429 = vsel %vm1354, %v1426, %v1428
        %v1430 = vrot.slane %v590, 2
        %v1431 = vrot.slane %v591, 2
        %v1432 = vsel %vm1354, %v1430, %v1431
        %v1433 = vrot.slane %v592, 2
        %v1434 = vsel %vm1354, %v1431, %v1433
        %v1467 = vpack.c.bf16 %v1359, %v1357
        %v1468 = vpack.c.bf16 %v1364, %v1362
        %v1469 = vpack.c.bf16 %v1369, %v1367
        %v1470 = vpack.c.bf16 %v1374, %v1372
        %v1471 = vpack.c.bf16 %v1379, %v1377
        %v1472 = vpack.c.bf16 %v1384, %v1382
        %v1473 = vpack.c.bf16 %v1389, %v1387
        %v1474 = vpack.c.bf16 %v1394, %v1392
        %v1475 = vpack.c.bf16 %v1399, %v1397
        %v1476 = vpack.c.bf16 %v1404, %v1402
        %v1477 = vpack.c.bf16 %v1409, %v1407
        %v1478 = vpack.c.bf16 %v1414, %v1412
        %v1479 = vpack.c.bf16 %v1419, %v1417
        %v1480 = vpack.c.bf16 %v1424, %v1422
        %v1481 = vpack.c.bf16 %v1429, %v1427
        %v1482 = vpack.c.bf16 %v1434, %v1432
        %v1499 = vunpack.c.l.b16 %v631
        %v1500 = vunpack.c.l.b16 %v632
        %v1501 = vunpack.c.l.b16 %v633
        %v1502 = vunpack.c.l.b16 %v634
        %v1503 = vunpack.c.l.b16 %v635
        %v1504 = vunpack.c.l.b16 %v636
        %v1505 = vunpack.c.l.b16 %v637
        %v1506 = vunpack.c.l.b16 %v638
        %v1507 = vunpack.c.l.b16 %v639
        %v1508 = vunpack.c.l.b16 %v640
        %v1509 = vunpack.c.l.b16 %v641
        %v1510 = vunpack.c.l.b16 %v642
        %v1511 = vunpack.c.l.b16 %v643
        %v1512 = vunpack.c.l.b16 %v644
        %v1513 = vunpack.c.l.b16 %v645
        %v1514 = vunpack.c.l.b16 %v646
        %v1515 = vpack.c.b16 %v1500, %v1499
        %v1516 = vpack.c.b16 %v1502, %v1501
        %v1517 = vpack.c.b16 %v1504, %v1503
        %v1518 = vpack.c.b16 %v1506, %v1505
        %v1519 = vpack.c.b16 %v1508, %v1507
        %v1520 = vpack.c.b16 %v1510, %v1509
        %v1521 = vpack.c.b16 %v1512, %v1511
        %v1522 = vpack.c.b16 %v1514, %v1513
        %1531 = vmatprep.subr.bf16.mxu0 0
        %1532 = vmatpush1.bf16.msra.mxu0 %v1515
        %1533 = vmatprep.subr.bf16.mxu0 0
        %1534 = vmatpush1.bf16.msra.mxu0 %v1516
        %1535 = vmatprep.subr.bf16.mxu0 0
        %1536 = vmatpush1.bf16.msra.mxu0 %v1517
        %1537 = vmatprep.subr.bf16.mxu0 0
        %1538 = vmatpush1.bf16.msra.mxu0 %v1518
        %1539 = vmatprep.subr.bf16.mxu0 0
        %1540 = vmatpush1.bf16.msra.mxu0 %v1519
        %1541 = vmatprep.subr.bf16.mxu0 0
        %1542 = vmatpush1.bf16.msra.mxu0 %v1520
        %1543 = vmatprep.subr.bf16.mxu0 0
        %1544 = vmatpush1.bf16.msra.mxu0 %v1521
        %1545 = vmatprep.subr.bf16.mxu0 0
        %1546 = vmatpush1.bf16.msra.mxu0 %v1522
        %1547 = vmatprep.subr.bf16.mxu0 0
        %1548 = vmatpush1.bf16.msra.mxu0 0
        %1549 = vmatprep.subr.bf16.mxu0 0
        %1550 = vmatpush1.bf16.msra.mxu0 0
        %1551 = vmatprep.subr.bf16.mxu0 0
        %1552 = vmatpush1.bf16.msra.mxu0 0
        %1553 = vmatprep.subr.bf16.mxu0 0
        %1554 = vmatpush1.bf16.msra.mxu0 0
        %1555 = vmatprep.subr.bf16.mxu0 0
        %1556 = vmatpush1.bf16.msra.mxu0 0
        %1557 = vmatprep.subr.bf16.mxu0 0
        %1558 = vmatpush1.bf16.msra.mxu0 0
        %1559 = vmatprep.subr.bf16.mxu0 0
        %1560 = vmatpush1.bf16.msra.mxu0 0
        %1561 = vmatprep.subr.bf16.mxu0 0
        %1562 = vmatpush1.bf16.msra.mxu0 0
        %1563 = vmatprep.mubr.bf16.mxu0 0
        %1564 = vmatmul.mubr.bf16.gmra.mrb[0].mxu0 %v1467
        %v1565 = vpop.f32.mrb[0].mxu0
        %v1566 = vadd.f32 0.0, %v1565
        %v1567 = vpop.f32.mrb[0].mxu0
        %v1568 = vpop.f32.mrb[0].mxu0
        %v1569 = vadd.f32 0.0, %v1568
        %v1570 = vpop.f32.mrb[0].mxu0
        %1571 = vmatprep.mubr.bf16.mxu0 0
        %1572 = vmatmul.mubr.bf16.gmra.mrb[0].mxu0 %v1468
        %v1573 = vpop.f32.mrb[0].mxu0
        %v1574 = vadd.f32 0.0, %v1573
        %v1575 = vpop.f32.mrb[0].mxu0
        %v1576 = vpop.f32.mrb[0].mxu0
        %v1577 = vadd.f32 0.0, %v1576
        %v1578 = vpop.f32.mrb[0].mxu0
        %1579 = vmatprep.mubr.bf16.mxu0 0
        %1580 = vmatmul.mubr.bf16.gmra.mrb[0].mxu0 %v1469
        %v1581 = vpop.f32.mrb[0].mxu0
        %v1582 = vadd.f32 0.0, %v1581
        %v1583 = vpop.f32.mrb[0].mxu0
        %v1584 = vpop.f32.mrb[0].mxu0
        %v1585 = vadd.f32 0.0, %v1584
        %v1586 = vpop.f32.mrb[0].mxu0
        %1587 = vmatprep.mubr.bf16.mxu0 0
        %1588 = vmatmul.mubr.bf16.gmra.mrb[0].mxu0 %v1470
        %v1589 = vpop.f32.mrb[0].mxu0
        %v1590 = vadd.f32 0.0, %v1589
        %v1591 = vpop.f32.mrb[0].mxu0
        %v1592 = vpop.f32.mrb[0].mxu0
        %v1593 = vadd.f32 0.0, %v1592
        %v1594 = vpop.f32.mrb[0].mxu0
        %1595 = vmatprep.mubr.bf16.mxu0 0
        %1596 = vmatmul.mubr.bf16.gmra.mrb[0].mxu0 %v1471
        %v1597 = vpop.f32.mrb[0].mxu0
        %v1598 = vadd.f32 0.0, %v1597
        %v1599 = vpop.f32.mrb[0].mxu0
        %v1600 = vpop.f32.mrb[0].mxu0
        %v1601 = vadd.f32 0.0, %v1600
        %v1602 = vpop.f32.mrb[0].mxu0
        %1603 = vmatprep.mubr.bf16.mxu0 0
        %1604 = vmatmul.mubr.bf16.gmra.mrb[0].mxu0 %v1472
        %v1605 = vpop.f32.mrb[0].mxu0
        %v1606 = vadd.f32 0.0, %v1605
        %v1607 = vpop.f32.mrb[0].mxu0
        %v1608 = vpop.f32.mrb[0].mxu0
        %v1609 = vadd.f32 0.0, %v1608
        %v1610 = vpop.f32.mrb[0].mxu0
        %1611 = vmatprep.mubr.bf16.mxu0 0
        %1612 = vmatmul.mubr.bf16.gmra.mrb[0].mxu0 %v1473
        %v1613 = vpop.f32.mrb[0].mxu0
        %v1614 = vadd.f32 0.0, %v1613
        %v1615 = vpop.f32.mrb[0].mxu0
        %v1616 = vpop.f32.mrb[0].mxu0
        %v1617 = vadd.f32 0.0, %v1616
        %v1618 = vpop.f32.mrb[0].mxu0
        %1619 = vmatprep.mubr.bf16.mxu0 0
        %1620 = vmatmul.mubr.bf16.gmra.mrb[0].mxu0 %v1474
        %v1621 = vpop.f32.mrb[0].mxu0
        %v1622 = vadd.f32 0.0, %v1621
        %v1623 = vpop.f32.mrb[0].mxu0
        %v1624 = vpop.f32.mrb[0].mxu0
        %v1625 = vadd.f32 0.0, %v1624
        %v1626 = vpop.f32.mrb[0].mxu0
        %1627 = vmatprep.mubr.bf16.mxu0 0
        %1628 = vmatmul.mubr.bf16.gmra.mrb[0].mxu0 %v1475
        %v1629 = vpop.f32.mrb[0].mxu0
        %v1630 = vadd.f32 0.0, %v1629
        %v1631 = vpop.f32.mrb[0].mxu0
        %v1632 = vpop.f32.mrb[0].mxu0
        %v1633 = vadd.f32 0.0, %v1632
        %v1634 = vpop.f32.mrb[0].mxu0
        %1635 = vmatprep.mubr.bf16.mxu0 0
        %1636 = vmatmul.mubr.bf16.gmra.mrb[0].mxu0 %v1476
        %v1637 = vpop.f32.mrb[0].mxu0
        %v1638 = vadd.f32 0.0, %v1637
        %v1639 = vpop.f32.mrb[0].mxu0
        %v1640 = vpop.f32.mrb[0].mxu0
        %v1641 = vadd.f32 0.0, %v1640
        %v1642 = vpop.f32.mrb[0].mxu0
        %1643 = vmatprep.mubr.bf16.mxu0 0
        %1644 = vmatmul.mubr.bf16.gmra.mrb[0].mxu0 %v1477
        %v1645 = vpop.f32.mrb[0].mxu0
        %v1646 = vadd.f32 0.0, %v1645
        %v1647 = vpop.f32.mrb[0].mxu0
        %v1648 = vpop.f32.mrb[0].mxu0
        %v1649 = vadd.f32 0.0, %v1648
        %v1650 = vpop.f32.mrb[0].mxu0
        %1651 = vmatprep.mubr.bf16.mxu0 0
        %1652 = vmatmul.mubr.bf16.gmra.mrb[0].mxu0 %v1478
        %v1653 = vpop.f32.mrb[0].mxu0
        %v1654 = vadd.f32 0.0, %v1653
        %v1655 = vpop.f32.mrb[0].mxu0
        %v1656 = vpop.f32.mrb[0].mxu0
        %v1657 = vadd.f32 0.0, %v1656
        %v1658 = vpop.f32.mrb[0].mxu0
        %1659 = vmatprep.mubr.bf16.mxu0 0
        %1660 = vmatmul.mubr.bf16.gmra.mrb[0].mxu0 %v1479
        %v1661 = vpop.f32.mrb[0].mxu0
        %v1662 = vadd.f32 0.0, %v1661
        %v1663 = vpop.f32.mrb[0].mxu0
        %v1664 = vpop.f32.mrb[0].mxu0
        %v1665 = vadd.f32 0.0, %v1664
        %v1666 = vpop.f32.mrb[0].mxu0
        %1667 = vmatprep.mubr.bf16.mxu0 0
        %1668 = vmatmul.mubr.bf16.gmra.mrb[0].mxu0 %v1480
        %v1669 = vpop.f32.mrb[0].mxu0
        %v1670 = vadd.f32 0.0, %v1669
        %v1671 = vpop.f32.mrb[0].mxu0
        %v1672 = vpop.f32.mrb[0].mxu0
        %v1673 = vadd.f32 0.0, %v1672
        %v1674 = vpop.f32.mrb[0].mxu0
        %1675 = vmatprep.mubr.bf16.mxu0 0
        %1676 = vmatmul.mubr.bf16.gmra.mrb[0].mxu0 %v1481
        %v1677 = vpop.f32.mrb[0].mxu0
        %v1678 = vadd.f32 0.0, %v1677
        %v1679 = vpop.f32.mrb[0].mxu0
        %v1680 = vpop.f32.mrb[0].mxu0
        %v1681 = vadd.f32 0.0, %v1680
        %v1682 = vpop.f32.mrb[0].mxu0
        %1683 = vmatprep.mubr.bf16.mxu0 0
        %1684 = vmatmul.mubr.bf16.gmra.mrb[0].mxu0 %v1482
        %v1685 = vpop.f32.mrb[0].mxu0
        %v1686 = vadd.f32 0.0, %v1685
        %v1687 = vpop.f32.mrb[0].mxu0
        %v1688 = vpop.f32.mrb[0].mxu0
        %v1689 = vadd.f32 0.0, %v1688
        %v1690 = vpop.f32.mrb[0].mxu0
        %1691 = vdwg.mxu0
        %v1692 = vadd.f32 %v1228, %v1566
        %v1693 = vadd.f32 %v1231, %v1569
        %v1694 = vadd.f32 %v1236, %v1574
        %v1695 = vadd.f32 %v1239, %v1577
        %v1696 = vadd.f32 %v1244, %v1582
        %v1697 = vadd.f32 %v1247, %v1585
        %v1698 = vadd.f32 %v1252, %v1590
        %v1699 = vadd.f32 %v1255, %v1593
        %v1700 = vadd.f32 %v1260, %v1598
        %v1701 = vadd.f32 %v1263, %v1601
        %v1702 = vadd.f32 %v1268, %v1606
        %v1703 = vadd.f32 %v1271, %v1609
        %v1704 = vadd.f32 %v1276, %v1614
        %v1705 = vadd.f32 %v1279, %v1617
        %v1706 = vadd.f32 %v1284, %v1622
        %v1707 = vadd.f32 %v1287, %v1625
        %v1708 = vadd.f32 %v1292, %v1630
        %v1709 = vadd.f32 %v1295, %v1633
        %v1710 = vadd.f32 %v1300, %v1638
        %v1711 = vadd.f32 %v1303, %v1641
        %v1712 = vadd.f32 %v1308, %v1646
        %v1713 = vadd.f32 %v1311, %v1649
        %v1714 = vadd.f32 %v1316, %v1654
        %v1715 = vadd.f32 %v1319, %v1657
        %v1716 = vadd.f32 %v1324, %v1662
        %v1717 = vadd.f32 %v1327, %v1665
        %v1718 = vadd.f32 %v1332, %v1670
        %v1719 = vadd.f32 %v1335, %v1673
        %v1720 = vadd.f32 %v1340, %v1678
        %v1721 = vadd.f32 %v1343, %v1681
        %v1722 = vadd.f32 %v1348, %v1686
        %v1723 = vadd.f32 %v1351, %v1689
        %v1724 = vpack.c.bf16 %v594, %v593
        %v1741 = vunpack.c.l.b16 %v647
        %v1742 = vunpack.c.l.b16 %v648
        %v1743 = vunpack.c.l.b16 %v649
        %v1744 = vunpack.c.l.b16 %v650
        %v1745 = vunpack.c.l.b16 %v651
        %v1746 = vunpack.c.l.b16 %v652
        %v1747 = vunpack.c.l.b16 %v653
        %v1748 = vunpack.c.l.b16 %v654
        %v1749 = vunpack.c.l.b16 %v655
        %v1750 = vunpack.c.l.b16 %v656
        %v1751 = vunpack.c.l.b16 %v657
        %v1752 = vunpack.c.l.b16 %v658
        %v1753 = vunpack.c.l.b16 %v659
        %v1754 = vunpack.c.l.b16 %v660
        %v1755 = vunpack.c.l.b16 %v661
        %v1756 = vunpack.c.l.b16 %v662
        %v1757 = vpack.c.b16 %v1742, %v1741
        %v1758 = vpack.c.b16 %v1744, %v1743
        %v1759 = vpack.c.b16 %v1746, %v1745
        %v1760 = vpack.c.b16 %v1748, %v1747
        %v1761 = vpack.c.b16 %v1750, %v1749
        %v1762 = vpack.c.b16 %v1752, %v1751
        %v1763 = vpack.c.b16 %v1754, %v1753
        %v1764 = vpack.c.b16 %v1756, %v1755
        %1773 = vmatprep.subr.bf16.mxu0 0
        %1774 = vmatpush1.bf16.msra.mxu0 %v1757
        %1775 = vmatprep.subr.bf16.mxu0 0
        %1776 = vmatpush1.bf16.msra.mxu0 %v1758
        %1777 = vmatprep.subr.bf16.mxu0 0
        %1778 = vmatpush1.bf16.msra.mxu0 %v1759
        %1779 = vmatprep.subr.bf16.mxu0 0
        %1780 = vmatpush1.bf16.msra.mxu0 %v1760
        %1781 = vmatprep.subr.bf16.mxu0 0
        %1782 = vmatpush1.bf16.msra.mxu0 %v1761
        %1783 = vmatprep.subr.bf16.mxu0 0
        %1784 = vmatpush1.bf16.msra.mxu0 %v1762
        %1785 = vmatprep.subr.bf16.mxu0 0
        %1786 = vmatpush1.bf16.msra.mxu0 %v1763
        %1787 = vmatprep.subr.bf16.mxu0 0
        %1788 = vmatpush1.bf16.msra.mxu0 %v1764
        %1789 = vmatprep.subr.bf16.mxu0 0
        %1790 = vmatpush1.bf16.msra.mxu0 0
        %1791 = vmatprep.subr.bf16.mxu0 0
        %1792 = vmatpush1.bf16.msra.mxu0 0
        %1793 = vmatprep.subr.bf16.mxu0 0
        %1794 = vmatpush1.bf16.msra.mxu0 0
        %1795 = vmatprep.subr.bf16.mxu0 0
        %1796 = vmatpush1.bf16.msra.mxu0 0
        %1797 = vmatprep.subr.bf16.mxu0 0
        %1798 = vmatpush1.bf16.msra.mxu0 0
        %1799 = vmatprep.subr.bf16.mxu0 0
        %1800 = vmatpush1.bf16.msra.mxu0 0
        %1801 = vmatprep.subr.bf16.mxu0 0
        %1802 = vmatpush1.bf16.msra.mxu0 0
        %1803 = vmatprep.subr.bf16.mxu0 0
        %1804 = vmatpush1.bf16.msra.mxu0 0
        %1805 = vmatprep.mubr.bf16.mxu0 0
        %1806 = vmatmul.mubr.bf16.gmra.mrb[0].mxu0 %v744
        %v1807 = vpop.f32.mrb[0].mxu0
        %v1808 = vadd.f32 0.0, %v1807
        %v1809 = vpop.f32.mrb[0].mxu0
        %v1810 = vpop.f32.mrb[0].mxu0
        %v1811 = vadd.f32 0.0, %v1810
        %v1812 = vpop.f32.mrb[0].mxu0
        %1813 = vmatprep.mubr.bf16.mxu0 0
        %1814 = vmatmul.mubr.bf16.gmra.mrb[0].mxu0 %v745
        %v1815 = vpop.f32.mrb[0].mxu0
        %v1816 = vadd.f32 0.0, %v1815
        %v1817 = vpop.f32.mrb[0].mxu0
        %v1818 = vpop.f32.mrb[0].mxu0
        %v1819 = vadd.f32 0.0, %v1818
        %v1820 = vpop.f32.mrb[0].mxu0
        %1821 = vmatprep.mubr.bf16.mxu0 0
        %1822 = vmatmul.mubr.bf16.gmra.mrb[0].mxu0 %v746
        %v1823 = vpop.f32.mrb[0].mxu0
        %v1824 = vadd.f32 0.0, %v1823
        %v1825 = vpop.f32.mrb[0].mxu0
        %v1826 = vpop.f32.mrb[0].mxu0
        %v1827 = vadd.f32 0.0, %v1826
        %v1828 = vpop.f32.mrb[0].mxu0
        %1829 = vmatprep.mubr.bf16.mxu0 0
        %1830 = vmatmul.mubr.bf16.gmra.mrb[0].mxu0 %v747
        %v1831 = vpop.f32.mrb[0].mxu0
        %v1832 = vadd.f32 0.0, %v1831
        %v1833 = vpop.f32.mrb[0].mxu0
        %v1834 = vpop.f32.mrb[0].mxu0
        %v1835 = vadd.f32 0.0, %v1834
        %v1836 = vpop.f32.mrb[0].mxu0
        %1837 = vmatprep.mubr.bf16.mxu0 0
        %1838 = vmatmul.mubr.bf16.gmra.mrb[0].mxu0 %v748
        %v1839 = vpop.f32.mrb[0].mxu0
        %v1840 = vadd.f32 0.0, %v1839
        %v1841 = vpop.f32.mrb[0].mxu0
        %v1842 = vpop.f32.mrb[0].mxu0
        %v1843 = vadd.f32 0.0, %v1842
        %v1844 = vpop.f32.mrb[0].mxu0
        %1845 = vmatprep.mubr.bf16.mxu0 0
        %1846 = vmatmul.mubr.bf16.gmra.mrb[0].mxu0 %v749
        %v1847 = vpop.f32.mrb[0].mxu0
        %v1848 = vadd.f32 0.0, %v1847
        %v1849 = vpop.f32.mrb[0].mxu0
        %v1850 = vpop.f32.mrb[0].mxu0
        %v1851 = vadd.f32 0.0, %v1850
        %v1852 = vpop.f32.mrb[0].mxu0
        %1853 = vmatprep.mubr.bf16.mxu0 0
        %1854 = vmatmul.mubr.bf16.gmra.mrb[0].mxu0 %v750
        %v1855 = vpop.f32.mrb[0].mxu0
        %v1856 = vadd.f32 0.0, %v1855
        %v1857 = vpop.f32.mrb[0].mxu0
        %v1858 = vpop.f32.mrb[0].mxu0
        %v1859 = vadd.f32 0.0, %v1858
        %v1860 = vpop.f32.mrb[0].mxu0
        %1861 = vmatprep.mubr.bf16.mxu0 0
        %1862 = vmatmul.mubr.bf16.gmra.mrb[0].mxu0 %v751
        %v1863 = vpop.f32.mrb[0].mxu0
        %v1864 = vadd.f32 0.0, %v1863
        %v1865 = vpop.f32.mrb[0].mxu0
        %v1866 = vpop.f32.mrb[0].mxu0
        %v1867 = vadd.f32 0.0, %v1866
        %v1868 = vpop.f32.mrb[0].mxu0
        %1869 = vmatprep.mubr.bf16.mxu0 0
        %1870 = vmatmul.mubr.bf16.gmra.mrb[0].mxu0 %v752
        %v1871 = vpop.f32.mrb[0].mxu0
        %v1872 = vadd.f32 0.0, %v1871
        %v1873 = vpop.f32.mrb[0].mxu0
        %v1874 = vpop.f32.mrb[0].mxu0
        %v1875 = vadd.f32 0.0, %v1874
        %v1876 = vpop.f32.mrb[0].mxu0
        %1877 = vmatprep.mubr.bf16.mxu0 0
        %1878 = vmatmul.mubr.bf16.gmra.mrb[0].mxu0 %v753
        %v1879 = vpop.f32.mrb[0].mxu0
        %v1880 = vadd.f32 0.0, %v1879
        %v1881 = vpop.f32.mrb[0].mxu0
        %v1882 = vpop.f32.mrb[0].mxu0
        %v1883 = vadd.f32 0.0, %v1882
        %v1884 = vpop.f32.mrb[0].mxu0
        %1885 = vmatprep.mubr.bf16.mxu0 0
        %1886 = vmatmul.mubr.bf16.gmra.mrb[0].mxu0 %v754
        %v1887 = vpop.f32.mrb[0].mxu0
        %v1888 = vadd.f32 0.0, %v1887
        %v1889 = vpop.f32.mrb[0].mxu0
        %v1890 = vpop.f32.mrb[0].mxu0
        %v1891 = vadd.f32 0.0, %v1890
        %v1892 = vpop.f32.mrb[0].mxu0
        %1893 = vmatprep.mubr.bf16.mxu0 0
        %1894 = vmatmul.mubr.bf16.gmra.mrb[0].mxu0 %v755
        %v1895 = vpop.f32.mrb[0].mxu0
        %v1896 = vadd.f32 0.0, %v1895
        %v1897 = vpop.f32.mrb[0].mxu0
        %v1898 = vpop.f32.mrb[0].mxu0
        %v1899 = vadd.f32 0.0, %v1898
        %v1900 = vpop.f32.mrb[0].mxu0
        %1901 = vmatprep.mubr.bf16.mxu0 0
        %1902 = vmatmul.mubr.bf16.gmra.mrb[0].mxu0 %v756
        %v1903 = vpop.f32.mrb[0].mxu0
        %v1904 = vadd.f32 0.0, %v1903
        %v1905 = vpop.f32.mrb[0].mxu0
        %v1906 = vpop.f32.mrb[0].mxu0
        %v1907 = vadd.f32 0.0, %v1906
        %v1908 = vpop.f32.mrb[0].mxu0
        %1909 = vmatprep.mubr.bf16.mxu0 0
        %1910 = vmatmul.mubr.bf16.gmra.mrb[0].mxu0 %v757
        %v1911 = vpop.f32.mrb[0].mxu0
        %v1912 = vadd.f32 0.0, %v1911
        %v1913 = vpop.f32.mrb[0].mxu0
        %v1914 = vpop.f32.mrb[0].mxu0
        %v1915 = vadd.f32 0.0, %v1914
        %v1916 = vpop.f32.mrb[0].mxu0
        %1917 = vmatprep.mubr.bf16.mxu0 0
        %1918 = vmatmul.mubr.bf16.gmra.mrb[0].mxu0 %v758
        %v1919 = vpop.f32.mrb[0].mxu0
        %v1920 = vadd.f32 0.0, %v1919
        %v1921 = vpop.f32.mrb[0].mxu0
        %v1922 = vpop.f32.mrb[0].mxu0
        %v1923 = vadd.f32 0.0, %v1922
        %v1924 = vpop.f32.mrb[0].mxu0
        %1925 = vmatprep.mubr.bf16.mxu0 0
        %1926 = vmatmul.mubr.bf16.gmra.mrb[0].mxu0 %v1724
        %v1927 = vpop.f32.mrb[0].mxu0
        %v1928 = vadd.f32 0.0, %v1927
        %v1929 = vpop.f32.mrb[0].mxu0
        %v1930 = vpop.f32.mrb[0].mxu0
        %v1931 = vadd.f32 0.0, %v1930
        %v1932 = vpop.f32.mrb[0].mxu0
        %1933 = vdwg.mxu0
        %v1934 = vadd.f32 %v1692, %v1808
        %v1935 = vadd.f32 %v1693, %v1811
        %v1936 = vadd.f32 %v1694, %v1816
        %v1937 = vadd.f32 %v1695, %v1819
        %v1938 = vadd.f32 %v1696, %v1824
        %v1939 = vadd.f32 %v1697, %v1827
        %v1940 = vadd.f32 %v1698, %v1832
        %v1941 = vadd.f32 %v1699, %v1835
        %v1942 = vadd.f32 %v1700, %v1840
        %v1943 = vadd.f32 %v1701, %v1843
        %v1944 = vadd.f32 %v1702, %v1848
        %v1945 = vadd.f32 %v1703, %v1851
        %v1946 = vadd.f32 %v1704, %v1856
        %v1947 = vadd.f32 %v1705, %v1859
        %v1948 = vadd.f32 %v1706, %v1864
        %v1949 = vadd.f32 %v1707, %v1867
        %v1950 = vadd.f32 %v1708, %v1872
        %v1951 = vadd.f32 %v1709, %v1875
        %v1952 = vadd.f32 %v1710, %v1880
        %v1953 = vadd.f32 %v1711, %v1883
        %v1954 = vadd.f32 %v1712, %v1888
        %v1955 = vadd.f32 %v1713, %v1891
        %v1956 = vadd.f32 %v1714, %v1896
        %v1957 = vadd.f32 %v1715, %v1899
        %v1958 = vadd.f32 %v1716, %v1904
        %v1959 = vadd.f32 %v1717, %v1907
        %v1960 = vadd.f32 %v1718, %v1912
        %v1961 = vadd.f32 %v1719, %v1915
        %v1962 = vadd.f32 %v1720, %v1920
        %v1963 = vadd.f32 %v1721, %v1923
        %v1964 = vadd.f32 %v1722, %v1928
        %v1965 = vadd.f32 %v1723, %v1931
        %v1969 = vrot.slane %v593, 1
        %v1970 = vrot.slane %v594, 1
        %v1971 = vsel %vm807, %v1969, %v1970
        %v1972 = vrot.slane %v595, 1
        %v1973 = vsel %vm807, %v1970, %v1972
        %v1976 = vpack.c.bf16 %v1973, %v1971
        %v1993 = vunpack.c.l.b16 %v663
        %v1994 = vunpack.c.l.b16 %v664
        %v1995 = vunpack.c.l.b16 %v665
        %v1996 = vunpack.c.l.b16 %v666
        %v1997 = vunpack.c.l.b16 %v667
        %v1998 = vunpack.c.l.b16 %v668
        %v1999 = vunpack.c.l.b16 %v669
        %v2000 = vunpack.c.l.b16 %v670
        %v2001 = vunpack.c.l.b16 %v671
        %v2002 = vunpack.c.l.b16 %v672
        %v2003 = vunpack.c.l.b16 %v673
        %v2004 = vunpack.c.l.b16 %v674
        %v2005 = vunpack.c.l.b16 %v675
        %v2006 = vunpack.c.l.b16 %v676
        %v2007 = vunpack.c.l.b16 %v677
        %v2008 = vunpack.c.l.b16 %v678
        %v2009 = vpack.c.b16 %v1994, %v1993
        %v2010 = vpack.c.b16 %v1996, %v1995
        %v2011 = vpack.c.b16 %v1998, %v1997
        %v2012 = vpack.c.b16 %v2000, %v1999
        %v2013 = vpack.c.b16 %v2002, %v2001
        %v2014 = vpack.c.b16 %v2004, %v2003
        %v2015 = vpack.c.b16 %v2006, %v2005
        %v2016 = vpack.c.b16 %v2008, %v2007
        %2025 = vmatprep.subr.bf16.mxu0 0
        %2026 = vmatpush1.bf16.msra.mxu0 %v2009
        %2027 = vmatprep.subr.bf16.mxu0 0
        %2028 = vmatpush1.bf16.msra.mxu0 %v2010
        %2029 = vmatprep.subr.bf16.mxu0 0
        %2030 = vmatpush1.bf16.msra.mxu0 %v2011
        %2031 = vmatprep.subr.bf16.mxu0 0
        %2032 = vmatpush1.bf16.msra.mxu0 %v2012
        %2033 = vmatprep.subr.bf16.mxu0 0
        %2034 = vmatpush1.bf16.msra.mxu0 %v2013
        %2035 = vmatprep.subr.bf16.mxu0 0
        %2036 = vmatpush1.bf16.msra.mxu0 %v2014
        %2037 = vmatprep.subr.bf16.mxu0 0
        %2038 = vmatpush1.bf16.msra.mxu0 %v2015
        %2039 = vmatprep.subr.bf16.mxu0 0
        %2040 = vmatpush1.bf16.msra.mxu0 %v2016
        %2041 = vmatprep.subr.bf16.mxu0 0
        %2042 = vmatpush1.bf16.msra.mxu0 0
        %2043 = vmatprep.subr.bf16.mxu0 0
        %2044 = vmatpush1.bf16.msra.mxu0 0
        %2045 = vmatprep.subr.bf16.mxu0 0
        %2046 = vmatpush1.bf16.msra.mxu0 0
        %2047 = vmatprep.subr.bf16.mxu0 0
        %2048 = vmatpush1.bf16.msra.mxu0 0
        %2049 = vmatprep.subr.bf16.mxu0 0
        %2050 = vmatpush1.bf16.msra.mxu0 0
        %2051 = vmatprep.subr.bf16.mxu0 0
        %2052 = vmatpush1.bf16.msra.mxu0 0
        %2053 = vmatprep.subr.bf16.mxu0 0
        %2054 = vmatpush1.bf16.msra.mxu0 0
        %2055 = vmatprep.subr.bf16.mxu0 0
        %2056 = vmatpush1.bf16.msra.mxu0 0
        %2057 = vmatprep.mubr.bf16.mxu0 0
        %2058 = vmatmul.mubr.bf16.gmra.mrb[0].mxu0 %v921
        %v2059 = vpop.f32.mrb[0].mxu0
        %v2060 = vadd.f32 0.0, %v2059
        %v2061 = vpop.f32.mrb[0].mxu0
        %v2062 = vpop.f32.mrb[0].mxu0
        %v2063 = vadd.f32 0.0, %v2062
        %v2064 = vpop.f32.mrb[0].mxu0
        %2065 = vmatprep.mubr.bf16.mxu0 0
        %2066 = vmatmul.mubr.bf16.gmra.mrb[0].mxu0 %v922
        %v2067 = vpop.f32.mrb[0].mxu0
        %v2068 = vadd.f32 0.0, %v2067
        %v2069 = vpop.f32.mrb[0].mxu0
        %v2070 = vpop.f32.mrb[0].mxu0
        %v2071 = vadd.f32 0.0, %v2070
        %v2072 = vpop.f32.mrb[0].mxu0
        %2073 = vmatprep.mubr.bf16.mxu0 0
        %2074 = vmatmul.mubr.bf16.gmra.mrb[0].mxu0 %v923
        %v2075 = vpop.f32.mrb[0].mxu0
        %v2076 = vadd.f32 0.0, %v2075
        %v2077 = vpop.f32.mrb[0].mxu0
        %v2078 = vpop.f32.mrb[0].mxu0
        %v2079 = vadd.f32 0.0, %v2078
        %v2080 = vpop.f32.mrb[0].mxu0
        %2081 = vmatprep.mubr.bf16.mxu0 0
        %2082 = vmatmul.mubr.bf16.gmra.mrb[0].mxu0 %v924
        %v2083 = vpop.f32.mrb[0].mxu0
        %v2084 = vadd.f32 0.0, %v2083
        %v2085 = vpop.f32.mrb[0].mxu0
        %v2086 = vpop.f32.mrb[0].mxu0
        %v2087 = vadd.f32 0.0, %v2086
        %v2088 = vpop.f32.mrb[0].mxu0
        %2089 = vmatprep.mubr.bf16.mxu0 0
        %2090 = vmatmul.mubr.bf16.gmra.mrb[0].mxu0 %v925
        %v2091 = vpop.f32.mrb[0].mxu0
        %v2092 = vadd.f32 0.0, %v2091
        %v2093 = vpop.f32.mrb[0].mxu0
        %v2094 = vpop.f32.mrb[0].mxu0
        %v2095 = vadd.f32 0.0, %v2094
        %v2096 = vpop.f32.mrb[0].mxu0
        %2097 = vmatprep.mubr.bf16.mxu0 0
        %2098 = vmatmul.mubr.bf16.gmra.mrb[0].mxu0 %v926
        %v2099 = vpop.f32.mrb[0].mxu0
        %v2100 = vadd.f32 0.0, %v2099
        %v2101 = vpop.f32.mrb[0].mxu0
        %v2102 = vpop.f32.mrb[0].mxu0
        %v2103 = vadd.f32 0.0, %v2102
        %v2104 = vpop.f32.mrb[0].mxu0
        %2105 = vmatprep.mubr.bf16.mxu0 0
        %2106 = vmatmul.mubr.bf16.gmra.mrb[0].mxu0 %v927
        %v2107 = vpop.f32.mrb[0].mxu0
        %v2108 = vadd.f32 0.0, %v2107
        %v2109 = vpop.f32.mrb[0].mxu0
        %v2110 = vpop.f32.mrb[0].mxu0
        %v2111 = vadd.f32 0.0, %v2110
        %v2112 = vpop.f32.mrb[0].mxu0
        %2113 = vmatprep.mubr.bf16.mxu0 0
        %2114 = vmatmul.mubr.bf16.gmra.mrb[0].mxu0 %v928
        %v2115 = vpop.f32.mrb[0].mxu0
        %v2116 = vadd.f32 0.0, %v2115
        %v2117 = vpop.f32.mrb[0].mxu0
        %v2118 = vpop.f32.mrb[0].mxu0
        %v2119 = vadd.f32 0.0, %v2118
        %v2120 = vpop.f32.mrb[0].mxu0
        %2121 = vmatprep.mubr.bf16.mxu0 0
        %2122 = vmatmul.mubr.bf16.gmra.mrb[0].mxu0 %v929
        %v2123 = vpop.f32.mrb[0].mxu0
        %v2124 = vadd.f32 0.0, %v2123
        %v2125 = vpop.f32.mrb[0].mxu0
        %v2126 = vpop.f32.mrb[0].mxu0
        %v2127 = vadd.f32 0.0, %v2126
        %v2128 = vpop.f32.mrb[0].mxu0
        %2129 = vmatprep.mubr.bf16.mxu0 0
        %2130 = vmatmul.mubr.bf16.gmra.mrb[0].mxu0 %v930
        %v2131 = vpop.f32.mrb[0].mxu0
        %v2132 = vadd.f32 0.0, %v2131
        %v2133 = vpop.f32.mrb[0].mxu0
        %v2134 = vpop.f32.mrb[0].mxu0
        %v2135 = vadd.f32 0.0, %v2134
        %v2136 = vpop.f32.mrb[0].mxu0
        %2137 = vmatprep.mubr.bf16.mxu0 0
        %2138 = vmatmul.mubr.bf16.gmra.mrb[0].mxu0 %v931
        %v2139 = vpop.f32.mrb[0].mxu0
        %v2140 = vadd.f32 0.0, %v2139
        %v2141 = vpop.f32.mrb[0].mxu0
        %v2142 = vpop.f32.mrb[0].mxu0
        %v2143 = vadd.f32 0.0, %v2142
        %v2144 = vpop.f32.mrb[0].mxu0
        %2145 = vmatprep.mubr.bf16.mxu0 0
        %2146 = vmatmul.mubr.bf16.gmra.mrb[0].mxu0 %v932
        %v2147 = vpop.f32.mrb[0].mxu0
        %v2148 = vadd.f32 0.0, %v2147
        %v2149 = vpop.f32.mrb[0].mxu0
        %v2150 = vpop.f32.mrb[0].mxu0
        %v2151 = vadd.f32 0.0, %v2150
        %v2152 = vpop.f32.mrb[0].mxu0
        %2153 = vmatprep.mubr.bf16.mxu0 0
        %2154 = vmatmul.mubr.bf16.gmra.mrb[0].mxu0 %v933
        %v2155 = vpop.f32.mrb[0].mxu0
        %v2156 = vadd.f32 0.0, %v2155
        %v2157 = vpop.f32.mrb[0].mxu0
        %v2158 = vpop.f32.mrb[0].mxu0
        %v2159 = vadd.f32 0.0, %v2158
        %v2160 = vpop.f32.mrb[0].mxu0
        %2161 = vmatprep.mubr.bf16.mxu0 0
        %2162 = vmatmul.mubr.bf16.gmra.mrb[0].mxu0 %v934
        %v2163 = vpop.f32.mrb[0].mxu0
        %v2164 = vadd.f32 0.0, %v2163
        %v2165 = vpop.f32.mrb[0].mxu0
        %v2166 = vpop.f32.mrb[0].mxu0
        %v2167 = vadd.f32 0.0, %v2166
        %v2168 = vpop.f32.mrb[0].mxu0
        %2169 = vmatprep.mubr.bf16.mxu0 0
        %2170 = vmatmul.mubr.bf16.gmra.mrb[0].mxu0 %v935
        %v2171 = vpop.f32.mrb[0].mxu0
        %v2172 = vadd.f32 0.0, %v2171
        %v2173 = vpop.f32.mrb[0].mxu0
        %v2174 = vpop.f32.mrb[0].mxu0
        %v2175 = vadd.f32 0.0, %v2174
        %v2176 = vpop.f32.mrb[0].mxu0
        %2177 = vmatprep.mubr.bf16.mxu0 0
        %2178 = vmatmul.mubr.bf16.gmra.mrb[0].mxu0 %v1976
        %v2179 = vpop.f32.mrb[0].mxu0
        %v2180 = vadd.f32 0.0, %v2179
        %v2181 = vpop.f32.mrb[0].mxu0
        %v2182 = vpop.f32.mrb[0].mxu0
        %v2183 = vadd.f32 0.0, %v2182
        %v2184 = vpop.f32.mrb[0].mxu0
        %2185 = vdwg.mxu0
        %v2186 = vadd.f32 %v1934, %v2060
        %v2187 = vadd.f32 %v1935, %v2063
        %v2188 = vadd.f32 %v1936, %v2068
        %v2189 = vadd.f32 %v1937, %v2071
        %v2190 = vadd.f32 %v1938, %v2076
        %v2191 = vadd.f32 %v1939, %v2079
        %v2192 = vadd.f32 %v1940, %v2084
        %v2193 = vadd.f32 %v1941, %v2087
        %v2194 = vadd.f32 %v1942, %v2092
        %v2195 = vadd.f32 %v1943, %v2095
        %v2196 = vadd.f32 %v1944, %v2100
        %v2197 = vadd.f32 %v1945, %v2103
        %v2198 = vadd.f32 %v1946, %v2108
        %v2199 = vadd.f32 %v1947, %v2111
        %v2200 = vadd.f32 %v1948, %v2116
        %v2201 = vadd.f32 %v1949, %v2119
        %v2202 = vadd.f32 %v1950, %v2124
        %v2203 = vadd.f32 %v1951, %v2127
        %v2204 = vadd.f32 %v1952, %v2132
        %v2205 = vadd.f32 %v1953, %v2135
        %v2206 = vadd.f32 %v1954, %v2140
        %v2207 = vadd.f32 %v1955, %v2143
        %v2208 = vadd.f32 %v1956, %v2148
        %v2209 = vadd.f32 %v1957, %v2151
        %v2210 = vadd.f32 %v1958, %v2156
        %v2211 = vadd.f32 %v1959, %v2159
        %v2212 = vadd.f32 %v1960, %v2164
        %v2213 = vadd.f32 %v1961, %v2167
        %v2214 = vadd.f32 %v1962, %v2172
        %v2215 = vadd.f32 %v1963, %v2175
        %v2216 = vadd.f32 %v1964, %v2180
        %v2217 = vadd.f32 %v1965, %v2183
        %v2218 = vrot.slane %v593, 2
        %v2219 = vrot.slane %v594, 2
        %v2220 = vsel %vm1354, %v2218, %v2219
        %v2221 = vrot.slane %v595, 2
        %v2222 = vsel %vm1354, %v2219, %v2221
        %v2225 = vpack.c.bf16 %v2222, %v2220
        %v2242 = vunpack.c.l.b16 %v679
        %v2243 = vunpack.c.l.b16 %v680
        %v2244 = vunpack.c.l.b16 %v681
        %v2245 = vunpack.c.l.b16 %v682
        %v2246 = vunpack.c.l.b16 %v683
        %v2247 = vunpack.c.l.b16 %v684
        %v2248 = vunpack.c.l.b16 %v685
        %v2249 = vunpack.c.l.b16 %v686
        %v2250 = vunpack.c.l.b16 %v687
        %v2251 = vunpack.c.l.b16 %v688
        %v2252 = vunpack.c.l.b16 %v689
        %v2253 = vunpack.c.l.b16 %v690
        %v2254 = vunpack.c.l.b16 %v691
        %v2255 = vunpack.c.l.b16 %v692
        %v2256 = vunpack.c.l.b16 %v693
        %v2257 = vunpack.c.l.b16 %v694
        %v2258 = vpack.c.b16 %v2243, %v2242
        %v2259 = vpack.c.b16 %v2245, %v2244
        %v2260 = vpack.c.b16 %v2247, %v2246
        %v2261 = vpack.c.b16 %v2249, %v2248
        %v2262 = vpack.c.b16 %v2251, %v2250
        %v2263 = vpack.c.b16 %v2253, %v2252
        %v2264 = vpack.c.b16 %v2255, %v2254
        %v2265 = vpack.c.b16 %v2257, %v2256
        %2274 = vmatprep.subr.bf16.mxu0 0
        %2275 = vmatpush1.bf16.msra.mxu0 %v2258
        %2276 = vmatprep.subr.bf16.mxu0 0
        %2277 = vmatpush1.bf16.msra.mxu0 %v2259
        %2278 = vmatprep.subr.bf16.mxu0 0
        %2279 = vmatpush1.bf16.msra.mxu0 %v2260
        %2280 = vmatprep.subr.bf16.mxu0 0
        %2281 = vmatpush1.bf16.msra.mxu0 %v2261
        %2282 = vmatprep.subr.bf16.mxu0 0
        %2283 = vmatpush1.bf16.msra.mxu0 %v2262
        %2284 = vmatprep.subr.bf16.mxu0 0
        %2285 = vmatpush1.bf16.msra.mxu0 %v2263
        %2286 = vmatprep.subr.bf16.mxu0 0
        %2287 = vmatpush1.bf16.msra.mxu0 %v2264
        %2288 = vmatprep.subr.bf16.mxu0 0
        %2289 = vmatpush1.bf16.msra.mxu0 %v2265
        %2290 = vmatprep.subr.bf16.mxu0 0
        %2291 = vmatpush1.bf16.msra.mxu0 0
        %2292 = vmatprep.subr.bf16.mxu0 0
        %2293 = vmatpush1.bf16.msra.mxu0 0
        %2294 = vmatprep.subr.bf16.mxu0 0
        %2295 = vmatpush1.bf16.msra.mxu0 0
        %2296 = vmatprep.subr.bf16.mxu0 0
        %2297 = vmatpush1.bf16.msra.mxu0 0
        %2298 = vmatprep.subr.bf16.mxu0 0
        %2299 = vmatpush1.bf16.msra.mxu0 0
        %2300 = vmatprep.subr.bf16.mxu0 0
        %2301 = vmatpush1.bf16.msra.mxu0 0
        %2302 = vmatprep.subr.bf16.mxu0 0
        %2303 = vmatpush1.bf16.msra.mxu0 0
        %2304 = vmatprep.subr.bf16.mxu0 0
        %2305 = vmatpush1.bf16.msra.mxu0 0
        %2306 = vmatprep.mubr.bf16.mxu0 0
        %2307 = vmatmul.mubr.bf16.gmra.mrb[0].mxu0 %v1468
        %v2308 = vpop.f32.mrb[0].mxu0
        %v2309 = vadd.f32 0.0, %v2308
        %v2310 = vpop.f32.mrb[0].mxu0
        %v2311 = vpop.f32.mrb[0].mxu0
        %v2312 = vadd.f32 0.0, %v2311
        %v2313 = vpop.f32.mrb[0].mxu0
        %2314 = vmatprep.mubr.bf16.mxu0 0
        %2315 = vmatmul.mubr.bf16.gmra.mrb[0].mxu0 %v1469
        %v2316 = vpop.f32.mrb[0].mxu0
        %v2317 = vadd.f32 0.0, %v2316
        %v2318 = vpop.f32.mrb[0].mxu0
        %v2319 = vpop.f32.mrb[0].mxu0
        %v2320 = vadd.f32 0.0, %v2319
        %v2321 = vpop.f32.mrb[0].mxu0
        %2322 = vmatprep.mubr.bf16.mxu0 0
        %2323 = vmatmul.mubr.bf16.gmra.mrb[0].mxu0 %v1470
        %v2324 = vpop.f32.mrb[0].mxu0
        %v2325 = vadd.f32 0.0, %v2324
        %v2326 = vpop.f32.mrb[0].mxu0
        %v2327 = vpop.f32.mrb[0].mxu0
        %v2328 = vadd.f32 0.0, %v2327
        %v2329 = vpop.f32.mrb[0].mxu0
        %2330 = vmatprep.mubr.bf16.mxu0 0
        %2331 = vmatmul.mubr.bf16.gmra.mrb[0].mxu0 %v1471
        %v2332 = vpop.f32.mrb[0].mxu0
        %v2333 = vadd.f32 0.0, %v2332
        %v2334 = vpop.f32.mrb[0].mxu0
        %v2335 = vpop.f32.mrb[0].mxu0
        %v2336 = vadd.f32 0.0, %v2335
        %v2337 = vpop.f32.mrb[0].mxu0
        %2338 = vmatprep.mubr.bf16.mxu0 0
        %2339 = vmatmul.mubr.bf16.gmra.mrb[0].mxu0 %v1472
        %v2340 = vpop.f32.mrb[0].mxu0
        %v2341 = vadd.f32 0.0, %v2340
        %v2342 = vpop.f32.mrb[0].mxu0
        %v2343 = vpop.f32.mrb[0].mxu0
        %v2344 = vadd.f32 0.0, %v2343
        %v2345 = vpop.f32.mrb[0].mxu0
        %2346 = vmatprep.mubr.bf16.mxu0 0
        %2347 = vmatmul.mubr.bf16.gmra.mrb[0].mxu0 %v1473
        %v2348 = vpop.f32.mrb[0].mxu0
        %v2349 = vadd.f32 0.0, %v2348
        %v2350 = vpop.f32.mrb[0].mxu0
        %v2351 = vpop.f32.mrb[0].mxu0
        %v2352 = vadd.f32 0.0, %v2351
        %v2353 = vpop.f32.mrb[0].mxu0
        %2354 = vmatprep.mubr.bf16.mxu0 0
        %2355 = vmatmul.mubr.bf16.gmra.mrb[0].mxu0 %v1474
        %v2356 = vpop.f32.mrb[0].mxu0
        %v2357 = vadd.f32 0.0, %v2356
        %v2358 = vpop.f32.mrb[0].mxu0
        %v2359 = vpop.f32.mrb[0].mxu0
        %v2360 = vadd.f32 0.0, %v2359
        %v2361 = vpop.f32.mrb[0].mxu0
        %2362 = vmatprep.mubr.bf16.mxu0 0
        %2363 = vmatmul.mubr.bf16.gmra.mrb[0].mxu0 %v1475
        %v2364 = vpop.f32.mrb[0].mxu0
        %v2365 = vadd.f32 0.0, %v2364
        %v2366 = vpop.f32.mrb[0].mxu0
        %v2367 = vpop.f32.mrb[0].mxu0
        %v2368 = vadd.f32 0.0, %v2367
        %v2369 = vpop.f32.mrb[0].mxu0
        %2370 = vmatprep.mubr.bf16.mxu0 0
        %2371 = vmatmul.mubr.bf16.gmra.mrb[0].mxu0 %v1476
        %v2372 = vpop.f32.mrb[0].mxu0
        %v2373 = vadd.f32 0.0, %v2372
        %v2374 = vpop.f32.mrb[0].mxu0
        %v2375 = vpop.f32.mrb[0].mxu0
        %v2376 = vadd.f32 0.0, %v2375
        %v2377 = vpop.f32.mrb[0].mxu0
        %2378 = vmatprep.mubr.bf16.mxu0 0
        %2379 = vmatmul.mubr.bf16.gmra.mrb[0].mxu0 %v1477
        %v2380 = vpop.f32.mrb[0].mxu0
        %v2381 = vadd.f32 0.0, %v2380
        %v2382 = vpop.f32.mrb[0].mxu0
        %v2383 = vpop.f32.mrb[0].mxu0
        %v2384 = vadd.f32 0.0, %v2383
        %v2385 = vpop.f32.mrb[0].mxu0
        %2386 = vmatprep.mubr.bf16.mxu0 0
        %2387 = vmatmul.mubr.bf16.gmra.mrb[0].mxu0 %v1478
        %v2388 = vpop.f32.mrb[0].mxu0
        %v2389 = vadd.f32 0.0, %v2388
        %v2390 = vpop.f32.mrb[0].mxu0
        %v2391 = vpop.f32.mrb[0].mxu0
        %v2392 = vadd.f32 0.0, %v2391
        %v2393 = vpop.f32.mrb[0].mxu0
        %2394 = vmatprep.mubr.bf16.mxu0 0
        %2395 = vmatmul.mubr.bf16.gmra.mrb[0].mxu0 %v1479
        %v2396 = vpop.f32.mrb[0].mxu0
        %v2397 = vadd.f32 0.0, %v2396
        %v2398 = vpop.f32.mrb[0].mxu0
        %v2399 = vpop.f32.mrb[0].mxu0
        %v2400 = vadd.f32 0.0, %v2399
        %v2401 = vpop.f32.mrb[0].mxu0
        %2402 = vmatprep.mubr.bf16.mxu0 0
        %2403 = vmatmul.mubr.bf16.gmra.mrb[0].mxu0 %v1480
        %v2404 = vpop.f32.mrb[0].mxu0
        %v2405 = vadd.f32 0.0, %v2404
        %v2406 = vpop.f32.mrb[0].mxu0
        %v2407 = vpop.f32.mrb[0].mxu0
        %v2408 = vadd.f32 0.0, %v2407
        %v2409 = vpop.f32.mrb[0].mxu0
        %2410 = vmatprep.mubr.bf16.mxu0 0
        %2411 = vmatmul.mubr.bf16.gmra.mrb[0].mxu0 %v1481
        %v2412 = vpop.f32.mrb[0].mxu0
        %v2413 = vadd.f32 0.0, %v2412
        %v2414 = vpop.f32.mrb[0].mxu0
        %v2415 = vpop.f32.mrb[0].mxu0
        %v2416 = vadd.f32 0.0, %v2415
        %v2417 = vpop.f32.mrb[0].mxu0
        %2418 = vmatprep.mubr.bf16.mxu0 0
        %2419 = vmatmul.mubr.bf16.gmra.mrb[0].mxu0 %v1482
        %v2420 = vpop.f32.mrb[0].mxu0
        %v2421 = vadd.f32 0.0, %v2420
        %v2422 = vpop.f32.mrb[0].mxu0
        %v2423 = vpop.f32.mrb[0].mxu0
        %v2424 = vadd.f32 0.0, %v2423
        %v2425 = vpop.f32.mrb[0].mxu0
        %2426 = vmatprep.mubr.bf16.mxu0 0
        %2427 = vmatmul.mubr.bf16.gmra.mrb[0].mxu0 %v2225
        %v2428 = vpop.f32.mrb[0].mxu0
        %v2429 = vadd.f32 0.0, %v2428
        %v2430 = vpop.f32.mrb[0].mxu0
        %v2431 = vpop.f32.mrb[0].mxu0
        %v2432 = vadd.f32 0.0, %v2431
        %v2433 = vpop.f32.mrb[0].mxu0
        %2434 = vdwg.mxu0
        %v2435 = vadd.f32 %v2186, %v2309
        %v2436 = vadd.f32 %v2187, %v2312
        %v2437 = vadd.f32 %v2188, %v2317
        %v2438 = vadd.f32 %v2189, %v2320
        %v2439 = vadd.f32 %v2190, %v2325
        %v2440 = vadd.f32 %v2191, %v2328
        %v2441 = vadd.f32 %v2192, %v2333
        %v2442 = vadd.f32 %v2193, %v2336
        %v2443 = vadd.f32 %v2194, %v2341
        %v2444 = vadd.f32 %v2195, %v2344
        %v2445 = vadd.f32 %v2196, %v2349
        %v2446 = vadd.f32 %v2197, %v2352
        %v2447 = vadd.f32 %v2198, %v2357
        %v2448 = vadd.f32 %v2199, %v2360
        %v2449 = vadd.f32 %v2200, %v2365
        %v2450 = vadd.f32 %v2201, %v2368
        %v2451 = vadd.f32 %v2202, %v2373
        %v2452 = vadd.f32 %v2203, %v2376
        %v2453 = vadd.f32 %v2204, %v2381
        %v2454 = vadd.f32 %v2205, %v2384
        %v2455 = vadd.f32 %v2206, %v2389
        %v2456 = vadd.f32 %v2207, %v2392
        %v2457 = vadd.f32 %v2208, %v2397
        %v2458 = vadd.f32 %v2209, %v2400
        %v2459 = vadd.f32 %v2210, %v2405
        %v2460 = vadd.f32 %v2211, %v2408
        %v2461 = vadd.f32 %v2212, %v2413
        %v2462 = vadd.f32 %v2213, %v2416
        %v2463 = vadd.f32 %v2214, %v2421
        %v2464 = vadd.f32 %v2215, %v2424
        %v2465 = vadd.f32 %v2216, %v2429
        %v2466 = vadd.f32 %v2217, %v2432
        %v2467 = vpack.c.bf16 %v597, %v596
        %v2484 = vunpack.c.l.b16 %v695
        %v2485 = vunpack.c.l.b16 %v696
        %v2486 = vunpack.c.l.b16 %v697
        %v2487 = vunpack.c.l.b16 %v698
        %v2488 = vunpack.c.l.b16 %v699
        %v2489 = vunpack.c.l.b16 %v700
        %v2490 = vunpack.c.l.b16 %v701
        %v2491 = vunpack.c.l.b16 %v702
        %v2492 = vunpack.c.l.b16 %v703
        %v2493 = vunpack.c.l.b16 %v704
        %v2494 = vunpack.c.l.b16 %v705
        %v2495 = vunpack.c.l.b16 %v706
        %v2496 = vunpack.c.l.b16 %v707
        %v2497 = vunpack.c.l.b16 %v708
        %v2498 = vunpack.c.l.b16 %v709
        %v2499 = vunpack.c.l.b16 %v710
        %v2500 = vpack.c.b16 %v2485, %v2484
        %v2501 = vpack.c.b16 %v2487, %v2486
        %v2502 = vpack.c.b16 %v2489, %v2488
        %v2503 = vpack.c.b16 %v2491, %v2490
        %v2504 = vpack.c.b16 %v2493, %v2492
        %v2505 = vpack.c.b16 %v2495, %v2494
        %v2506 = vpack.c.b16 %v2497, %v2496
        %v2507 = vpack.c.b16 %v2499, %v2498
        %2516 = vmatprep.subr.bf16.mxu0 0
        %2517 = vmatpush1.bf16.msra.mxu0 %v2500
        %2518 = vmatprep.subr.bf16.mxu0 0
        %2519 = vmatpush1.bf16.msra.mxu0 %v2501
        %2520 = vmatprep.subr.bf16.mxu0 0
        %2521 = vmatpush1.bf16.msra.mxu0 %v2502
        %2522 = vmatprep.subr.bf16.mxu0 0
        %2523 = vmatpush1.bf16.msra.mxu0 %v2503
        %2524 = vmatprep.subr.bf16.mxu0 0
        %2525 = vmatpush1.bf16.msra.mxu0 %v2504
        %2526 = vmatprep.subr.bf16.mxu0 0
        %2527 = vmatpush1.bf16.msra.mxu0 %v2505
        %2528 = vmatprep.subr.bf16.mxu0 0
        %2529 = vmatpush1.bf16.msra.mxu0 %v2506
        %2530 = vmatprep.subr.bf16.mxu0 0
        %2531 = vmatpush1.bf16.msra.mxu0 %v2507
        %2532 = vmatprep.subr.bf16.mxu0 0
        %2533 = vmatpush1.bf16.msra.mxu0 0
        %2534 = vmatprep.subr.bf16.mxu0 0
        %2535 = vmatpush1.bf16.msra.mxu0 0
        %2536 = vmatprep.subr.bf16.mxu0 0
        %2537 = vmatpush1.bf16.msra.mxu0 0
        %2538 = vmatprep.subr.bf16.mxu0 0
        %2539 = vmatpush1.bf16.msra.mxu0 0
        %2540 = vmatprep.subr.bf16.mxu0 0
        %2541 = vmatpush1.bf16.msra.mxu0 0
        %2542 = vmatprep.subr.bf16.mxu0 0
        %2543 = vmatpush1.bf16.msra.mxu0 0
        %2544 = vmatprep.subr.bf16.mxu0 0
        %2545 = vmatpush1.bf16.msra.mxu0 0
        %2546 = vmatprep.subr.bf16.mxu0 0
        %2547 = vmatpush1.bf16.msra.mxu0 0
        %2548 = vmatprep.mubr.bf16.mxu0 0
        %2549 = vmatmul.mubr.bf16.gmra.mrb[0].mxu0 %v745
        %v2550 = vpop.f32.mrb[0].mxu0
        %v2551 = vadd.f32 0.0, %v2550
        %v2552 = vpop.f32.mrb[0].mxu0
        %v2553 = vpop.f32.mrb[0].mxu0
        %v2554 = vadd.f32 0.0, %v2553
        %v2555 = vpop.f32.mrb[0].mxu0
        %2556 = vmatprep.mubr.bf16.mxu0 0
        %2557 = vmatmul.mubr.bf16.gmra.mrb[0].mxu0 %v746
        %v2558 = vpop.f32.mrb[0].mxu0
        %v2559 = vadd.f32 0.0, %v2558
        %v2560 = vpop.f32.mrb[0].mxu0
        %v2561 = vpop.f32.mrb[0].mxu0
        %v2562 = vadd.f32 0.0, %v2561
        %v2563 = vpop.f32.mrb[0].mxu0
        %2564 = vmatprep.mubr.bf16.mxu0 0
        %2565 = vmatmul.mubr.bf16.gmra.mrb[0].mxu0 %v747
        %v2566 = vpop.f32.mrb[0].mxu0
        %v2567 = vadd.f32 0.0, %v2566
        %v2568 = vpop.f32.mrb[0].mxu0
        %v2569 = vpop.f32.mrb[0].mxu0
        %v2570 = vadd.f32 0.0, %v2569
        %v2571 = vpop.f32.mrb[0].mxu0
        %2572 = vmatprep.mubr.bf16.mxu0 0
        %2573 = vmatmul.mubr.bf16.gmra.mrb[0].mxu0 %v748
        %v2574 = vpop.f32.mrb[0].mxu0
        %v2575 = vadd.f32 0.0, %v2574
        %v2576 = vpop.f32.mrb[0].mxu0
        %v2577 = vpop.f32.mrb[0].mxu0
        %v2578 = vadd.f32 0.0, %v2577
        %v2579 = vpop.f32.mrb[0].mxu0
        %2580 = vmatprep.mubr.bf16.mxu0 0
        %2581 = vmatmul.mubr.bf16.gmra.mrb[0].mxu0 %v749
        %v2582 = vpop.f32.mrb[0].mxu0
        %v2583 = vadd.f32 0.0, %v2582
        %v2584 = vpop.f32.mrb[0].mxu0
        %v2585 = vpop.f32.mrb[0].mxu0
        %v2586 = vadd.f32 0.0, %v2585
        %v2587 = vpop.f32.mrb[0].mxu0
        %2588 = vmatprep.mubr.bf16.mxu0 0
        %2589 = vmatmul.mubr.bf16.gmra.mrb[0].mxu0 %v750
        %v2590 = vpop.f32.mrb[0].mxu0
        %v2591 = vadd.f32 0.0, %v2590
        %v2592 = vpop.f32.mrb[0].mxu0
        %v2593 = vpop.f32.mrb[0].mxu0
        %v2594 = vadd.f32 0.0, %v2593
        %v2595 = vpop.f32.mrb[0].mxu0
        %2596 = vmatprep.mubr.bf16.mxu0 0
        %2597 = vmatmul.mubr.bf16.gmra.mrb[0].mxu0 %v751
        %v2598 = vpop.f32.mrb[0].mxu0
        %v2599 = vadd.f32 0.0, %v2598
        %v2600 = vpop.f32.mrb[0].mxu0
        %v2601 = vpop.f32.mrb[0].mxu0
        %v2602 = vadd.f32 0.0, %v2601
        %v2603 = vpop.f32.mrb[0].mxu0
        %2604 = vmatprep.mubr.bf16.mxu0 0
        %2605 = vmatmul.mubr.bf16.gmra.mrb[0].mxu0 %v752
        %v2606 = vpop.f32.mrb[0].mxu0
        %v2607 = vadd.f32 0.0, %v2606
        %v2608 = vpop.f32.mrb[0].mxu0
        %v2609 = vpop.f32.mrb[0].mxu0
        %v2610 = vadd.f32 0.0, %v2609
        %v2611 = vpop.f32.mrb[0].mxu0
        %2612 = vmatprep.mubr.bf16.mxu0 0
        %2613 = vmatmul.mubr.bf16.gmra.mrb[0].mxu0 %v753
        %v2614 = vpop.f32.mrb[0].mxu0
        %v2615 = vadd.f32 0.0, %v2614
        %v2616 = vpop.f32.mrb[0].mxu0
        %v2617 = vpop.f32.mrb[0].mxu0
        %v2618 = vadd.f32 0.0, %v2617
        %v2619 = vpop.f32.mrb[0].mxu0
        %2620 = vmatprep.mubr.bf16.mxu0 0
        %2621 = vmatmul.mubr.bf16.gmra.mrb[0].mxu0 %v754
        %v2622 = vpop.f32.mrb[0].mxu0
        %v2623 = vadd.f32 0.0, %v2622
        %v2624 = vpop.f32.mrb[0].mxu0
        %v2625 = vpop.f32.mrb[0].mxu0
        %v2626 = vadd.f32 0.0, %v2625
        %v2627 = vpop.f32.mrb[0].mxu0
        %2628 = vmatprep.mubr.bf16.mxu0 0
        %2629 = vmatmul.mubr.bf16.gmra.mrb[0].mxu0 %v755
        %v2630 = vpop.f32.mrb[0].mxu0
        %v2631 = vadd.f32 0.0, %v2630
        %v2632 = vpop.f32.mrb[0].mxu0
        %v2633 = vpop.f32.mrb[0].mxu0
        %v2634 = vadd.f32 0.0, %v2633
        %v2635 = vpop.f32.mrb[0].mxu0
        %2636 = vmatprep.mubr.bf16.mxu0 0
        %2637 = vmatmul.mubr.bf16.gmra.mrb[0].mxu0 %v756
        %v2638 = vpop.f32.mrb[0].mxu0
        %v2639 = vadd.f32 0.0, %v2638
        %v2640 = vpop.f32.mrb[0].mxu0
        %v2641 = vpop.f32.mrb[0].mxu0
        %v2642 = vadd.f32 0.0, %v2641
        %v2643 = vpop.f32.mrb[0].mxu0
        %2644 = vmatprep.mubr.bf16.mxu0 0
        %2645 = vmatmul.mubr.bf16.gmra.mrb[0].mxu0 %v757
        %v2646 = vpop.f32.mrb[0].mxu0
        %v2647 = vadd.f32 0.0, %v2646
        %v2648 = vpop.f32.mrb[0].mxu0
        %v2649 = vpop.f32.mrb[0].mxu0
        %v2650 = vadd.f32 0.0, %v2649
        %v2651 = vpop.f32.mrb[0].mxu0
        %2652 = vmatprep.mubr.bf16.mxu0 0
        %2653 = vmatmul.mubr.bf16.gmra.mrb[0].mxu0 %v758
        %v2654 = vpop.f32.mrb[0].mxu0
        %v2655 = vadd.f32 0.0, %v2654
        %v2656 = vpop.f32.mrb[0].mxu0
        %v2657 = vpop.f32.mrb[0].mxu0
        %v2658 = vadd.f32 0.0, %v2657
        %v2659 = vpop.f32.mrb[0].mxu0
        %2660 = vmatprep.mubr.bf16.mxu0 0
        %2661 = vmatmul.mubr.bf16.gmra.mrb[0].mxu0 %v1724
        %v2662 = vpop.f32.mrb[0].mxu0
        %v2663 = vadd.f32 0.0, %v2662
        %v2664 = vpop.f32.mrb[0].mxu0
        %v2665 = vpop.f32.mrb[0].mxu0
        %v2666 = vadd.f32 0.0, %v2665
        %v2667 = vpop.f32.mrb[0].mxu0
        %2668 = vmatprep.mubr.bf16.mxu0 0
        %2669 = vmatmul.mubr.bf16.gmra.mrb[0].mxu0 %v2467
        %v2670 = vpop.f32.mrb[0].mxu0
        %v2671 = vadd.f32 0.0, %v2670
        %v2672 = vpop.f32.mrb[0].mxu0
        %v2673 = vpop.f32.mrb[0].mxu0
        %v2674 = vadd.f32 0.0, %v2673
        %v2675 = vpop.f32.mrb[0].mxu0
        %2676 = vdwg.mxu0
        %v2677 = vadd.f32 %v2435, %v2551
        %v2678 = vadd.f32 %v2436, %v2554
        %v2679 = vadd.f32 %v2437, %v2559
        %v2680 = vadd.f32 %v2438, %v2562
        %v2681 = vadd.f32 %v2439, %v2567
        %v2682 = vadd.f32 %v2440, %v2570
        %v2683 = vadd.f32 %v2441, %v2575
        %v2684 = vadd.f32 %v2442, %v2578
        %v2685 = vadd.f32 %v2443, %v2583
        %v2686 = vadd.f32 %v2444, %v2586
        %v2687 = vadd.f32 %v2445, %v2591
        %v2688 = vadd.f32 %v2446, %v2594
        %v2689 = vadd.f32 %v2447, %v2599
        %v2690 = vadd.f32 %v2448, %v2602
        %v2691 = vadd.f32 %v2449, %v2607
        %v2692 = vadd.f32 %v2450, %v2610
        %v2693 = vadd.f32 %v2451, %v2615
        %v2694 = vadd.f32 %v2452, %v2618
        %v2695 = vadd.f32 %v2453, %v2623
        %v2696 = vadd.f32 %v2454, %v2626
        %v2697 = vadd.f32 %v2455, %v2631
        %v2698 = vadd.f32 %v2456, %v2634
        %v2699 = vadd.f32 %v2457, %v2639
        %v2700 = vadd.f32 %v2458, %v2642
        %v2701 = vadd.f32 %v2459, %v2647
        %v2702 = vadd.f32 %v2460, %v2650
        %v2703 = vadd.f32 %v2461, %v2655
        %v2704 = vadd.f32 %v2462, %v2658
        %v2705 = vadd.f32 %v2463, %v2663
        %v2706 = vadd.f32 %v2464, %v2666
        %v2707 = vadd.f32 %v2465, %v2671
        %v2708 = vadd.f32 %v2466, %v2674
        %v2712 = vrot.slane %v596, 1
        %v2713 = vrot.slane %v597, 1
        %v2714 = vsel %vm807, %v2712, %v2713
        %v2715 = vrot.slane %v598, 1
        %v2716 = vsel %vm807, %v2713, %v2715
        %v2719 = vpack.c.bf16 %v2716, %v2714
        %v2736 = vunpack.c.l.b16 %v711
        %v2737 = vunpack.c.l.b16 %v712
        %v2738 = vunpack.c.l.b16 %v713
        %v2739 = vunpack.c.l.b16 %v714
        %v2740 = vunpack.c.l.b16 %v715
        %v2741 = vunpack.c.l.b16 %v716
        %v2742 = vunpack.c.l.b16 %v717
        %v2743 = vunpack.c.l.b16 %v718
        %v2744 = vunpack.c.l.b16 %v719
        %v2745 = vunpack.c.l.b16 %v720
        %v2746 = vunpack.c.l.b16 %v721
        %v2747 = vunpack.c.l.b16 %v722
        %v2748 = vunpack.c.l.b16 %v723
        %v2749 = vunpack.c.l.b16 %v724
        %v2750 = vunpack.c.l.b16 %v725
        %v2751 = vunpack.c.l.b16 %v726
        %v2752 = vpack.c.b16 %v2737, %v2736
        %v2753 = vpack.c.b16 %v2739, %v2738
        %v2754 = vpack.c.b16 %v2741, %v2740
        %v2755 = vpack.c.b16 %v2743, %v2742
        %v2756 = vpack.c.b16 %v2745, %v2744
        %v2757 = vpack.c.b16 %v2747, %v2746
        %v2758 = vpack.c.b16 %v2749, %v2748
        %v2759 = vpack.c.b16 %v2751, %v2750
        %2768 = vmatprep.subr.bf16.mxu0 0
        %2769 = vmatpush1.bf16.msra.mxu0 %v2752
        %2770 = vmatprep.subr.bf16.mxu0 0
        %2771 = vmatpush1.bf16.msra.mxu0 %v2753
        %2772 = vmatprep.subr.bf16.mxu0 0
        %2773 = vmatpush1.bf16.msra.mxu0 %v2754
        %2774 = vmatprep.subr.bf16.mxu0 0
        %2775 = vmatpush1.bf16.msra.mxu0 %v2755
        %2776 = vmatprep.subr.bf16.mxu0 0
        %2777 = vmatpush1.bf16.msra.mxu0 %v2756
        %2778 = vmatprep.subr.bf16.mxu0 0
        %2779 = vmatpush1.bf16.msra.mxu0 %v2757
        %2780 = vmatprep.subr.bf16.mxu0 0
        %2781 = vmatpush1.bf16.msra.mxu0 %v2758
        %2782 = vmatprep.subr.bf16.mxu0 0
        %2783 = vmatpush1.bf16.msra.mxu0 %v2759
        %2784 = vmatprep.subr.bf16.mxu0 0
        %2785 = vmatpush1.bf16.msra.mxu0 0
        %2786 = vmatprep.subr.bf16.mxu0 0
        %2787 = vmatpush1.bf16.msra.mxu0 0
        %2788 = vmatprep.subr.bf16.mxu0 0
        %2789 = vmatpush1.bf16.msra.mxu0 0
        %2790 = vmatprep.subr.bf16.mxu0 0
        %2791 = vmatpush1.bf16.msra.mxu0 0
        %2792 = vmatprep.subr.bf16.mxu0 0
        %2793 = vmatpush1.bf16.msra.mxu0 0
        %2794 = vmatprep.subr.bf16.mxu0 0
        %2795 = vmatpush1.bf16.msra.mxu0 0
        %2796 = vmatprep.subr.bf16.mxu0 0
        %2797 = vmatpush1.bf16.msra.mxu0 0
        %2798 = vmatprep.subr.bf16.mxu0 0
        %2799 = vmatpush1.bf16.msra.mxu0 0
        %2800 = vmatprep.mubr.bf16.mxu0 0
        %2801 = vmatmul.mubr.bf16.gmra.mrb[0].mxu0 %v922
        %v2802 = vpop.f32.mrb[0].mxu0
        %v2803 = vadd.f32 0.0, %v2802
        %v2804 = vpop.f32.mrb[0].mxu0
        %v2805 = vpop.f32.mrb[0].mxu0
        %v2806 = vadd.f32 0.0, %v2805
        %v2807 = vpop.f32.mrb[0].mxu0
        %2808 = vmatprep.mubr.bf16.mxu0 0
        %2809 = vmatmul.mubr.bf16.gmra.mrb[0].mxu0 %v923
        %v2810 = vpop.f32.mrb[0].mxu0
        %v2811 = vadd.f32 0.0, %v2810
        %v2812 = vpop.f32.mrb[0].mxu0
        %v2813 = vpop.f32.mrb[0].mxu0
        %v2814 = vadd.f32 0.0, %v2813
        %v2815 = vpop.f32.mrb[0].mxu0
        %2816 = vmatprep.mubr.bf16.mxu0 0
        %2817 = vmatmul.mubr.bf16.gmra.mrb[0].mxu0 %v924
        %v2818 = vpop.f32.mrb[0].mxu0
        %v2819 = vadd.f32 0.0, %v2818
        %v2820 = vpop.f32.mrb[0].mxu0
        %v2821 = vpop.f32.mrb[0].mxu0
        %v2822 = vadd.f32 0.0, %v2821
        %v2823 = vpop.f32.mrb[0].mxu0
        %2824 = vmatprep.mubr.bf16.mxu0 0
        %2825 = vmatmul.mubr.bf16.gmra.mrb[0].mxu0 %v925
        %v2826 = vpop.f32.mrb[0].mxu0
        %v2827 = vadd.f32 0.0, %v2826
        %v2828 = vpop.f32.mrb[0].mxu0
        %v2829 = vpop.f32.mrb[0].mxu0
        %v2830 = vadd.f32 0.0, %v2829
        %v2831 = vpop.f32.mrb[0].mxu0
        %2832 = vmatprep.mubr.bf16.mxu0 0
        %2833 = vmatmul.mubr.bf16.gmra.mrb[0].mxu0 %v926
        %v2834 = vpop.f32.mrb[0].mxu0
        %v2835 = vadd.f32 0.0, %v2834
        %v2836 = vpop.f32.mrb[0].mxu0
        %v2837 = vpop.f32.mrb[0].mxu0
        %v2838 = vadd.f32 0.0, %v2837
        %v2839 = vpop.f32.mrb[0].mxu0
        %2840 = vmatprep.mubr.bf16.mxu0 0
        %2841 = vmatmul.mubr.bf16.gmra.mrb[0].mxu0 %v927
        %v2842 = vpop.f32.mrb[0].mxu0
        %v2843 = vadd.f32 0.0, %v2842
        %v2844 = vpop.f32.mrb[0].mxu0
        %v2845 = vpop.f32.mrb[0].mxu0
        %v2846 = vadd.f32 0.0, %v2845
        %v2847 = vpop.f32.mrb[0].mxu0
        %2848 = vmatprep.mubr.bf16.mxu0 0
        %2849 = vmatmul.mubr.bf16.gmra.mrb[0].mxu0 %v928
        %v2850 = vpop.f32.mrb[0].mxu0
        %v2851 = vadd.f32 0.0, %v2850
        %v2852 = vpop.f32.mrb[0].mxu0
        %v2853 = vpop.f32.mrb[0].mxu0
        %v2854 = vadd.f32 0.0, %v2853
        %v2855 = vpop.f32.mrb[0].mxu0
        %2856 = vmatprep.mubr.bf16.mxu0 0
        %2857 = vmatmul.mubr.bf16.gmra.mrb[0].mxu0 %v929
        %v2858 = vpop.f32.mrb[0].mxu0
        %v2859 = vadd.f32 0.0, %v2858
        %v2860 = vpop.f32.mrb[0].mxu0
        %v2861 = vpop.f32.mrb[0].mxu0
        %v2862 = vadd.f32 0.0, %v2861
        %v2863 = vpop.f32.mrb[0].mxu0
        %2864 = vmatprep.mubr.bf16.mxu0 0
        %2865 = vmatmul.mubr.bf16.gmra.mrb[0].mxu0 %v930
        %v2866 = vpop.f32.mrb[0].mxu0
        %v2867 = vadd.f32 0.0, %v2866
        %v2868 = vpop.f32.mrb[0].mxu0
        %v2869 = vpop.f32.mrb[0].mxu0
        %v2870 = vadd.f32 0.0, %v2869
        %v2871 = vpop.f32.mrb[0].mxu0
        %2872 = vmatprep.mubr.bf16.mxu0 0
        %2873 = vmatmul.mubr.bf16.gmra.mrb[0].mxu0 %v931
        %v2874 = vpop.f32.mrb[0].mxu0
        %v2875 = vadd.f32 0.0, %v2874
        %v2876 = vpop.f32.mrb[0].mxu0
        %v2877 = vpop.f32.mrb[0].mxu0
        %v2878 = vadd.f32 0.0, %v2877
        %v2879 = vpop.f32.mrb[0].mxu0
        %2880 = vmatprep.mubr.bf16.mxu0 0
        %2881 = vmatmul.mubr.bf16.gmra.mrb[0].mxu0 %v932
        %v2882 = vpop.f32.mrb[0].mxu0
        %v2883 = vadd.f32 0.0, %v2882
        %v2884 = vpop.f32.mrb[0].mxu0
        %v2885 = vpop.f32.mrb[0].mxu0
        %v2886 = vadd.f32 0.0, %v2885
        %v2887 = vpop.f32.mrb[0].mxu0
        %2888 = vmatprep.mubr.bf16.mxu0 0
        %2889 = vmatmul.mubr.bf16.gmra.mrb[0].mxu0 %v933
        %v2890 = vpop.f32.mrb[0].mxu0
        %v2891 = vadd.f32 0.0, %v2890
        %v2892 = vpop.f32.mrb[0].mxu0
        %v2893 = vpop.f32.mrb[0].mxu0
        %v2894 = vadd.f32 0.0, %v2893
        %v2895 = vpop.f32.mrb[0].mxu0
        %2896 = vmatprep.mubr.bf16.mxu0 0
        %2897 = vmatmul.mubr.bf16.gmra.mrb[0].mxu0 %v934
        %v2898 = vpop.f32.mrb[0].mxu0
        %v2899 = vadd.f32 0.0, %v2898
        %v2900 = vpop.f32.mrb[0].mxu0
        %v2901 = vpop.f32.mrb[0].mxu0
        %v2902 = vadd.f32 0.0, %v2901
        %v2903 = vpop.f32.mrb[0].mxu0
        %2904 = vmatprep.mubr.bf16.mxu0 0
        %2905 = vmatmul.mubr.bf16.gmra.mrb[0].mxu0 %v935
        %v2906 = vpop.f32.mrb[0].mxu0
        %v2907 = vadd.f32 0.0, %v2906
        %v2908 = vpop.f32.mrb[0].mxu0
        %v2909 = vpop.f32.mrb[0].mxu0
        %v2910 = vadd.f32 0.0, %v2909
        %v2911 = vpop.f32.mrb[0].mxu0
        %2912 = vmatprep.mubr.bf16.mxu0 0
        %2913 = vmatmul.mubr.bf16.gmra.mrb[0].mxu0 %v1976
        %v2914 = vpop.f32.mrb[0].mxu0
        %v2915 = vadd.f32 0.0, %v2914
        %v2916 = vpop.f32.mrb[0].mxu0
        %v2917 = vpop.f32.mrb[0].mxu0
        %v2918 = vadd.f32 0.0, %v2917
        %v2919 = vpop.f32.mrb[0].mxu0
        %2920 = vmatprep.mubr.bf16.mxu0 0
        %2921 = vmatmul.mubr.bf16.gmra.mrb[0].mxu0 %v2719
        %v2922 = vpop.f32.mrb[0].mxu0
        %v2923 = vadd.f32 0.0, %v2922
        %v2924 = vpop.f32.mrb[0].mxu0
        %v2925 = vpop.f32.mrb[0].mxu0
        %v2926 = vadd.f32 0.0, %v2925
        %v2927 = vpop.f32.mrb[0].mxu0
        %2928 = vdwg.mxu0
        %v2929 = vadd.f32 %v2677, %v2803
        %v2930 = vadd.f32 %v2678, %v2806
        %v2931 = vadd.f32 %v2679, %v2811
        %v2932 = vadd.f32 %v2680, %v2814
        %v2933 = vadd.f32 %v2681, %v2819
        %v2934 = vadd.f32 %v2682, %v2822
        %v2935 = vadd.f32 %v2683, %v2827
        %v2936 = vadd.f32 %v2684, %v2830
        %v2937 = vadd.f32 %v2685, %v2835
        %v2938 = vadd.f32 %v2686, %v2838
        %v2939 = vadd.f32 %v2687, %v2843
        %v2940 = vadd.f32 %v2688, %v2846
        %v2941 = vadd.f32 %v2689, %v2851
        %v2942 = vadd.f32 %v2690, %v2854
        %v2943 = vadd.f32 %v2691, %v2859
        %v2944 = vadd.f32 %v2692, %v2862
        %v2945 = vadd.f32 %v2693, %v2867
        %v2946 = vadd.f32 %v2694, %v2870
        %v2947 = vadd.f32 %v2695, %v2875
        %v2948 = vadd.f32 %v2696, %v2878
        %v2949 = vadd.f32 %v2697, %v2883
        %v2950 = vadd.f32 %v2698, %v2886
        %v2951 = vadd.f32 %v2699, %v2891
        %v2952 = vadd.f32 %v2700, %v2894
        %v2953 = vadd.f32 %v2701, %v2899
        %v2954 = vadd.f32 %v2702, %v2902
        %v2955 = vadd.f32 %v2703, %v2907
        %v2956 = vadd.f32 %v2704, %v2910
        %v2957 = vadd.f32 %v2705, %v2915
        %v2958 = vadd.f32 %v2706, %v2918
        %v2959 = vadd.f32 %v2707, %v2923
        %v2960 = vadd.f32 %v2708, %v2926
        %v2961 = vrot.slane %v596, 2
        %v2962 = vrot.slane %v597, 2
        %v2963 = vsel %vm1354, %v2961, %v2962
        %v2964 = vrot.slane %v598, 2
        %v2965 = vsel %vm1354, %v2962, %v2964
        %v2968 = vpack.c.bf16 %v2965, %v2963
        %v2985 = vunpack.c.l.b16 %v727
        %v2986 = vunpack.c.l.b16 %v728
        %v2987 = vunpack.c.l.b16 %v729
        %v2988 = vunpack.c.l.b16 %v730
        %v2989 = vunpack.c.l.b16 %v731
        %v2990 = vunpack.c.l.b16 %v732
        %v2991 = vunpack.c.l.b16 %v733
        %v2992 = vunpack.c.l.b16 %v734
        %v2993 = vunpack.c.l.b16 %v735
        %v2994 = vunpack.c.l.b16 %v736
        %v2995 = vunpack.c.l.b16 %v737
        %v2996 = vunpack.c.l.b16 %v738
        %v2997 = vunpack.c.l.b16 %v739
        %v2998 = vunpack.c.l.b16 %v740
        %v2999 = vunpack.c.l.b16 %v741
        %v3000 = vunpack.c.l.b16 %v742
        %v3001 = vpack.c.b16 %v2986, %v2985
        %v3002 = vpack.c.b16 %v2988, %v2987
        %v3003 = vpack.c.b16 %v2990, %v2989
        %v3004 = vpack.c.b16 %v2992, %v2991
        %v3005 = vpack.c.b16 %v2994, %v2993
        %v3006 = vpack.c.b16 %v2996, %v2995
        %v3007 = vpack.c.b16 %v2998, %v2997
        %v3008 = vpack.c.b16 %v3000, %v2999
        %3017 = vmatprep.subr.bf16.mxu0 0
        %3018 = vmatpush1.bf16.msra.mxu0 %v3001
        %3019 = vmatprep.subr.bf16.mxu0 0
        %3020 = vmatpush1.bf16.msra.mxu0 %v3002
        %3021 = vmatprep.subr.bf16.mxu0 0
        %3022 = vmatpush1.bf16.msra.mxu0 %v3003
        %3023 = vmatprep.subr.bf16.mxu0 0
        %3024 = vmatpush1.bf16.msra.mxu0 %v3004
        %3025 = vmatprep.subr.bf16.mxu0 0
        %3026 = vmatpush1.bf16.msra.mxu0 %v3005
        %3027 = vmatprep.subr.bf16.mxu0 0
        %3028 = vmatpush1.bf16.msra.mxu0 %v3006
        %3029 = vmatprep.subr.bf16.mxu0 0
        %3030 = vmatpush1.bf16.msra.mxu0 %v3007
        %3031 = vmatprep.subr.bf16.mxu0 0
        %3032 = vmatpush1.bf16.msra.mxu0 %v3008
        %3033 = vmatprep.subr.bf16.mxu0 0
        %3034 = vmatpush1.bf16.msra.mxu0 0
        %3035 = vmatprep.subr.bf16.mxu0 0
        %3036 = vmatpush1.bf16.msra.mxu0 0
        %3037 = vmatprep.subr.bf16.mxu0 0
        %3038 = vmatpush1.bf16.msra.mxu0 0
        %3039 = vmatprep.subr.bf16.mxu0 0
        %3040 = vmatpush1.bf16.msra.mxu0 0
        %3041 = vmatprep.subr.bf16.mxu0 0
        %3042 = vmatpush1.bf16.msra.mxu0 0
        %3043 = vmatprep.subr.bf16.mxu0 0
        %3044 = vmatpush1.bf16.msra.mxu0 0
        %3045 = vmatprep.subr.bf16.mxu0 0
        %3046 = vmatpush1.bf16.msra.mxu0 0
        %3047 = vmatprep.subr.bf16.mxu0 0
        %3048 = vmatpush1.bf16.msra.mxu0 0
        %3049 = vmatprep.mubr.bf16.mxu0 0
        %3050 = vmatmul.mubr.bf16.gmra.mrb[0].mxu0 %v1469
        %v3051 = vpop.f32.mrb[0].mxu0
        %v3052 = vadd.f32 0.0, %v3051
        %v3053 = vpop.f32.mrb[0].mxu0
        %v3054 = vpop.f32.mrb[0].mxu0
        %v3055 = vadd.f32 0.0, %v3054
        %v3056 = vpop.f32.mrb[0].mxu0
        %3057 = vmatprep.mubr.bf16.mxu0 0
        %3058 = vmatmul.mubr.bf16.gmra.mrb[0].mxu0 %v1470
        %v3059 = vpop.f32.mrb[0].mxu0
        %v3060 = vadd.f32 0.0, %v3059
        %v3061 = vpop.f32.mrb[0].mxu0
        %v3062 = vpop.f32.mrb[0].mxu0
        %v3063 = vadd.f32 0.0, %v3062
        %v3064 = vpop.f32.mrb[0].mxu0
        %3065 = vmatprep.mubr.bf16.mxu0 0
        %3066 = vmatmul.mubr.bf16.gmra.mrb[0].mxu0 %v1471
        %v3067 = vpop.f32.mrb[0].mxu0
        %v3068 = vadd.f32 0.0, %v3067
        %v3069 = vpop.f32.mrb[0].mxu0
        %v3070 = vpop.f32.mrb[0].mxu0
        %v3071 = vadd.f32 0.0, %v3070
        %v3072 = vpop.f32.mrb[0].mxu0
        %3073 = vmatprep.mubr.bf16.mxu0 0
        %3074 = vmatmul.mubr.bf16.gmra.mrb[0].mxu0 %v1472
        %v3075 = vpop.f32.mrb[0].mxu0
        %v3076 = vadd.f32 0.0, %v3075
        %v3077 = vpop.f32.mrb[0].mxu0
        %v3078 = vpop.f32.mrb[0].mxu0
        %v3079 = vadd.f32 0.0, %v3078
        %v3080 = vpop.f32.mrb[0].mxu0
        %3081 = vmatprep.mubr.bf16.mxu0 0
        %3082 = vmatmul.mubr.bf16.gmra.mrb[0].mxu0 %v1473
        %v3083 = vpop.f32.mrb[0].mxu0
        %v3084 = vadd.f32 0.0, %v3083
        %v3085 = vpop.f32.mrb[0].mxu0
        %v3086 = vpop.f32.mrb[0].mxu0
        %v3087 = vadd.f32 0.0, %v3086
        %v3088 = vpop.f32.mrb[0].mxu0
        %3089 = vmatprep.mubr.bf16.mxu0 0
        %3090 = vmatmul.mubr.bf16.gmra.mrb[0].mxu0 %v1474
        %v3091 = vpop.f32.mrb[0].mxu0
        %v3092 = vadd.f32 0.0, %v3091
        %v3093 = vpop.f32.mrb[0].mxu0
        %v3094 = vpop.f32.mrb[0].mxu0
        %v3095 = vadd.f32 0.0, %v3094
        %v3096 = vpop.f32.mrb[0].mxu0
        %3097 = vmatprep.mubr.bf16.mxu0 0
        %3098 = vmatmul.mubr.bf16.gmra.mrb[0].mxu0 %v1475
        %v3099 = vpop.f32.mrb[0].mxu0
        %v3100 = vadd.f32 0.0, %v3099
        %v3101 = vpop.f32.mrb[0].mxu0
        %v3102 = vpop.f32.mrb[0].mxu0
        %v3103 = vadd.f32 0.0, %v3102
        %v3104 = vpop.f32.mrb[0].mxu0
        %3105 = vmatprep.mubr.bf16.mxu0 0
        %3106 = vmatmul.mubr.bf16.gmra.mrb[0].mxu0 %v1476
        %v3107 = vpop.f32.mrb[0].mxu0
        %v3108 = vadd.f32 0.0, %v3107
        %v3109 = vpop.f32.mrb[0].mxu0
        %v3110 = vpop.f32.mrb[0].mxu0
        %v3111 = vadd.f32 0.0, %v3110
        %v3112 = vpop.f32.mrb[0].mxu0
        %3113 = vmatprep.mubr.bf16.mxu0 0
        %3114 = vmatmul.mubr.bf16.gmra.mrb[0].mxu0 %v1477
        %v3115 = vpop.f32.mrb[0].mxu0
        %v3116 = vadd.f32 0.0, %v3115
        %v3117 = vpop.f32.mrb[0].mxu0
        %v3118 = vpop.f32.mrb[0].mxu0
        %v3119 = vadd.f32 0.0, %v3118
        %v3120 = vpop.f32.mrb[0].mxu0
        %3121 = vmatprep.mubr.bf16.mxu0 0
        %3122 = vmatmul.mubr.bf16.gmra.mrb[0].mxu0 %v1478
        %v3123 = vpop.f32.mrb[0].mxu0
        %v3124 = vadd.f32 0.0, %v3123
        %v3125 = vpop.f32.mrb[0].mxu0
        %v3126 = vpop.f32.mrb[0].mxu0
        %v3127 = vadd.f32 0.0, %v3126
        %v3128 = vpop.f32.mrb[0].mxu0
        %3129 = vmatprep.mubr.bf16.mxu0 0
        %3130 = vmatmul.mubr.bf16.gmra.mrb[0].mxu0 %v1479
        %v3131 = vpop.f32.mrb[0].mxu0
        %v3132 = vadd.f32 0.0, %v3131
        %v3133 = vpop.f32.mrb[0].mxu0
        %v3134 = vpop.f32.mrb[0].mxu0
        %v3135 = vadd.f32 0.0, %v3134
        %v3136 = vpop.f32.mrb[0].mxu0
        %3137 = vmatprep.mubr.bf16.mxu0 0
        %3138 = vmatmul.mubr.bf16.gmra.mrb[0].mxu0 %v1480
        %v3139 = vpop.f32.mrb[0].mxu0
        %v3140 = vadd.f32 0.0, %v3139
        %v3141 = vpop.f32.mrb[0].mxu0
        %v3142 = vpop.f32.mrb[0].mxu0
        %v3143 = vadd.f32 0.0, %v3142
        %v3144 = vpop.f32.mrb[0].mxu0
        %3145 = vmatprep.mubr.bf16.mxu0 0
        %3146 = vmatmul.mubr.bf16.gmra.mrb[0].mxu0 %v1481
        %v3147 = vpop.f32.mrb[0].mxu0
        %v3148 = vadd.f32 0.0, %v3147
        %v3149 = vpop.f32.mrb[0].mxu0
        %v3150 = vpop.f32.mrb[0].mxu0
        %v3151 = vadd.f32 0.0, %v3150
        %v3152 = vpop.f32.mrb[0].mxu0
        %3153 = vmatprep.mubr.bf16.mxu0 0
        %3154 = vmatmul.mubr.bf16.gmra.mrb[0].mxu0 %v1482
        %v3155 = vpop.f32.mrb[0].mxu0
        %v3156 = vadd.f32 0.0, %v3155
        %v3157 = vpop.f32.mrb[0].mxu0
        %v3158 = vpop.f32.mrb[0].mxu0
        %v3159 = vadd.f32 0.0, %v3158
        %v3160 = vpop.f32.mrb[0].mxu0
        %3161 = vmatprep.mubr.bf16.mxu0 0
        %3162 = vmatmul.mubr.bf16.gmra.mrb[0].mxu0 %v2225
        %v3163 = vpop.f32.mrb[0].mxu0
        %v3164 = vadd.f32 0.0, %v3163
        %v3165 = vpop.f32.mrb[0].mxu0
        %v3166 = vpop.f32.mrb[0].mxu0
        %v3167 = vadd.f32 0.0, %v3166
        %v3168 = vpop.f32.mrb[0].mxu0
        %3169 = vmatprep.mubr.bf16.mxu0 0
        %3170 = vmatmul.mubr.bf16.gmra.mrb[0].mxu0 %v2968
        %v3171 = vpop.f32.mrb[0].mxu0
        %v3172 = vadd.f32 0.0, %v3171
        %v3173 = vpop.f32.mrb[0].mxu0
        %v3174 = vpop.f32.mrb[0].mxu0
        %v3175 = vadd.f32 0.0, %v3174
        %v3176 = vpop.f32.mrb[0].mxu0
        %3177 = vdwg.mxu0
        %v3178 = vadd.f32 %v2929, %v3052
        %v3179 = vadd.f32 %v2930, %v3055
        %v3180 = vadd.f32 %v2931, %v3060
        %v3181 = vadd.f32 %v2932, %v3063
        %v3182 = vadd.f32 %v2933, %v3068
        %v3183 = vadd.f32 %v2934, %v3071
        %v3184 = vadd.f32 %v2935, %v3076
        %v3185 = vadd.f32 %v2936, %v3079
        %v3186 = vadd.f32 %v2937, %v3084
        %v3187 = vadd.f32 %v2938, %v3087
        %v3188 = vadd.f32 %v2939, %v3092
        %v3189 = vadd.f32 %v2940, %v3095
        %v3190 = vadd.f32 %v2941, %v3100
        %v3191 = vadd.f32 %v2942, %v3103
        %v3192 = vadd.f32 %v2943, %v3108
        %v3193 = vadd.f32 %v2944, %v3111
        %v3194 = vadd.f32 %v2945, %v3116
        %v3195 = vadd.f32 %v2946, %v3119
        %v3196 = vadd.f32 %v2947, %v3124
        %v3197 = vadd.f32 %v2948, %v3127
        %v3198 = vadd.f32 %v2949, %v3132
        %v3199 = vadd.f32 %v2950, %v3135
        %v3200 = vadd.f32 %v2951, %v3140
        %v3201 = vadd.f32 %v2952, %v3143
        %v3202 = vadd.f32 %v2953, %v3148
        %v3203 = vadd.f32 %v2954, %v3151
        %v3204 = vadd.f32 %v2955, %v3156
        %v3205 = vadd.f32 %v2956, %v3159
        %v3206 = vadd.f32 %v2957, %v3164
        %v3207 = vadd.f32 %v2958, %v3167
        %v3208 = vadd.f32 %v2959, %v3172
        %v3209 = vadd.f32 %v2960, %v3175
        %v3210 = vadd.f32 %v3178, %v3179
        %v3211 = vadd.f32 %v3210, %v3180
        %v3212 = vadd.f32 %v3211, %v3181
        %v3213 = vadd.f32 %v3212, %v3182
        %v3214 = vadd.f32 %v3213, %v3183
        %v3215 = vadd.f32 %v3214, %v3184
        %v3216 = vadd.f32 %v3215, %v3185
        %v3217 = vadd.f32 %v3216, %v3186
        %v3218 = vadd.f32 %v3217, %v3187
        %v3219 = vadd.f32 %v3218, %v3188
        %v3220 = vadd.f32 %v3219, %v3189
        %v3221 = vadd.f32 %v3220, %v3190
        %v3222 = vadd.f32 %v3221, %v3191
        %v3223 = vadd.f32 %v3222, %v3192
        %v3224 = vadd.f32 %v3223, %v3193
        %v3225 = vadd.f32 %v3224, %v3194
        %v3226 = vadd.f32 %v3225, %v3195
        %v3227 = vadd.f32 %v3226, %v3196
        %v3228 = vadd.f32 %v3227, %v3197
        %v3229 = vadd.f32 %v3228, %v3198
        %v3230 = vadd.f32 %v3229, %v3199
        %v3231 = vadd.f32 %v3230, %v3200
        %v3232 = vadd.f32 %v3231, %v3201
        %v3233 = vadd.f32 %v3232, %v3202
        %v3234 = vadd.f32 %v3233, %v3203
        %v3235 = vadd.f32 %v3234, %v3204
        %v3236 = vadd.f32 %v3235, %v3205
        %v3237 = vadd.f32 %v3236, %v3206
        %v3238 = vadd.f32 %v3237, %v3207
        %v3239 = vadd.f32 %v3238, %v3208
        %v3240 = vadd.f32 %v3239, %v3209
        %v3241 = vrot.slane %v3240, 4
        %v3242 = vadd.f32 %v3240, %v3241
        %v3243 = vrot.slane %v3242, 2
        %v3244 = vadd.f32 %v3242, %v3243
        %v3245 = vrot.slane %v3244, 1
        %v3246 = vadd.f32 %v3244, %v3245
        %v3247 = vmul.f32 %v3178, %v3178
        %v3248 = vmul.f32 %v3179, %v3179
        %v3249 = vmul.f32 %v3180, %v3180
        %v3250 = vmul.f32 %v3181, %v3181
        %v3251 = vmul.f32 %v3182, %v3182
        %v3252 = vmul.f32 %v3183, %v3183
        %v3253 = vmul.f32 %v3184, %v3184
        %v3254 = vmul.f32 %v3185, %v3185
        %v3255 = vmul.f32 %v3186, %v3186
        %v3256 = vmul.f32 %v3187, %v3187
        %v3257 = vmul.f32 %v3188, %v3188
        %v3258 = vmul.f32 %v3189, %v3189
        %v3259 = vmul.f32 %v3190, %v3190
        %v3260 = vmul.f32 %v3191, %v3191
        %v3261 = vmul.f32 %v3192, %v3192
        %v3262 = vmul.f32 %v3193, %v3193
        %v3263 = vmul.f32 %v3194, %v3194
        %v3264 = vmul.f32 %v3195, %v3195
        %v3265 = vmul.f32 %v3196, %v3196
        %v3266 = vmul.f32 %v3197, %v3197
        %v3267 = vmul.f32 %v3198, %v3198
        %v3268 = vmul.f32 %v3199, %v3199
        %v3269 = vmul.f32 %v3200, %v3200
        %v3270 = vmul.f32 %v3201, %v3201
        %v3271 = vmul.f32 %v3202, %v3202
        %v3272 = vmul.f32 %v3203, %v3203
        %v3273 = vmul.f32 %v3204, %v3204
        %v3274 = vmul.f32 %v3205, %v3205
        %v3275 = vmul.f32 %v3206, %v3206
        %v3276 = vmul.f32 %v3207, %v3207
        %v3277 = vmul.f32 %v3208, %v3208
        %v3278 = vmul.f32 %v3209, %v3209
        %v3279 = vadd.f32 %v3247, %v3248
        %v3280 = vadd.f32 %v3279, %v3249
        %v3281 = vadd.f32 %v3280, %v3250
        %v3282 = vadd.f32 %v3281, %v3251
        %v3283 = vadd.f32 %v3282, %v3252
        %v3284 = vadd.f32 %v3283, %v3253
        %v3285 = vadd.f32 %v3284, %v3254
        %v3286 = vadd.f32 %v3285, %v3255
        %v3287 = vadd.f32 %v3286, %v3256
        %v3288 = vadd.f32 %v3287, %v3257
        %v3289 = vadd.f32 %v3288, %v3258
        %v3290 = vadd.f32 %v3289, %v3259
        %v3291 = vadd.f32 %v3290, %v3260
        %v3292 = vadd.f32 %v3291, %v3261
        %v3293 = vadd.f32 %v3292, %v3262
        %v3294 = vadd.f32 %v3293, %v3263
        %v3295 = vadd.f32 %v3294, %v3264
        %v3296 = vadd.f32 %v3295, %v3265
        %v3297 = vadd.f32 %v3296, %v3266
        %v3298 = vadd.f32 %v3297, %v3267
        %v3299 = vadd.f32 %v3298, %v3268
        %v3300 = vadd.f32 %v3299, %v3269
        %v3301 = vadd.f32 %v3300, %v3270
        %v3302 = vadd.f32 %v3301, %v3271
        %v3303 = vadd.f32 %v3302, %v3272
        %v3304 = vadd.f32 %v3303, %v3273
        %v3305 = vadd.f32 %v3304, %v3274
        %v3306 = vadd.f32 %v3305, %v3275
        %v3307 = vadd.f32 %v3306, %v3276
        %v3308 = vadd.f32 %v3307, %v3277
        %v3309 = vadd.f32 %v3308, %v3278
        %v3310 = vrot.slane %v3309, 4
        %v3311 = vadd.f32 %v3309, %v3310
        %v3312 = vrot.slane %v3311, 2
        %v3313 = vadd.f32 %v3311, %v3312
        %v3314 = vrot.slane %v3313, 1
        %v3315 = vadd.f32 %v3313, %v3314
        %vm3316 = vcmask 1040384
        %v3317 = vsel %vm3316, %v3246, %v3315
        %3318 = vst [vmem:[%s293] sm:$0x3] %v3317
        %v3319 = vpack.c.bf16 %v3179, %v3178
        %v3320 = vpack.c.bf16 %v3181, %v3180
        %v3321 = vpack.c.bf16 %v3183, %v3182
        %v3322 = vpack.c.bf16 %v3185, %v3184
        %v3323 = vpack.c.bf16 %v3187, %v3186
        %v3324 = vpack.c.bf16 %v3189, %v3188
        %v3325 = vpack.c.bf16 %v3191, %v3190
        %v3326 = vpack.c.bf16 %v3193, %v3192
        %v3327 = vpack.c.bf16 %v3195, %v3194
        %v3328 = vpack.c.bf16 %v3197, %v3196
        %v3329 = vpack.c.bf16 %v3199, %v3198
        %v3330 = vpack.c.bf16 %v3201, %v3200
        %v3331 = vpack.c.bf16 %v3203, %v3202
        %v3332 = vpack.c.bf16 %v3205, %v3204
        %v3333 = vpack.c.bf16 %v3207, %v3206
        %v3334 = vpack.c.bf16 %v3209, %v3208
        %v3351 = vunpack.c.l.b16 %v3319
        %v3352 = vunpack.c.h.b16 %v3319
        %v3353 = vunpack.c.l.b16 %v3320
        %v3354 = vunpack.c.h.b16 %v3320
        %v3355 = vunpack.c.l.b16 %v3321
        %v3356 = vunpack.c.h.b16 %v3321
        %v3357 = vunpack.c.l.b16 %v3322
        %v3358 = vunpack.c.h.b16 %v3322
        %v3359 = vunpack.c.l.b16 %v3323
        %v3360 = vunpack.c.h.b16 %v3323
        %v3361 = vunpack.c.l.b16 %v3324
        %v3362 = vunpack.c.h.b16 %v3324
        %v3363 = vunpack.c.l.b16 %v3325
        %v3364 = vunpack.c.h.b16 %v3325
        %v3365 = vunpack.c.l.b16 %v3326
        %v3366 = vunpack.c.h.b16 %v3326
        %v3367 = vunpack.c.l.b16 %v3327
        %v3368 = vunpack.c.h.b16 %v3327
        %v3369 = vunpack.c.l.b16 %v3328
        %v3370 = vunpack.c.h.b16 %v3328
        %v3371 = vunpack.c.l.b16 %v3329
        %v3372 = vunpack.c.h.b16 %v3329
        %v3373 = vunpack.c.l.b16 %v3330
        %v3374 = vunpack.c.h.b16 %v3330
        %v3375 = vunpack.c.l.b16 %v3331
        %v3376 = vunpack.c.h.b16 %v3331
        %v3377 = vunpack.c.l.b16 %v3332
        %v3378 = vunpack.c.h.b16 %v3332
        %v3379 = vunpack.c.l.b16 %v3333
        %v3380 = vunpack.c.h.b16 %v3333
        %v3381 = vunpack.c.l.b16 %v3334
        %v3382 = vunpack.c.h.b16 %v3334
        %v3383 = vpack.c.b16 %v3351, %v3351
        %v3384 = vpack.c.b16 %v3352, %v3352
        %v3385 = vpack.c.b16 %v3353, %v3353
        %v3386 = vpack.c.b16 %v3354, %v3354
        %v3387 = vpack.c.b16 %v3355, %v3355
        %v3388 = vpack.c.b16 %v3356, %v3356
        %v3389 = vpack.c.b16 %v3357, %v3357
        %v3390 = vpack.c.b16 %v3358, %v3358
        %v3391 = vpack.c.b16 %v3359, %v3359
        %v3392 = vpack.c.b16 %v3360, %v3360
        %v3393 = vpack.c.b16 %v3361, %v3361
        %v3394 = vpack.c.b16 %v3362, %v3362
        %v3395 = vpack.c.b16 %v3363, %v3363
        %v3396 = vpack.c.b16 %v3364, %v3364
        %v3397 = vpack.c.b16 %v3365, %v3365
        %v3398 = vpack.c.b16 %v3366, %v3366
        %v3399 = vpack.c.b16 %v3367, %v3367
        %v3400 = vpack.c.b16 %v3368, %v3368
        %v3401 = vpack.c.b16 %v3369, %v3369
        %v3402 = vpack.c.b16 %v3370, %v3370
        %v3403 = vpack.c.b16 %v3371, %v3371
        %v3404 = vpack.c.b16 %v3372, %v3372
        %v3405 = vpack.c.b16 %v3373, %v3373
        %v3406 = vpack.c.b16 %v3374, %v3374
        %v3407 = vpack.c.b16 %v3375, %v3375
        %v3408 = vpack.c.b16 %v3376, %v3376
        %v3409 = vpack.c.b16 %v3377, %v3377
        %v3410 = vpack.c.b16 %v3378, %v3378
        %v3411 = vpack.c.b16 %v3379, %v3379
        %v3412 = vpack.c.b16 %v3380, %v3380
        %v3413 = vpack.c.b16 %v3381, %v3381
        %v3414 = vpack.c.b16 %v3382, %v3382
        %3447 = vst [vmem:[%s286] sm:$0xf] %v3383
        %3448 = vst [vmem:[%s286 + $0x4] sm:$0xf] %v3384
        %3449 = vst [vmem:[%s286 + $0x8] sm:$0xf] %v3385
        %3450 = vst [vmem:[%s286 + $0xc] sm:$0xf] %v3386
        %3451 = vst [vmem:[%s286 + $0x10] sm:$0xf] %v3387
        %3452 = vst [vmem:[%s286 + $0x14] sm:$0xf] %v3388
        %3453 = vst [vmem:[%s286 + $0x18] sm:$0xf] %v3389
        %3454 = vst [vmem:[%s286 + $0x1c] sm:$0xf] %v3390
        %3455 = vst [vmem:[%s286 + $0x20] sm:$0xf] %v3391
        %3456 = vst [vmem:[%s286 + $0x24] sm:$0xf] %v3392
        %3457 = vst [vmem:[%s286 + $0x28] sm:$0xf] %v3393
        %3458 = vst [vmem:[%s286 + $0x2c] sm:$0xf] %v3394
        %3459 = vst [vmem:[%s286 + $0x30] sm:$0xf] %v3395
        %3460 = vst [vmem:[%s286 + $0x34] sm:$0xf] %v3396
        %3461 = vst [vmem:[%s286 + $0x38] sm:$0xf] %v3397
        %3462 = vst [vmem:[%s286 + $0x3c] sm:$0xf] %v3398
        %3463 = vst [vmem:[%s286 + $0x40] sm:$0xf] %v3399
        %3464 = vst [vmem:[%s286 + $0x44] sm:$0xf] %v3400
        %3465 = vst [vmem:[%s286 + $0x48] sm:$0xf] %v3401
        %3466 = vst [vmem:[%s286 + $0x4c] sm:$0xf] %v3402
        %3467 = vst [vmem:[%s286 + $0x50] sm:$0xf] %v3403
        %3468 = vst [vmem:[%s286 + $0x54] sm:$0xf] %v3404
        %3469 = vst [vmem:[%s286 + $0x58] sm:$0xf] %v3405
        %3470 = vst [vmem:[%s286 + $0x5c] sm:$0xf] %v3406
        %3471 = vst [vmem:[%s286 + $0x60] sm:$0xf] %v3407
        %3472 = vst [vmem:[%s286 + $0x64] sm:$0xf] %v3408
        %3473 = vst [vmem:[%s286 + $0x68] sm:$0xf] %v3409
        %3474 = vst [vmem:[%s286 + $0x6c] sm:$0xf] %v3410
        %3475 = vst [vmem:[%s286 + $0x70] sm:$0xf] %v3411
        %3476 = vst [vmem:[%s286 + $0x74] sm:$0xf] %v3412
        %3477 = vst [vmem:[%s286 + $0x78] sm:$0xf] %v3413
        %3478 = vst [vmem:[%s286 + $0x7c] sm:$0xf] %v3414
        %s3479 = sand.u32 %s125, 1
        %s3480 = scalar_lea.sflag [#allocation5], %s3479
        %s3481 = sand.u32 %s125, 1
        %s3482 = smul.addr %s3481, 128
        %s3483 = scalar_lea.vmem [#allocation11], %s3482
        %s3484 = sand.u32 %s151, 1
        %s3485 = scalar_lea.sflag [#allocation13], %s3484
        %s3486 = sand.u32 %s151, 1
        %s3487 = smul.addr %s3486, 2
        %s3488 = scalar_lea.vmem [#allocation12], %s3487
        // Predicated region
        $region53: #{basic_block_forward.4} parent=35 // pred_check
          %p3489 = pneg %p135
        $region54: #{basic_block_forward.4} parent=35 // pred_check_branch
          %3491 = sbr.rel (%p3489) target = $region56
        $region55: #{basic_block_forward.4} parent=35 // pred_region
          %s3493 = ssub.s32 2048, 2048
          %3494 = vsyncadd %s3480, %s3493
          %s3495 = smul.addr %s28, 32
          %s3496 = smul.addr %s3495, 64
          %s3497 = scalar_lea.hbm %s4, %s3496
          %s3498 = sshll.u32 %s3483, 4
          %s3499 = int_to_ptr.vmem [resolvable:$true] %s3498
          %3504 = dma.vmem_to_hbm [thread:$0]  %s3499, 2048, %s3497, %s3480, 64, 64, 4
        $region56: #{basic_block_forward.4} parent=35 // pred_fallthru
          _
        // Predicated region
        $region57: #{basic_block_forward.4} parent=35 // pred_check
          %p3505 = pneg %p161
        $region58: #{basic_block_forward.4} parent=35 // pred_check_branch
          %3507 = sbr.rel (%p3505) target = $region60
        $region59: #{basic_block_forward.4} parent=35 // pred_region
          %s3509 = ssub.s32 32, 32
          %3510 = vsyncadd %s3485, %s3509
          %s3511 = smul.addr %s28, 32
          %s3512 = scalar_lea.hbm %s5, %s3511
          %s3514 = sshll.u32 %s3488, 4
          %s3515 = int_to_ptr.vmem [resolvable:$true] %s3514
          %3517 = dma.vmem_to_hbm [thread:$0]  %s3515, 32, %s3512, %s3485
        $region60: #{basic_block_forward.4} parent=35 // pred_fallthru
          _
      $region36: #{basic_block_forward.4} parent=5 // pred_fallthru
        _
      %p3518 = scmp.le.s32.totalorder 2, %s23
      // Predicated region
      $region61: #{basic_block_forward.4} parent=5 // pred_check
        %p3519 = pneg %p3518
      $region62: #{basic_block_forward.4} parent=5 // pred_check_branch
        %3521 = sbr.rel (%p3519) target = $region64
      $region63: #{basic_block_forward.4} parent=5 // pred_region
        %s3522 = ssub.s32 %s23, 2
        // Predicated region
        $region65: #{basic_block_forward.4} parent=63 // pred_check
          %p3523 = pneg %p141
        $region66: #{basic_block_forward.4} parent=63 // pred_check_branch
          %3525 = sbr.rel (%p3523) target = $region68
        $region67: #{basic_block_forward.4} parent=63 // pred_region
          %s3526 = sand.u32 %s126, 1
          %s3527 = scalar_lea.sflag [#allocation5], %s3526
          %s3528 = sand.u32 %s126, 1
          %s3529 = smul.addr %s3528, 128
          %s3530 = scalar_lea.vmem [#allocation11], %s3529
          %3531 = dma.done %s3527, 2048
        $region68: #{basic_block_forward.4} parent=63 // pred_fallthru
          _
        // Predicated region
        $region69: #{basic_block_forward.4} parent=63 // pred_check
          %p3532 = pneg %p167
        $region70: #{basic_block_forward.4} parent=63 // pred_check_branch
          %3534 = sbr.rel (%p3532) target = $region72
        $region71: #{basic_block_forward.4} parent=63 // pred_region
          %s3535 = sand.u32 %s152, 1
          %s3536 = scalar_lea.sflag [#allocation13], %s3535
          %s3537 = sand.u32 %s152, 1
          %s3538 = smul.addr %s3537, 2
          %s3539 = scalar_lea.vmem [#allocation12], %s3538
          %3540 = dma.done %s3536, 32
        $region72: #{basic_block_forward.4} parent=63 // pred_fallthru
          _
      $region64: #{basic_block_forward.4} parent=5 // pred_fallthru
        _
    $region6: #{basic_block_forward.4} parent=1 // loop_footer
      %s27 = sadd.s32 1, %s23
    $region7: #{basic_block_forward.4} parent=1 // loop_footer_branch
      %22 = sbr.rel target = $region3
    $region8: #{basic_block_forward.4} parent=1 // loop_exit
      _
    %3541 = vsyncpa [#allocation4], 1
    %s3542 = scalar_lea.sflag [#allocation4], 1
    %3543 = vsyncpa %s3542, 1
    %3544 = vsyncpa [#allocation7], 1
    %3545 = vsyncpa [#allocation10], 1
    %3546 = vsyncpa [#allocation5], 1
    %s3547 = scalar_lea.sflag [#allocation5], 1
    %3548 = vsyncpa %s3547, 1
    %3549 = vsyncpa [#allocation13], 1
    %s3550 = scalar_lea.sflag [#allocation13], 1
    %3551 = vsyncpa %s3550, 1

</llo_original>
